<compile_context>
chip_gen: v5e
topology: v5e:2x2
jax: 0.10.0
libtpu: 0.0.40
codegen_flags: <defaults>
</compile_context>

<pallas_src>
import math

import jax
import jax.numpy as jnp
from jax.experimental import pallas as pl
from jax.experimental.pallas import tpu as pltpu

LEAKY_SLOPE = 0.2
ACT_GAIN = math.sqrt(2.0)   # FusedLeakyReLU gain


# ----------------------------------------------------------------------------
# In-kernel helpers (traced inside the Pallas kernel, values live in VMEM)
# ----------------------------------------------------------------------------
def _zero_pad_hw(x):
    """(B, H, W, C) -> (B, H+2, W+2, C) with a zero border."""
    B, H, W, C = x.shape
    zr = jnp.zeros((B, 1, W, C), x.dtype)
    x = jnp.concatenate([zr, x, zr], axis=1)
    zc = jnp.zeros((B, H + 2, 1, C), x.dtype)
    return jnp.concatenate([zc, x, zc], axis=2)


def _upsample2x(x):
    """Nearest-neighbour 2x upsample (B,H,W,C)->(B,2H,2W,C); concat/reshape only, rank<=4.

    Called on already-modulated bf16 data so the duplicated tensor is moved once in bf16."""
    B, H, W, C = x.shape
    xf = x.reshape(B * H * W, C)
    # duplicate columns: rows become [r0, r0, r1, r1, ...]  -> (B*H, 2W, C)
    xw = jnp.concatenate([xf[:, None, :], xf[:, None, :]], axis=1).reshape(B * H, 2 * W, C)
    # duplicate rows: (B*H, 2W, C) -> (B*H, 2, 2W, C) -> (B, 2H, 2W, C)
    xh = jnp.concatenate([xw[:, None, :, :], xw[:, None, :, :]], axis=1)
    return xh.reshape(B * 2 * H * 2 * W, C).reshape(B, 2 * H, 2 * W, C)


def _modulate(x, ms):
    """(B,H,W,C) f32 x (B,C) modulation -> bf16; all downstream copy-heavy work is bf16."""
    return (x * ms[:, None, None, :]).astype(jnp.bfloat16)


def _conv3x3_core(x, w_ref, demod, bias, noise, nw):
    """3x3 conv (pad=1) on already-modulated bf16 input + demod + noise + bias + leaky*sqrt(2).

    x:     (B, H, W, Cin) bf16, already modulated
    w_ref: (9*Cin, Cout)  bf16 im2col weight ref (tap-major rows)
    demod: (B, Cout) f32  algebraic demodulation (computed outside the kernel)
    bias:  (1, Cout) f32  FusedLeakyReLU bias
    noise: (H*W, 1)  f32  batch-shared noise map (flattened row-major)
    nw:    scalar         NoiseInjection weight (SMEM)
    returns (B, H*W, Cout) f32
    """
    B, H, W, Cin = x.shape
    Cout = w_ref.shape[-1]
    xp = _zero_pad_hw(x)                                                 # (B, H+2, W+2, Cin)
    cols = [xp[:, dy:dy + H, dx:dx + W, :] for dy in range(3) for dx in range(3)]
    patches = jnp.concatenate(cols, axis=-1).reshape(B * H * W, 9 * Cin)  # bf16, K = 9*Cin
    y = jnp.dot(patches, w_ref[...], preferred_element_type=jnp.float32)  # one MXU matmul
    y = y.reshape(B, H * W, Cout)
    y = y * demod[:, None, :]                                            # demodulation
    y = y + nw * noise[None, :, :]                                       # noise injection
    y = y + bias[None, :, :]                                             # FusedLeakyReLU bias
    return jnp.where(y >= 0.0, y, LEAKY_SLOPE * y) * ACT_GAIN


# ----------------------------------------------------------------------------
# The single fused kernel (constant StyledConv + n_blocks synthesis blocks)
# ----------------------------------------------------------------------------
def _make_fused_kernel(n_blocks):
    n_convs = 1 + 2 * n_blocks

    def kernel(*refs):
        const_ref = refs[0]
        conv_refs = refs[1:1 + 4 * n_convs]          # (ms, demod, w, bias) per conv
        noise_refs = refs[1 + 4 * n_convs:-2]        # conv1 noise + one per block
        nw_ref = refs[-2]                            # (n_convs,) f32 in SMEM
        out_ref = refs[-1]                           # (B, H_out*W_out, C_out) f32

        def conv(k, x_bf16, noise):
            _, demod_ref, w_ref, bias_ref = conv_refs[4 * k:4 * k + 4]
            return _conv3x3_core(x_bf16, w_ref, demod_ref[...], bias_ref[...],
                                 noise, nw_ref[k])

        def modulate(k, x):
            return _modulate(x, conv_refs[4 * k][...])

        B = conv_refs[0].shape[0]

        # ---- StyledConv (full ModulatedConv2d 3x3) on the learned 4x4 constant ----
        x = modulate(0, const_ref[...][None, :, :, :])                   # (B, 4, 4, C0) bf16
        y = conv(0, x, noise_refs[0][0])                                 # (B, 16, C0) f32

        h = 4
        for b in range(n_blocks):
            noise = noise_refs[1 + b]
            # conv1: modulate the small tensor, 2x upsample in bf16, then 3x3 conv.
            # TODO(synk): reference MobileSynthesisBlock upsamples with blur_kernel=[1,3,3,1];
            # nearest-neighbour 2x is used here.
            k1 = 1 + 2 * b
            cin = conv_refs[4 * k1].shape[-1]
            xu = _upsample2x(modulate(k1, y.reshape(B, h, h, cin)))      # (B, 2h, 2h, Cin)
            y = conv(k1, xu, noise[0])                                   # (B, (2h)^2, Cmid)
            h *= 2
            # conv2 (no upsample); the intermediate activation never leaves VMEM.
            k2 = 2 + 2 * b
            cmid = conv_refs[4 * k2].shape[-1]
            y = conv(k2, modulate(k2, y.reshape(B, h, h, cmid)), noise[1])

        out_ref[...] = y                                                 # lane/sublane dense

    return kernel


# ----------------------------------------------------------------------------
# Style math done OUTSIDE the kernel (batched, overlaps with the kernel)
# ----------------------------------------------------------------------------
def _style_mod(style, p):
    """ms = scale * EqualLinear(style) (scale folded into mwT/mb at init),
       demod = rsqrt(ms^2 @ sum_k w^2 + 1e-8)  — algebraic demodulation."""
    ms = style @ p["mwT"] + p["mb"]                         # (B, Cin)
    demod = jax.lax.rsqrt((ms * ms) @ p["wsq"] + 1e-8)      # (B, Cout)
    return ms, demod


# ----------------------------------------------------------------------------
# Forward pass (jit this whole function)
# ----------------------------------------------------------------------------
def style_encoder_forward(params, style, noise_key):
    B = style.shape[0]
    convs = params["convs"]
    n_convs = len(convs)
    n_blocks = (n_convs - 1) // 2
    h_out = 4 * (2 ** n_blocks)
    c_out = convs[-1]["w"].shape[-1]

    # per-conv modulation / demodulation for the whole batch, as plain XLA matmuls
    conv_args = []
    for p in convs:
        ms, demod = _style_mod(style, p)
        conv_args += [ms, demod, p["w"], p["bias"]]

    # batch-shared noise maps (torch.randn(1,1,H,W) / torch.randn(2,1,1,H,W)), flattened
    nkeys = jax.random.split(noise_key, 1 + n_blocks)
    noises = [jax.random.normal(nkeys[0], (1, 16, 1), jnp.float32)]
    for i in range(n_blocks):
        hw = (2 ** (i + 3)) ** 2
        noises.append(jax.random.normal(nkeys[1 + i], (2, hw, 1), jnp.float32))

    args = [params["const"], *conv_args, *noises, params["nw"]]

    # advisory cost estimate so XLA can schedule the RNG / style matmuls around the kernel
    flops, hw = 0, 16
    for k, p in enumerate(convs):
        kdim, cout = p["w"].shape
        if k >= 1 and (k - 1) % 2 == 0:
            hw *= 4
        flops += 2 * B * hw * kdim * cout
    bytes_accessed = int(sum(a.size * a.dtype.itemsize for a in args)
                         + B * h_out * h_out * c_out * 4)

    vmem = pl.BlockSpec(memory_space=pltpu.MemorySpace.VMEM)
    smem = pl.BlockSpec(memory_space=pltpu.MemorySpace.SMEM)

    out = pl.pallas_call(
        _make_fused_kernel(n_blocks),
        out_shape=jax.ShapeDtypeStruct((B, h_out * h_out, c_out), jnp.float32),
        in_specs=[vmem] * (len(args) - 1) + [smem],
        out_specs=vmem,
        cost_estimate=pl.CostEstimate(flops=int(flops), transcendentals=0,
                                      bytes_accessed=bytes_accessed),
    )(*args)

    # NHWC -> NCHW at the module boundary (free metadata reshape + transpose in XLA)
    return jnp.transpose(out.reshape(B, h_out, h_out, c_out), (0, 3, 1, 2))


# ----------------------------------------------------------------------------
# Parameter init (derived tensors precomputed once: pre-scaled EqualLinear,
# bf16 im2col weights, per-(cin,cout) squared-weight sums for algebraic demod)
# ----------------------------------------------------------------------------
def _pack_conv_params(weight, mod_w, cin, cout, style_dim, ksize=3):
    scale = 1.0 / math.sqrt(cin * ksize * ksize)        # ModulatedConv scale
    lin_scale = 1.0 / math.sqrt(style_dim)              # EqualLinear scale (lr_mul = 1)
    return {
        # style -> (scale * s): EqualLinear and the modulation scale folded together
        "mwT": (scale * lin_scale) * mod_w.T,                               # (S, cin)
        "mb": scale * jnp.ones((1, cin), jnp.float32),                      # bias_init = 1
        # demod = rsqrt((scale*s)^2 @ wsq + 1e-8), wsq[cin,cout] = sum_k w[cout,cin,k]^2
        "wsq": jnp.sum(weight * weight, axis=(2, 3)).T,                     # (cin, cout)
        # im2col weight, tap-major rows: (9*cin, cout), bf16 for the MXU
        "w": jnp.transpose(weight, (2, 3, 1, 0)).reshape(ksize * ksize * cin,
                                                         cout).astype(jnp.bfloat16),
        "bias": jnp.zeros((1, cout), jnp.float32),                          # FusedLeakyReLU bias
    }


def init_styled_conv(key, cin, cout, style_dim, ksize=3):
    """StyledConv with a full ModulatedConv2d."""
    kw, km = jax.random.split(key)
    weight = jax.random.normal(kw, (cout, cin, ksize, ksize), jnp.float32)
    mod_w = jax.random.normal(km, (cin, style_dim), jnp.float32)
    return _pack_conv_params(weight, mod_w, cin, cout, style_dim, ksize)


def init_styled_dwconv(key, cin, cout, style_dim, ksize=3):
    """StyledConv2d with ModulatedDWConv2d: depthwise 3x3 + pointwise 1x1 folded into one
       effective weight w[cout,cin,ky,kx] = w_pw[cout,cin] * w_dw[cin,ky,kx]."""
    kd, kp, km = jax.random.split(key, 3)
    w_dw = jax.random.normal(kd, (cin, ksize, ksize), jnp.float32)
    w_pw = jax.random.normal(kp, (cout, cin), jnp.float32)
    mod_w = jax.random.normal(km, (cin, style_dim), jnp.float32)
    w_full = w_pw[:, :, None, None] * w_dw[None, :, :, :]                   # (cout,cin,k,k)
    # TODO(synk): demodulation uses the combined dw*pw effective weight (ModulatedConv2d
    # semantics); verify against ModulatedDWConv2d's reference demod.
    return _pack_conv_params(w_full, mod_w, cin, cout, style_dim, ksize)


def init_style_encoder(key, style_dim, channels):
    n_blocks = len(channels) - 1
    keys = jax.random.split(key, 2 + 2 * n_blocks)
    convs = [init_styled_conv(keys[1], channels[0], channels[0], style_dim)]
    cin = channels[0]
    for i, cout in enumerate(channels[1:]):
        # TODO(synk): MobileSynthesisBlock.to_img (IDWT "freq" branch) is discarded by
        # StyleEncoder.forward, so it is omitted here.
        convs.append(init_styled_dwconv(keys[2 + 2 * i], cin, cout, style_dim))
        convs.append(init_styled_dwconv(keys[3 + 2 * i], cout, cout, style_dim))
        cin = cout
    return {
        "const": jax.random.normal(keys[0], (4, 4, channels[0]), jnp.float32),
        "convs": convs,                                                     # flat forward order
        "nw": jnp.zeros((len(convs),), jnp.float32),   # NoiseInjection weights (init 0)
    }


if __name__ == "__main__":
    key = jax.random.PRNGKey(0)
    kparam, kstyle, knoise = jax.random.split(key, 3)

    # small shapes consistent with the module: batch=2, style_dim=64,
    # channels kept at multiples of 128 so every store is lane-dense.
    style_dim = 64
    channels = (128, 128, 128)
    params = init_style_encoder(kparam, style_dim, channels)
    style = jax.random.normal(kstyle, (2, style_dim), jnp.float32)

    fwd = jax.jit(style_encoder_forward)
    out = jax.block_until_ready(fwd(params, style, knoise))
    assert out.shape == (2, channels[-1], 16, 16), out.shape
    assert bool(jnp.all(jnp.isfinite(out)))
    print("KERNEL_OK")
</pallas_src>

<mosaic_0001>
module attributes {stable_mosaic.version = 11 : i64} {
  func.func @kernel(%arg0: memref<4x4x128xf32, #tpu.memory_space<vmem>>, %arg1: memref<2x128xf32, #tpu.memory_space<vmem>>, %arg2: memref<2x128xf32, #tpu.memory_space<vmem>>, %arg3: memref<1152x128xbf16, #tpu.memory_space<vmem>>, %arg4: memref<1x128xf32, #tpu.memory_space<vmem>>, %arg5: memref<2x128xf32, #tpu.memory_space<vmem>>, %arg6: memref<2x128xf32, #tpu.memory_space<vmem>>, %arg7: memref<1152x128xbf16, #tpu.memory_space<vmem>>, %arg8: memref<1x128xf32, #tpu.memory_space<vmem>>, %arg9: memref<2x128xf32, #tpu.memory_space<vmem>>, %arg10: memref<2x128xf32, #tpu.memory_space<vmem>>, %arg11: memref<1152x128xbf16, #tpu.memory_space<vmem>>, %arg12: memref<1x128xf32, #tpu.memory_space<vmem>>, %arg13: memref<2x128xf32, #tpu.memory_space<vmem>>, %arg14: memref<2x128xf32, #tpu.memory_space<vmem>>, %arg15: memref<1152x128xbf16, #tpu.memory_space<vmem>>, %arg16: memref<1x128xf32, #tpu.memory_space<vmem>>, %arg17: memref<2x128xf32, #tpu.memory_space<vmem>>, %arg18: memref<2x128xf32, #tpu.memory_space<vmem>>, %arg19: memref<1152x128xbf16, #tpu.memory_space<vmem>>, %arg20: memref<1x128xf32, #tpu.memory_space<vmem>>, %arg21: memref<1x16x1xf32, #tpu.memory_space<vmem>>, %arg22: memref<2x64x1xf32, #tpu.memory_space<vmem>>, %arg23: memref<2x256x1xf32, #tpu.memory_space<vmem>>, %arg24: memref<5xf32, #tpu.memory_space<smem>>, %arg25: memref<2x256x128xf32, #tpu.memory_space<vmem>>) attributes {dimension_semantics = [], scalar_prefetch = 0 : i64, scratch_operands = 0 : i64, tpu.core_type = #tpu.core_type<tc>} {
    %c0 = arith.constant 0 : index
    %c0_0 = arith.constant 0 : index
    %c0_1 = arith.constant 0 : index
    %0 = vector.load %arg0[%c0, %c0_0, %c0_1] : memref<4x4x128xf32, #tpu.memory_space<vmem>>, vector<4x4x128xf32>
    %1 = vector.shape_cast %0 : vector<4x4x128xf32> to vector<1x4x4x128xf32>
    %c0_2 = arith.constant 0 : index
    %c0_3 = arith.constant 0 : index
    %2 = vector.load %arg1[%c0_2, %c0_3] : memref<2x128xf32, #tpu.memory_space<vmem>>, vector<2x128xf32>
    %3 = vector.shape_cast %2 : vector<2x128xf32> to vector<2x1x1x128xf32>
    %4 = vector.broadcast %1 : vector<1x4x4x128xf32> to vector<2x4x4x128xf32>
    %5 = vector.broadcast %3 : vector<2x1x1x128xf32> to vector<2x4x4x128xf32>
    %6 = arith.mulf %4, %5 : vector<2x4x4x128xf32>
    %7 = arith.truncf %6 : vector<2x4x4x128xf32> to vector<2x4x4x128xbf16>
    %c0_4 = arith.constant 0 : index
    %c0_5 = arith.constant 0 : index
    %c0_6 = arith.constant 0 : index
    %8 = vector.load %arg21[%c0_4, %c0_5, %c0_6] : memref<1x16x1xf32, #tpu.memory_space<vmem>>, vector<1x16x1xf32>
    %9 = vector.shape_cast %8 : vector<1x16x1xf32> to vector<16x1xf32>
    %c0_7 = arith.constant 0 : index
    %c0_8 = arith.constant 0 : index
    %10 = vector.load %arg2[%c0_7, %c0_8] : memref<2x128xf32, #tpu.memory_space<vmem>>, vector<2x128xf32>
    %c0_9 = arith.constant 0 : index
    %c0_10 = arith.constant 0 : index
    %11 = vector.load %arg4[%c0_9, %c0_10] : memref<1x128xf32, #tpu.memory_space<vmem>>, vector<1x128xf32>
    %c0_11 = arith.constant 0 : index
    %12 = memref.load %arg24[%c0_11] : memref<5xf32, #tpu.memory_space<smem>>
    %cst = arith.constant 0.000000e+00 : bf16
    %13 = vector.broadcast %cst : bf16 to vector<2x1x4x128xbf16>
    %14 = tpu.concatenate %13, %7, %13 in 1 : vector<2x1x4x128xbf16>, vector<2x4x4x128xbf16>, vector<2x1x4x128xbf16> -> vector<2x6x4x128xbf16>
    %cst_12 = arith.constant 0.000000e+00 : bf16
    %15 = vector.broadcast %cst_12 : bf16 to vector<2x6x1x128xbf16>
    %16 = tpu.concatenate %15, %14, %15 in 2 : vector<2x6x1x128xbf16>, vector<2x6x4x128xbf16>, vector<2x6x1x128xbf16> -> vector<2x6x6x128xbf16>
    %17 = vector.extract_strided_slice %16 {offsets = [0, 0, 0, 0], sizes = [2, 4, 4, 128], strides = [1, 1, 1, 1]} : vector<2x6x6x128xbf16> to vector<2x4x4x128xbf16>
    %18 = vector.extract_strided_slice %16 {offsets = [0, 0, 1, 0], sizes = [2, 4, 4, 128], strides = [1, 1, 1, 1]} : vector<2x6x6x128xbf16> to vector<2x4x4x128xbf16>
    %19 = vector.extract_strided_slice %16 {offsets = [0, 0, 2, 0], sizes = [2, 4, 4, 128], strides = [1, 1, 1, 1]} : vector<2x6x6x128xbf16> to vector<2x4x4x128xbf16>
    %20 = vector.extract_strided_slice %16 {offsets = [0, 1, 0, 0], sizes = [2, 4, 4, 128], strides = [1, 1, 1, 1]} : vector<2x6x6x128xbf16> to vector<2x4x4x128xbf16>
    %21 = vector.extract_strided_slice %16 {offsets = [0, 1, 1, 0], sizes = [2, 4, 4, 128], strides = [1, 1, 1, 1]} : vector<2x6x6x128xbf16> to vector<2x4x4x128xbf16>
    %22 = vector.extract_strided_slice %16 {offsets = [0, 1, 2, 0], sizes = [2, 4, 4, 128], strides = [1, 1, 1, 1]} : vector<2x6x6x128xbf16> to vector<2x4x4x128xbf16>
    %23 = vector.extract_strided_slice %16 {offsets = [0, 2, 0, 0], sizes = [2, 4, 4, 128], strides = [1, 1, 1, 1]} : vector<2x6x6x128xbf16> to vector<2x4x4x128xbf16>
    %24 = vector.extract_strided_slice %16 {offsets = [0, 2, 1, 0], sizes = [2, 4, 4, 128], strides = [1, 1, 1, 1]} : vector<2x6x6x128xbf16> to vector<2x4x4x128xbf16>
    %25 = vector.extract_strided_slice %16 {offsets = [0, 2, 2, 0], sizes = [2, 4, 4, 128], strides = [1, 1, 1, 1]} : vector<2x6x6x128xbf16> to vector<2x4x4x128xbf16>
    %26 = tpu.concatenate %17, %18, %19, %20, %21, %22, %23, %24, %25 in 3 : vector<2x4x4x128xbf16>, vector<2x4x4x128xbf16>, vector<2x4x4x128xbf16>, vector<2x4x4x128xbf16>, vector<2x4x4x128xbf16>, vector<2x4x4x128xbf16>, vector<2x4x4x128xbf16>, vector<2x4x4x128xbf16>, vector<2x4x4x128xbf16> -> vector<2x4x4x1152xbf16>
    %27 = vector.shape_cast %26 : vector<2x4x4x1152xbf16> to vector<32x1152xbf16>
    %c0_13 = arith.constant 0 : index
    %c0_14 = arith.constant 0 : index
    %28 = vector.load %arg3[%c0_13, %c0_14] : memref<1152x128xbf16, #tpu.memory_space<vmem>>, vector<1152x128xbf16>
    %cst_15 = arith.constant dense<0.000000e+00> : vector<32x128xf32>
    %29 = tpu.matmul %27, %28, %cst_15 {dimension_numbers = #tpu.dot_dimension_numbers<[1], [0], [0], [1], [0, 0, 1, 1], [], []>} : vector<32x1152xbf16>, vector<1152x128xbf16>, vector<32x128xf32> -> vector<32x128xf32>
    %30 = vector.shape_cast %29 : vector<32x128xf32> to vector<2x16x128xf32>
    %31 = vector.shape_cast %10 : vector<2x128xf32> to vector<2x1x128xf32>
    %32 = vector.broadcast %31 : vector<2x1x128xf32> to vector<2x16x128xf32>
    %33 = arith.mulf %30, %32 : vector<2x16x128xf32>
    %34 = vector.shape_cast %9 : vector<16x1xf32> to vector<1x16x1xf32>
    %35 = vector.broadcast %12 : f32 to vector<1x16x1xf32>
    %36 = arith.mulf %35, %34 : vector<1x16x1xf32>
    %37 = vector.broadcast %36 : vector<1x16x1xf32> to vector<2x16x128xf32>
    %38 = arith.addf %33, %37 : vector<2x16x128xf32>
    %39 = vector.shape_cast %11 : vector<1x128xf32> to vector<1x1x128xf32>
    %40 = vector.broadcast %39 : vector<1x1x128xf32> to vector<2x16x128xf32>
    %41 = arith.addf %38, %40 : vector<2x16x128xf32>
    %cst_16 = arith.constant 0.000000e+00 : f32
    %42 = vector.broadcast %cst_16 : f32 to vector<2x16x128xf32>
    %43 = arith.cmpf oge, %41, %42 : vector<2x16x128xf32>
    %cst_17 = arith.constant 2.000000e-01 : f32
    %44 = vector.broadcast %cst_17 : f32 to vector<2x16x128xf32>
    %45 = arith.mulf %44, %41 : vector<2x16x128xf32>
    %46 = arith.select %43, %41, %45 : vector<2x16x128xi1>, vector<2x16x128xf32>
    %cst_18 = arith.constant 1.41421354 : f32
    %47 = vector.broadcast %cst_18 : f32 to vector<2x16x128xf32>
    %48 = arith.mulf %46, %47 : vector<2x16x128xf32>
    %49 = vector.shape_cast %48 : vector<2x16x128xf32> to vector<2x4x4x128xf32>
    %c0_19 = arith.constant 0 : index
    %c0_20 = arith.constant 0 : index
    %50 = vector.load %arg5[%c0_19, %c0_20] : memref<2x128xf32, #tpu.memory_space<vmem>>, vector<2x128xf32>
    %51 = vector.shape_cast %50 : vector<2x128xf32> to vector<2x1x1x128xf32>
    %52 = vector.broadcast %51 : vector<2x1x1x128xf32> to vector<2x4x4x128xf32>
    %53 = arith.mulf %49, %52 : vector<2x4x4x128xf32>
    %54 = arith.truncf %53 : vector<2x4x4x128xf32> to vector<2x4x4x128xbf16>
    %55 = vector.shape_cast %54 : vector<2x4x4x128xbf16> to vector<32x128xbf16>
    %56 = vector.shape_cast %55 : vector<32x128xbf16> to vector<32x1x128xbf16>
    %57 = vector.shape_cast %55 : vector<32x128xbf16> to vector<32x1x128xbf16>
    %58 = tpu.concatenate %56, %57 in 1 : vector<32x1x128xbf16>, vector<32x1x128xbf16> -> vector<32x2x128xbf16>
    %59 = vector.shape_cast %58 : vector<32x2x128xbf16> to vector<8x8x128xbf16>
    %60 = vector.shape_cast %59 : vector<8x8x128xbf16> to vector<8x1x8x128xbf16>
    %61 = vector.shape_cast %59 : vector<8x8x128xbf16> to vector<8x1x8x128xbf16>
    %62 = tpu.concatenate %60, %61 in 1 : vector<8x1x8x128xbf16>, vector<8x1x8x128xbf16> -> vector<8x2x8x128xbf16>
    %63 = vector.shape_cast %62 : vector<8x2x8x128xbf16> to vector<128x128xbf16>
    %64 = vector.shape_cast %63 : vector<128x128xbf16> to vector<2x8x8x128xbf16>
    %c0_21 = arith.constant 0 : index
    %c0_22 = arith.constant 0 : index
    %c0_23 = arith.constant 0 : index
    %65 = vector.load %arg22[%c0_21, %c0_22, %c0_23] : memref<2x64x1xf32, #tpu.memory_space<vmem>>, vector<1x64x1xf32>
    %66 = vector.shape_cast %65 : vector<1x64x1xf32> to vector<64x1xf32>
    %c0_24 = arith.constant 0 : index
    %c0_25 = arith.constant 0 : index
    %67 = vector.load %arg6[%c0_24, %c0_25] : memref<2x128xf32, #tpu.memory_space<vmem>>, vector<2x128xf32>
    %c0_26 = arith.constant 0 : index
    %c0_27 = arith.constant 0 : index
    %68 = vector.load %arg8[%c0_26, %c0_27] : memref<1x128xf32, #tpu.memory_space<vmem>>, vector<1x128xf32>
    %c1 = arith.constant 1 : index
    %69 = memref.load %arg24[%c1] : memref<5xf32, #tpu.memory_space<smem>>
    %cst_28 = arith.constant 0.000000e+00 : bf16
    %70 = vector.broadcast %cst_28 : bf16 to vector<2x1x8x128xbf16>
    %71 = tpu.concatenate %70, %64, %70 in 1 : vector<2x1x8x128xbf16>, vector<2x8x8x128xbf16>, vector<2x1x8x128xbf16> -> vector<2x10x8x128xbf16>
    %cst_29 = arith.constant 0.000000e+00 : bf16
    %72 = vector.broadcast %cst_29 : bf16 to vector<2x10x1x128xbf16>
    %73 = tpu.concatenate %72, %71, %72 in 2 : vector<2x10x1x128xbf16>, vector<2x10x8x128xbf16>, vector<2x10x1x128xbf16> -> vector<2x10x10x128xbf16>
    %74 = vector.extract_strided_slice %73 {offsets = [0, 0, 0, 0], sizes = [2, 8, 8, 128], strides = [1, 1, 1, 1]} : vector<2x10x10x128xbf16> to vector<2x8x8x128xbf16>
    %75 = vector.extract_strided_slice %73 {offsets = [0, 0, 1, 0], sizes = [2, 8, 8, 128], strides = [1, 1, 1, 1]} : vector<2x10x10x128xbf16> to vector<2x8x8x128xbf16>
    %76 = vector.extract_strided_slice %73 {offsets = [0, 0, 2, 0], sizes = [2, 8, 8, 128], strides = [1, 1, 1, 1]} : vector<2x10x10x128xbf16> to vector<2x8x8x128xbf16>
    %77 = vector.extract_strided_slice %73 {offsets = [0, 1, 0, 0], sizes = [2, 8, 8, 128], strides = [1, 1, 1, 1]} : vector<2x10x10x128xbf16> to vector<2x8x8x128xbf16>
    %78 = vector.extract_strided_slice %73 {offsets = [0, 1, 1, 0], sizes = [2, 8, 8, 128], strides = [1, 1, 1, 1]} : vector<2x10x10x128xbf16> to vector<2x8x8x128xbf16>
    %79 = vector.extract_strided_slice %73 {offsets = [0, 1, 2, 0], sizes = [2, 8, 8, 128], strides = [1, 1, 1, 1]} : vector<2x10x10x128xbf16> to vector<2x8x8x128xbf16>
    %80 = vector.extract_strided_slice %73 {offsets = [0, 2, 0, 0], sizes = [2, 8, 8, 128], strides = [1, 1, 1, 1]} : vector<2x10x10x128xbf16> to vector<2x8x8x128xbf16>
    %81 = vector.extract_strided_slice %73 {offsets = [0, 2, 1, 0], sizes = [2, 8, 8, 128], strides = [1, 1, 1, 1]} : vector<2x10x10x128xbf16> to vector<2x8x8x128xbf16>
    %82 = vector.extract_strided_slice %73 {offsets = [0, 2, 2, 0], sizes = [2, 8, 8, 128], strides = [1, 1, 1, 1]} : vector<2x10x10x128xbf16> to vector<2x8x8x128xbf16>
    %83 = tpu.concatenate %74, %75, %76, %77, %78, %79, %80, %81, %82 in 3 : vector<2x8x8x128xbf16>, vector<2x8x8x128xbf16>, vector<2x8x8x128xbf16>, vector<2x8x8x128xbf16>, vector<2x8x8x128xbf16>, vector<2x8x8x128xbf16>, vector<2x8x8x128xbf16>, vector<2x8x8x128xbf16>, vector<2x8x8x128xbf16> -> vector<2x8x8x1152xbf16>
    %84 = vector.shape_cast %83 : vector<2x8x8x1152xbf16> to vector<128x1152xbf16>
    %c0_30 = arith.constant 0 : index
    %c0_31 = arith.constant 0 : index
    %85 = vector.load %arg7[%c0_30, %c0_31] : memref<1152x128xbf16, #tpu.memory_space<vmem>>, vector<1152x128xbf16>
    %cst_32 = arith.constant dense<0.000000e+00> : vector<128x128xf32>
    %86 = tpu.matmul %84, %85, %cst_32 {dimension_numbers = #tpu.dot_dimension_numbers<[1], [0], [0], [1], [0, 0, 1, 1], [], []>} : vector<128x1152xbf16>, vector<1152x128xbf16>, vector<128x128xf32> -> vector<128x128xf32>
    %87 = vector.shape_cast %86 : vector<128x128xf32> to vector<2x64x128xf32>
    %88 = vector.shape_cast %67 : vector<2x128xf32> to vector<2x1x128xf32>
    %89 = vector.broadcast %88 : vector<2x1x128xf32> to vector<2x64x128xf32>
    %90 = arith.mulf %87, %89 : vector<2x64x128xf32>
    %91 = vector.shape_cast %66 : vector<64x1xf32> to vector<1x64x1xf32>
    %92 = vector.broadcast %69 : f32 to vector<1x64x1xf32>
    %93 = arith.mulf %92, %91 : vector<1x64x1xf32>
    %94 = vector.broadcast %93 : vector<1x64x1xf32> to vector<2x64x128xf32>
    %95 = arith.addf %90, %94 : vector<2x64x128xf32>
    %96 = vector.shape_cast %68 : vector<1x128xf32> to vector<1x1x128xf32>
    %97 = vector.broadcast %96 : vector<1x1x128xf32> to vector<2x64x128xf32>
    %98 = arith.addf %95, %97 : vector<2x64x128xf32>
    %cst_33 = arith.constant 0.000000e+00 : f32
    %99 = vector.broadcast %cst_33 : f32 to vector<2x64x128xf32>
    %100 = arith.cmpf oge, %98, %99 : vector<2x64x128xf32>
    %cst_34 = arith.constant 2.000000e-01 : f32
    %101 = vector.broadcast %cst_34 : f32 to vector<2x64x128xf32>
    %102 = arith.mulf %101, %98 : vector<2x64x128xf32>
    %103 = arith.select %100, %98, %102 : vector<2x64x128xi1>, vector<2x64x128xf32>
    %cst_35 = arith.constant 1.41421354 : f32
    %104 = vector.broadcast %cst_35 : f32 to vector<2x64x128xf32>
    %105 = arith.mulf %103, %104 : vector<2x64x128xf32>
    %106 = vector.shape_cast %105 : vector<2x64x128xf32> to vector<2x8x8x128xf32>
    %c0_36 = arith.constant 0 : index
    %c0_37 = arith.constant 0 : index
    %107 = vector.load %arg9[%c0_36, %c0_37] : memref<2x128xf32, #tpu.memory_space<vmem>>, vector<2x128xf32>
    %108 = vector.shape_cast %107 : vector<2x128xf32> to vector<2x1x1x128xf32>
    %109 = vector.broadcast %108 : vector<2x1x1x128xf32> to vector<2x8x8x128xf32>
    %110 = arith.mulf %106, %109 : vector<2x8x8x128xf32>
    %111 = arith.truncf %110 : vector<2x8x8x128xf32> to vector<2x8x8x128xbf16>
    %c1_38 = arith.constant 1 : index
    %c0_39 = arith.constant 0 : index
    %c0_40 = arith.constant 0 : index
    %112 = vector.load %arg22[%c1_38, %c0_39, %c0_40] : memref<2x64x1xf32, #tpu.memory_space<vmem>>, vector<1x64x1xf32>
    %113 = vector.shape_cast %112 : vector<1x64x1xf32> to vector<64x1xf32>
    %c0_41 = arith.constant 0 : index
    %c0_42 = arith.constant 0 : index
    %114 = vector.load %arg10[%c0_41, %c0_42] : memref<2x128xf32, #tpu.memory_space<vmem>>, vector<2x128xf32>
    %c0_43 = arith.constant 0 : index
    %c0_44 = arith.constant 0 : index
    %115 = vector.load %arg12[%c0_43, %c0_44] : memref<1x128xf32, #tpu.memory_space<vmem>>, vector<1x128xf32>
    %c2 = arith.constant 2 : index
    %116 = memref.load %arg24[%c2] : memref<5xf32, #tpu.memory_space<smem>>
    %cst_45 = arith.constant 0.000000e+00 : bf16
    %117 = vector.broadcast %cst_45 : bf16 to vector<2x1x8x128xbf16>
    %118 = tpu.concatenate %117, %111, %117 in 1 : vector<2x1x8x128xbf16>, vector<2x8x8x128xbf16>, vector<2x1x8x128xbf16> -> vector<2x10x8x128xbf16>
    %cst_46 = arith.constant 0.000000e+00 : bf16
    %119 = vector.broadcast %cst_46 : bf16 to vector<2x10x1x128xbf16>
    %120 = tpu.concatenate %119, %118, %119 in 2 : vector<2x10x1x128xbf16>, vector<2x10x8x128xbf16>, vector<2x10x1x128xbf16> -> vector<2x10x10x128xbf16>
    %121 = vector.extract_strided_slice %120 {offsets = [0, 0, 0, 0], sizes = [2, 8, 8, 128], strides = [1, 1, 1, 1]} : vector<2x10x10x128xbf16> to vector<2x8x8x128xbf16>
    %122 = vector.extract_strided_slice %120 {offsets = [0, 0, 1, 0], sizes = [2, 8, 8, 128], strides = [1, 1, 1, 1]} : vector<2x10x10x128xbf16> to vector<2x8x8x128xbf16>
    %123 = vector.extract_strided_slice %120 {offsets = [0, 0, 2, 0], sizes = [2, 8, 8, 128], strides = [1, 1, 1, 1]} : vector<2x10x10x128xbf16> to vector<2x8x8x128xbf16>
    %124 = vector.extract_strided_slice %120 {offsets = [0, 1, 0, 0], sizes = [2, 8, 8, 128], strides = [1, 1, 1, 1]} : vector<2x10x10x128xbf16> to vector<2x8x8x128xbf16>
    %125 = vector.extract_strided_slice %120 {offsets = [0, 1, 1, 0], sizes = [2, 8, 8, 128], strides = [1, 1, 1, 1]} : vector<2x10x10x128xbf16> to vector<2x8x8x128xbf16>
    %126 = vector.extract_strided_slice %120 {offsets = [0, 1, 2, 0], sizes = [2, 8, 8, 128], strides = [1, 1, 1, 1]} : vector<2x10x10x128xbf16> to vector<2x8x8x128xbf16>
    %127 = vector.extract_strided_slice %120 {offsets = [0, 2, 0, 0], sizes = [2, 8, 8, 128], strides = [1, 1, 1, 1]} : vector<2x10x10x128xbf16> to vector<2x8x8x128xbf16>
    %128 = vector.extract_strided_slice %120 {offsets = [0, 2, 1, 0], sizes = [2, 8, 8, 128], strides = [1, 1, 1, 1]} : vector<2x10x10x128xbf16> to vector<2x8x8x128xbf16>
    %129 = vector.extract_strided_slice %120 {offsets = [0, 2, 2, 0], sizes = [2, 8, 8, 128], strides = [1, 1, 1, 1]} : vector<2x10x10x128xbf16> to vector<2x8x8x128xbf16>
    %130 = tpu.concatenate %121, %122, %123, %124, %125, %126, %127, %128, %129 in 3 : vector<2x8x8x128xbf16>, vector<2x8x8x128xbf16>, vector<2x8x8x128xbf16>, vector<2x8x8x128xbf16>, vector<2x8x8x128xbf16>, vector<2x8x8x128xbf16>, vector<2x8x8x128xbf16>, vector<2x8x8x128xbf16>, vector<2x8x8x128xbf16> -> vector<2x8x8x1152xbf16>
    %131 = vector.shape_cast %130 : vector<2x8x8x1152xbf16> to vector<128x1152xbf16>
    %c0_47 = arith.constant 0 : index
    %c0_48 = arith.constant 0 : index
    %132 = vector.load %arg11[%c0_47, %c0_48] : memref<1152x128xbf16, #tpu.memory_space<vmem>>, vector<1152x128xbf16>
    %cst_49 = arith.constant dense<0.000000e+00> : vector<128x128xf32>
    %133 = tpu.matmul %131, %132, %cst_49 {dimension_numbers = #tpu.dot_dimension_numbers<[1], [0], [0], [1], [0, 0, 1, 1], [], []>} : vector<128x1152xbf16>, vector<1152x128xbf16>, vector<128x128xf32> -> vector<128x128xf32>
    %134 = vector.shape_cast %133 : vector<128x128xf32> to vector<2x64x128xf32>
    %135 = vector.shape_cast %114 : vector<2x128xf32> to vector<2x1x128xf32>
    %136 = vector.broadcast %135 : vector<2x1x128xf32> to vector<2x64x128xf32>
    %137 = arith.mulf %134, %136 : vector<2x64x128xf32>
    %138 = vector.shape_cast %113 : vector<64x1xf32> to vector<1x64x1xf32>
    %139 = vector.broadcast %116 : f32 to vector<1x64x1xf32>
    %140 = arith.mulf %139, %138 : vector<1x64x1xf32>
    %141 = vector.broadcast %140 : vector<1x64x1xf32> to vector<2x64x128xf32>
    %142 = arith.addf %137, %141 : vector<2x64x128xf32>
    %143 = vector.shape_cast %115 : vector<1x128xf32> to vector<1x1x128xf32>
    %144 = vector.broadcast %143 : vector<1x1x128xf32> to vector<2x64x128xf32>
    %145 = arith.addf %142, %144 : vector<2x64x128xf32>
    %cst_50 = arith.constant 0.000000e+00 : f32
    %146 = vector.broadcast %cst_50 : f32 to vector<2x64x128xf32>
    %147 = arith.cmpf oge, %145, %146 : vector<2x64x128xf32>
    %cst_51 = arith.constant 2.000000e-01 : f32
    %148 = vector.broadcast %cst_51 : f32 to vector<2x64x128xf32>
    %149 = arith.mulf %148, %145 : vector<2x64x128xf32>
    %150 = arith.select %147, %145, %149 : vector<2x64x128xi1>, vector<2x64x128xf32>
    %cst_52 = arith.constant 1.41421354 : f32
    %151 = vector.broadcast %cst_52 : f32 to vector<2x64x128xf32>
    %152 = arith.mulf %150, %151 : vector<2x64x128xf32>
    %153 = vector.shape_cast %152 : vector<2x64x128xf32> to vector<2x8x8x128xf32>
    %c0_53 = arith.constant 0 : index
    %c0_54 = arith.constant 0 : index
    %154 = vector.load %arg13[%c0_53, %c0_54] : memref<2x128xf32, #tpu.memory_space<vmem>>, vector<2x128xf32>
    %155 = vector.shape_cast %154 : vector<2x128xf32> to vector<2x1x1x128xf32>
    %156 = vector.broadcast %155 : vector<2x1x1x128xf32> to vector<2x8x8x128xf32>
    %157 = arith.mulf %153, %156 : vector<2x8x8x128xf32>
    %158 = arith.truncf %157 : vector<2x8x8x128xf32> to vector<2x8x8x128xbf16>
    %159 = vector.shape_cast %158 : vector<2x8x8x128xbf16> to vector<128x128xbf16>
    %160 = vector.shape_cast %159 : vector<128x128xbf16> to vector<128x1x128xbf16>
    %161 = vector.shape_cast %159 : vector<128x128xbf16> to vector<128x1x128xbf16>
    %162 = tpu.concatenate %160, %161 in 1 : vector<128x1x128xbf16>, vector<128x1x128xbf16> -> vector<128x2x128xbf16>
    %163 = vector.shape_cast %162 : vector<128x2x128xbf16> to vector<16x16x128xbf16>
    %164 = vector.shape_cast %163 : vector<16x16x128xbf16> to vector<16x1x16x128xbf16>
    %165 = vector.shape_cast %163 : vector<16x16x128xbf16> to vector<16x1x16x128xbf16>
    %166 = tpu.concatenate %164, %165 in 1 : vector<16x1x16x128xbf16>, vector<16x1x16x128xbf16> -> vector<16x2x16x128xbf16>
    %167 = vector.shape_cast %166 : vector<16x2x16x128xbf16> to vector<512x128xbf16>
    %168 = vector.shape_cast %167 : vector<512x128xbf16> to vector<2x16x16x128xbf16>
    %c0_55 = arith.constant 0 : index
    %c0_56 = arith.constant 0 : index
    %c0_57 = arith.constant 0 : index
    %169 = vector.load %arg23[%c0_55, %c0_56, %c0_57] : memref<2x256x1xf32, #tpu.memory_space<vmem>>, vector<1x256x1xf32>
    %170 = vector.shape_cast %169 : vector<1x256x1xf32> to vector<256x1xf32>
    %c0_58 = arith.constant 0 : index
    %c0_59 = arith.constant 0 : index
    %171 = vector.load %arg14[%c0_58, %c0_59] : memref<2x128xf32, #tpu.memory_space<vmem>>, vector<2x128xf32>
    %c0_60 = arith.constant 0 : index
    %c0_61 = arith.constant 0 : index
    %172 = vector.load %arg16[%c0_60, %c0_61] : memref<1x128xf32, #tpu.memory_space<vmem>>, vector<1x128xf32>
    %c3 = arith.constant 3 : index
    %173 = memref.load %arg24[%c3] : memref<5xf32, #tpu.memory_space<smem>>
    %cst_62 = arith.constant 0.000000e+00 : bf16
    %174 = vector.broadcast %cst_62 : bf16 to vector<2x1x16x128xbf16>
    %175 = tpu.concatenate %174, %168, %174 in 1 : vector<2x1x16x128xbf16>, vector<2x16x16x128xbf16>, vector<2x1x16x128xbf16> -> vector<2x18x16x128xbf16>
    %cst_63 = arith.constant 0.000000e+00 : bf16
    %176 = vector.broadcast %cst_63 : bf16 to vector<2x18x1x128xbf16>
    %177 = tpu.concatenate %176, %175, %176 in 2 : vector<2x18x1x128xbf16>, vector<2x18x16x128xbf16>, vector<2x18x1x128xbf16> -> vector<2x18x18x128xbf16>
    %178 = vector.extract_strided_slice %177 {offsets = [0, 0, 0, 0], sizes = [2, 16, 16, 128], strides = [1, 1, 1, 1]} : vector<2x18x18x128xbf16> to vector<2x16x16x128xbf16>
    %179 = vector.extract_strided_slice %177 {offsets = [0, 0, 1, 0], sizes = [2, 16, 16, 128], strides = [1, 1, 1, 1]} : vector<2x18x18x128xbf16> to vector<2x16x16x128xbf16>
    %180 = vector.extract_strided_slice %177 {offsets = [0, 0, 2, 0], sizes = [2, 16, 16, 128], strides = [1, 1, 1, 1]} : vector<2x18x18x128xbf16> to vector<2x16x16x128xbf16>
    %181 = vector.extract_strided_slice %177 {offsets = [0, 1, 0, 0], sizes = [2, 16, 16, 128], strides = [1, 1, 1, 1]} : vector<2x18x18x128xbf16> to vector<2x16x16x128xbf16>
    %182 = vector.extract_strided_slice %177 {offsets = [0, 1, 1, 0], sizes = [2, 16, 16, 128], strides = [1, 1, 1, 1]} : vector<2x18x18x128xbf16> to vector<2x16x16x128xbf16>
    %183 = vector.extract_strided_slice %177 {offsets = [0, 1, 2, 0], sizes = [2, 16, 16, 128], strides = [1, 1, 1, 1]} : vector<2x18x18x128xbf16> to vector<2x16x16x128xbf16>
    %184 = vector.extract_strided_slice %177 {offsets = [0, 2, 0, 0], sizes = [2, 16, 16, 128], strides = [1, 1, 1, 1]} : vector<2x18x18x128xbf16> to vector<2x16x16x128xbf16>
    %185 = vector.extract_strided_slice %177 {offsets = [0, 2, 1, 0], sizes = [2, 16, 16, 128], strides = [1, 1, 1, 1]} : vector<2x18x18x128xbf16> to vector<2x16x16x128xbf16>
    %186 = vector.extract_strided_slice %177 {offsets = [0, 2, 2, 0], sizes = [2, 16, 16, 128], strides = [1, 1, 1, 1]} : vector<2x18x18x128xbf16> to vector<2x16x16x128xbf16>
    %187 = tpu.concatenate %178, %179, %180, %181, %182, %183, %184, %185, %186 in 3 : vector<2x16x16x128xbf16>, vector<2x16x16x128xbf16>, vector<2x16x16x128xbf16>, vector<2x16x16x128xbf16>, vector<2x16x16x128xbf16>, vector<2x16x16x128xbf16>, vector<2x16x16x128xbf16>, vector<2x16x16x128xbf16>, vector<2x16x16x128xbf16> -> vector<2x16x16x1152xbf16>
    %188 = vector.shape_cast %187 : vector<2x16x16x1152xbf16> to vector<512x1152xbf16>
    %c0_64 = arith.constant 0 : index
    %c0_65 = arith.constant 0 : index
    %189 = vector.load %arg15[%c0_64, %c0_65] : memref<1152x128xbf16, #tpu.memory_space<vmem>>, vector<1152x128xbf16>
    %cst_66 = arith.constant dense<0.000000e+00> : vector<512x128xf32>
    %190 = tpu.matmul %188, %189, %cst_66 {dimension_numbers = #tpu.dot_dimension_numbers<[1], [0], [0], [1], [0, 0, 1, 1], [], []>} : vector<512x1152xbf16>, vector<1152x128xbf16>, vector<512x128xf32> -> vector<512x128xf32>
    %191 = vector.shape_cast %190 : vector<512x128xf32> to vector<2x256x128xf32>
    %192 = vector.shape_cast %171 : vector<2x128xf32> to vector<2x1x128xf32>
    %193 = vector.broadcast %192 : vector<2x1x128xf32> to vector<2x256x128xf32>
    %194 = arith.mulf %191, %193 : vector<2x256x128xf32>
    %195 = vector.shape_cast %170 : vector<256x1xf32> to vector<1x256x1xf32>
    %196 = vector.broadcast %173 : f32 to vector<1x256x1xf32>
    %197 = arith.mulf %196, %195 : vector<1x256x1xf32>
    %198 = vector.broadcast %197 : vector<1x256x1xf32> to vector<2x256x128xf32>
    %199 = arith.addf %194, %198 : vector<2x256x128xf32>
    %200 = vector.shape_cast %172 : vector<1x128xf32> to vector<1x1x128xf32>
    %201 = vector.broadcast %200 : vector<1x1x128xf32> to vector<2x256x128xf32>
    %202 = arith.addf %199, %201 : vector<2x256x128xf32>
    %cst_67 = arith.constant 0.000000e+00 : f32
    %203 = vector.broadcast %cst_67 : f32 to vector<2x256x128xf32>
    %204 = arith.cmpf oge, %202, %203 : vector<2x256x128xf32>
    %cst_68 = arith.constant 2.000000e-01 : f32
    %205 = vector.broadcast %cst_68 : f32 to vector<2x256x128xf32>
    %206 = arith.mulf %205, %202 : vector<2x256x128xf32>
    %207 = arith.select %204, %202, %206 : vector<2x256x128xi1>, vector<2x256x128xf32>
    %cst_69 = arith.constant 1.41421354 : f32
    %208 = vector.broadcast %cst_69 : f32 to vector<2x256x128xf32>
    %209 = arith.mulf %207, %208 : vector<2x256x128xf32>
    %210 = vector.shape_cast %209 : vector<2x256x128xf32> to vector<2x16x16x128xf32>
    %c0_70 = arith.constant 0 : index
    %c0_71 = arith.constant 0 : index
    %211 = vector.load %arg17[%c0_70, %c0_71] : memref<2x128xf32, #tpu.memory_space<vmem>>, vector<2x128xf32>
    %212 = vector.shape_cast %211 : vector<2x128xf32> to vector<2x1x1x128xf32>
    %213 = vector.broadcast %212 : vector<2x1x1x128xf32> to vector<2x16x16x128xf32>
    %214 = arith.mulf %210, %213 : vector<2x16x16x128xf32>
    %215 = arith.truncf %214 : vector<2x16x16x128xf32> to vector<2x16x16x128xbf16>
    %c1_72 = arith.constant 1 : index
    %c0_73 = arith.constant 0 : index
    %c0_74 = arith.constant 0 : index
    %216 = vector.load %arg23[%c1_72, %c0_73, %c0_74] : memref<2x256x1xf32, #tpu.memory_space<vmem>>, vector<1x256x1xf32>
    %217 = vector.shape_cast %216 : vector<1x256x1xf32> to vector<256x1xf32>
    %c0_75 = arith.constant 0 : index
    %c0_76 = arith.constant 0 : index
    %218 = vector.load %arg18[%c0_75, %c0_76] : memref<2x128xf32, #tpu.memory_space<vmem>>, vector<2x128xf32>
    %c0_77 = arith.constant 0 : index
    %c0_78 = arith.constant 0 : index
    %219 = vector.load %arg20[%c0_77, %c0_78] : memref<1x128xf32, #tpu.memory_space<vmem>>, vector<1x128xf32>
    %c4 = arith.constant 4 : index
    %220 = memref.load %arg24[%c4] : memref<5xf32, #tpu.memory_space<smem>>
    %cst_79 = arith.constant 0.000000e+00 : bf16
    %221 = vector.broadcast %cst_79 : bf16 to vector<2x1x16x128xbf16>
    %222 = tpu.concatenate %221, %215, %221 in 1 : vector<2x1x16x128xbf16>, vector<2x16x16x128xbf16>, vector<2x1x16x128xbf16> -> vector<2x18x16x128xbf16>
    %cst_80 = arith.constant 0.000000e+00 : bf16
    %223 = vector.broadcast %cst_80 : bf16 to vector<2x18x1x128xbf16>
    %224 = tpu.concatenate %223, %222, %223 in 2 : vector<2x18x1x128xbf16>, vector<2x18x16x128xbf16>, vector<2x18x1x128xbf16> -> vector<2x18x18x128xbf16>
    %225 = vector.extract_strided_slice %224 {offsets = [0, 0, 0, 0], sizes = [2, 16, 16, 128], strides = [1, 1, 1, 1]} : vector<2x18x18x128xbf16> to vector<2x16x16x128xbf16>
    %226 = vector.extract_strided_slice %224 {offsets = [0, 0, 1, 0], sizes = [2, 16, 16, 128], strides = [1, 1, 1, 1]} : vector<2x18x18x128xbf16> to vector<2x16x16x128xbf16>
    %227 = vector.extract_strided_slice %224 {offsets = [0, 0, 2, 0], sizes = [2, 16, 16, 128], strides = [1, 1, 1, 1]} : vector<2x18x18x128xbf16> to vector<2x16x16x128xbf16>
    %228 = vector.extract_strided_slice %224 {offsets = [0, 1, 0, 0], sizes = [2, 16, 16, 128], strides = [1, 1, 1, 1]} : vector<2x18x18x128xbf16> to vector<2x16x16x128xbf16>
    %229 = vector.extract_strided_slice %224 {offsets = [0, 1, 1, 0], sizes = [2, 16, 16, 128], strides = [1, 1, 1, 1]} : vector<2x18x18x128xbf16> to vector<2x16x16x128xbf16>
    %230 = vector.extract_strided_slice %224 {offsets = [0, 1, 2, 0], sizes = [2, 16, 16, 128], strides = [1, 1, 1, 1]} : vector<2x18x18x128xbf16> to vector<2x16x16x128xbf16>
    %231 = vector.extract_strided_slice %224 {offsets = [0, 2, 0, 0], sizes = [2, 16, 16, 128], strides = [1, 1, 1, 1]} : vector<2x18x18x128xbf16> to vector<2x16x16x128xbf16>
    %232 = vector.extract_strided_slice %224 {offsets = [0, 2, 1, 0], sizes = [2, 16, 16, 128], strides = [1, 1, 1, 1]} : vector<2x18x18x128xbf16> to vector<2x16x16x128xbf16>
    %233 = vector.extract_strided_slice %224 {offsets = [0, 2, 2, 0], sizes = [2, 16, 16, 128], strides = [1, 1, 1, 1]} : vector<2x18x18x128xbf16> to vector<2x16x16x128xbf16>
    %234 = tpu.concatenate %225, %226, %227, %228, %229, %230, %231, %232, %233 in 3 : vector<2x16x16x128xbf16>, vector<2x16x16x128xbf16>, vector<2x16x16x128xbf16>, vector<2x16x16x128xbf16>, vector<2x16x16x128xbf16>, vector<2x16x16x128xbf16>, vector<2x16x16x128xbf16>, vector<2x16x16x128xbf16>, vector<2x16x16x128xbf16> -> vector<2x16x16x1152xbf16>
    %235 = vector.shape_cast %234 : vector<2x16x16x1152xbf16> to vector<512x1152xbf16>
    %c0_81 = arith.constant 0 : index
    %c0_82 = arith.constant 0 : index
    %236 = vector.load %arg19[%c0_81, %c0_82] : memref<1152x128xbf16, #tpu.memory_space<vmem>>, vector<1152x128xbf16>
    %cst_83 = arith.constant dense<0.000000e+00> : vector<512x128xf32>
    %237 = tpu.matmul %235, %236, %cst_83 {dimension_numbers = #tpu.dot_dimension_numbers<[1], [0], [0], [1], [0, 0, 1, 1], [], []>} : vector<512x1152xbf16>, vector<1152x128xbf16>, vector<512x128xf32> -> vector<512x128xf32>
    %238 = vector.shape_cast %237 : vector<512x128xf32> to vector<2x256x128xf32>
    %239 = vector.shape_cast %218 : vector<2x128xf32> to vector<2x1x128xf32>
    %240 = vector.broadcast %239 : vector<2x1x128xf32> to vector<2x256x128xf32>
    %241 = arith.mulf %238, %240 : vector<2x256x128xf32>
    %242 = vector.shape_cast %217 : vector<256x1xf32> to vector<1x256x1xf32>
    %243 = vector.broadcast %220 : f32 to vector<1x256x1xf32>
    %244 = arith.mulf %243, %242 : vector<1x256x1xf32>
    %245 = vector.broadcast %244 : vector<1x256x1xf32> to vector<2x256x128xf32>
    %246 = arith.addf %241, %245 : vector<2x256x128xf32>
    %247 = vector.shape_cast %219 : vector<1x128xf32> to vector<1x1x128xf32>
    %248 = vector.broadcast %247 : vector<1x1x128xf32> to vector<2x256x128xf32>
    %249 = arith.addf %246, %248 : vector<2x256x128xf32>
    %cst_84 = arith.constant 0.000000e+00 : f32
    %250 = vector.broadcast %cst_84 : f32 to vector<2x256x128xf32>
    %251 = arith.cmpf oge, %249, %250 : vector<2x256x128xf32>
    %cst_85 = arith.constant 2.000000e-01 : f32
    %252 = vector.broadcast %cst_85 : f32 to vector<2x256x128xf32>
    %253 = arith.mulf %252, %249 : vector<2x256x128xf32>
    %254 = arith.select %251, %249, %253 : vector<2x256x128xi1>, vector<2x256x128xf32>
    %cst_86 = arith.constant 1.41421354 : f32
    %255 = vector.broadcast %cst_86 : f32 to vector<2x256x128xf32>
    %256 = arith.mulf %254, %255 : vector<2x256x128xf32>
    %c0_87 = arith.constant 0 : index
    %c0_88 = arith.constant 0 : index
    %c0_89 = arith.constant 0 : index
    %257 = vector.load %arg25[%c0_87, %c0_88, %c0_89] : memref<2x256x128xf32, #tpu.memory_space<vmem>>, vector<2x256x128xf32>
    tpu.vector_store %arg25[%c0_87, %c0_88, %c0_89], %256 {strides = array<i32>} : memref<2x256x128xf32, #tpu.memory_space<vmem>>, vector<2x256x128xf32>,
    return
  }
}

</mosaic_0001>

<llo_original>
// kernel: style_encoder_forward.3
$region0: #{style_encoder_forward.3}
  #allocation0 [shape = 'u32[]', space=smem, size = 0x4, offset = 0x4, fixed_abs, tag = 'smem constant byte address 0x4 - core index']
  #allocation1 [shape = 'u32[72,128]{1,0:T(1,128)}', space=vmem, size = 0x9000, scoped, tag = 'internal scratch']
  %s0 = inlined_call_operand.hbm [shape: f32[4,4,128], index: 0, kind: input, shape index: {}]
  %s1 = inlined_call_operand.vmem [shape: f32[2,128], index: 1, kind: input, shape index: {}]
  %s2 = inlined_call_operand.vmem [shape: f32[2,128], index: 2, kind: input, shape index: {}]
  %s3 = inlined_call_operand.vmem [shape: bf16[1152,128], index: 3, kind: input, shape index: {}]
  %s4 = inlined_call_operand.hbm [shape: f32[1,128], index: 4, kind: input, shape index: {}]
  %s5 = inlined_call_operand.vmem [shape: f32[2,128], index: 5, kind: input, shape index: {}]
  %s6 = inlined_call_operand.vmem [shape: f32[2,128], index: 6, kind: input, shape index: {}]
  %s7 = inlined_call_operand.vmem [shape: bf16[1152,128], index: 7, kind: input, shape index: {}]
  %s8 = inlined_call_operand.hbm [shape: f32[1,128], index: 8, kind: input, shape index: {}]
  %s9 = inlined_call_operand.vmem [shape: f32[2,128], index: 9, kind: input, shape index: {}]
  %s10 = inlined_call_operand.vmem [shape: f32[2,128], index: 10, kind: input, shape index: {}]
  %s11 = inlined_call_operand.vmem [shape: bf16[1152,128], index: 11, kind: input, shape index: {}]
  %s12 = inlined_call_operand.hbm [shape: f32[1,128], index: 12, kind: input, shape index: {}]
  %s13 = inlined_call_operand.vmem [shape: f32[2,128], index: 13, kind: input, shape index: {}]
  %s14 = inlined_call_operand.vmem [shape: f32[2,128], index: 14, kind: input, shape index: {}]
  %s15 = inlined_call_operand.hbm [shape: bf16[1152,128], index: 15, kind: input, shape index: {}]
  %s16 = inlined_call_operand.hbm [shape: f32[1,128], index: 16, kind: input, shape index: {}]
  %s17 = inlined_call_operand.vmem [shape: f32[2,128], index: 17, kind: input, shape index: {}]
  %s18 = inlined_call_operand.vmem [shape: f32[2,128], index: 18, kind: input, shape index: {}]
  %s19 = inlined_call_operand.hbm [shape: bf16[1152,128], index: 19, kind: input, shape index: {}]
  %s20 = inlined_call_operand.hbm [shape: f32[1,128], index: 20, kind: input, shape index: {}]
  %s21 = inlined_call_operand.vmem [shape: f32[1,16,1], index: 21, kind: input, shape index: {}]
  %s22 = inlined_call_operand.vmem [shape: f32[2,64,1], index: 22, kind: input, shape index: {}]
  %s23 = inlined_call_operand.vmem [shape: f32[2,256,1], index: 23, kind: input, shape index: {}]
  %s24 = inlined_call_operand.vmem [shape: f32[5], index: 24, kind: input, shape index: {}]
  %s25 = inlined_call_operand.hbm [shape: f32[2,256,128], index: 25, kind: output, shape index: {}]
  %s26 = sld [smem:[#allocation0]]
  $region146: #{style_encoder_forward.3} parent=0
    _
  %s28 = ssub.s32 1, %s26
  %s29 = scalar_select 0, %s28, %s26
  $region1: #{style_encoder_forward.3} parent=0
    #allocation2 [shape = 'u8[8192]{0}', space=vmem, size = 0x2000, scoped, tag = 'input window, operand 0, single buffered']
    #allocation3 [shape = 's32[1]{0}', space=sflag, size = 0x4, scoped, tag = 'scoped memory for style_encoder_forward.3']
    #allocation4 [shape = 's32[1]{0}', space=sflag, size = 0x4, scoped, tag = 'scoped memory for style_encoder_forward.3']
    #allocation5 [shape = 's32[1]{0}', space=sflag, size = 0x4, scoped, tag = 'scoped memory for style_encoder_forward.3']
    #allocation6 [shape = 'u8[512]{0}', space=vmem, size = 0x400, scoped, tag = 'input window, operand 4, single buffered']
    #allocation7 [shape = 's32[1]{0}', space=sflag, size = 0x4, scoped, tag = 'scoped memory for style_encoder_forward.3']
    #allocation8 [shape = 'u8[512]{0}', space=vmem, size = 0x400, scoped, tag = 'input window, operand 8, single buffered']
    #allocation9 [shape = 'u8[512]{0}', space=vmem, size = 0x400, scoped, tag = 'input window, operand 12, single buffered']
    #allocation10 [shape = 's32[1]{0}', space=sflag, size = 0x4, scoped, tag = 'scoped memory for style_encoder_forward.3']
    #allocation11 [shape = 'u8[294912]{0}', space=vmem, size = 0x48000, scoped, tag = 'input window, operand 15, single buffered']
    #allocation12 [shape = 'u8[512]{0}', space=vmem, size = 0x400, scoped, tag = 'input window, operand 16, single buffered']
    #allocation13 [shape = 's32[1]{0}', space=sflag, size = 0x4, scoped, tag = 'scoped memory for style_encoder_forward.3']
    #allocation14 [shape = 'u8[294912]{0}', space=vmem, size = 0x48000, scoped, tag = 'input window, operand 19, single buffered']
    #allocation15 [shape = 'u8[512]{0}', space=vmem, size = 0x400, scoped, tag = 'input window, operand 20, single buffered']
    #allocation16 [shape = 's32[1]{0}', space=sflag, size = 0x4, scoped, tag = 'scoped memory for style_encoder_forward.3']
    #allocation17 [shape = 'u8[512]{0}', space=smem, size = 0x200, scoped, tag = 'input window, operand 24, single buffered']
    #allocation18 [shape = 'u8[262144]{0}', space=vmem, size = 0x40000, scoped, tag = 'output window, operand 0, single buffered']
    %30 = vsyncpa [#allocation3], 0
    %31 = vsyncpa [#allocation7], 0
    %32 = vsyncpa [#allocation10], 0
    %33 = vsyncpa [#allocation13], 0
    %34 = vsyncpa [#allocation16], 0
    %35 = vsyncpa [#allocation5], 0
    %36 = vsyncpa [#allocation4], 0
    // Predicated region
    $region2: #{style_encoder_forward.3} parent=1 // pred_check
      _
    $region3: #{style_encoder_forward.3} parent=1 // pred_check_branch
      %38 = sbr.rel (0) target = $region5
    $region4: #{style_encoder_forward.3} parent=1 // pred_region
      %40 = vsyncadd [#allocation3], 0
      %s41 = sshll.u32 %s0, 4
      %s42 = int_to_ptr.hbm [resolvable:$true] %s41
      %s43 = sshll.u32 [#allocation2], 4
      %s44 = int_to_ptr.vmem [resolvable:$true] %s43
      %49 = dma.hbm_to_vmem [thread:$0]  %s42, 256, %s44, [#allocation3], 64, 64, 4
    $region5: #{style_encoder_forward.3} parent=1 // pred_fallthru
      _
    // Predicated region
    $region6: #{style_encoder_forward.3} parent=1 // pred_check
      _
    $region7: #{style_encoder_forward.3} parent=1 // pred_check_branch
      %51 = sbr.rel (0) target = $region9
    $region8: #{style_encoder_forward.3} parent=1 // pred_region
      _
    $region9: #{style_encoder_forward.3} parent=1 // pred_fallthru
      _
    // Predicated region
    $region10: #{style_encoder_forward.3} parent=1 // pred_check
      _
    $region11: #{style_encoder_forward.3} parent=1 // pred_check_branch
      %53 = sbr.rel (0) target = $region13
    $region12: #{style_encoder_forward.3} parent=1 // pred_region
      _
    $region13: #{style_encoder_forward.3} parent=1 // pred_fallthru
      _
    // Predicated region
    $region14: #{style_encoder_forward.3} parent=1 // pred_check
      _
    $region15: #{style_encoder_forward.3} parent=1 // pred_check_branch
      %55 = sbr.rel (0) target = $region17
    $region16: #{style_encoder_forward.3} parent=1 // pred_region
      _
    $region17: #{style_encoder_forward.3} parent=1 // pred_fallthru
      _
    // Predicated region
    $region18: #{style_encoder_forward.3} parent=1 // pred_check
      _
    $region19: #{style_encoder_forward.3} parent=1 // pred_check_branch
      %57 = sbr.rel (0) target = $region21
    $region20: #{style_encoder_forward.3} parent=1 // pred_region
      %59 = vsyncadd [#allocation7], 0
      %s61 = sshll.u32 %s4, 4
      %s62 = int_to_ptr.hbm [resolvable:$true] %s61
      %s63 = sshll.u32 [#allocation6], 4
      %s64 = int_to_ptr.vmem [resolvable:$true] %s63
      %66 = dma.hbm_to_vmem [thread:$0]  %s62, 16, %s64, [#allocation7]
    $region21: #{style_encoder_forward.3} parent=1 // pred_fallthru
      _
    // Predicated region
    $region22: #{style_encoder_forward.3} parent=1 // pred_check
      _
    $region23: #{style_encoder_forward.3} parent=1 // pred_check_branch
      %68 = sbr.rel (0) target = $region25
    $region24: #{style_encoder_forward.3} parent=1 // pred_region
      _
    $region25: #{style_encoder_forward.3} parent=1 // pred_fallthru
      _
    // Predicated region
    $region26: #{style_encoder_forward.3} parent=1 // pred_check
      _
    $region27: #{style_encoder_forward.3} parent=1 // pred_check_branch
      %70 = sbr.rel (0) target = $region29
    $region28: #{style_encoder_forward.3} parent=1 // pred_region
      _
    $region29: #{style_encoder_forward.3} parent=1 // pred_fallthru
      _
    // Predicated region
    $region30: #{style_encoder_forward.3} parent=1 // pred_check
      _
    $region31: #{style_encoder_forward.3} parent=1 // pred_check_branch
      %72 = sbr.rel (0) target = $region33
    $region32: #{style_encoder_forward.3} parent=1 // pred_region
      _
    $region33: #{style_encoder_forward.3} parent=1 // pred_fallthru
      _
    // Predicated region
    $region34: #{style_encoder_forward.3} parent=1 // pred_check
      _
    $region35: #{style_encoder_forward.3} parent=1 // pred_check_branch
      %74 = sbr.rel (0) target = $region37
    $region36: #{style_encoder_forward.3} parent=1 // pred_region
      %76 = vsyncadd [#allocation7], 0
      %s78 = sshll.u32 %s8, 4
      %s79 = int_to_ptr.hbm [resolvable:$true] %s78
      %s80 = sshll.u32 [#allocation8], 4
      %s81 = int_to_ptr.vmem [resolvable:$true] %s80
      %83 = dma.hbm_to_vmem [thread:$0]  %s79, 16, %s81, [#allocation7]
    $region37: #{style_encoder_forward.3} parent=1 // pred_fallthru
      _
    // Predicated region
    $region38: #{style_encoder_forward.3} parent=1 // pred_check
      _
    $region39: #{style_encoder_forward.3} parent=1 // pred_check_branch
      %85 = sbr.rel (0) target = $region41
    $region40: #{style_encoder_forward.3} parent=1 // pred_region
      _
    $region41: #{style_encoder_forward.3} parent=1 // pred_fallthru
      _
    // Predicated region
    $region42: #{style_encoder_forward.3} parent=1 // pred_check
      _
    $region43: #{style_encoder_forward.3} parent=1 // pred_check_branch
      %87 = sbr.rel (0) target = $region45
    $region44: #{style_encoder_forward.3} parent=1 // pred_region
      _
    $region45: #{style_encoder_forward.3} parent=1 // pred_fallthru
      _
    // Predicated region
    $region46: #{style_encoder_forward.3} parent=1 // pred_check
      _
    $region47: #{style_encoder_forward.3} parent=1 // pred_check_branch
      %89 = sbr.rel (0) target = $region49
    $region48: #{style_encoder_forward.3} parent=1 // pred_region
      _
    $region49: #{style_encoder_forward.3} parent=1 // pred_fallthru
      _
    // Predicated region
    $region50: #{style_encoder_forward.3} parent=1 // pred_check
      _
    $region51: #{style_encoder_forward.3} parent=1 // pred_check_branch
      %91 = sbr.rel (0) target = $region53
    $region52: #{style_encoder_forward.3} parent=1 // pred_region
      %93 = vsyncadd [#allocation10], 0
      %s95 = sshll.u32 %s12, 4
      %s96 = int_to_ptr.hbm [resolvable:$true] %s95
      %s97 = sshll.u32 [#allocation9], 4
      %s98 = int_to_ptr.vmem [resolvable:$true] %s97
      %100 = dma.hbm_to_vmem [thread:$0]  %s96, 16, %s98, [#allocation10]
    $region53: #{style_encoder_forward.3} parent=1 // pred_fallthru
      _
    // Predicated region
    $region54: #{style_encoder_forward.3} parent=1 // pred_check
      _
    $region55: #{style_encoder_forward.3} parent=1 // pred_check_branch
      %102 = sbr.rel (0) target = $region57
    $region56: #{style_encoder_forward.3} parent=1 // pred_region
      _
    $region57: #{style_encoder_forward.3} parent=1 // pred_fallthru
      _
    // Predicated region
    $region58: #{style_encoder_forward.3} parent=1 // pred_check
      _
    $region59: #{style_encoder_forward.3} parent=1 // pred_check_branch
      %104 = sbr.rel (0) target = $region61
    $region60: #{style_encoder_forward.3} parent=1 // pred_region
      _
    $region61: #{style_encoder_forward.3} parent=1 // pred_fallthru
      _
    // Predicated region
    $region62: #{style_encoder_forward.3} parent=1 // pred_check
      _
    $region63: #{style_encoder_forward.3} parent=1 // pred_check_branch
      %106 = sbr.rel (0) target = $region65
    $region64: #{style_encoder_forward.3} parent=1 // pred_region
      %108 = vsyncadd [#allocation10], 0
      %s109 = sshll.u32 %s15, 4
      %s110 = int_to_ptr.hbm [resolvable:$true] %s109
      %s111 = sshll.u32 [#allocation11], 4
      %s112 = int_to_ptr.vmem [resolvable:$true] %s111
      %117 = dma.hbm_to_vmem [thread:$0]  %s110, 9216, %s112, [#allocation10], 64, 64, 4
    $region65: #{style_encoder_forward.3} parent=1 // pred_fallthru
      _
    // Predicated region
    $region66: #{style_encoder_forward.3} parent=1 // pred_check
      _
    $region67: #{style_encoder_forward.3} parent=1 // pred_check_branch
      %119 = sbr.rel (0) target = $region69
    $region68: #{style_encoder_forward.3} parent=1 // pred_region
      %121 = vsyncadd [#allocation13], 0
      %s123 = sshll.u32 %s16, 4
      %s124 = int_to_ptr.hbm [resolvable:$true] %s123
      %s125 = sshll.u32 [#allocation12], 4
      %s126 = int_to_ptr.vmem [resolvable:$true] %s125
      %128 = dma.hbm_to_vmem [thread:$0]  %s124, 16, %s126, [#allocation13]
    $region69: #{style_encoder_forward.3} parent=1 // pred_fallthru
      _
    // Predicated region
    $region70: #{style_encoder_forward.3} parent=1 // pred_check
      _
    $region71: #{style_encoder_forward.3} parent=1 // pred_check_branch
      %130 = sbr.rel (0) target = $region73
    $region72: #{style_encoder_forward.3} parent=1 // pred_region
      _
    $region73: #{style_encoder_forward.3} parent=1 // pred_fallthru
      _
    // Predicated region
    $region74: #{style_encoder_forward.3} parent=1 // pred_check
      _
    $region75: #{style_encoder_forward.3} parent=1 // pred_check_branch
      %132 = sbr.rel (0) target = $region77
    $region76: #{style_encoder_forward.3} parent=1 // pred_region
      _
    $region77: #{style_encoder_forward.3} parent=1 // pred_fallthru
      _
    // Predicated region
    $region78: #{style_encoder_forward.3} parent=1 // pred_check
      _
    $region79: #{style_encoder_forward.3} parent=1 // pred_check_branch
      %134 = sbr.rel (0) target = $region81
    $region80: #{style_encoder_forward.3} parent=1 // pred_region
      %136 = vsyncadd [#allocation13], 0
      %s137 = sshll.u32 %s19, 4
      %s138 = int_to_ptr.hbm [resolvable:$true] %s137
      %s139 = sshll.u32 [#allocation14], 4
      %s140 = int_to_ptr.vmem [resolvable:$true] %s139
      %145 = dma.hbm_to_vmem [thread:$0]  %s138, 9216, %s140, [#allocation13], 64, 64, 4
    $region81: #{style_encoder_forward.3} parent=1 // pred_fallthru
      _
    // Predicated region
    $region82: #{style_encoder_forward.3} parent=1 // pred_check
      _
    $region83: #{style_encoder_forward.3} parent=1 // pred_check_branch
      %147 = sbr.rel (0) target = $region85
    $region84: #{style_encoder_forward.3} parent=1 // pred_region
      %149 = vsyncadd [#allocation16], 0
      %s151 = sshll.u32 %s20, 4
      %s152 = int_to_ptr.hbm [resolvable:$true] %s151
      %s153 = sshll.u32 [#allocation15], 4
      %s154 = int_to_ptr.vmem [resolvable:$true] %s153
      %156 = dma.hbm_to_vmem [thread:$0]  %s152, 16, %s154, [#allocation16]
    $region85: #{style_encoder_forward.3} parent=1 // pred_fallthru
      _
    // Predicated region
    $region86: #{style_encoder_forward.3} parent=1 // pred_check
      _
    $region87: #{style_encoder_forward.3} parent=1 // pred_check_branch
      %158 = sbr.rel (0) target = $region89
    $region88: #{style_encoder_forward.3} parent=1 // pred_region
      _
    $region89: #{style_encoder_forward.3} parent=1 // pred_fallthru
      _
    // Predicated region
    $region90: #{style_encoder_forward.3} parent=1 // pred_check
      _
    $region91: #{style_encoder_forward.3} parent=1 // pred_check_branch
      %160 = sbr.rel (0) target = $region93
    $region92: #{style_encoder_forward.3} parent=1 // pred_region
      _
    $region93: #{style_encoder_forward.3} parent=1 // pred_fallthru
      _
    // Predicated region
    $region94: #{style_encoder_forward.3} parent=1 // pred_check
      _
    $region95: #{style_encoder_forward.3} parent=1 // pred_check_branch
      %162 = sbr.rel (0) target = $region97
    $region96: #{style_encoder_forward.3} parent=1 // pred_region
      _
    $region97: #{style_encoder_forward.3} parent=1 // pred_fallthru
      _
    // Predicated region
    $region98: #{style_encoder_forward.3} parent=1 // pred_check
      _
    $region99: #{style_encoder_forward.3} parent=1 // pred_check_branch
      %164 = sbr.rel (0) target = $region101
    $region100: #{style_encoder_forward.3} parent=1 // pred_region
      %166 = vsyncadd [#allocation5], 0
      %s168 = sshll.u32 %s24, 4
      %s169 = int_to_ptr.vmem [resolvable:$true] %s168
      %171 = dma.vmem_to_smem %s169, 16, [#allocation17], [#allocation5]
    $region101: #{style_encoder_forward.3} parent=1 // pred_fallthru
      _
    // Predicated region
    $region102: #{style_encoder_forward.3} parent=1 // pred_check
      _
    $region103: #{style_encoder_forward.3} parent=1 // pred_check_branch
      %173 = sbr.rel (0) target = $region105
    $region104: #{style_encoder_forward.3} parent=1 // pred_region
      %175 = dma.done [#allocation3], 256
    $region105: #{style_encoder_forward.3} parent=1 // pred_fallthru
      _
    // Predicated region
    $region106: #{style_encoder_forward.3} parent=1 // pred_check
      _
    $region107: #{style_encoder_forward.3} parent=1 // pred_check_branch
      %177 = sbr.rel (0) target = $region109
    $region108: #{style_encoder_forward.3} parent=1 // pred_region
      %179 = dma.done [#allocation7], 16
    $region109: #{style_encoder_forward.3} parent=1 // pred_fallthru
      _
    // Predicated region
    $region110: #{style_encoder_forward.3} parent=1 // pred_check
      _
    $region111: #{style_encoder_forward.3} parent=1 // pred_check_branch
      %181 = sbr.rel (0) target = $region113
    $region112: #{style_encoder_forward.3} parent=1 // pred_region
      %183 = dma.done [#allocation7], 16
    $region113: #{style_encoder_forward.3} parent=1 // pred_fallthru
      _
    // Predicated region
    $region114: #{style_encoder_forward.3} parent=1 // pred_check
      _
    $region115: #{style_encoder_forward.3} parent=1 // pred_check_branch
      %185 = sbr.rel (0) target = $region117
    $region116: #{style_encoder_forward.3} parent=1 // pred_region
      %187 = dma.done [#allocation10], 16
    $region117: #{style_encoder_forward.3} parent=1 // pred_fallthru
      _
    // Predicated region
    $region118: #{style_encoder_forward.3} parent=1 // pred_check
      _
    $region119: #{style_encoder_forward.3} parent=1 // pred_check_branch
      %189 = sbr.rel (0) target = $region121
    $region120: #{style_encoder_forward.3} parent=1 // pred_region
      %191 = dma.done [#allocation10], 9216
    $region121: #{style_encoder_forward.3} parent=1 // pred_fallthru
      _
    // Predicated region
    $region122: #{style_encoder_forward.3} parent=1 // pred_check
      _
    $region123: #{style_encoder_forward.3} parent=1 // pred_check_branch
      %193 = sbr.rel (0) target = $region125
    $region124: #{style_encoder_forward.3} parent=1 // pred_region
      %195 = dma.done [#allocation13], 16
    $region125: #{style_encoder_forward.3} parent=1 // pred_fallthru
      _
    // Predicated region
    $region126: #{style_encoder_forward.3} parent=1 // pred_check
      _
    $region127: #{style_encoder_forward.3} parent=1 // pred_check_branch
      %197 = sbr.rel (0) target = $region129
    $region128: #{style_encoder_forward.3} parent=1 // pred_region
      %199 = dma.done [#allocation13], 9216
    $region129: #{style_encoder_forward.3} parent=1 // pred_fallthru
      _
    // Predicated region
    $region130: #{style_encoder_forward.3} parent=1 // pred_check
      _
    $region131: #{style_encoder_forward.3} parent=1 // pred_check_branch
      %201 = sbr.rel (0) target = $region133
    $region132: #{style_encoder_forward.3} parent=1 // pred_region
      %203 = dma.done [#allocation16], 16
    $region133: #{style_encoder_forward.3} parent=1 // pred_fallthru
      _
    // Predicated region
    $region134: #{style_encoder_forward.3} parent=1 // pred_check
      _
    $region135: #{style_encoder_forward.3} parent=1 // pred_check_branch
      %205 = sbr.rel (0) target = $region137
    $region136: #{style_encoder_forward.3} parent=1 // pred_region
      %207 = dma.done [#allocation5], 16
    $region137: #{style_encoder_forward.3} parent=1 // pred_fallthru
      _
    %208 = sfence
    %v210 = vld [vmem:[#allocation2] sm:$0xf]
    %v211 = vld [vmem:[#allocation2 + $0x4] sm:$0xf]
    %v212 = vld [vmem:[#allocation2 + $0x8] sm:$0xf]
    %v213 = vld [vmem:[#allocation2 + $0xc] sm:$0xf]
    %v214 = vld [vmem:[%s1] sm:$0x3]
    %v216 = vrot.slane %v214, 1
    %v217 = vperm.slane %v214, 0
    %v218 = vperm.slane %v216, 0
    %v221 = vmul.f32 %v210, %v217
    %v222 = vmul.f32 %v211, %v217
    %v223 = vmul.f32 %v212, %v217
    %v224 = vmul.f32 %v213, %v217
    %v225 = vmul.f32 %v210, %v218
    %v226 = vmul.f32 %v211, %v218
    %v227 = vmul.f32 %v212, %v218
    %v228 = vmul.f32 %v213, %v218
    %v229 = vpack.c.bf16 %v221, %v221
    %v230 = vpack.c.bf16 %v222, %v222
    %v231 = vpack.c.bf16 %v223, %v223
    %v232 = vpack.c.bf16 %v224, %v224
    %v233 = vpack.c.bf16 %v225, %v225
    %v234 = vpack.c.bf16 %v226, %v226
    %v235 = vpack.c.bf16 %v227, %v227
    %v236 = vpack.c.bf16 %v228, %v228
    %v237 = vld [vmem:[%s21] sm:$0xff]
    %v238 = vld [vmem:[%s21 + $0x8] sm:$0xff]
    %v239 = vld [vmem:[%s2] sm:$0x3]
    %v240 = vld [vmem:[#allocation6] sm:$0x1]
    %s241 = sld [smem:[#allocation17]]
    %v243 = vshrl.u32 0, 16
    %v245 = vrot.slane %v243, 7
    %v246 = vshll.u32 0, 16
    %v248 = vor.u32 %v245, %v246
    %v250 = vshrl.u32 %v229, 16
    %v252 = vrot.slane %v250, 7
    %v253 = vshll.u32 %v229, 16
    %v255 = vor.u32 %v252, %v253
    %v257 = vshrl.u32 %v230, 16
    %v259 = vrot.slane %v257, 7
    %v260 = vshll.u32 %v230, 16
    %v262 = vor.u32 %v259, %v260
    %v264 = vshrl.u32 %v231, 16
    %v266 = vrot.slane %v264, 7
    %v267 = vshll.u32 %v231, 16
    %v269 = vor.u32 %v266, %v267
    %v271 = vshrl.u32 %v232, 16
    %v273 = vrot.slane %v271, 7
    %v274 = vshll.u32 %v232, 16
    %v276 = vor.u32 %v273, %v274
    %v278 = vshrl.u32 %v233, 16
    %v280 = vrot.slane %v278, 7
    %v281 = vshll.u32 %v233, 16
    %v283 = vor.u32 %v280, %v281
    %v285 = vshrl.u32 %v234, 16
    %v287 = vrot.slane %v285, 7
    %v288 = vshll.u32 %v234, 16
    %v290 = vor.u32 %v287, %v288
    %v292 = vshrl.u32 %v235, 16
    %v294 = vrot.slane %v292, 7
    %v295 = vshll.u32 %v235, 16
    %v297 = vor.u32 %v294, %v295
    %v299 = vshrl.u32 %v236, 16
    %v301 = vrot.slane %v299, 7
    %v302 = vshll.u32 %v236, 16
    %v304 = vor.u32 %v301, %v302
    %vm314 = vcmask 1040384
    %vm315 = vsmask.f32 256
    %vm316 = vmand %vm314, %vm315
    %v317 = vsel %vm316, 0, %v248
    %v318 = vsel %vm316, 0, %v255
    %v319 = vsel %vm316, 0, %v262
    %v320 = vsel %vm316, 0, %v269
    %v321 = vsel %vm316, 0, %v276
    %v322 = vsel %vm316, 0, %v283
    %v323 = vsel %vm316, 0, %v290
    %v324 = vsel %vm316, 0, %v297
    %v325 = vsel %vm316, 0, %v304
    %vm326 = vcmask 1042432
    %vm327 = vsmask.f32 2304
    %vm328 = vmand %vm326, %vm327
    %v329 = vsel %vm328, %v317, 0
    %v330 = vsel %vm328, %v318, 0
    %v331 = vsel %vm328, %v319, 0
    %v332 = vsel %vm328, %v320, 0
    %v333 = vsel %vm328, %v321, 0
    %v334 = vsel %vm328, %v322, 0
    %v335 = vsel %vm328, %v323, 0
    %v336 = vsel %vm328, %v324, 0
    %v337 = vsel %vm328, %v325, 0
    %v339 = vshrl.u32 %v329, 16
    %v341 = vshll.u32 %v329, 16
    %v343 = vrot.slane %v341, 1
    %v344 = vor.u32 %v339, %v343
    %v346 = vshrl.u32 %v330, 16
    %v348 = vshll.u32 %v330, 16
    %v350 = vrot.slane %v348, 1
    %v351 = vor.u32 %v346, %v350
    %v353 = vshrl.u32 %v331, 16
    %v355 = vshll.u32 %v331, 16
    %v357 = vrot.slane %v355, 1
    %v358 = vor.u32 %v353, %v357
    %v360 = vshrl.u32 %v332, 16
    %v362 = vshll.u32 %v332, 16
    %v364 = vrot.slane %v362, 1
    %v365 = vor.u32 %v360, %v364
    %v367 = vshrl.u32 %v334, 16
    %v369 = vshll.u32 %v334, 16
    %v371 = vrot.slane %v369, 1
    %v372 = vor.u32 %v367, %v371
    %v374 = vshrl.u32 %v335, 16
    %v376 = vshll.u32 %v335, 16
    %v378 = vrot.slane %v376, 1
    %v379 = vor.u32 %v374, %v378
    %v381 = vshrl.u32 %v336, 16
    %v383 = vshll.u32 %v336, 16
    %v385 = vrot.slane %v383, 1
    %v386 = vor.u32 %v381, %v385
    %v394 = vrot.slane %v329, 1
    %v395 = vrot.slane %v330, 1
    %v396 = vrot.slane %v331, 1
    %v397 = vrot.slane %v332, 1
    %v398 = vrot.slane %v334, 1
    %v399 = vrot.slane %v335, 1
    %v400 = vrot.slane %v336, 1
    %v402 = vshrl.u32 %v333, 16
    %v404 = vshll.u32 %v333, 16
    %v406 = vrot.slane %v404, 1
    %v407 = vor.u32 %v402, %v406
    %v409 = vshrl.u32 %v337, 16
    %v411 = vshll.u32 %v337, 16
    %v413 = vrot.slane %v411, 1
    %v414 = vor.u32 %v409, %v413
    %v417 = vrot.slane %v333, 1
    %v418 = vrot.slane %v337, 1
    %v419 = vrot.slane %v344, 6
    %v420 = vrot.slane %v394, 4
    %v421 = vrot.slane %v330, 2
    %v422 = vrot.slane %v395, 6
    %v423 = vrot.slane %v331, 4
    %v424 = vrot.slane %v358, 2
    %v425 = vrot.slane %v351, 6
    %v426 = vrot.slane %v395, 4
    %v427 = vrot.slane %v331, 2
    %v428 = vrot.slane %v396, 6
    %v429 = vrot.slane %v332, 4
    %v430 = vrot.slane %v365, 2
    %v431 = vrot.slane %v358, 6
    %v432 = vrot.slane %v396, 4
    %v433 = vrot.slane %v332, 2
    %v434 = vrot.slane %v397, 6
    %v435 = vrot.slane %v333, 4
    %v436 = vrot.slane %v407, 2
    %v437 = vrot.slane %v365, 6
    %v438 = vrot.slane %v397, 4
    %v439 = vrot.slane %v333, 2
    %v440 = vrot.slane %v417, 6
    %v441 = vrot.slane %v329, 4
    %v442 = vrot.slane %v344, 2
    %v443 = vrot.slane %v334, 2
    %v444 = vrot.slane %v398, 6
    %v445 = vrot.slane %v335, 4
    %v446 = vrot.slane %v379, 2
    %v447 = vrot.slane %v372, 6
    %v448 = vrot.slane %v398, 4
    %v449 = vrot.slane %v335, 2
    %v450 = vrot.slane %v399, 6
    %v451 = vrot.slane %v336, 4
    %v452 = vrot.slane %v386, 2
    %v453 = vrot.slane %v379, 6
    %v454 = vrot.slane %v399, 4
    %v455 = vrot.slane %v336, 2
    %v456 = vrot.slane %v400, 6
    %v457 = vrot.slane %v337, 4
    %v458 = vrot.slane %v414, 2
    %v459 = vrot.slane %v386, 6
    %v460 = vrot.slane %v400, 4
    %v461 = vrot.slane %v337, 2
    %v462 = vrot.slane %v418, 6
    %vm463 = vcmask 1041408
    %v465 = vsel %vm463, %v329, %v419
    %vm466 = vcmask 1045508
    %v469 = vsel %vm466, %v420, %v421
    %vm470 = vcmask 1043456
    %v471 = vsel %vm470, %v465, %v469
    %v474 = vsel %vm463, %v351, %v422
    %v477 = vsel %vm466, %v423, %v424
    %v478 = vsel %vm470, %v474, %v477
    %v480 = vsel %vm463, %v330, %v425
    %v483 = vsel %vm466, %v426, %v427
    %v484 = vsel %vm470, %v480, %v483
    %v487 = vsel %vm463, %v358, %v428
    %v490 = vsel %vm466, %v429, %v430
    %v491 = vsel %vm470, %v487, %v490
    %v493 = vsel %vm463, %v331, %v431
    %v496 = vsel %vm466, %v432, %v433
    %v497 = vsel %vm470, %v493, %v496
    %v500 = vsel %vm463, %v365, %v434
    %v503 = vsel %vm466, %v435, %v436
    %v504 = vsel %vm470, %v500, %v503
    %v506 = vsel %vm463, %v332, %v437
    %v509 = vsel %vm466, %v438, %v439
    %v510 = vsel %vm470, %v506, %v509
    %v513 = vsel %vm463, %v407, %v440
    %v516 = vsel %vm466, %v441, %v442
    %v517 = vsel %vm470, %v513, %v516
    %v519 = vsel %vm466, %v420, %v443
    %v520 = vsel %vm470, %v465, %v519
    %v523 = vsel %vm463, %v372, %v444
    %v526 = vsel %vm466, %v445, %v446
    %v527 = vsel %vm470, %v523, %v526
    %v529 = vsel %vm463, %v334, %v447
    %v532 = vsel %vm466, %v448, %v449
    %v533 = vsel %vm470, %v529, %v532
    %v536 = vsel %vm463, %v379, %v450
    %v539 = vsel %vm466, %v451, %v452
    %v540 = vsel %vm470, %v536, %v539
    %v542 = vsel %vm463, %v335, %v453
    %v545 = vsel %vm466, %v454, %v455
    %v546 = vsel %vm470, %v542, %v545
    %v549 = vsel %vm463, %v386, %v456
    %v552 = vsel %vm466, %v457, %v458
    %v553 = vsel %vm470, %v549, %v552
    %v555 = vsel %vm463, %v336, %v459
    %v558 = vsel %vm466, %v460, %v461
    %v559 = vsel %vm470, %v555, %v558
    %v562 = vsel %vm463, %v414, %v462
    %v563 = vsel %vm470, %v562, %v516
    %v564 = vld [vmem:[%s3] sm:$0xf]
    %v565 = vld [vmem:[%s3 + $0x4] sm:$0xf]
    %v566 = vld [vmem:[%s3 + $0x8] sm:$0xf]
    %v567 = vld [vmem:[%s3 + $0xc] sm:$0xf]
    %v568 = vld [vmem:[%s3 + $0x10] sm:$0xf]
    %v569 = vld [vmem:[%s3 + $0x14] sm:$0xf]
    %v570 = vld [vmem:[%s3 + $0x18] sm:$0xf]
    %v571 = vld [vmem:[%s3 + $0x1c] sm:$0xf]
    %v572 = vld [vmem:[%s3 + $0x20] sm:$0xf]
    %v573 = vld [vmem:[%s3 + $0x24] sm:$0xf]
    %v574 = vld [vmem:[%s3 + $0x28] sm:$0xf]
    %v575 = vld [vmem:[%s3 + $0x2c] sm:$0xf]
    %v576 = vld [vmem:[%s3 + $0x30] sm:$0xf]
    %v577 = vld [vmem:[%s3 + $0x34] sm:$0xf]
    %v578 = vld [vmem:[%s3 + $0x38] sm:$0xf]
    %v579 = vld [vmem:[%s3 + $0x3c] sm:$0xf]
    %v580 = vld [vmem:[%s3 + $0x40] sm:$0xf]
    %v581 = vld [vmem:[%s3 + $0x44] sm:$0xf]
    %v582 = vld [vmem:[%s3 + $0x48] sm:$0xf]
    %v583 = vld [vmem:[%s3 + $0x4c] sm:$0xf]
    %v584 = vld [vmem:[%s3 + $0x50] sm:$0xf]
    %v585 = vld [vmem:[%s3 + $0x54] sm:$0xf]
    %v586 = vld [vmem:[%s3 + $0x58] sm:$0xf]
    %v587 = vld [vmem:[%s3 + $0x5c] sm:$0xf]
    %v588 = vld [vmem:[%s3 + $0x60] sm:$0xf]
    %v589 = vld [vmem:[%s3 + $0x64] sm:$0xf]
    %v590 = vld [vmem:[%s3 + $0x68] sm:$0xf]
    %v591 = vld [vmem:[%s3 + $0x6c] sm:$0xf]
    %v592 = vld [vmem:[%s3 + $0x70] sm:$0xf]
    %v593 = vld [vmem:[%s3 + $0x74] sm:$0xf]
    %v594 = vld [vmem:[%s3 + $0x78] sm:$0xf]
    %v595 = vld [vmem:[%s3 + $0x7c] sm:$0xf]
    %v596 = vld [vmem:[%s3 + $0x80] sm:$0xf]
    %v597 = vld [vmem:[%s3 + $0x84] sm:$0xf]
    %v598 = vld [vmem:[%s3 + $0x88] sm:$0xf]
    %v599 = vld [vmem:[%s3 + $0x8c] sm:$0xf]
    %v600 = vld [vmem:[%s3 + $0x90] sm:$0xf]
    %v601 = vld [vmem:[%s3 + $0x94] sm:$0xf]
    %v602 = vld [vmem:[%s3 + $0x98] sm:$0xf]
    %v603 = vld [vmem:[%s3 + $0x9c] sm:$0xf]
    %v604 = vld [vmem:[%s3 + $0xa0] sm:$0xf]
    %v605 = vld [vmem:[%s3 + $0xa4] sm:$0xf]
    %v606 = vld [vmem:[%s3 + $0xa8] sm:$0xf]
    %v607 = vld [vmem:[%s3 + $0xac] sm:$0xf]
    %v608 = vld [vmem:[%s3 + $0xb0] sm:$0xf]
    %v609 = vld [vmem:[%s3 + $0xb4] sm:$0xf]
    %v610 = vld [vmem:[%s3 + $0xb8] sm:$0xf]
    %v611 = vld [vmem:[%s3 + $0xbc] sm:$0xf]
    %v612 = vld [vmem:[%s3 + $0xc0] sm:$0xf]
    %v613 = vld [vmem:[%s3 + $0xc4] sm:$0xf]
    %v614 = vld [vmem:[%s3 + $0xc8] sm:$0xf]
    %v615 = vld [vmem:[%s3 + $0xcc] sm:$0xf]
    %v616 = vld [vmem:[%s3 + $0xd0] sm:$0xf]
    %v617 = vld [vmem:[%s3 + $0xd4] sm:$0xf]
    %v618 = vld [vmem:[%s3 + $0xd8] sm:$0xf]
    %v619 = vld [vmem:[%s3 + $0xdc] sm:$0xf]
    %v620 = vld [vmem:[%s3 + $0xe0] sm:$0xf]
    %v621 = vld [vmem:[%s3 + $0xe4] sm:$0xf]
    %v622 = vld [vmem:[%s3 + $0xe8] sm:$0xf]
    %v623 = vld [vmem:[%s3 + $0xec] sm:$0xf]
    %v624 = vld [vmem:[%s3 + $0xf0] sm:$0xf]
    %v625 = vld [vmem:[%s3 + $0xf4] sm:$0xf]
    %v626 = vld [vmem:[%s3 + $0xf8] sm:$0xf]
    %v627 = vld [vmem:[%s3 + $0xfc] sm:$0xf]
    %v628 = vld [vmem:[%s3 + $0x100] sm:$0xf]
    %v629 = vld [vmem:[%s3 + $0x104] sm:$0xf]
    %v630 = vld [vmem:[%s3 + $0x108] sm:$0xf]
    %v631 = vld [vmem:[%s3 + $0x10c] sm:$0xf]
    %v632 = vld [vmem:[%s3 + $0x110] sm:$0xf]
    %v633 = vld [vmem:[%s3 + $0x114] sm:$0xf]
    %v634 = vld [vmem:[%s3 + $0x118] sm:$0xf]
    %v635 = vld [vmem:[%s3 + $0x11c] sm:$0xf]
    %v636 = vld [vmem:[%s3 + $0x120] sm:$0xf]
    %v637 = vld [vmem:[%s3 + $0x124] sm:$0xf]
    %v638 = vld [vmem:[%s3 + $0x128] sm:$0xf]
    %v639 = vld [vmem:[%s3 + $0x12c] sm:$0xf]
    %v640 = vld [vmem:[%s3 + $0x130] sm:$0xf]
    %v641 = vld [vmem:[%s3 + $0x134] sm:$0xf]
    %v642 = vld [vmem:[%s3 + $0x138] sm:$0xf]
    %v643 = vld [vmem:[%s3 + $0x13c] sm:$0xf]
    %v644 = vld [vmem:[%s3 + $0x140] sm:$0xf]
    %v645 = vld [vmem:[%s3 + $0x144] sm:$0xf]
    %v646 = vld [vmem:[%s3 + $0x148] sm:$0xf]
    %v647 = vld [vmem:[%s3 + $0x14c] sm:$0xf]
    %v648 = vld [vmem:[%s3 + $0x150] sm:$0xf]
    %v649 = vld [vmem:[%s3 + $0x154] sm:$0xf]
    %v650 = vld [vmem:[%s3 + $0x158] sm:$0xf]
    %v651 = vld [vmem:[%s3 + $0x15c] sm:$0xf]
    %v652 = vld [vmem:[%s3 + $0x160] sm:$0xf]
    %v653 = vld [vmem:[%s3 + $0x164] sm:$0xf]
    %v654 = vld [vmem:[%s3 + $0x168] sm:$0xf]
    %v655 = vld [vmem:[%s3 + $0x16c] sm:$0xf]
    %v656 = vld [vmem:[%s3 + $0x170] sm:$0xf]
    %v657 = vld [vmem:[%s3 + $0x174] sm:$0xf]
    %v658 = vld [vmem:[%s3 + $0x178] sm:$0xf]
    %v659 = vld [vmem:[%s3 + $0x17c] sm:$0xf]
    %v660 = vld [vmem:[%s3 + $0x180] sm:$0xf]
    %v661 = vld [vmem:[%s3 + $0x184] sm:$0xf]
    %v662 = vld [vmem:[%s3 + $0x188] sm:$0xf]
    %v663 = vld [vmem:[%s3 + $0x18c] sm:$0xf]
    %v664 = vld [vmem:[%s3 + $0x190] sm:$0xf]
    %v665 = vld [vmem:[%s3 + $0x194] sm:$0xf]
    %v666 = vld [vmem:[%s3 + $0x198] sm:$0xf]
    %v667 = vld [vmem:[%s3 + $0x19c] sm:$0xf]
    %v668 = vld [vmem:[%s3 + $0x1a0] sm:$0xf]
    %v669 = vld [vmem:[%s3 + $0x1a4] sm:$0xf]
    %v670 = vld [vmem:[%s3 + $0x1a8] sm:$0xf]
    %v671 = vld [vmem:[%s3 + $0x1ac] sm:$0xf]
    %v672 = vld [vmem:[%s3 + $0x1b0] sm:$0xf]
    %v673 = vld [vmem:[%s3 + $0x1b4] sm:$0xf]
    %v674 = vld [vmem:[%s3 + $0x1b8] sm:$0xf]
    %v675 = vld [vmem:[%s3 + $0x1bc] sm:$0xf]
    %v676 = vld [vmem:[%s3 + $0x1c0] sm:$0xf]
    %v677 = vld [vmem:[%s3 + $0x1c4] sm:$0xf]
    %v678 = vld [vmem:[%s3 + $0x1c8] sm:$0xf]
    %v679 = vld [vmem:[%s3 + $0x1cc] sm:$0xf]
    %v680 = vld [vmem:[%s3 + $0x1d0] sm:$0xf]
    %v681 = vld [vmem:[%s3 + $0x1d4] sm:$0xf]
    %v682 = vld [vmem:[%s3 + $0x1d8] sm:$0xf]
    %v683 = vld [vmem:[%s3 + $0x1dc] sm:$0xf]
    %v684 = vld [vmem:[%s3 + $0x1e0] sm:$0xf]
    %v685 = vld [vmem:[%s3 + $0x1e4] sm:$0xf]
    %v686 = vld [vmem:[%s3 + $0x1e8] sm:$0xf]
    %v687 = vld [vmem:[%s3 + $0x1ec] sm:$0xf]
    %v688 = vld [vmem:[%s3 + $0x1f0] sm:$0xf]
    %v689 = vld [vmem:[%s3 + $0x1f4] sm:$0xf]
    %v690 = vld [vmem:[%s3 + $0x1f8] sm:$0xf]
    %v691 = vld [vmem:[%s3 + $0x1fc] sm:$0xf]
    %v692 = vld [vmem:[%s3 + $0x200] sm:$0xf]
    %v693 = vld [vmem:[%s3 + $0x204] sm:$0xf]
    %v694 = vld [vmem:[%s3 + $0x208] sm:$0xf]
    %v695 = vld [vmem:[%s3 + $0x20c] sm:$0xf]
    %v696 = vld [vmem:[%s3 + $0x210] sm:$0xf]
    %v697 = vld [vmem:[%s3 + $0x214] sm:$0xf]
    %v698 = vld [vmem:[%s3 + $0x218] sm:$0xf]
    %v699 = vld [vmem:[%s3 + $0x21c] sm:$0xf]
    %v700 = vld [vmem:[%s3 + $0x220] sm:$0xf]
    %v701 = vld [vmem:[%s3 + $0x224] sm:$0xf]
    %v702 = vld [vmem:[%s3 + $0x228] sm:$0xf]
    %v703 = vld [vmem:[%s3 + $0x22c] sm:$0xf]
    %v704 = vld [vmem:[%s3 + $0x230] sm:$0xf]
    %v705 = vld [vmem:[%s3 + $0x234] sm:$0xf]
    %v706 = vld [vmem:[%s3 + $0x238] sm:$0xf]
    %v707 = vld [vmem:[%s3 + $0x23c] sm:$0xf]
    %708 = vst [vmem:[#allocation1] ss:$4 sm:$0xff] %v471
    %s709 = scalar_lea.vmem [#allocation1], 1
    %710 = vst [vmem:[%s709] ss:$4 sm:$0xff] %v484
    %s711 = scalar_lea.vmem [#allocation1], 2
    %712 = vst [vmem:[%s711] ss:$4 sm:$0xff] %v497
    %s713 = scalar_lea.vmem [#allocation1], 3
    %714 = vst [vmem:[%s713] ss:$4 sm:$0xff] %v510
    %s715 = scalar_lea.vmem [#allocation1], 32
    %716 = vst [vmem:[%s715] ss:$4 sm:$0xff] %v478
    %s717 = scalar_lea.vmem [#allocation1], 33
    %718 = vst [vmem:[%s717] ss:$4 sm:$0xff] %v491
    %s719 = scalar_lea.vmem [#allocation1], 34
    %720 = vst [vmem:[%s719] ss:$4 sm:$0xff] %v504
    %s721 = scalar_lea.vmem [#allocation1], 35
    %722 = vst [vmem:[%s721] ss:$4 sm:$0xff] %v517
    %v723 = vld.sshfl [vmem:[#allocation1] sm:$0xff pattern:$0x73625140]
    %v724 = vld.sshfl [vmem:[#allocation1 + $0x8] sm:$0xff pattern:$0x73625140]
    %v725 = vld.sshfl [vmem:[#allocation1 + $0x10] sm:$0xff pattern:$0x73625140]
    %v726 = vld.sshfl [vmem:[#allocation1 + $0x18] sm:$0xff pattern:$0x73625140]
    %v727 = vld.sshfl [vmem:[#allocation1 + $0x20] sm:$0xff pattern:$0x73625140]
    %v728 = vld.sshfl [vmem:[#allocation1 + $0x28] sm:$0xff pattern:$0x73625140]
    %v729 = vld.sshfl [vmem:[#allocation1 + $0x30] sm:$0xff pattern:$0x73625140]
    %v730 = vld.sshfl [vmem:[#allocation1 + $0x38] sm:$0xff pattern:$0x73625140]
    %732 = vst [vmem:[#allocation1] ss:$4 sm:$0xff] %v396
    %734 = vst [vmem:[%s709] ss:$4 sm:$0xff] %v397
    %736 = vst [vmem:[%s711] ss:$4 sm:$0xff] %v417
    %738 = vst [vmem:[%s713] ss:$4 sm:$0xff] %v394
    %739 = vst [vmem:[%s715] ss:$4 sm:$0xff] %v520
    %740 = vst [vmem:[%s717] ss:$4 sm:$0xff] %v533
    %741 = vst [vmem:[%s719] ss:$4 sm:$0xff] %v546
    %742 = vst [vmem:[%s721] ss:$4 sm:$0xff] %v559
    %v743 = vld.sshfl [vmem:[#allocation1] sm:$0xff pattern:$0x73625140]
    %v744 = vld.sshfl [vmem:[#allocation1 + $0x20] sm:$0xff pattern:$0x73625140]
    %v745 = vld.sshfl [vmem:[#allocation1 + $0x28] sm:$0xff pattern:$0x73625140]
    %v746 = vld.sshfl [vmem:[#allocation1 + $0x30] sm:$0xff pattern:$0x73625140]
    %v747 = vld.sshfl [vmem:[#allocation1 + $0x38] sm:$0xff pattern:$0x73625140]
    %748 = vst [vmem:[#allocation1] ss:$4 sm:$0xff] %v527
    %749 = vst [vmem:[%s709] ss:$4 sm:$0xff] %v540
    %750 = vst [vmem:[%s711] ss:$4 sm:$0xff] %v553
    %751 = vst [vmem:[%s713] ss:$4 sm:$0xff] %v563
    %753 = vst [vmem:[%s715] ss:$4 sm:$0xff] %v399
    %755 = vst [vmem:[%s717] ss:$4 sm:$0xff] %v400
    %757 = vst [vmem:[%s719] ss:$4 sm:$0xff] %v418
    %758 = vst [vmem:[%s721] ss:$4 sm:$0xff] %v394
    %v759 = vld.sshfl [vmem:[#allocation1] sm:$0xff pattern:$0x73625140]
    %v760 = vld.sshfl [vmem:[#allocation1 + $0x8] sm:$0xff pattern:$0x73625140]
    %v761 = vld.sshfl [vmem:[#allocation1 + $0x10] sm:$0xff pattern:$0x73625140]
    %v762 = vld.sshfl [vmem:[#allocation1 + $0x18] sm:$0xff pattern:$0x73625140]
    %v763 = vld.sshfl [vmem:[#allocation1 + $0x20] sm:$0xff pattern:$0x73625140]
    %v926 = vunpack.c.l.b16 %v564
    %v927 = vunpack.c.l.b16 %v565
    %v928 = vunpack.c.l.b16 %v566
    %v929 = vunpack.c.l.b16 %v567
    %v930 = vunpack.c.l.b16 %v568
    %v931 = vunpack.c.l.b16 %v569
    %v932 = vunpack.c.l.b16 %v570
    %v933 = vunpack.c.l.b16 %v571
    %v934 = vunpack.c.l.b16 %v572
    %v935 = vunpack.c.l.b16 %v573
    %v936 = vunpack.c.l.b16 %v574
    %v937 = vunpack.c.l.b16 %v575
    %v938 = vunpack.c.l.b16 %v576
    %v939 = vunpack.c.l.b16 %v577
    %v940 = vunpack.c.l.b16 %v578
    %v941 = vunpack.c.l.b16 %v579
    %v942 = vunpack.c.l.b16 %v580
    %v943 = vunpack.c.l.b16 %v581
    %v944 = vunpack.c.l.b16 %v582
    %v945 = vunpack.c.l.b16 %v583
    %v946 = vunpack.c.l.b16 %v584
    %v947 = vunpack.c.l.b16 %v585
    %v948 = vunpack.c.l.b16 %v586
    %v949 = vunpack.c.l.b16 %v587
    %v950 = vunpack.c.l.b16 %v588
    %v951 = vunpack.c.l.b16 %v589
    %v952 = vunpack.c.l.b16 %v590
    %v953 = vunpack.c.l.b16 %v591
    %v954 = vunpack.c.l.b16 %v592
    %v955 = vunpack.c.l.b16 %v593
    %v956 = vunpack.c.l.b16 %v594
    %v957 = vunpack.c.l.b16 %v595
    %v958 = vunpack.c.l.b16 %v596
    %v959 = vunpack.c.l.b16 %v597
    %v960 = vunpack.c.l.b16 %v598
    %v961 = vunpack.c.l.b16 %v599
    %v962 = vunpack.c.l.b16 %v600
    %v963 = vunpack.c.l.b16 %v601
    %v964 = vunpack.c.l.b16 %v602
    %v965 = vunpack.c.l.b16 %v603
    %v966 = vunpack.c.l.b16 %v604
    %v967 = vunpack.c.l.b16 %v605
    %v968 = vunpack.c.l.b16 %v606
    %v969 = vunpack.c.l.b16 %v607
    %v970 = vunpack.c.l.b16 %v608
    %v971 = vunpack.c.l.b16 %v609
    %v972 = vunpack.c.l.b16 %v610
    %v973 = vunpack.c.l.b16 %v611
    %v974 = vunpack.c.l.b16 %v612
    %v975 = vunpack.c.l.b16 %v613
    %v976 = vunpack.c.l.b16 %v614
    %v977 = vunpack.c.l.b16 %v615
    %v978 = vunpack.c.l.b16 %v616
    %v979 = vunpack.c.l.b16 %v617
    %v980 = vunpack.c.l.b16 %v618
    %v981 = vunpack.c.l.b16 %v619
    %v982 = vunpack.c.l.b16 %v620
    %v983 = vunpack.c.l.b16 %v621
    %v984 = vunpack.c.l.b16 %v622
    %v985 = vunpack.c.l.b16 %v623
    %v986 = vunpack.c.l.b16 %v624
    %v987 = vunpack.c.l.b16 %v625
    %v988 = vunpack.c.l.b16 %v626
    %v989 = vunpack.c.l.b16 %v627
    %v990 = vunpack.c.l.b16 %v628
    %v991 = vunpack.c.l.b16 %v629
    %v992 = vunpack.c.l.b16 %v630
    %v993 = vunpack.c.l.b16 %v631
    %v994 = vunpack.c.l.b16 %v632
    %v995 = vunpack.c.l.b16 %v633
    %v996 = vunpack.c.l.b16 %v634
    %v997 = vunpack.c.l.b16 %v635
    %v998 = vunpack.c.l.b16 %v636
    %v999 = vunpack.c.l.b16 %v637
    %v1000 = vunpack.c.l.b16 %v638
    %v1001 = vunpack.c.l.b16 %v639
    %v1002 = vunpack.c.l.b16 %v640
    %v1003 = vunpack.c.l.b16 %v641
    %v1004 = vunpack.c.l.b16 %v642
    %v1005 = vunpack.c.l.b16 %v643
    %v1006 = vunpack.c.l.b16 %v644
    %v1007 = vunpack.c.l.b16 %v645
    %v1008 = vunpack.c.l.b16 %v646
    %v1009 = vunpack.c.l.b16 %v647
    %v1010 = vunpack.c.l.b16 %v648
    %v1011 = vunpack.c.l.b16 %v649
    %v1012 = vunpack.c.l.b16 %v650
    %v1013 = vunpack.c.l.b16 %v651
    %v1014 = vunpack.c.l.b16 %v652
    %v1015 = vunpack.c.l.b16 %v653
    %v1016 = vunpack.c.l.b16 %v654
    %v1017 = vunpack.c.l.b16 %v655
    %v1018 = vunpack.c.l.b16 %v656
    %v1019 = vunpack.c.l.b16 %v657
    %v1020 = vunpack.c.l.b16 %v658
    %v1021 = vunpack.c.l.b16 %v659
    %v1022 = vunpack.c.l.b16 %v660
    %v1023 = vunpack.c.l.b16 %v661
    %v1024 = vunpack.c.l.b16 %v662
    %v1025 = vunpack.c.l.b16 %v663
    %v1026 = vunpack.c.l.b16 %v664
    %v1027 = vunpack.c.l.b16 %v665
    %v1028 = vunpack.c.l.b16 %v666
    %v1029 = vunpack.c.l.b16 %v667
    %v1030 = vunpack.c.l.b16 %v668
    %v1031 = vunpack.c.l.b16 %v669
    %v1032 = vunpack.c.l.b16 %v670
    %v1033 = vunpack.c.l.b16 %v671
    %v1034 = vunpack.c.l.b16 %v672
    %v1035 = vunpack.c.l.b16 %v673
    %v1036 = vunpack.c.l.b16 %v674
    %v1037 = vunpack.c.l.b16 %v675
    %v1038 = vunpack.c.l.b16 %v676
    %v1039 = vunpack.c.l.b16 %v677
    %v1040 = vunpack.c.l.b16 %v678
    %v1041 = vunpack.c.l.b16 %v679
    %v1042 = vunpack.c.l.b16 %v680
    %v1043 = vunpack.c.l.b16 %v681
    %v1044 = vunpack.c.l.b16 %v682
    %v1045 = vunpack.c.l.b16 %v683
    %v1046 = vunpack.c.l.b16 %v684
    %v1047 = vunpack.c.l.b16 %v685
    %v1048 = vunpack.c.l.b16 %v686
    %v1049 = vunpack.c.l.b16 %v687
    %v1050 = vunpack.c.l.b16 %v688
    %v1051 = vunpack.c.l.b16 %v689
    %v1052 = vunpack.c.l.b16 %v690
    %v1053 = vunpack.c.l.b16 %v691
    %v1054 = vunpack.c.l.b16 %v692
    %v1055 = vunpack.c.l.b16 %v693
    %v1056 = vunpack.c.l.b16 %v694
    %v1057 = vunpack.c.l.b16 %v695
    %v1058 = vunpack.c.l.b16 %v696
    %v1059 = vunpack.c.l.b16 %v697
    %v1060 = vunpack.c.l.b16 %v698
    %v1061 = vunpack.c.l.b16 %v699
    %v1062 = vunpack.c.l.b16 %v700
    %v1063 = vunpack.c.l.b16 %v701
    %v1064 = vunpack.c.l.b16 %v702
    %v1065 = vunpack.c.l.b16 %v703
    %v1066 = vunpack.c.l.b16 %v704
    %v1067 = vunpack.c.l.b16 %v705
    %v1068 = vunpack.c.l.b16 %v706
    %v1069 = vunpack.c.l.b16 %v707
    %v1070 = vpack.c.b16 %v927, %v926
    %v1071 = vpack.c.b16 %v929, %v928
    %v1072 = vpack.c.b16 %v931, %v930
    %v1073 = vpack.c.b16 %v933, %v932
    %v1074 = vpack.c.b16 %v935, %v934
    %v1075 = vpack.c.b16 %v937, %v936
    %v1076 = vpack.c.b16 %v939, %v938
    %v1077 = vpack.c.b16 %v941, %v940
    %v1078 = vpack.c.b16 %v943, %v942
    %v1079 = vpack.c.b16 %v945, %v944
    %v1080 = vpack.c.b16 %v947, %v946
    %v1081 = vpack.c.b16 %v949, %v948
    %v1082 = vpack.c.b16 %v951, %v950
    %v1083 = vpack.c.b16 %v953, %v952
    %v1084 = vpack.c.b16 %v955, %v954
    %v1085 = vpack.c.b16 %v957, %v956
    %v1086 = vpack.c.b16 %v959, %v958
    %v1087 = vpack.c.b16 %v961, %v960
    %v1088 = vpack.c.b16 %v963, %v962
    %v1089 = vpack.c.b16 %v965, %v964
    %v1090 = vpack.c.b16 %v967, %v966
    %v1091 = vpack.c.b16 %v969, %v968
    %v1092 = vpack.c.b16 %v971, %v970
    %v1093 = vpack.c.b16 %v973, %v972
    %v1094 = vpack.c.b16 %v975, %v974
    %v1095 = vpack.c.b16 %v977, %v976
    %v1096 = vpack.c.b16 %v979, %v978
    %v1097 = vpack.c.b16 %v981, %v980
    %v1098 = vpack.c.b16 %v983, %v982
    %v1099 = vpack.c.b16 %v985, %v984
    %v1100 = vpack.c.b16 %v987, %v986
    %v1101 = vpack.c.b16 %v989, %v988
    %v1102 = vpack.c.b16 %v991, %v990
    %v1103 = vpack.c.b16 %v993, %v992
    %v1104 = vpack.c.b16 %v995, %v994
    %v1105 = vpack.c.b16 %v997, %v996
    %v1106 = vpack.c.b16 %v999, %v998
    %v1107 = vpack.c.b16 %v1001, %v1000
    %v1108 = vpack.c.b16 %v1003, %v1002
    %v1109 = vpack.c.b16 %v1005, %v1004
    %v1110 = vpack.c.b16 %v1007, %v1006
    %v1111 = vpack.c.b16 %v1009, %v1008
    %v1112 = vpack.c.b16 %v1011, %v1010
    %v1113 = vpack.c.b16 %v1013, %v1012
    %v1114 = vpack.c.b16 %v1015, %v1014
    %v1115 = vpack.c.b16 %v1017, %v1016
    %v1116 = vpack.c.b16 %v1019, %v1018
    %v1117 = vpack.c.b16 %v1021, %v1020
    %v1118 = vpack.c.b16 %v1023, %v1022
    %v1119 = vpack.c.b16 %v1025, %v1024
    %v1120 = vpack.c.b16 %v1027, %v1026
    %v1121 = vpack.c.b16 %v1029, %v1028
    %v1122 = vpack.c.b16 %v1031, %v1030
    %v1123 = vpack.c.b16 %v1033, %v1032
    %v1124 = vpack.c.b16 %v1035, %v1034
    %v1125 = vpack.c.b16 %v1037, %v1036
    %v1126 = vpack.c.b16 %v1039, %v1038
    %v1127 = vpack.c.b16 %v1041, %v1040
    %v1128 = vpack.c.b16 %v1043, %v1042
    %v1129 = vpack.c.b16 %v1045, %v1044
    %v1130 = vpack.c.b16 %v1047, %v1046
    %v1131 = vpack.c.b16 %v1049, %v1048
    %v1132 = vpack.c.b16 %v1051, %v1050
    %v1133 = vpack.c.b16 %v1053, %v1052
    %v1134 = vpack.c.b16 %v1055, %v1054
    %v1135 = vpack.c.b16 %v1057, %v1056
    %v1136 = vpack.c.b16 %v1059, %v1058
    %v1137 = vpack.c.b16 %v1061, %v1060
    %v1138 = vpack.c.b16 %v1063, %v1062
    %v1139 = vpack.c.b16 %v1065, %v1064
    %v1140 = vpack.c.b16 %v1067, %v1066
    %v1141 = vpack.c.b16 %v1069, %v1068
    %1214 = vmatpush.bf16.msra.mxu0 %v1077
    %1215 = vmatpush.bf16.msra.mxu0 %v1076
    %1216 = vmatpush.bf16.msra.mxu0 %v1075
    %1217 = vmatpush.bf16.msra.mxu0 %v1074
    %1218 = vmatpush.bf16.msra.mxu0 %v1073
    %1219 = vmatpush.bf16.msra.mxu0 %v1072
    %1220 = vmatpush.bf16.msra.mxu0 %v1071
    %1221 = vmatpush.bf16.msra.mxu0 %v1070
    %1222 = vmatmul.bf16.gmra.mxu0 %v723
    %v1223 = vpop.f32.mrf.mxu0
    %v1224 = vadd.f32 0.0, %v1223
    %v1225 = vpop.f32.mrf.mxu0
    %v1226 = vadd.f32 0.0, %v1225
    %1227 = vmatmul.bf16.gmra.mxu0 %v744
    %v1228 = vpop.f32.mrf.mxu0
    %v1229 = vadd.f32 0.0, %v1228
    %v1230 = vpop.f32.mrf.mxu0
    %v1231 = vadd.f32 0.0, %v1230
    %1232 = vdwg.mxu0
    %1233 = vmatpush.bf16.msra.mxu0 %v1085
    %1234 = vmatpush.bf16.msra.mxu0 %v1084
    %1235 = vmatpush.bf16.msra.mxu0 %v1083
    %1236 = vmatpush.bf16.msra.mxu0 %v1082
    %1237 = vmatpush.bf16.msra.mxu0 %v1081
    %1238 = vmatpush.bf16.msra.mxu0 %v1080
    %1239 = vmatpush.bf16.msra.mxu0 %v1079
    %1240 = vmatpush.bf16.msra.mxu0 %v1078
    %1241 = vmatmul.bf16.gmra.mxu0 %v724
    %v1242 = vpop.f32.mrf.mxu0
    %v1243 = vadd.f32 %v1224, %v1242
    %v1244 = vpop.f32.mrf.mxu0
    %v1245 = vadd.f32 %v1226, %v1244
    %1246 = vmatmul.bf16.gmra.mxu0 %v745
    %v1247 = vpop.f32.mrf.mxu0
    %v1248 = vadd.f32 %v1229, %v1247
    %v1249 = vpop.f32.mrf.mxu0
    %v1250 = vadd.f32 %v1231, %v1249
    %1251 = vdwg.mxu0
    %1252 = vmatpush.bf16.msra.mxu0 %v1093
    %1253 = vmatpush.bf16.msra.mxu0 %v1092
    %1254 = vmatpush.bf16.msra.mxu0 %v1091
    %1255 = vmatpush.bf16.msra.mxu0 %v1090
    %1256 = vmatpush.bf16.msra.mxu0 %v1089
    %1257 = vmatpush.bf16.msra.mxu0 %v1088
    %1258 = vmatpush.bf16.msra.mxu0 %v1087
    %1259 = vmatpush.bf16.msra.mxu0 %v1086
    %1260 = vmatmul.bf16.gmra.mxu0 %v725
    %v1261 = vpop.f32.mrf.mxu0
    %v1262 = vadd.f32 %v1243, %v1261
    %v1263 = vpop.f32.mrf.mxu0
    %v1264 = vadd.f32 %v1245, %v1263
    %1265 = vmatmul.bf16.gmra.mxu0 %v746
    %v1266 = vpop.f32.mrf.mxu0
    %v1267 = vadd.f32 %v1248, %v1266
    %v1268 = vpop.f32.mrf.mxu0
    %v1269 = vadd.f32 %v1250, %v1268
    %1270 = vdwg.mxu0
    %1271 = vmatpush.bf16.msra.mxu0 %v1101
    %1272 = vmatpush.bf16.msra.mxu0 %v1100
    %1273 = vmatpush.bf16.msra.mxu0 %v1099
    %1274 = vmatpush.bf16.msra.mxu0 %v1098
    %1275 = vmatpush.bf16.msra.mxu0 %v1097
    %1276 = vmatpush.bf16.msra.mxu0 %v1096
    %1277 = vmatpush.bf16.msra.mxu0 %v1095
    %1278 = vmatpush.bf16.msra.mxu0 %v1094
    %1279 = vmatmul.bf16.gmra.mxu0 %v726
    %v1280 = vpop.f32.mrf.mxu0
    %v1281 = vadd.f32 %v1262, %v1280
    %v1282 = vpop.f32.mrf.mxu0
    %v1283 = vadd.f32 %v1264, %v1282
    %1284 = vmatmul.bf16.gmra.mxu0 %v747
    %v1285 = vpop.f32.mrf.mxu0
    %v1286 = vadd.f32 %v1267, %v1285
    %v1287 = vpop.f32.mrf.mxu0
    %v1288 = vadd.f32 %v1269, %v1287
    %1289 = vdwg.mxu0
    %1290 = vmatpush.bf16.msra.mxu0 %v1109
    %1291 = vmatpush.bf16.msra.mxu0 %v1108
    %1292 = vmatpush.bf16.msra.mxu0 %v1107
    %1293 = vmatpush.bf16.msra.mxu0 %v1106
    %1294 = vmatpush.bf16.msra.mxu0 %v1105
    %1295 = vmatpush.bf16.msra.mxu0 %v1104
    %1296 = vmatpush.bf16.msra.mxu0 %v1103
    %1297 = vmatpush.bf16.msra.mxu0 %v1102
    %1298 = vmatmul.bf16.gmra.mxu0 %v727
    %v1299 = vpop.f32.mrf.mxu0
    %v1300 = vadd.f32 %v1281, %v1299
    %v1301 = vpop.f32.mrf.mxu0
    %v1302 = vadd.f32 %v1283, %v1301
    %1303 = vmatmul.bf16.gmra.mxu0 %v759
    %v1304 = vpop.f32.mrf.mxu0
    %v1305 = vadd.f32 %v1286, %v1304
    %v1306 = vpop.f32.mrf.mxu0
    %v1307 = vadd.f32 %v1288, %v1306
    %1308 = vdwg.mxu0
    %1309 = vmatpush.bf16.msra.mxu0 %v1117
    %1310 = vmatpush.bf16.msra.mxu0 %v1116
    %1311 = vmatpush.bf16.msra.mxu0 %v1115
    %1312 = vmatpush.bf16.msra.mxu0 %v1114
    %1313 = vmatpush.bf16.msra.mxu0 %v1113
    %1314 = vmatpush.bf16.msra.mxu0 %v1112
    %1315 = vmatpush.bf16.msra.mxu0 %v1111
    %1316 = vmatpush.bf16.msra.mxu0 %v1110
    %1317 = vmatmul.bf16.gmra.mxu0 %v728
    %v1318 = vpop.f32.mrf.mxu0
    %v1319 = vadd.f32 %v1300, %v1318
    %v1320 = vpop.f32.mrf.mxu0
    %v1321 = vadd.f32 %v1302, %v1320
    %1322 = vmatmul.bf16.gmra.mxu0 %v760
    %v1323 = vpop.f32.mrf.mxu0
    %v1324 = vadd.f32 %v1305, %v1323
    %v1325 = vpop.f32.mrf.mxu0
    %v1326 = vadd.f32 %v1307, %v1325
    %1327 = vdwg.mxu0
    %1328 = vmatpush.bf16.msra.mxu0 %v1125
    %1329 = vmatpush.bf16.msra.mxu0 %v1124
    %1330 = vmatpush.bf16.msra.mxu0 %v1123
    %1331 = vmatpush.bf16.msra.mxu0 %v1122
    %1332 = vmatpush.bf16.msra.mxu0 %v1121
    %1333 = vmatpush.bf16.msra.mxu0 %v1120
    %1334 = vmatpush.bf16.msra.mxu0 %v1119
    %1335 = vmatpush.bf16.msra.mxu0 %v1118
    %1336 = vmatmul.bf16.gmra.mxu0 %v729
    %v1337 = vpop.f32.mrf.mxu0
    %v1338 = vadd.f32 %v1319, %v1337
    %v1339 = vpop.f32.mrf.mxu0
    %v1340 = vadd.f32 %v1321, %v1339
    %1341 = vmatmul.bf16.gmra.mxu0 %v761
    %v1342 = vpop.f32.mrf.mxu0
    %v1343 = vadd.f32 %v1324, %v1342
    %v1344 = vpop.f32.mrf.mxu0
    %v1345 = vadd.f32 %v1326, %v1344
    %1346 = vdwg.mxu0
    %1347 = vmatpush.bf16.msra.mxu0 %v1133
    %1348 = vmatpush.bf16.msra.mxu0 %v1132
    %1349 = vmatpush.bf16.msra.mxu0 %v1131
    %1350 = vmatpush.bf16.msra.mxu0 %v1130
    %1351 = vmatpush.bf16.msra.mxu0 %v1129
    %1352 = vmatpush.bf16.msra.mxu0 %v1128
    %1353 = vmatpush.bf16.msra.mxu0 %v1127
    %1354 = vmatpush.bf16.msra.mxu0 %v1126
    %1355 = vmatmul.bf16.gmra.mxu0 %v730
    %v1356 = vpop.f32.mrf.mxu0
    %v1357 = vadd.f32 %v1338, %v1356
    %v1358 = vpop.f32.mrf.mxu0
    %v1359 = vadd.f32 %v1340, %v1358
    %1360 = vmatmul.bf16.gmra.mxu0 %v762
    %v1361 = vpop.f32.mrf.mxu0
    %v1362 = vadd.f32 %v1343, %v1361
    %v1363 = vpop.f32.mrf.mxu0
    %v1364 = vadd.f32 %v1345, %v1363
    %1365 = vdwg.mxu0
    %1366 = vmatpush.bf16.msra.mxu0 %v1141
    %1367 = vmatpush.bf16.msra.mxu0 %v1140
    %1368 = vmatpush.bf16.msra.mxu0 %v1139
    %1369 = vmatpush.bf16.msra.mxu0 %v1138
    %1370 = vmatpush.bf16.msra.mxu0 %v1137
    %1371 = vmatpush.bf16.msra.mxu0 %v1136
    %1372 = vmatpush.bf16.msra.mxu0 %v1135
    %1373 = vmatpush.bf16.msra.mxu0 %v1134
    %1374 = vmatmul.bf16.gmra.mxu0 %v743
    %v1375 = vpop.f32.mrf.mxu0
    %v1376 = vadd.f32 %v1357, %v1375
    %v1377 = vpop.f32.mrf.mxu0
    %v1378 = vadd.f32 %v1359, %v1377
    %1379 = vmatmul.bf16.gmra.mxu0 %v763
    %v1380 = vpop.f32.mrf.mxu0
    %v1381 = vadd.f32 %v1362, %v1380
    %v1382 = vpop.f32.mrf.mxu0
    %v1383 = vadd.f32 %v1364, %v1382
    %1384 = vdwg.mxu0
    %v1386 = vrot.slane %v239, 1
    %v1387 = vperm.slane %v239, 0
    %v1388 = vperm.slane %v1386, 0
    %v1391 = vmul.f32 %v1376, %v1387
    %v1392 = vmul.f32 %v1378, %v1387
    %v1393 = vmul.f32 %v1381, %v1388
    %v1394 = vmul.f32 %v1383, %v1388
    %v1395 = vstv %s241
    %v1396 = vmul.f32 %v1395, %v237
    %v1397 = vmul.f32 %v1395, %v238
    %1399 = vset.pattern.permute.xlu0 0
    %1400 = vperm.xlu0 %1399, %v1396
    %v1401 = vpop.permute.xlu0 %1400
    %1404 = vset.pattern.permute.xlu0 0
    %1405 = vperm.xlu0 %1404, %v1397
    %v1406 = vpop.permute.xlu0 %1405
    %v1408 = vadd.f32 %v1391, %v1401
    %v1409 = vadd.f32 %v1392, %v1406
    %v1410 = vadd.f32 %v1393, %v1401
    %v1411 = vadd.f32 %v1394, %v1406
    %v1413 = vperm.slane %v240, 0
    %v1415 = vadd.f32 %v1408, %v1413
    %v1416 = vadd.f32 %v1409, %v1413
    %v1417 = vadd.f32 %v1410, %v1413
    %v1418 = vadd.f32 %v1411, %v1413
    %vm1419 = vcmp.ge.f32.partialorder %v1415, 0.0
    %vm1420 = vcmp.ge.f32.partialorder %v1416, 0.0
    %vm1421 = vcmp.ge.f32.partialorder %v1417, 0.0
    %vm1422 = vcmp.ge.f32.partialorder %v1418, 0.0
    %v1423 = vmul.f32 %v1415, 0.2
    %v1424 = vmul.f32 %v1416, 0.2
    %v1425 = vmul.f32 %v1417, 0.2
    %v1426 = vmul.f32 %v1418, 0.2
    %v1427 = vsel %vm1419, %v1415, %v1423
    %v1428 = vsel %vm1420, %v1416, %v1424
    %v1429 = vsel %vm1421, %v1417, %v1425
    %v1430 = vsel %vm1422, %v1418, %v1426
    %v1431 = vmul.f32 %v1427, 1.4142135
    %v1432 = vmul.f32 %v1428, 1.4142135
    %v1433 = vmul.f32 %v1429, 1.4142135
    %v1434 = vmul.f32 %v1430, 1.4142135
    %v1439 = vrot.slane %v1431, 4
    %v1440 = vrot.slane %v1432, 4
    %v1441 = vrot.slane %v1433, 4
    %v1442 = vrot.slane %v1434, 4
    %v1447 = vld [vmem:[%s5] sm:$0x3]
    %v1449 = vrot.slane %v1447, 1
    %v1450 = vperm.slane %v1447, 0
    %v1451 = vperm.slane %v1449, 0
    %v1454 = vmul.f32 %v1431, %v1450
    %v1455 = vmul.f32 %v1439, %v1450
    %v1456 = vmul.f32 %v1432, %v1450
    %v1457 = vmul.f32 %v1440, %v1450
    %v1458 = vmul.f32 %v1433, %v1451
    %v1459 = vmul.f32 %v1441, %v1451
    %v1460 = vmul.f32 %v1434, %v1451
    %v1461 = vmul.f32 %v1442, %v1451
    %v1462 = vpack.c.bf16 %v1454, %v1454
    %v1463 = vpack.c.bf16 %v1455, %v1455
    %v1464 = vpack.c.bf16 %v1456, %v1456
    %v1465 = vpack.c.bf16 %v1457, %v1457
    %v1466 = vpack.c.bf16 %v1458, %v1458
    %v1467 = vpack.c.bf16 %v1459, %v1459
    %v1468 = vpack.c.bf16 %v1460, %v1460
    %v1469 = vpack.c.bf16 %v1461, %v1461
    %v1478 = vrot.slane %v1462, 3
    %v1479 = vrot.slane %v1463, 3
    %v1480 = vrot.slane %v1464, 3
    %v1481 = vrot.slane %v1465, 3
    %v1482 = vrot.slane %v1466, 3
    %v1483 = vrot.slane %v1467, 3
    %v1484 = vrot.slane %v1468, 3
    %v1485 = vrot.slane %v1469, 3
    %vm1486 = vcmask 1040384
    %v1489 = vsel %vm1486, %v1462, %v1478
    %vm1491 = vcmask 1041409
    %v1492 = vsel %vm1491, %v1462, %v1478
    %v1494 = vrot.slane %v1492, 1
    %v1497 = vsel %vm1486, %v1463, %v1479
    %v1499 = vsel %vm1491, %v1463, %v1479
    %v1501 = vrot.slane %v1499, 1
    %v1504 = vsel %vm1486, %v1464, %v1480
    %v1506 = vsel %vm1491, %v1464, %v1480
    %v1508 = vrot.slane %v1506, 1
    %v1511 = vsel %vm1486, %v1465, %v1481
    %v1513 = vsel %vm1491, %v1465, %v1481
    %v1515 = vrot.slane %v1513, 1
    %v1518 = vsel %vm1486, %v1466, %v1482
    %v1520 = vsel %vm1491, %v1466, %v1482
    %v1522 = vrot.slane %v1520, 1
    %v1525 = vsel %vm1486, %v1467, %v1483
    %v1527 = vsel %vm1491, %v1467, %v1483
    %v1529 = vrot.slane %v1527, 1
    %v1532 = vsel %vm1486, %v1468, %v1484
    %v1534 = vsel %vm1491, %v1468, %v1484
    %v1536 = vrot.slane %v1534, 1
    %v1539 = vsel %vm1486, %v1469, %v1485
    %v1541 = vsel %vm1491, %v1469, %v1485
    %v1543 = vrot.slane %v1541, 1
    %v1544 = vunpack.i.l.s16 %v1489
    %v1545 = vunpack.i.h.s16 %v1489
    %v1546 = vunpack.i.l.s16 %v1494
    %v1547 = vunpack.i.h.s16 %v1494
    %v1548 = vunpack.i.l.s16 %v1497
    %v1549 = vunpack.i.h.s16 %v1497
    %v1550 = vunpack.i.l.s16 %v1501
    %v1551 = vunpack.i.h.s16 %v1501
    %v1552 = vunpack.i.l.s16 %v1504
    %v1553 = vunpack.i.h.s16 %v1504
    %v1554 = vunpack.i.l.s16 %v1508
    %v1555 = vunpack.i.h.s16 %v1508
    %v1556 = vunpack.i.l.s16 %v1511
    %v1557 = vunpack.i.h.s16 %v1511
    %v1558 = vunpack.i.l.s16 %v1515
    %v1559 = vunpack.i.h.s16 %v1515
    %v1560 = vunpack.i.l.s16 %v1518
    %v1561 = vunpack.i.h.s16 %v1518
    %v1562 = vunpack.i.l.s16 %v1522
    %v1563 = vunpack.i.h.s16 %v1522
    %v1564 = vunpack.i.l.s16 %v1525
    %v1565 = vunpack.i.h.s16 %v1525
    %v1566 = vunpack.i.l.s16 %v1529
    %v1567 = vunpack.i.h.s16 %v1529
    %v1568 = vunpack.i.l.s16 %v1532
    %v1569 = vunpack.i.h.s16 %v1532
    %v1570 = vunpack.i.l.s16 %v1536
    %v1571 = vunpack.i.h.s16 %v1536
    %v1572 = vunpack.i.l.s16 %v1539
    %v1573 = vunpack.i.h.s16 %v1539
    %v1574 = vunpack.i.l.s16 %v1543
    %v1575 = vunpack.i.h.s16 %v1543
    %v1576 = vpack.i.b16 %v1544, %v1544
    %v1577 = vpack.i.b16 %v1545, %v1545
    %v1578 = vpack.i.b16 %v1546, %v1546
    %v1579 = vpack.i.b16 %v1547, %v1547
    %v1580 = vpack.i.b16 %v1548, %v1548
    %v1581 = vpack.i.b16 %v1549, %v1549
    %v1582 = vpack.i.b16 %v1550, %v1550
    %v1583 = vpack.i.b16 %v1551, %v1551
    %v1584 = vpack.i.b16 %v1552, %v1552
    %v1585 = vpack.i.b16 %v1553, %v1553
    %v1586 = vpack.i.b16 %v1554, %v1554
    %v1587 = vpack.i.b16 %v1555, %v1555
    %v1588 = vpack.i.b16 %v1556, %v1556
    %v1589 = vpack.i.b16 %v1557, %v1557
    %v1590 = vpack.i.b16 %v1558, %v1558
    %v1591 = vpack.i.b16 %v1559, %v1559
    %v1592 = vpack.i.b16 %v1560, %v1560
    %v1593 = vpack.i.b16 %v1561, %v1561
    %v1594 = vpack.i.b16 %v1562, %v1562
    %v1595 = vpack.i.b16 %v1563, %v1563
    %v1596 = vpack.i.b16 %v1564, %v1564
    %v1597 = vpack.i.b16 %v1565, %v1565
    %v1598 = vpack.i.b16 %v1566, %v1566
    %v1599 = vpack.i.b16 %v1567, %v1567
    %v1600 = vpack.i.b16 %v1568, %v1568
    %v1601 = vpack.i.b16 %v1569, %v1569
    %v1602 = vpack.i.b16 %v1570, %v1570
    %v1603 = vpack.i.b16 %v1571, %v1571
    %v1604 = vpack.i.b16 %v1572, %v1572
    %v1605 = vpack.i.b16 %v1573, %v1573
    %v1606 = vpack.i.b16 %v1574, %v1574
    %v1607 = vpack.i.b16 %v1575, %v1575
    %v1608 = vperm.slane %v1576, 0
    %v1609 = vperm.slane %v1577, 0
    %v1610 = vperm.slane %v1578, 0
    %v1611 = vperm.slane %v1579, 0
    %v1612 = vperm.slane %v1580, 0
    %v1613 = vperm.slane %v1581, 0
    %v1614 = vperm.slane %v1582, 0
    %v1615 = vperm.slane %v1583, 0
    %v1616 = vperm.slane %v1584, 0
    %v1617 = vperm.slane %v1585, 0
    %v1618 = vperm.slane %v1586, 0
    %v1619 = vperm.slane %v1587, 0
    %v1620 = vperm.slane %v1588, 0
    %v1621 = vperm.slane %v1589, 0
    %v1622 = vperm.slane %v1590, 0
    %v1623 = vperm.slane %v1591, 0
    %v1624 = vperm.slane %v1592, 0
    %v1625 = vperm.slane %v1593, 0
    %v1626 = vperm.slane %v1594, 0
    %v1627 = vperm.slane %v1595, 0
    %v1628 = vperm.slane %v1596, 0
    %v1629 = vperm.slane %v1597, 0
    %v1630 = vperm.slane %v1598, 0
    %v1631 = vperm.slane %v1599, 0
    %v1632 = vperm.slane %v1600, 0
    %v1633 = vperm.slane %v1601, 0
    %v1634 = vperm.slane %v1602, 0
    %v1635 = vperm.slane %v1603, 0
    %v1636 = vperm.slane %v1604, 0
    %v1637 = vperm.slane %v1605, 0
    %v1638 = vperm.slane %v1606, 0
    %v1639 = vperm.slane %v1607, 0
    %v1672 = vld [vmem:[%s22] sm:$0xff]
    %v1673 = vld [vmem:[%s22 + $0x8] sm:$0xff]
    %v1674 = vld [vmem:[%s22 + $0x10] sm:$0xff]
    %v1675 = vld [vmem:[%s22 + $0x18] sm:$0xff]
    %v1676 = vld [vmem:[%s22 + $0x20] sm:$0xff]
    %v1677 = vld [vmem:[%s22 + $0x28] sm:$0xff]
    %v1678 = vld [vmem:[%s22 + $0x30] sm:$0xff]
    %v1679 = vld [vmem:[%s22 + $0x38] sm:$0xff]
    %v1680 = vld [vmem:[%s6] sm:$0x3]
    %v1681 = vld [vmem:[#allocation8] sm:$0x1]
    %s1682 = sld [smem:[#allocation17 + $0x1]]
    %1684 = vst [vmem:[#allocation1] ss:$9 sm:$0xff] %v1608
    %s1686 = scalar_lea.vmem [#allocation1], 1
    %1687 = vst [vmem:[%s1686] ss:$9 sm:$0xff] %v1609
    %s1689 = scalar_lea.vmem [#allocation1], 2
    %1690 = vst [vmem:[%s1689] ss:$9 sm:$0xff] %v1610
    %s1692 = scalar_lea.vmem [#allocation1], 3
    %1693 = vst [vmem:[%s1692] ss:$9 sm:$0xff] %v1611
    %v1694 = vld [vmem:[#allocation1] sm:$0xff]
    %1695 = vst [vmem:[#allocation1] ss:$9 sm:$0xff] %v1608
    %1696 = vst [vmem:[%s1686] ss:$9 sm:$0xff] %v1609
    %1697 = vst [vmem:[%s1689] ss:$9 sm:$0xff] %v1610
    %1698 = vst [vmem:[%s1692] ss:$9 sm:$0xff] %v1611
    %v1699 = vld [vmem:[#allocation1] sm:$0xff]
    %1701 = vst [vmem:[#allocation1] ss:$9 sm:$0xff] %v1612
    %1703 = vst [vmem:[%s1686] ss:$9 sm:$0xff] %v1613
    %1705 = vst [vmem:[%s1689] ss:$9 sm:$0xff] %v1614
    %1707 = vst [vmem:[%s1692] ss:$9 sm:$0xff] %v1615
    %v1708 = vld [vmem:[#allocation1] sm:$0xff]
    %1709 = vst [vmem:[#allocation1] ss:$9 sm:$0xff] %v1612
    %1710 = vst [vmem:[%s1686] ss:$9 sm:$0xff] %v1613
    %1711 = vst [vmem:[%s1689] ss:$9 sm:$0xff] %v1614
    %1712 = vst [vmem:[%s1692] ss:$9 sm:$0xff] %v1615
    %v1713 = vld [vmem:[#allocation1] sm:$0xff]
    %1715 = vst [vmem:[#allocation1] ss:$9 sm:$0xff] %v1616
    %1717 = vst [vmem:[%s1686] ss:$9 sm:$0xff] %v1617
    %1719 = vst [vmem:[%s1689] ss:$9 sm:$0xff] %v1618
    %1721 = vst [vmem:[%s1692] ss:$9 sm:$0xff] %v1619
    %v1722 = vld [vmem:[#allocation1] sm:$0xff]
    %1723 = vst [vmem:[#allocation1] ss:$9 sm:$0xff] %v1616
    %1724 = vst [vmem:[%s1686] ss:$9 sm:$0xff] %v1617
    %1725 = vst [vmem:[%s1689] ss:$9 sm:$0xff] %v1618
    %1726 = vst [vmem:[%s1692] ss:$9 sm:$0xff] %v1619
    %v1727 = vld [vmem:[#allocation1] sm:$0xff]
    %1729 = vst [vmem:[#allocation1] ss:$9 sm:$0xff] %v1620
    %1731 = vst [vmem:[%s1686] ss:$9 sm:$0xff] %v1621
    %1733 = vst [vmem:[%s1689] ss:$9 sm:$0xff] %v1622
    %1735 = vst [vmem:[%s1692] ss:$9 sm:$0xff] %v1623
    %v1736 = vld [vmem:[#allocation1] sm:$0xff]
    %1737 = vst [vmem:[#allocation1] ss:$9 sm:$0xff] %v1620
    %1738 = vst [vmem:[%s1686] ss:$9 sm:$0xff] %v1621
    %1739 = vst [vmem:[%s1689] ss:$9 sm:$0xff] %v1622
    %1740 = vst [vmem:[%s1692] ss:$9 sm:$0xff] %v1623
    %v1741 = vld [vmem:[#allocation1] sm:$0xff]
    %1743 = vst [vmem:[#allocation1] ss:$9 sm:$0xff] %v1624
    %1745 = vst [vmem:[%s1686] ss:$9 sm:$0xff] %v1625
    %1747 = vst [vmem:[%s1689] ss:$9 sm:$0xff] %v1626
    %1749 = vst [vmem:[%s1692] ss:$9 sm:$0xff] %v1627
    %v1750 = vld [vmem:[#allocation1] sm:$0xff]
    %1751 = vst [vmem:[#allocation1] ss:$9 sm:$0xff] %v1624
    %1752 = vst [vmem:[%s1686] ss:$9 sm:$0xff] %v1625
    %1753 = vst [vmem:[%s1689] ss:$9 sm:$0xff] %v1626
    %1754 = vst [vmem:[%s1692] ss:$9 sm:$0xff] %v1627
    %v1755 = vld [vmem:[#allocation1] sm:$0xff]
    %1757 = vst [vmem:[#allocation1] ss:$9 sm:$0xff] %v1628
    %1759 = vst [vmem:[%s1686] ss:$9 sm:$0xff] %v1629
    %1761 = vst [vmem:[%s1689] ss:$9 sm:$0xff] %v1630
    %1763 = vst [vmem:[%s1692] ss:$9 sm:$0xff] %v1631
    %v1764 = vld [vmem:[#allocation1] sm:$0xff]
    %1765 = vst [vmem:[#allocation1] ss:$9 sm:$0xff] %v1628
    %1766 = vst [vmem:[%s1686] ss:$9 sm:$0xff] %v1629
    %1767 = vst [vmem:[%s1689] ss:$9 sm:$0xff] %v1630
    %1768 = vst [vmem:[%s1692] ss:$9 sm:$0xff] %v1631
    %v1769 = vld [vmem:[#allocation1] sm:$0xff]
    %1771 = vst [vmem:[#allocation1] ss:$9 sm:$0xff] %v1632
    %1773 = vst [vmem:[%s1686] ss:$9 sm:$0xff] %v1633
    %1775 = vst [vmem:[%s1689] ss:$9 sm:$0xff] %v1634
    %1777 = vst [vmem:[%s1692] ss:$9 sm:$0xff] %v1635
    %v1778 = vld [vmem:[#allocation1] sm:$0xff]
    %1779 = vst [vmem:[#allocation1] ss:$9 sm:$0xff] %v1632
    %1780 = vst [vmem:[%s1686] ss:$9 sm:$0xff] %v1633
    %1781 = vst [vmem:[%s1689] ss:$9 sm:$0xff] %v1634
    %1782 = vst [vmem:[%s1692] ss:$9 sm:$0xff] %v1635
    %v1783 = vld [vmem:[#allocation1] sm:$0xff]
    %1785 = vst [vmem:[#allocation1] ss:$9 sm:$0xff] %v1636
    %1787 = vst [vmem:[%s1686] ss:$9 sm:$0xff] %v1637
    %1789 = vst [vmem:[%s1689] ss:$9 sm:$0xff] %v1638
    %1791 = vst [vmem:[%s1692] ss:$9 sm:$0xff] %v1639
    %v1792 = vld [vmem:[#allocation1] sm:$0xff]
    %1793 = vst [vmem:[#allocation1] ss:$9 sm:$0xff] %v1636
    %1794 = vst [vmem:[%s1686] ss:$9 sm:$0xff] %v1637
    %1795 = vst [vmem:[%s1689] ss:$9 sm:$0xff] %v1638
    %1796 = vst [vmem:[%s1692] ss:$9 sm:$0xff] %v1639
    %v1797 = vld [vmem:[#allocation1] sm:$0xff]
    %v1798 = vshrl.u32 %v1694, 16
    %v1800 = vrot.slane %v1798, 7
    %v1801 = vshll.u32 %v1694, 16
    %v1803 = vor.u32 %v1800, %v1801
    %v1804 = vshrl.u32 %v1699, 16
    %v1806 = vrot.slane %v1804, 7
    %v1807 = vshll.u32 %v1699, 16
    %v1809 = vor.u32 %v1806, %v1807
    %v1810 = vshrl.u32 %v1708, 16
    %v1812 = vrot.slane %v1810, 7
    %v1813 = vshll.u32 %v1708, 16
    %v1815 = vor.u32 %v1812, %v1813
    %v1816 = vshrl.u32 %v1713, 16
    %v1818 = vrot.slane %v1816, 7
    %v1819 = vshll.u32 %v1713, 16
    %v1821 = vor.u32 %v1818, %v1819
    %v1822 = vshrl.u32 %v1722, 16
    %v1824 = vrot.slane %v1822, 7
    %v1825 = vshll.u32 %v1722, 16
    %v1827 = vor.u32 %v1824, %v1825
    %v1828 = vshrl.u32 %v1727, 16
    %v1830 = vrot.slane %v1828, 7
    %v1831 = vshll.u32 %v1727, 16
    %v1833 = vor.u32 %v1830, %v1831
    %v1834 = vshrl.u32 %v1736, 16
    %v1836 = vrot.slane %v1834, 7
    %v1837 = vshll.u32 %v1736, 16
    %v1839 = vor.u32 %v1836, %v1837
    %v1840 = vshrl.u32 %v1741, 16
    %v1842 = vrot.slane %v1840, 7
    %v1843 = vshll.u32 %v1741, 16
    %v1845 = vor.u32 %v1842, %v1843
    %v1846 = vshrl.u32 %v1750, 16
    %v1848 = vrot.slane %v1846, 7
    %v1849 = vshll.u32 %v1750, 16
    %v1851 = vor.u32 %v1848, %v1849
    %v1852 = vshrl.u32 %v1755, 16
    %v1854 = vrot.slane %v1852, 7
    %v1855 = vshll.u32 %v1755, 16
    %v1857 = vor.u32 %v1854, %v1855
    %v1858 = vshrl.u32 %v1764, 16
    %v1860 = vrot.slane %v1858, 7
    %v1861 = vshll.u32 %v1764, 16
    %v1863 = vor.u32 %v1860, %v1861
    %v1864 = vshrl.u32 %v1769, 16
    %v1866 = vrot.slane %v1864, 7
    %v1867 = vshll.u32 %v1769, 16
    %v1869 = vor.u32 %v1866, %v1867
    %v1870 = vshrl.u32 %v1778, 16
    %v1872 = vrot.slane %v1870, 7
    %v1873 = vshll.u32 %v1778, 16
    %v1875 = vor.u32 %v1872, %v1873
    %v1876 = vshrl.u32 %v1783, 16
    %v1878 = vrot.slane %v1876, 7
    %v1879 = vshll.u32 %v1783, 16
    %v1881 = vor.u32 %v1878, %v1879
    %v1882 = vshrl.u32 %v1792, 16
    %v1884 = vrot.slane %v1882, 7
    %v1885 = vshll.u32 %v1792, 16
    %v1887 = vor.u32 %v1884, %v1885
    %v1888 = vshrl.u32 %v1797, 16
    %v1890 = vrot.slane %v1888, 7
    %v1891 = vshll.u32 %v1797, 16
    %v1893 = vor.u32 %v1890, %v1891
    %v1910 = vsel %vm316, 0, %v1803
    %v1911 = vsel %vm316, 0, %v1809
    %v1912 = vsel %vm316, 0, %v1815
    %v1913 = vsel %vm316, 0, %v1821
    %v1914 = vsel %vm316, 0, %v1827
    %v1915 = vsel %vm316, 0, %v1833
    %v1916 = vsel %vm316, 0, %v1839
    %v1917 = vsel %vm316, 0, %v1845
    %v1918 = vsel %vm316, 0, %v1851
    %v1919 = vsel %vm316, 0, %v1857
    %v1920 = vsel %vm316, 0, %v1863
    %v1921 = vsel %vm316, 0, %v1869
    %v1922 = vsel %vm316, 0, %v1875
    %v1923 = vsel %vm316, 0, %v1881
    %v1924 = vsel %vm316, 0, %v1887
    %v1925 = vsel %vm316, 0, %v1893
    %vm1926 = vcmask 1044480
    %vm1927 = vsmask.f32 4352
    %vm1928 = vmand %vm1926, %vm1927
    %v1929 = vsel %vm1928, %v317, 0
    %v1930 = vsel %vm1928, %v1910, 0
    %v1931 = vsel %vm1928, %v1911, 0
    %v1932 = vsel %vm1928, %v1912, 0
    %v1933 = vsel %vm1928, %v1913, 0
    %v1934 = vsel %vm1928, %v1914, 0
    %v1935 = vsel %vm1928, %v1915, 0
    %v1936 = vsel %vm1928, %v1916, 0
    %v1937 = vsel %vm1928, %v1917, 0
    %v1938 = vsel %vm1928, %v1918, 0
    %v1939 = vsel %vm1928, %v1919, 0
    %v1940 = vsel %vm1928, %v1920, 0
    %v1941 = vsel %vm1928, %v1921, 0
    %v1942 = vsel %vm1928, %v1922, 0
    %v1943 = vsel %vm1928, %v1923, 0
    %v1944 = vsel %vm1928, %v1924, 0
    %v1945 = vsel %vm1928, %v1925, 0
    %v1947 = vshrl.u32 %v1929, 16
    %v1949 = vshll.u32 %v1929, 16
    %v1951 = vrot.slane %v1949, 1
    %v1952 = vor.u32 %v1947, %v1951
    %v1954 = vshrl.u32 %v1930, 16
    %v1956 = vshll.u32 %v1930, 16
    %v1958 = vrot.slane %v1956, 1
    %v1959 = vor.u32 %v1954, %v1958
    %v1961 = vshrl.u32 %v1931, 16
    %v1963 = vshll.u32 %v1931, 16
    %v1965 = vrot.slane %v1963, 1
    %v1966 = vor.u32 %v1961, %v1965
    %v1968 = vshrl.u32 %v1932, 16
    %v1970 = vshll.u32 %v1932, 16
    %v1972 = vrot.slane %v1970, 1
    %v1973 = vor.u32 %v1968, %v1972
    %v1975 = vshrl.u32 %v1933, 16
    %v1977 = vshll.u32 %v1933, 16
    %v1979 = vrot.slane %v1977, 1
    %v1980 = vor.u32 %v1975, %v1979
    %v1982 = vshrl.u32 %v1934, 16
    %v1984 = vshll.u32 %v1934, 16
    %v1986 = vrot.slane %v1984, 1
    %v1987 = vor.u32 %v1982, %v1986
    %v1989 = vshrl.u32 %v1935, 16
    %v1991 = vshll.u32 %v1935, 16
    %v1993 = vrot.slane %v1991, 1
    %v1994 = vor.u32 %v1989, %v1993
    %v1996 = vshrl.u32 %v1936, 16
    %v1998 = vshll.u32 %v1936, 16
    %v2000 = vrot.slane %v1998, 1
    %v2001 = vor.u32 %v1996, %v2000
    %v2003 = vshrl.u32 %v1938, 16
    %v2005 = vshll.u32 %v1938, 16
    %v2007 = vrot.slane %v2005, 1
    %v2008 = vor.u32 %v2003, %v2007
    %v2010 = vshrl.u32 %v1939, 16
    %v2012 = vshll.u32 %v1939, 16
    %v2014 = vrot.slane %v2012, 1
    %v2015 = vor.u32 %v2010, %v2014
    %v2017 = vshrl.u32 %v1940, 16
    %v2019 = vshll.u32 %v1940, 16
    %v2021 = vrot.slane %v2019, 1
    %v2022 = vor.u32 %v2017, %v2021
    %v2024 = vshrl.u32 %v1941, 16
    %v2026 = vshll.u32 %v1941, 16
    %v2028 = vrot.slane %v2026, 1
    %v2029 = vor.u32 %v2024, %v2028
    %v2031 = vshrl.u32 %v1942, 16
    %v2033 = vshll.u32 %v1942, 16
    %v2035 = vrot.slane %v2033, 1
    %v2036 = vor.u32 %v2031, %v2035
    %v2038 = vshrl.u32 %v1943, 16
    %v2040 = vshll.u32 %v1943, 16
    %v2042 = vrot.slane %v2040, 1
    %v2043 = vor.u32 %v2038, %v2042
    %v2045 = vshrl.u32 %v1944, 16
    %v2047 = vshll.u32 %v1944, 16
    %v2049 = vrot.slane %v2047, 1
    %v2050 = vor.u32 %v2045, %v2049
    %v2066 = vrot.slane %v1929, 1
    %v2067 = vrot.slane %v1930, 1
    %v2068 = vrot.slane %v1931, 1
    %v2069 = vrot.slane %v1932, 1
    %v2070 = vrot.slane %v1933, 1
    %v2071 = vrot.slane %v1934, 1
    %v2072 = vrot.slane %v1935, 1
    %v2073 = vrot.slane %v1936, 1
    %v2074 = vrot.slane %v1938, 1
    %v2075 = vrot.slane %v1939, 1
    %v2076 = vrot.slane %v1940, 1
    %v2077 = vrot.slane %v1941, 1
    %v2078 = vrot.slane %v1942, 1
    %v2079 = vrot.slane %v1943, 1
    %v2080 = vrot.slane %v1944, 1
    %v2082 = vshrl.u32 %v1937, 16
    %v2084 = vshll.u32 %v1937, 16
    %v2086 = vrot.slane %v2084, 1
    %v2087 = vor.u32 %v2082, %v2086
    %v2089 = vshrl.u32 %v1945, 16
    %v2091 = vshll.u32 %v1945, 16
    %v2093 = vrot.slane %v2091, 1
    %v2094 = vor.u32 %v2089, %v2093
    %v2097 = vrot.slane %v1937, 1
    %v2098 = vrot.slane %v1945, 1
    %v2099 = vunpack.c.l.b16 %v1929
    %v2100 = vunpack.c.l.b16 %v1952
    %v2101 = vunpack.c.l.b16 %v2066
    %v2102 = vunpack.c.l.b16 %v1930
    %v2103 = vunpack.c.l.b16 %v1959
    %v2104 = vunpack.c.l.b16 %v2067
    %v2105 = vunpack.c.l.b16 %v1931
    %v2106 = vunpack.c.l.b16 %v1966
    %v2107 = vunpack.c.l.b16 %v2068
    %v2108 = vunpack.c.l.b16 %v1932
    %v2109 = vunpack.c.l.b16 %v1973
    %v2110 = vunpack.c.l.b16 %v2069
    %v2111 = vunpack.c.l.b16 %v1933
    %v2112 = vunpack.c.l.b16 %v1980
    %v2113 = vunpack.c.l.b16 %v2070
    %v2114 = vunpack.c.l.b16 %v1934
    %v2115 = vunpack.c.l.b16 %v1987
    %v2116 = vunpack.c.l.b16 %v2071
    %v2117 = vunpack.c.l.b16 %v1935
    %v2118 = vunpack.c.l.b16 %v1994
    %v2119 = vunpack.c.l.b16 %v2072
    %v2120 = vunpack.c.l.b16 %v1936
    %v2121 = vunpack.c.l.b16 %v2001
    %v2122 = vunpack.c.l.b16 %v2073
    %v2123 = vunpack.c.l.b16 %v1937
    %v2124 = vunpack.c.l.b16 %v2087
    %v2125 = vunpack.c.l.b16 %v2097
    %v2126 = vunpack.c.l.b16 %v1938
    %v2127 = vunpack.c.l.b16 %v2008
    %v2128 = vunpack.c.l.b16 %v2074
    %v2129 = vunpack.c.l.b16 %v1939
    %v2130 = vunpack.c.l.b16 %v2015
    %v2131 = vunpack.c.l.b16 %v2075
    %v2132 = vunpack.c.l.b16 %v1940
    %v2133 = vunpack.c.l.b16 %v2022
    %v2134 = vunpack.c.l.b16 %v2076
    %v2135 = vunpack.c.l.b16 %v1941
    %v2136 = vunpack.c.l.b16 %v2029
    %v2137 = vunpack.c.l.b16 %v2077
    %v2138 = vunpack.c.l.b16 %v1942
    %v2139 = vunpack.c.l.b16 %v2036
    %v2140 = vunpack.c.l.b16 %v2078
    %v2141 = vunpack.c.l.b16 %v1943
    %v2142 = vunpack.c.l.b16 %v2043
    %v2143 = vunpack.c.l.b16 %v2079
    %v2144 = vunpack.c.l.b16 %v1944
    %v2145 = vunpack.c.l.b16 %v2050
    %v2146 = vunpack.c.l.b16 %v2080
    %v2147 = vunpack.c.l.b16 %v1945
    %v2148 = vunpack.c.l.b16 %v2094
    %v2149 = vunpack.c.l.b16 %v2098
    %v2150 = vld [vmem:[%s7] sm:$0xf]
    %v2151 = vld [vmem:[%s7 + $0x4] sm:$0xf]
    %v2152 = vld [vmem:[%s7 + $0x8] sm:$0xf]
    %v2153 = vld [vmem:[%s7 + $0xc] sm:$0xf]
    %v2154 = vld [vmem:[%s7 + $0x10] sm:$0xf]
    %v2155 = vld [vmem:[%s7 + $0x14] sm:$0xf]
    %v2156 = vld [vmem:[%s7 + $0x18] sm:$0xf]
    %v2157 = vld [vmem:[%s7 + $0x1c] sm:$0xf]
    %v2158 = vld [vmem:[%s7 + $0x20] sm:$0xf]
    %v2159 = vld [vmem:[%s7 + $0x24] sm:$0xf]
    %v2160 = vld [vmem:[%s7 + $0x28] sm:$0xf]
    %v2161 = vld [vmem:[%s7 + $0x2c] sm:$0xf]
    %v2162 = vld [vmem:[%s7 + $0x30] sm:$0xf]
    %v2163 = vld [vmem:[%s7 + $0x34] sm:$0xf]
    %v2164 = vld [vmem:[%s7 + $0x38] sm:$0xf]
    %v2165 = vld [vmem:[%s7 + $0x3c] sm:$0xf]
    %v2166 = vld [vmem:[%s7 + $0x40] sm:$0xf]
    %v2167 = vld [vmem:[%s7 + $0x44] sm:$0xf]
    %v2168 = vld [vmem:[%s7 + $0x48] sm:$0xf]
    %v2169 = vld [vmem:[%s7 + $0x4c] sm:$0xf]
    %v2170 = vld [vmem:[%s7 + $0x50] sm:$0xf]
    %v2171 = vld [vmem:[%s7 + $0x54] sm:$0xf]
    %v2172 = vld [vmem:[%s7 + $0x58] sm:$0xf]
    %v2173 = vld [vmem:[%s7 + $0x5c] sm:$0xf]
    %v2174 = vld [vmem:[%s7 + $0x60] sm:$0xf]
    %v2175 = vld [vmem:[%s7 + $0x64] sm:$0xf]
    %v2176 = vld [vmem:[%s7 + $0x68] sm:$0xf]
    %v2177 = vld [vmem:[%s7 + $0x6c] sm:$0xf]
    %v2178 = vld [vmem:[%s7 + $0x70] sm:$0xf]
    %v2179 = vld [vmem:[%s7 + $0x74] sm:$0xf]
    %v2180 = vld [vmem:[%s7 + $0x78] sm:$0xf]
    %v2181 = vld [vmem:[%s7 + $0x7c] sm:$0xf]
    %v2182 = vld [vmem:[%s7 + $0x80] sm:$0xf]
    %v2183 = vld [vmem:[%s7 + $0x84] sm:$0xf]
    %v2184 = vld [vmem:[%s7 + $0x88] sm:$0xf]
    %v2185 = vld [vmem:[%s7 + $0x8c] sm:$0xf]
    %v2186 = vld [vmem:[%s7 + $0x90] sm:$0xf]
    %v2187 = vld [vmem:[%s7 + $0x94] sm:$0xf]
    %v2188 = vld [vmem:[%s7 + $0x98] sm:$0xf]
    %v2189 = vld [vmem:[%s7 + $0x9c] sm:$0xf]
    %v2190 = vld [vmem:[%s7 + $0xa0] sm:$0xf]
    %v2191 = vld [vmem:[%s7 + $0xa4] sm:$0xf]
    %v2192 = vld [vmem:[%s7 + $0xa8] sm:$0xf]
    %v2193 = vld [vmem:[%s7 + $0xac] sm:$0xf]
    %v2194 = vld [vmem:[%s7 + $0xb0] sm:$0xf]
    %v2195 = vld [vmem:[%s7 + $0xb4] sm:$0xf]
    %v2196 = vld [vmem:[%s7 + $0xb8] sm:$0xf]
    %v2197 = vld [vmem:[%s7 + $0xbc] sm:$0xf]
    %v2198 = vld [vmem:[%s7 + $0xc0] sm:$0xf]
    %v2199 = vld [vmem:[%s7 + $0xc4] sm:$0xf]
    %v2200 = vld [vmem:[%s7 + $0xc8] sm:$0xf]
    %v2201 = vld [vmem:[%s7 + $0xcc] sm:$0xf]
    %v2202 = vld [vmem:[%s7 + $0xd0] sm:$0xf]
    %v2203 = vld [vmem:[%s7 + $0xd4] sm:$0xf]
    %v2204 = vld [vmem:[%s7 + $0xd8] sm:$0xf]
    %v2205 = vld [vmem:[%s7 + $0xdc] sm:$0xf]
    %v2206 = vld [vmem:[%s7 + $0xe0] sm:$0xf]
    %v2207 = vld [vmem:[%s7 + $0xe4] sm:$0xf]
    %v2208 = vld [vmem:[%s7 + $0xe8] sm:$0xf]
    %v2209 = vld [vmem:[%s7 + $0xec] sm:$0xf]
    %v2210 = vld [vmem:[%s7 + $0xf0] sm:$0xf]
    %v2211 = vld [vmem:[%s7 + $0xf4] sm:$0xf]
    %v2212 = vld [vmem:[%s7 + $0xf8] sm:$0xf]
    %v2213 = vld [vmem:[%s7 + $0xfc] sm:$0xf]
    %v2214 = vld [vmem:[%s7 + $0x100] sm:$0xf]
    %v2215 = vld [vmem:[%s7 + $0x104] sm:$0xf]
    %v2216 = vld [vmem:[%s7 + $0x108] sm:$0xf]
    %v2217 = vld [vmem:[%s7 + $0x10c] sm:$0xf]
    %v2218 = vld [vmem:[%s7 + $0x110] sm:$0xf]
    %v2219 = vld [vmem:[%s7 + $0x114] sm:$0xf]
    %v2220 = vld [vmem:[%s7 + $0x118] sm:$0xf]
    %v2221 = vld [vmem:[%s7 + $0x11c] sm:$0xf]
    %v2222 = vld [vmem:[%s7 + $0x120] sm:$0xf]
    %v2223 = vld [vmem:[%s7 + $0x124] sm:$0xf]
    %v2224 = vld [vmem:[%s7 + $0x128] sm:$0xf]
    %v2225 = vld [vmem:[%s7 + $0x12c] sm:$0xf]
    %v2226 = vld [vmem:[%s7 + $0x130] sm:$0xf]
    %v2227 = vld [vmem:[%s7 + $0x134] sm:$0xf]
    %v2228 = vld [vmem:[%s7 + $0x138] sm:$0xf]
    %v2229 = vld [vmem:[%s7 + $0x13c] sm:$0xf]
    %v2230 = vld [vmem:[%s7 + $0x140] sm:$0xf]
    %v2231 = vld [vmem:[%s7 + $0x144] sm:$0xf]
    %v2232 = vld [vmem:[%s7 + $0x148] sm:$0xf]
    %v2233 = vld [vmem:[%s7 + $0x14c] sm:$0xf]
    %v2234 = vld [vmem:[%s7 + $0x150] sm:$0xf]
    %v2235 = vld [vmem:[%s7 + $0x154] sm:$0xf]
    %v2236 = vld [vmem:[%s7 + $0x158] sm:$0xf]
    %v2237 = vld [vmem:[%s7 + $0x15c] sm:$0xf]
    %v2238 = vld [vmem:[%s7 + $0x160] sm:$0xf]
    %v2239 = vld [vmem:[%s7 + $0x164] sm:$0xf]
    %v2240 = vld [vmem:[%s7 + $0x168] sm:$0xf]
    %v2241 = vld [vmem:[%s7 + $0x16c] sm:$0xf]
    %v2242 = vld [vmem:[%s7 + $0x170] sm:$0xf]
    %v2243 = vld [vmem:[%s7 + $0x174] sm:$0xf]
    %v2244 = vld [vmem:[%s7 + $0x178] sm:$0xf]
    %v2245 = vld [vmem:[%s7 + $0x17c] sm:$0xf]
    %v2246 = vld [vmem:[%s7 + $0x180] sm:$0xf]
    %v2247 = vld [vmem:[%s7 + $0x184] sm:$0xf]
    %v2248 = vld [vmem:[%s7 + $0x188] sm:$0xf]
    %v2249 = vld [vmem:[%s7 + $0x18c] sm:$0xf]
    %v2250 = vld [vmem:[%s7 + $0x190] sm:$0xf]
    %v2251 = vld [vmem:[%s7 + $0x194] sm:$0xf]
    %v2252 = vld [vmem:[%s7 + $0x198] sm:$0xf]
    %v2253 = vld [vmem:[%s7 + $0x19c] sm:$0xf]
    %v2254 = vld [vmem:[%s7 + $0x1a0] sm:$0xf]
    %v2255 = vld [vmem:[%s7 + $0x1a4] sm:$0xf]
    %v2256 = vld [vmem:[%s7 + $0x1a8] sm:$0xf]
    %v2257 = vld [vmem:[%s7 + $0x1ac] sm:$0xf]
    %v2258 = vld [vmem:[%s7 + $0x1b0] sm:$0xf]
    %v2259 = vld [vmem:[%s7 + $0x1b4] sm:$0xf]
    %v2260 = vld [vmem:[%s7 + $0x1b8] sm:$0xf]
    %v2261 = vld [vmem:[%s7 + $0x1bc] sm:$0xf]
    %v2262 = vld [vmem:[%s7 + $0x1c0] sm:$0xf]
    %v2263 = vld [vmem:[%s7 + $0x1c4] sm:$0xf]
    %v2264 = vld [vmem:[%s7 + $0x1c8] sm:$0xf]
    %v2265 = vld [vmem:[%s7 + $0x1cc] sm:$0xf]
    %v2266 = vld [vmem:[%s7 + $0x1d0] sm:$0xf]
    %v2267 = vld [vmem:[%s7 + $0x1d4] sm:$0xf]
    %v2268 = vld [vmem:[%s7 + $0x1d8] sm:$0xf]
    %v2269 = vld [vmem:[%s7 + $0x1dc] sm:$0xf]
    %v2270 = vld [vmem:[%s7 + $0x1e0] sm:$0xf]
    %v2271 = vld [vmem:[%s7 + $0x1e4] sm:$0xf]
    %v2272 = vld [vmem:[%s7 + $0x1e8] sm:$0xf]
    %v2273 = vld [vmem:[%s7 + $0x1ec] sm:$0xf]
    %v2274 = vld [vmem:[%s7 + $0x1f0] sm:$0xf]
    %v2275 = vld [vmem:[%s7 + $0x1f4] sm:$0xf]
    %v2276 = vld [vmem:[%s7 + $0x1f8] sm:$0xf]
    %v2277 = vld [vmem:[%s7 + $0x1fc] sm:$0xf]
    %v2278 = vld [vmem:[%s7 + $0x200] sm:$0xf]
    %v2279 = vld [vmem:[%s7 + $0x204] sm:$0xf]
    %v2280 = vld [vmem:[%s7 + $0x208] sm:$0xf]
    %v2281 = vld [vmem:[%s7 + $0x20c] sm:$0xf]
    %v2282 = vld [vmem:[%s7 + $0x210] sm:$0xf]
    %v2283 = vld [vmem:[%s7 + $0x214] sm:$0xf]
    %v2284 = vld [vmem:[%s7 + $0x218] sm:$0xf]
    %v2285 = vld [vmem:[%s7 + $0x21c] sm:$0xf]
    %v2286 = vld [vmem:[%s7 + $0x220] sm:$0xf]
    %v2287 = vld [vmem:[%s7 + $0x224] sm:$0xf]
    %v2288 = vld [vmem:[%s7 + $0x228] sm:$0xf]
    %v2289 = vld [vmem:[%s7 + $0x22c] sm:$0xf]
    %v2290 = vld [vmem:[%s7 + $0x230] sm:$0xf]
    %v2291 = vld [vmem:[%s7 + $0x234] sm:$0xf]
    %v2292 = vld [vmem:[%s7 + $0x238] sm:$0xf]
    %v2293 = vld [vmem:[%s7 + $0x23c] sm:$0xf]
    %v2294 = vpack.c.b16 %v2102, %v2099
    %v2295 = vpack.c.b16 %v2103, %v2100
    %v2296 = vpack.c.b16 %v2104, %v2101
    %v2297 = vpack.c.b16 %v2105, %v2102
    %v2298 = vpack.c.b16 %v2106, %v2103
    %v2299 = vpack.c.b16 %v2107, %v2104
    %v2300 = vpack.c.b16 %v2108, %v2105
    %v2301 = vpack.c.b16 %v2109, %v2106
    %v2302 = vpack.c.b16 %v2110, %v2107
    %v2303 = vpack.c.b16 %v2111, %v2108
    %v2304 = vpack.c.b16 %v2112, %v2109
    %v2305 = vpack.c.b16 %v2113, %v2110
    %v2306 = vpack.c.b16 %v2114, %v2111
    %v2307 = vpack.c.b16 %v2115, %v2112
    %v2308 = vpack.c.b16 %v2116, %v2113
    %v2309 = vpack.c.b16 %v2117, %v2114
    %v2310 = vpack.c.b16 %v2118, %v2115
    %v2311 = vpack.c.b16 %v2119, %v2116
    %v2312 = vpack.c.b16 %v2120, %v2117
    %v2313 = vpack.c.b16 %v2121, %v2118
    %v2314 = vpack.c.b16 %v2122, %v2119
    %v2315 = vpack.c.b16 %v2123, %v2120
    %v2316 = vpack.c.b16 %v2124, %v2121
    %v2317 = vpack.c.b16 %v2125, %v2122
    %v2318 = vpack.c.b16 %v2099, %v2123
    %v2319 = vpack.c.b16 %v2100, %v2124
    %v2320 = vpack.c.b16 %v2101, %v2125
    %v2321 = vpack.c.b16 %v2126, %v2099
    %v2322 = vpack.c.b16 %v2127, %v2100
    %v2323 = vpack.c.b16 %v2128, %v2101
    %v2324 = vpack.c.b16 %v2129, %v2126
    %v2325 = vpack.c.b16 %v2130, %v2127
    %v2326 = vpack.c.b16 %v2131, %v2128
    %v2327 = vpack.c.b16 %v2132, %v2129
    %v2328 = vpack.c.b16 %v2133, %v2130
    %v2329 = vpack.c.b16 %v2134, %v2131
    %v2330 = vpack.c.b16 %v2135, %v2132
    %v2331 = vpack.c.b16 %v2136, %v2133
    %v2332 = vpack.c.b16 %v2137, %v2134
    %v2333 = vpack.c.b16 %v2138, %v2135
    %v2334 = vpack.c.b16 %v2139, %v2136
    %v2335 = vpack.c.b16 %v2140, %v2137
    %v2336 = vpack.c.b16 %v2141, %v2138
    %v2337 = vpack.c.b16 %v2142, %v2139
    %v2338 = vpack.c.b16 %v2143, %v2140
    %v2339 = vpack.c.b16 %v2144, %v2141
    %v2340 = vpack.c.b16 %v2145, %v2142
    %v2341 = vpack.c.b16 %v2146, %v2143
    %v2342 = vpack.c.b16 %v2147, %v2144
    %v2343 = vpack.c.b16 %v2148, %v2145
    %v2344 = vpack.c.b16 %v2149, %v2146
    %v2345 = vpack.c.b16 %v2099, %v2147
    %v2346 = vpack.c.b16 %v2100, %v2148
    %v2347 = vpack.c.b16 %v2101, %v2149
    %v2546 = vunpack.c.l.b16 %v2150
    %v2547 = vunpack.c.l.b16 %v2151
    %v2548 = vunpack.c.l.b16 %v2152
    %v2549 = vunpack.c.l.b16 %v2153
    %v2550 = vunpack.c.l.b16 %v2154
    %v2551 = vunpack.c.l.b16 %v2155
    %v2552 = vunpack.c.l.b16 %v2156
    %v2553 = vunpack.c.l.b16 %v2157
    %v2554 = vunpack.c.l.b16 %v2158
    %v2555 = vunpack.c.l.b16 %v2159
    %v2556 = vunpack.c.l.b16 %v2160
    %v2557 = vunpack.c.l.b16 %v2161
    %v2558 = vunpack.c.l.b16 %v2162
    %v2559 = vunpack.c.l.b16 %v2163
    %v2560 = vunpack.c.l.b16 %v2164
    %v2561 = vunpack.c.l.b16 %v2165
    %v2562 = vunpack.c.l.b16 %v2166
    %v2563 = vunpack.c.l.b16 %v2167
    %v2564 = vunpack.c.l.b16 %v2168
    %v2565 = vunpack.c.l.b16 %v2169
    %v2566 = vunpack.c.l.b16 %v2170
    %v2567 = vunpack.c.l.b16 %v2171
    %v2568 = vunpack.c.l.b16 %v2172
    %v2569 = vunpack.c.l.b16 %v2173
    %v2570 = vunpack.c.l.b16 %v2174
    %v2571 = vunpack.c.l.b16 %v2175
    %v2572 = vunpack.c.l.b16 %v2176
    %v2573 = vunpack.c.l.b16 %v2177
    %v2574 = vunpack.c.l.b16 %v2178
    %v2575 = vunpack.c.l.b16 %v2179
    %v2576 = vunpack.c.l.b16 %v2180
    %v2577 = vunpack.c.l.b16 %v2181
    %v2578 = vunpack.c.l.b16 %v2182
    %v2579 = vunpack.c.l.b16 %v2183
    %v2580 = vunpack.c.l.b16 %v2184
    %v2581 = vunpack.c.l.b16 %v2185
    %v2582 = vunpack.c.l.b16 %v2186
    %v2583 = vunpack.c.l.b16 %v2187
    %v2584 = vunpack.c.l.b16 %v2188
    %v2585 = vunpack.c.l.b16 %v2189
    %v2586 = vunpack.c.l.b16 %v2190
    %v2587 = vunpack.c.l.b16 %v2191
    %v2588 = vunpack.c.l.b16 %v2192
    %v2589 = vunpack.c.l.b16 %v2193
    %v2590 = vunpack.c.l.b16 %v2194
    %v2591 = vunpack.c.l.b16 %v2195
    %v2592 = vunpack.c.l.b16 %v2196
    %v2593 = vunpack.c.l.b16 %v2197
    %v2594 = vunpack.c.l.b16 %v2198
    %v2595 = vunpack.c.l.b16 %v2199
    %v2596 = vunpack.c.l.b16 %v2200
    %v2597 = vunpack.c.l.b16 %v2201
    %v2598 = vunpack.c.l.b16 %v2202
    %v2599 = vunpack.c.l.b16 %v2203
    %v2600 = vunpack.c.l.b16 %v2204
    %v2601 = vunpack.c.l.b16 %v2205
    %v2602 = vunpack.c.l.b16 %v2206
    %v2603 = vunpack.c.l.b16 %v2207
    %v2604 = vunpack.c.l.b16 %v2208
    %v2605 = vunpack.c.l.b16 %v2209
    %v2606 = vunpack.c.l.b16 %v2210
    %v2607 = vunpack.c.l.b16 %v2211
    %v2608 = vunpack.c.l.b16 %v2212
    %v2609 = vunpack.c.l.b16 %v2213
    %v2610 = vunpack.c.l.b16 %v2214
    %v2611 = vunpack.c.l.b16 %v2215
    %v2612 = vunpack.c.l.b16 %v2216
    %v2613 = vunpack.c.l.b16 %v2217
    %v2614 = vunpack.c.l.b16 %v2218
    %v2615 = vunpack.c.l.b16 %v2219
    %v2616 = vunpack.c.l.b16 %v2220
    %v2617 = vunpack.c.l.b16 %v2221
    %v2618 = vunpack.c.l.b16 %v2222
    %v2619 = vunpack.c.l.b16 %v2223
    %v2620 = vunpack.c.l.b16 %v2224
    %v2621 = vunpack.c.l.b16 %v2225
    %v2622 = vunpack.c.l.b16 %v2226
    %v2623 = vunpack.c.l.b16 %v2227
    %v2624 = vunpack.c.l.b16 %v2228
    %v2625 = vunpack.c.l.b16 %v2229
    %v2626 = vunpack.c.l.b16 %v2230
    %v2627 = vunpack.c.l.b16 %v2231
    %v2628 = vunpack.c.l.b16 %v2232
    %v2629 = vunpack.c.l.b16 %v2233
    %v2630 = vunpack.c.l.b16 %v2234
    %v2631 = vunpack.c.l.b16 %v2235
    %v2632 = vunpack.c.l.b16 %v2236
    %v2633 = vunpack.c.l.b16 %v2237
    %v2634 = vunpack.c.l.b16 %v2238
    %v2635 = vunpack.c.l.b16 %v2239
    %v2636 = vunpack.c.l.b16 %v2240
    %v2637 = vunpack.c.l.b16 %v2241
    %v2638 = vunpack.c.l.b16 %v2242
    %v2639 = vunpack.c.l.b16 %v2243
    %v2640 = vunpack.c.l.b16 %v2244
    %v2641 = vunpack.c.l.b16 %v2245
    %v2642 = vunpack.c.l.b16 %v2246
    %v2643 = vunpack.c.l.b16 %v2247
    %v2644 = vunpack.c.l.b16 %v2248
    %v2645 = vunpack.c.l.b16 %v2249
    %v2646 = vunpack.c.l.b16 %v2250
    %v2647 = vunpack.c.l.b16 %v2251
    %v2648 = vunpack.c.l.b16 %v2252
    %v2649 = vunpack.c.l.b16 %v2253
    %v2650 = vunpack.c.l.b16 %v2254
    %v2651 = vunpack.c.l.b16 %v2255
    %v2652 = vunpack.c.l.b16 %v2256
    %v2653 = vunpack.c.l.b16 %v2257
    %v2654 = vunpack.c.l.b16 %v2258
    %v2655 = vunpack.c.l.b16 %v2259
    %v2656 = vunpack.c.l.b16 %v2260
    %v2657 = vunpack.c.l.b16 %v2261
    %v2658 = vunpack.c.l.b16 %v2262
    %v2659 = vunpack.c.l.b16 %v2263
    %v2660 = vunpack.c.l.b16 %v2264
    %v2661 = vunpack.c.l.b16 %v2265
    %v2662 = vunpack.c.l.b16 %v2266
    %v2663 = vunpack.c.l.b16 %v2267
    %v2664 = vunpack.c.l.b16 %v2268
    %v2665 = vunpack.c.l.b16 %v2269
    %v2666 = vunpack.c.l.b16 %v2270
    %v2667 = vunpack.c.l.b16 %v2271
    %v2668 = vunpack.c.l.b16 %v2272
    %v2669 = vunpack.c.l.b16 %v2273
    %v2670 = vunpack.c.l.b16 %v2274
    %v2671 = vunpack.c.l.b16 %v2275
    %v2672 = vunpack.c.l.b16 %v2276
    %v2673 = vunpack.c.l.b16 %v2277
    %v2674 = vunpack.c.l.b16 %v2278
    %v2675 = vunpack.c.l.b16 %v2279
    %v2676 = vunpack.c.l.b16 %v2280
    %v2677 = vunpack.c.l.b16 %v2281
    %v2678 = vunpack.c.l.b16 %v2282
    %v2679 = vunpack.c.l.b16 %v2283
    %v2680 = vunpack.c.l.b16 %v2284
    %v2681 = vunpack.c.l.b16 %v2285
    %v2682 = vunpack.c.l.b16 %v2286
    %v2683 = vunpack.c.l.b16 %v2287
    %v2684 = vunpack.c.l.b16 %v2288
    %v2685 = vunpack.c.l.b16 %v2289
    %v2686 = vunpack.c.l.b16 %v2290
    %v2687 = vunpack.c.l.b16 %v2291
    %v2688 = vunpack.c.l.b16 %v2292
    %v2689 = vunpack.c.l.b16 %v2293
    %v2690 = vpack.c.b16 %v2547, %v2546
    %v2691 = vpack.c.b16 %v2549, %v2548
    %v2692 = vpack.c.b16 %v2551, %v2550
    %v2693 = vpack.c.b16 %v2553, %v2552
    %v2694 = vpack.c.b16 %v2555, %v2554
    %v2695 = vpack.c.b16 %v2557, %v2556
    %v2696 = vpack.c.b16 %v2559, %v2558
    %v2697 = vpack.c.b16 %v2561, %v2560
    %v2698 = vpack.c.b16 %v2563, %v2562
    %v2699 = vpack.c.b16 %v2565, %v2564
    %v2700 = vpack.c.b16 %v2567, %v2566
    %v2701 = vpack.c.b16 %v2569, %v2568
    %v2702 = vpack.c.b16 %v2571, %v2570
    %v2703 = vpack.c.b16 %v2573, %v2572
    %v2704 = vpack.c.b16 %v2575, %v2574
    %v2705 = vpack.c.b16 %v2577, %v2576
    %v2706 = vpack.c.b16 %v2579, %v2578
    %v2707 = vpack.c.b16 %v2581, %v2580
    %v2708 = vpack.c.b16 %v2583, %v2582
    %v2709 = vpack.c.b16 %v2585, %v2584
    %v2710 = vpack.c.b16 %v2587, %v2586
    %v2711 = vpack.c.b16 %v2589, %v2588
    %v2712 = vpack.c.b16 %v2591, %v2590
    %v2713 = vpack.c.b16 %v2593, %v2592
    %v2714 = vpack.c.b16 %v2595, %v2594
    %v2715 = vpack.c.b16 %v2597, %v2596
    %v2716 = vpack.c.b16 %v2599, %v2598
    %v2717 = vpack.c.b16 %v2601, %v2600
    %v2718 = vpack.c.b16 %v2603, %v2602
    %v2719 = vpack.c.b16 %v2605, %v2604
    %v2720 = vpack.c.b16 %v2607, %v2606
    %v2721 = vpack.c.b16 %v2609, %v2608
    %v2722 = vpack.c.b16 %v2611, %v2610
    %v2723 = vpack.c.b16 %v2613, %v2612
    %v2724 = vpack.c.b16 %v2615, %v2614
    %v2725 = vpack.c.b16 %v2617, %v2616
    %v2726 = vpack.c.b16 %v2619, %v2618
    %v2727 = vpack.c.b16 %v2621, %v2620
    %v2728 = vpack.c.b16 %v2623, %v2622
    %v2729 = vpack.c.b16 %v2625, %v2624
    %v2730 = vpack.c.b16 %v2627, %v2626
    %v2731 = vpack.c.b16 %v2629, %v2628
    %v2732 = vpack.c.b16 %v2631, %v2630
    %v2733 = vpack.c.b16 %v2633, %v2632
    %v2734 = vpack.c.b16 %v2635, %v2634
    %v2735 = vpack.c.b16 %v2637, %v2636
    %v2736 = vpack.c.b16 %v2639, %v2638
    %v2737 = vpack.c.b16 %v2641, %v2640
    %v2738 = vpack.c.b16 %v2643, %v2642
    %v2739 = vpack.c.b16 %v2645, %v2644
    %v2740 = vpack.c.b16 %v2647, %v2646
    %v2741 = vpack.c.b16 %v2649, %v2648
    %v2742 = vpack.c.b16 %v2651, %v2650
    %v2743 = vpack.c.b16 %v2653, %v2652
    %v2744 = vpack.c.b16 %v2655, %v2654
    %v2745 = vpack.c.b16 %v2657, %v2656
    %v2746 = vpack.c.b16 %v2659, %v2658
    %v2747 = vpack.c.b16 %v2661, %v2660
    %v2748 = vpack.c.b16 %v2663, %v2662
    %v2749 = vpack.c.b16 %v2665, %v2664
    %v2750 = vpack.c.b16 %v2667, %v2666
    %v2751 = vpack.c.b16 %v2669, %v2668
    %v2752 = vpack.c.b16 %v2671, %v2670
    %v2753 = vpack.c.b16 %v2673, %v2672
    %v2754 = vpack.c.b16 %v2675, %v2674
    %v2755 = vpack.c.b16 %v2677, %v2676
    %v2756 = vpack.c.b16 %v2679, %v2678
    %v2757 = vpack.c.b16 %v2681, %v2680
    %v2758 = vpack.c.b16 %v2683, %v2682
    %v2759 = vpack.c.b16 %v2685, %v2684
    %v2760 = vpack.c.b16 %v2687, %v2686
    %v2761 = vpack.c.b16 %v2689, %v2688
    %2834 = vmatpush.bf16.msra.mxu0 %v2697
    %2835 = vmatpush.bf16.msra.mxu0 %v2696
    %2836 = vmatpush.bf16.msra.mxu0 %v2695
    %2837 = vmatpush.bf16.msra.mxu0 %v2694
    %2838 = vmatpush.bf16.msra.mxu0 %v2693
    %2839 = vmatpush.bf16.msra.mxu0 %v2692
    %2840 = vmatpush.bf16.msra.mxu0 %v2691
    %2841 = vmatpush.bf16.msra.mxu0 %v2690
    %2842 = vmatmul.bf16.gmra.mxu0 %v2294
    %v2843 = vpop.f32.mrf.mxu0
    %v2844 = vadd.f32 0.0, %v2843
    %v2845 = vpop.f32.mrf.mxu0
    %v2846 = vadd.f32 0.0, %v2845
    %2847 = vmatmul.bf16.gmra.mxu0 %v2300
    %v2848 = vpop.f32.mrf.mxu0
    %v2849 = vadd.f32 0.0, %v2848
    %v2850 = vpop.f32.mrf.mxu0
    %v2851 = vadd.f32 0.0, %v2850
    %2852 = vmatmul.bf16.gmra.mxu0 %v2306
    %v2853 = vpop.f32.mrf.mxu0
    %v2854 = vadd.f32 0.0, %v2853
    %v2855 = vpop.f32.mrf.mxu0
    %v2856 = vadd.f32 0.0, %v2855
    %2857 = vmatmul.bf16.gmra.mxu0 %v2312
    %v2858 = vpop.f32.mrf.mxu0
    %v2859 = vadd.f32 0.0, %v2858
    %v2860 = vpop.f32.mrf.mxu0
    %v2861 = vadd.f32 0.0, %v2860
    %2862 = vmatmul.bf16.gmra.mxu0 %v2321
    %v2863 = vpop.f32.mrf.mxu0
    %v2864 = vadd.f32 0.0, %v2863
    %v2865 = vpop.f32.mrf.mxu0
    %v2866 = vadd.f32 0.0, %v2865
    %2867 = vmatmul.bf16.gmra.mxu0 %v2327
    %v2868 = vpop.f32.mrf.mxu0
    %v2869 = vadd.f32 0.0, %v2868
    %v2870 = vpop.f32.mrf.mxu0
    %v2871 = vadd.f32 0.0, %v2870
    %2872 = vmatmul.bf16.gmra.mxu0 %v2333
    %v2873 = vpop.f32.mrf.mxu0
    %v2874 = vadd.f32 0.0, %v2873
    %v2875 = vpop.f32.mrf.mxu0
    %v2876 = vadd.f32 0.0, %v2875
    %2877 = vmatmul.bf16.gmra.mxu0 %v2339
    %v2878 = vpop.f32.mrf.mxu0
    %v2879 = vadd.f32 0.0, %v2878
    %v2880 = vpop.f32.mrf.mxu0
    %v2881 = vadd.f32 0.0, %v2880
    %2882 = vdwg.mxu0
    %2883 = vmatpush.bf16.msra.mxu0 %v2705
    %2884 = vmatpush.bf16.msra.mxu0 %v2704
    %2885 = vmatpush.bf16.msra.mxu0 %v2703
    %2886 = vmatpush.bf16.msra.mxu0 %v2702
    %2887 = vmatpush.bf16.msra.mxu0 %v2701
    %2888 = vmatpush.bf16.msra.mxu0 %v2700
    %2889 = vmatpush.bf16.msra.mxu0 %v2699
    %2890 = vmatpush.bf16.msra.mxu0 %v2698
    %2891 = vmatmul.bf16.gmra.mxu0 %v2295
    %v2892 = vpop.f32.mrf.mxu0
    %v2893 = vadd.f32 %v2844, %v2892
    %v2894 = vpop.f32.mrf.mxu0
    %v2895 = vadd.f32 %v2846, %v2894
    %2896 = vmatmul.bf16.gmra.mxu0 %v2301
    %v2897 = vpop.f32.mrf.mxu0
    %v2898 = vadd.f32 %v2849, %v2897
    %v2899 = vpop.f32.mrf.mxu0
    %v2900 = vadd.f32 %v2851, %v2899
    %2901 = vmatmul.bf16.gmra.mxu0 %v2307
    %v2902 = vpop.f32.mrf.mxu0
    %v2903 = vadd.f32 %v2854, %v2902
    %v2904 = vpop.f32.mrf.mxu0
    %v2905 = vadd.f32 %v2856, %v2904
    %2906 = vmatmul.bf16.gmra.mxu0 %v2313
    %v2907 = vpop.f32.mrf.mxu0
    %v2908 = vadd.f32 %v2859, %v2907
    %v2909 = vpop.f32.mrf.mxu0
    %v2910 = vadd.f32 %v2861, %v2909
    %2911 = vmatmul.bf16.gmra.mxu0 %v2322
    %v2912 = vpop.f32.mrf.mxu0
    %v2913 = vadd.f32 %v2864, %v2912
    %v2914 = vpop.f32.mrf.mxu0
    %v2915 = vadd.f32 %v2866, %v2914
    %2916 = vmatmul.bf16.gmra.mxu0 %v2328
    %v2917 = vpop.f32.mrf.mxu0
    %v2918 = vadd.f32 %v2869, %v2917
    %v2919 = vpop.f32.mrf.mxu0
    %v2920 = vadd.f32 %v2871, %v2919
    %2921 = vmatmul.bf16.gmra.mxu0 %v2334
    %v2922 = vpop.f32.mrf.mxu0
    %v2923 = vadd.f32 %v2874, %v2922
    %v2924 = vpop.f32.mrf.mxu0
    %v2925 = vadd.f32 %v2876, %v2924
    %2926 = vmatmul.bf16.gmra.mxu0 %v2340
    %v2927 = vpop.f32.mrf.mxu0
    %v2928 = vadd.f32 %v2879, %v2927
    %v2929 = vpop.f32.mrf.mxu0
    %v2930 = vadd.f32 %v2881, %v2929
    %2931 = vdwg.mxu0
    %2932 = vmatpush.bf16.msra.mxu0 %v2713
    %2933 = vmatpush.bf16.msra.mxu0 %v2712
    %2934 = vmatpush.bf16.msra.mxu0 %v2711
    %2935 = vmatpush.bf16.msra.mxu0 %v2710
    %2936 = vmatpush.bf16.msra.mxu0 %v2709
    %2937 = vmatpush.bf16.msra.mxu0 %v2708
    %2938 = vmatpush.bf16.msra.mxu0 %v2707
    %2939 = vmatpush.bf16.msra.mxu0 %v2706
    %2940 = vmatmul.bf16.gmra.mxu0 %v2296
    %v2941 = vpop.f32.mrf.mxu0
    %v2942 = vadd.f32 %v2893, %v2941
    %v2943 = vpop.f32.mrf.mxu0
    %v2944 = vadd.f32 %v2895, %v2943
    %2945 = vmatmul.bf16.gmra.mxu0 %v2302
    %v2946 = vpop.f32.mrf.mxu0
    %v2947 = vadd.f32 %v2898, %v2946
    %v2948 = vpop.f32.mrf.mxu0
    %v2949 = vadd.f32 %v2900, %v2948
    %2950 = vmatmul.bf16.gmra.mxu0 %v2308
    %v2951 = vpop.f32.mrf.mxu0
    %v2952 = vadd.f32 %v2903, %v2951
    %v2953 = vpop.f32.mrf.mxu0
    %v2954 = vadd.f32 %v2905, %v2953
    %2955 = vmatmul.bf16.gmra.mxu0 %v2314
    %v2956 = vpop.f32.mrf.mxu0
    %v2957 = vadd.f32 %v2908, %v2956
    %v2958 = vpop.f32.mrf.mxu0
    %v2959 = vadd.f32 %v2910, %v2958
    %2960 = vmatmul.bf16.gmra.mxu0 %v2323
    %v2961 = vpop.f32.mrf.mxu0
    %v2962 = vadd.f32 %v2913, %v2961
    %v2963 = vpop.f32.mrf.mxu0
    %v2964 = vadd.f32 %v2915, %v2963
    %2965 = vmatmul.bf16.gmra.mxu0 %v2329
    %v2966 = vpop.f32.mrf.mxu0
    %v2967 = vadd.f32 %v2918, %v2966
    %v2968 = vpop.f32.mrf.mxu0
    %v2969 = vadd.f32 %v2920, %v2968
    %2970 = vmatmul.bf16.gmra.mxu0 %v2335
    %v2971 = vpop.f32.mrf.mxu0
    %v2972 = vadd.f32 %v2923, %v2971
    %v2973 = vpop.f32.mrf.mxu0
    %v2974 = vadd.f32 %v2925, %v2973
    %2975 = vmatmul.bf16.gmra.mxu0 %v2341
    %v2976 = vpop.f32.mrf.mxu0
    %v2977 = vadd.f32 %v2928, %v2976
    %v2978 = vpop.f32.mrf.mxu0
    %v2979 = vadd.f32 %v2930, %v2978
    %2980 = vdwg.mxu0
    %2981 = vmatpush.bf16.msra.mxu0 %v2721
    %2982 = vmatpush.bf16.msra.mxu0 %v2720
    %2983 = vmatpush.bf16.msra.mxu0 %v2719
    %2984 = vmatpush.bf16.msra.mxu0 %v2718
    %2985 = vmatpush.bf16.msra.mxu0 %v2717
    %2986 = vmatpush.bf16.msra.mxu0 %v2716
    %2987 = vmatpush.bf16.msra.mxu0 %v2715
    %2988 = vmatpush.bf16.msra.mxu0 %v2714
    %2989 = vmatmul.bf16.gmra.mxu0 %v2297
    %v2990 = vpop.f32.mrf.mxu0
    %v2991 = vadd.f32 %v2942, %v2990
    %v2992 = vpop.f32.mrf.mxu0
    %v2993 = vadd.f32 %v2944, %v2992
    %2994 = vmatmul.bf16.gmra.mxu0 %v2303
    %v2995 = vpop.f32.mrf.mxu0
    %v2996 = vadd.f32 %v2947, %v2995
    %v2997 = vpop.f32.mrf.mxu0
    %v2998 = vadd.f32 %v2949, %v2997
    %2999 = vmatmul.bf16.gmra.mxu0 %v2309
    %v3000 = vpop.f32.mrf.mxu0
    %v3001 = vadd.f32 %v2952, %v3000
    %v3002 = vpop.f32.mrf.mxu0
    %v3003 = vadd.f32 %v2954, %v3002
    %3004 = vmatmul.bf16.gmra.mxu0 %v2315
    %v3005 = vpop.f32.mrf.mxu0
    %v3006 = vadd.f32 %v2957, %v3005
    %v3007 = vpop.f32.mrf.mxu0
    %v3008 = vadd.f32 %v2959, %v3007
    %3009 = vmatmul.bf16.gmra.mxu0 %v2324
    %v3010 = vpop.f32.mrf.mxu0
    %v3011 = vadd.f32 %v2962, %v3010
    %v3012 = vpop.f32.mrf.mxu0
    %v3013 = vadd.f32 %v2964, %v3012
    %3014 = vmatmul.bf16.gmra.mxu0 %v2330
    %v3015 = vpop.f32.mrf.mxu0
    %v3016 = vadd.f32 %v2967, %v3015
    %v3017 = vpop.f32.mrf.mxu0
    %v3018 = vadd.f32 %v2969, %v3017
    %3019 = vmatmul.bf16.gmra.mxu0 %v2336
    %v3020 = vpop.f32.mrf.mxu0
    %v3021 = vadd.f32 %v2972, %v3020
    %v3022 = vpop.f32.mrf.mxu0
    %v3023 = vadd.f32 %v2974, %v3022
    %3024 = vmatmul.bf16.gmra.mxu0 %v2342
    %v3025 = vpop.f32.mrf.mxu0
    %v3026 = vadd.f32 %v2977, %v3025
    %v3027 = vpop.f32.mrf.mxu0
    %v3028 = vadd.f32 %v2979, %v3027
    %3029 = vdwg.mxu0
    %3030 = vmatpush.bf16.msra.mxu0 %v2729
    %3031 = vmatpush.bf16.msra.mxu0 %v2728
    %3032 = vmatpush.bf16.msra.mxu0 %v2727
    %3033 = vmatpush.bf16.msra.mxu0 %v2726
    %3034 = vmatpush.bf16.msra.mxu0 %v2725
    %3035 = vmatpush.bf16.msra.mxu0 %v2724
    %3036 = vmatpush.bf16.msra.mxu0 %v2723
    %3037 = vmatpush.bf16.msra.mxu0 %v2722
    %3038 = vmatmul.bf16.gmra.mxu0 %v2298
    %v3039 = vpop.f32.mrf.mxu0
    %v3040 = vadd.f32 %v2991, %v3039
    %v3041 = vpop.f32.mrf.mxu0
    %v3042 = vadd.f32 %v2993, %v3041
    %3043 = vmatmul.bf16.gmra.mxu0 %v2304
    %v3044 = vpop.f32.mrf.mxu0
    %v3045 = vadd.f32 %v2996, %v3044
    %v3046 = vpop.f32.mrf.mxu0
    %v3047 = vadd.f32 %v2998, %v3046
    %3048 = vmatmul.bf16.gmra.mxu0 %v2310
    %v3049 = vpop.f32.mrf.mxu0
    %v3050 = vadd.f32 %v3001, %v3049
    %v3051 = vpop.f32.mrf.mxu0
    %v3052 = vadd.f32 %v3003, %v3051
    %3053 = vmatmul.bf16.gmra.mxu0 %v2316
    %v3054 = vpop.f32.mrf.mxu0
    %v3055 = vadd.f32 %v3006, %v3054
    %v3056 = vpop.f32.mrf.mxu0
    %v3057 = vadd.f32 %v3008, %v3056
    %3058 = vmatmul.bf16.gmra.mxu0 %v2325
    %v3059 = vpop.f32.mrf.mxu0
    %v3060 = vadd.f32 %v3011, %v3059
    %v3061 = vpop.f32.mrf.mxu0
    %v3062 = vadd.f32 %v3013, %v3061
    %3063 = vmatmul.bf16.gmra.mxu0 %v2331
    %v3064 = vpop.f32.mrf.mxu0
    %v3065 = vadd.f32 %v3016, %v3064
    %v3066 = vpop.f32.mrf.mxu0
    %v3067 = vadd.f32 %v3018, %v3066
    %3068 = vmatmul.bf16.gmra.mxu0 %v2337
    %v3069 = vpop.f32.mrf.mxu0
    %v3070 = vadd.f32 %v3021, %v3069
    %v3071 = vpop.f32.mrf.mxu0
    %v3072 = vadd.f32 %v3023, %v3071
    %3073 = vmatmul.bf16.gmra.mxu0 %v2343
    %v3074 = vpop.f32.mrf.mxu0
    %v3075 = vadd.f32 %v3026, %v3074
    %v3076 = vpop.f32.mrf.mxu0
    %v3077 = vadd.f32 %v3028, %v3076
    %3078 = vdwg.mxu0
    %3079 = vmatpush.bf16.msra.mxu0 %v2737
    %3080 = vmatpush.bf16.msra.mxu0 %v2736
    %3081 = vmatpush.bf16.msra.mxu0 %v2735
    %3082 = vmatpush.bf16.msra.mxu0 %v2734
    %3083 = vmatpush.bf16.msra.mxu0 %v2733
    %3084 = vmatpush.bf16.msra.mxu0 %v2732
    %3085 = vmatpush.bf16.msra.mxu0 %v2731
    %3086 = vmatpush.bf16.msra.mxu0 %v2730
    %3087 = vmatmul.bf16.gmra.mxu0 %v2299
    %v3088 = vpop.f32.mrf.mxu0
    %v3089 = vadd.f32 %v3040, %v3088
    %v3090 = vpop.f32.mrf.mxu0
    %v3091 = vadd.f32 %v3042, %v3090
    %3092 = vmatmul.bf16.gmra.mxu0 %v2305
    %v3093 = vpop.f32.mrf.mxu0
    %v3094 = vadd.f32 %v3045, %v3093
    %v3095 = vpop.f32.mrf.mxu0
    %v3096 = vadd.f32 %v3047, %v3095
    %3097 = vmatmul.bf16.gmra.mxu0 %v2311
    %v3098 = vpop.f32.mrf.mxu0
    %v3099 = vadd.f32 %v3050, %v3098
    %v3100 = vpop.f32.mrf.mxu0
    %v3101 = vadd.f32 %v3052, %v3100
    %3102 = vmatmul.bf16.gmra.mxu0 %v2317
    %v3103 = vpop.f32.mrf.mxu0
    %v3104 = vadd.f32 %v3055, %v3103
    %v3105 = vpop.f32.mrf.mxu0
    %v3106 = vadd.f32 %v3057, %v3105
    %3107 = vmatmul.bf16.gmra.mxu0 %v2326
    %v3108 = vpop.f32.mrf.mxu0
    %v3109 = vadd.f32 %v3060, %v3108
    %v3110 = vpop.f32.mrf.mxu0
    %v3111 = vadd.f32 %v3062, %v3110
    %3112 = vmatmul.bf16.gmra.mxu0 %v2332
    %v3113 = vpop.f32.mrf.mxu0
    %v3114 = vadd.f32 %v3065, %v3113
    %v3115 = vpop.f32.mrf.mxu0
    %v3116 = vadd.f32 %v3067, %v3115
    %3117 = vmatmul.bf16.gmra.mxu0 %v2338
    %v3118 = vpop.f32.mrf.mxu0
    %v3119 = vadd.f32 %v3070, %v3118
    %v3120 = vpop.f32.mrf.mxu0
    %v3121 = vadd.f32 %v3072, %v3120
    %3122 = vmatmul.bf16.gmra.mxu0 %v2344
    %v3123 = vpop.f32.mrf.mxu0
    %v3124 = vadd.f32 %v3075, %v3123
    %v3125 = vpop.f32.mrf.mxu0
    %v3126 = vadd.f32 %v3077, %v3125
    %3127 = vdwg.mxu0
    %3128 = vmatpush.bf16.msra.mxu0 %v2745
    %3129 = vmatpush.bf16.msra.mxu0 %v2744
    %3130 = vmatpush.bf16.msra.mxu0 %v2743
    %3131 = vmatpush.bf16.msra.mxu0 %v2742
    %3132 = vmatpush.bf16.msra.mxu0 %v2741
    %3133 = vmatpush.bf16.msra.mxu0 %v2740
    %3134 = vmatpush.bf16.msra.mxu0 %v2739
    %3135 = vmatpush.bf16.msra.mxu0 %v2738
    %3136 = vmatmul.bf16.gmra.mxu0 %v2300
    %v3137 = vpop.f32.mrf.mxu0
    %v3138 = vadd.f32 %v3089, %v3137
    %v3139 = vpop.f32.mrf.mxu0
    %v3140 = vadd.f32 %v3091, %v3139
    %3141 = vmatmul.bf16.gmra.mxu0 %v2306
    %v3142 = vpop.f32.mrf.mxu0
    %v3143 = vadd.f32 %v3094, %v3142
    %v3144 = vpop.f32.mrf.mxu0
    %v3145 = vadd.f32 %v3096, %v3144
    %3146 = vmatmul.bf16.gmra.mxu0 %v2312
    %v3147 = vpop.f32.mrf.mxu0
    %v3148 = vadd.f32 %v3099, %v3147
    %v3149 = vpop.f32.mrf.mxu0
    %v3150 = vadd.f32 %v3101, %v3149
    %3151 = vmatmul.bf16.gmra.mxu0 %v2318
    %v3152 = vpop.f32.mrf.mxu0
    %v3153 = vadd.f32 %v3104, %v3152
    %v3154 = vpop.f32.mrf.mxu0
    %v3155 = vadd.f32 %v3106, %v3154
    %3156 = vmatmul.bf16.gmra.mxu0 %v2327
    %v3157 = vpop.f32.mrf.mxu0
    %v3158 = vadd.f32 %v3109, %v3157
    %v3159 = vpop.f32.mrf.mxu0
    %v3160 = vadd.f32 %v3111, %v3159
    %3161 = vmatmul.bf16.gmra.mxu0 %v2333
    %v3162 = vpop.f32.mrf.mxu0
    %v3163 = vadd.f32 %v3114, %v3162
    %v3164 = vpop.f32.mrf.mxu0
    %v3165 = vadd.f32 %v3116, %v3164
    %3166 = vmatmul.bf16.gmra.mxu0 %v2339
    %v3167 = vpop.f32.mrf.mxu0
    %v3168 = vadd.f32 %v3119, %v3167
    %v3169 = vpop.f32.mrf.mxu0
    %v3170 = vadd.f32 %v3121, %v3169
    %3171 = vmatmul.bf16.gmra.mxu0 %v2345
    %v3172 = vpop.f32.mrf.mxu0
    %v3173 = vadd.f32 %v3124, %v3172
    %v3174 = vpop.f32.mrf.mxu0
    %v3175 = vadd.f32 %v3126, %v3174
    %3176 = vdwg.mxu0
    %3177 = vmatpush.bf16.msra.mxu0 %v2753
    %3178 = vmatpush.bf16.msra.mxu0 %v2752
    %3179 = vmatpush.bf16.msra.mxu0 %v2751
    %3180 = vmatpush.bf16.msra.mxu0 %v2750
    %3181 = vmatpush.bf16.msra.mxu0 %v2749
    %3182 = vmatpush.bf16.msra.mxu0 %v2748
    %3183 = vmatpush.bf16.msra.mxu0 %v2747
    %3184 = vmatpush.bf16.msra.mxu0 %v2746
    %3185 = vmatmul.bf16.gmra.mxu0 %v2301
    %v3186 = vpop.f32.mrf.mxu0
    %v3187 = vadd.f32 %v3138, %v3186
    %v3188 = vpop.f32.mrf.mxu0
    %v3189 = vadd.f32 %v3140, %v3188
    %3190 = vmatmul.bf16.gmra.mxu0 %v2307
    %v3191 = vpop.f32.mrf.mxu0
    %v3192 = vadd.f32 %v3143, %v3191
    %v3193 = vpop.f32.mrf.mxu0
    %v3194 = vadd.f32 %v3145, %v3193
    %3195 = vmatmul.bf16.gmra.mxu0 %v2313
    %v3196 = vpop.f32.mrf.mxu0
    %v3197 = vadd.f32 %v3148, %v3196
    %v3198 = vpop.f32.mrf.mxu0
    %v3199 = vadd.f32 %v3150, %v3198
    %3200 = vmatmul.bf16.gmra.mxu0 %v2319
    %v3201 = vpop.f32.mrf.mxu0
    %v3202 = vadd.f32 %v3153, %v3201
    %v3203 = vpop.f32.mrf.mxu0
    %v3204 = vadd.f32 %v3155, %v3203
    %3205 = vmatmul.bf16.gmra.mxu0 %v2328
    %v3206 = vpop.f32.mrf.mxu0
    %v3207 = vadd.f32 %v3158, %v3206
    %v3208 = vpop.f32.mrf.mxu0
    %v3209 = vadd.f32 %v3160, %v3208
    %3210 = vmatmul.bf16.gmra.mxu0 %v2334
    %v3211 = vpop.f32.mrf.mxu0
    %v3212 = vadd.f32 %v3163, %v3211
    %v3213 = vpop.f32.mrf.mxu0
    %v3214 = vadd.f32 %v3165, %v3213
    %3215 = vmatmul.bf16.gmra.mxu0 %v2340
    %v3216 = vpop.f32.mrf.mxu0
    %v3217 = vadd.f32 %v3168, %v3216
    %v3218 = vpop.f32.mrf.mxu0
    %v3219 = vadd.f32 %v3170, %v3218
    %3220 = vmatmul.bf16.gmra.mxu0 %v2346
    %v3221 = vpop.f32.mrf.mxu0
    %v3222 = vadd.f32 %v3173, %v3221
    %v3223 = vpop.f32.mrf.mxu0
    %v3224 = vadd.f32 %v3175, %v3223
    %3225 = vdwg.mxu0
    %3226 = vmatpush.bf16.msra.mxu0 %v2761
    %3227 = vmatpush.bf16.msra.mxu0 %v2760
    %3228 = vmatpush.bf16.msra.mxu0 %v2759
    %3229 = vmatpush.bf16.msra.mxu0 %v2758
    %3230 = vmatpush.bf16.msra.mxu0 %v2757
    %3231 = vmatpush.bf16.msra.mxu0 %v2756
    %3232 = vmatpush.bf16.msra.mxu0 %v2755
    %3233 = vmatpush.bf16.msra.mxu0 %v2754
    %3234 = vmatmul.bf16.gmra.mxu0 %v2302
    %v3235 = vpop.f32.mrf.mxu0
    %v3236 = vadd.f32 %v3187, %v3235
    %v3237 = vpop.f32.mrf.mxu0
    %v3238 = vadd.f32 %v3189, %v3237
    %3239 = vmatmul.bf16.gmra.mxu0 %v2308
    %v3240 = vpop.f32.mrf.mxu0
    %v3241 = vadd.f32 %v3192, %v3240
    %v3242 = vpop.f32.mrf.mxu0
    %v3243 = vadd.f32 %v3194, %v3242
    %3244 = vmatmul.bf16.gmra.mxu0 %v2314
    %v3245 = vpop.f32.mrf.mxu0
    %v3246 = vadd.f32 %v3197, %v3245
    %v3247 = vpop.f32.mrf.mxu0
    %v3248 = vadd.f32 %v3199, %v3247
    %3249 = vmatmul.bf16.gmra.mxu0 %v2320
    %v3250 = vpop.f32.mrf.mxu0
    %v3251 = vadd.f32 %v3202, %v3250
    %v3252 = vpop.f32.mrf.mxu0
    %v3253 = vadd.f32 %v3204, %v3252
    %3254 = vmatmul.bf16.gmra.mxu0 %v2329
    %v3255 = vpop.f32.mrf.mxu0
    %v3256 = vadd.f32 %v3207, %v3255
    %v3257 = vpop.f32.mrf.mxu0
    %v3258 = vadd.f32 %v3209, %v3257
    %3259 = vmatmul.bf16.gmra.mxu0 %v2335
    %v3260 = vpop.f32.mrf.mxu0
    %v3261 = vadd.f32 %v3212, %v3260
    %v3262 = vpop.f32.mrf.mxu0
    %v3263 = vadd.f32 %v3214, %v3262
    %3264 = vmatmul.bf16.gmra.mxu0 %v2341
    %v3265 = vpop.f32.mrf.mxu0
    %v3266 = vadd.f32 %v3217, %v3265
    %v3267 = vpop.f32.mrf.mxu0
    %v3268 = vadd.f32 %v3219, %v3267
    %3269 = vmatmul.bf16.gmra.mxu0 %v2347
    %v3270 = vpop.f32.mrf.mxu0
    %v3271 = vadd.f32 %v3222, %v3270
    %v3272 = vpop.f32.mrf.mxu0
    %v3273 = vadd.f32 %v3224, %v3272
    %3274 = vdwg.mxu0
    %v3276 = vrot.slane %v1680, 1
    %v3277 = vperm.slane %v1680, 0
    %v3278 = vperm.slane %v3276, 0
    %v3281 = vmul.f32 %v3236, %v3277
    %v3282 = vmul.f32 %v3238, %v3277
    %v3283 = vmul.f32 %v3241, %v3277
    %v3284 = vmul.f32 %v3243, %v3277
    %v3285 = vmul.f32 %v3246, %v3277
    %v3286 = vmul.f32 %v3248, %v3277
    %v3287 = vmul.f32 %v3251, %v3277
    %v3288 = vmul.f32 %v3253, %v3277
    %v3289 = vmul.f32 %v3256, %v3278
    %v3290 = vmul.f32 %v3258, %v3278
    %v3291 = vmul.f32 %v3261, %v3278
    %v3292 = vmul.f32 %v3263, %v3278
    %v3293 = vmul.f32 %v3266, %v3278
    %v3294 = vmul.f32 %v3268, %v3278
    %v3295 = vmul.f32 %v3271, %v3278
    %v3296 = vmul.f32 %v3273, %v3278
    %v3297 = vstv %s1682
    %v3298 = vmul.f32 %v3297, %v1672
    %v3299 = vmul.f32 %v3297, %v1673
    %v3300 = vmul.f32 %v3297, %v1674
    %v3301 = vmul.f32 %v3297, %v1675
    %v3302 = vmul.f32 %v3297, %v1676
    %v3303 = vmul.f32 %v3297, %v1677
    %v3304 = vmul.f32 %v3297, %v1678
    %v3305 = vmul.f32 %v3297, %v1679
    %3307 = vset.pattern.permute.xlu0 0
    %3308 = vperm.xlu0 %3307, %v3298
    %v3309 = vpop.permute.xlu0 %3308
    %3312 = vset.pattern.permute.xlu0 0
    %3313 = vperm.xlu0 %3312, %v3299
    %v3314 = vpop.permute.xlu0 %3313
    %3317 = vset.pattern.permute.xlu0 0
    %3318 = vperm.xlu0 %3317, %v3300
    %v3319 = vpop.permute.xlu0 %3318
    %3322 = vset.pattern.permute.xlu0 0
    %3323 = vperm.xlu0 %3322, %v3301
    %v3324 = vpop.permute.xlu0 %3323
    %3327 = vset.pattern.permute.xlu0 0
    %3328 = vperm.xlu0 %3327, %v3302
    %v3329 = vpop.permute.xlu0 %3328
    %3332 = vset.pattern.permute.xlu0 0
    %3333 = vperm.xlu0 %3332, %v3303
    %v3334 = vpop.permute.xlu0 %3333
    %3337 = vset.pattern.permute.xlu0 0
    %3338 = vperm.xlu0 %3337, %v3304
    %v3339 = vpop.permute.xlu0 %3338
    %3342 = vset.pattern.permute.xlu0 0
    %3343 = vperm.xlu0 %3342, %v3305
    %v3344 = vpop.permute.xlu0 %3343
    %v3346 = vadd.f32 %v3281, %v3309
    %v3347 = vadd.f32 %v3282, %v3314
    %v3348 = vadd.f32 %v3283, %v3319
    %v3349 = vadd.f32 %v3284, %v3324
    %v3350 = vadd.f32 %v3285, %v3329
    %v3351 = vadd.f32 %v3286, %v3334
    %v3352 = vadd.f32 %v3287, %v3339
    %v3353 = vadd.f32 %v3288, %v3344
    %v3354 = vadd.f32 %v3289, %v3309
    %v3355 = vadd.f32 %v3290, %v3314
    %v3356 = vadd.f32 %v3291, %v3319
    %v3357 = vadd.f32 %v3292, %v3324
    %v3358 = vadd.f32 %v3293, %v3329
    %v3359 = vadd.f32 %v3294, %v3334
    %v3360 = vadd.f32 %v3295, %v3339
    %v3361 = vadd.f32 %v3296, %v3344
    %v3363 = vperm.slane %v1681, 0
    %v3365 = vadd.f32 %v3346, %v3363
    %v3366 = vadd.f32 %v3347, %v3363
    %v3367 = vadd.f32 %v3348, %v3363
    %v3368 = vadd.f32 %v3349, %v3363
    %v3369 = vadd.f32 %v3350, %v3363
    %v3370 = vadd.f32 %v3351, %v3363
    %v3371 = vadd.f32 %v3352, %v3363
    %v3372 = vadd.f32 %v3353, %v3363
    %v3373 = vadd.f32 %v3354, %v3363
    %v3374 = vadd.f32 %v3355, %v3363
    %v3375 = vadd.f32 %v3356, %v3363
    %v3376 = vadd.f32 %v3357, %v3363
    %v3377 = vadd.f32 %v3358, %v3363
    %v3378 = vadd.f32 %v3359, %v3363
    %v3379 = vadd.f32 %v3360, %v3363
    %v3380 = vadd.f32 %v3361, %v3363
    %vm3381 = vcmp.ge.f32.partialorder %v3365, 0.0
    %vm3382 = vcmp.ge.f32.partialorder %v3366, 0.0
    %vm3383 = vcmp.ge.f32.partialorder %v3367, 0.0
    %vm3384 = vcmp.ge.f32.partialorder %v3368, 0.0
    %vm3385 = vcmp.ge.f32.partialorder %v3369, 0.0
    %vm3386 = vcmp.ge.f32.partialorder %v3370, 0.0
    %vm3387 = vcmp.ge.f32.partialorder %v3371, 0.0
    %vm3388 = vcmp.ge.f32.partialorder %v3372, 0.0
    %vm3389 = vcmp.ge.f32.partialorder %v3373, 0.0
    %vm3390 = vcmp.ge.f32.partialorder %v3374, 0.0
    %vm3391 = vcmp.ge.f32.partialorder %v3375, 0.0
    %vm3392 = vcmp.ge.f32.partialorder %v3376, 0.0
    %vm3393 = vcmp.ge.f32.partialorder %v3377, 0.0
    %vm3394 = vcmp.ge.f32.partialorder %v3378, 0.0
    %vm3395 = vcmp.ge.f32.partialorder %v3379, 0.0
    %vm3396 = vcmp.ge.f32.partialorder %v3380, 0.0
    %v3397 = vmul.f32 %v3365, 0.2
    %v3398 = vmul.f32 %v3366, 0.2
    %v3399 = vmul.f32 %v3367, 0.2
    %v3400 = vmul.f32 %v3368, 0.2
    %v3401 = vmul.f32 %v3369, 0.2
    %v3402 = vmul.f32 %v3370, 0.2
    %v3403 = vmul.f32 %v3371, 0.2
    %v3404 = vmul.f32 %v3372, 0.2
    %v3405 = vmul.f32 %v3373, 0.2
    %v3406 = vmul.f32 %v3374, 0.2
    %v3407 = vmul.f32 %v3375, 0.2
    %v3408 = vmul.f32 %v3376, 0.2
    %v3409 = vmul.f32 %v3377, 0.2
    %v3410 = vmul.f32 %v3378, 0.2
    %v3411 = vmul.f32 %v3379, 0.2
    %v3412 = vmul.f32 %v3380, 0.2
    %v3413 = vsel %vm3381, %v3365, %v3397
    %v3414 = vsel %vm3382, %v3366, %v3398
    %v3415 = vsel %vm3383, %v3367, %v3399
    %v3416 = vsel %vm3384, %v3368, %v3400
    %v3417 = vsel %vm3385, %v3369, %v3401
    %v3418 = vsel %vm3386, %v3370, %v3402
    %v3419 = vsel %vm3387, %v3371, %v3403
    %v3420 = vsel %vm3388, %v3372, %v3404
    %v3421 = vsel %vm3389, %v3373, %v3405
    %v3422 = vsel %vm3390, %v3374, %v3406
    %v3423 = vsel %vm3391, %v3375, %v3407
    %v3424 = vsel %vm3392, %v3376, %v3408
    %v3425 = vsel %vm3393, %v3377, %v3409
    %v3426 = vsel %vm3394, %v3378, %v3410
    %v3427 = vsel %vm3395, %v3379, %v3411
    %v3428 = vsel %vm3396, %v3380, %v3412
    %v3429 = vmul.f32 %v3413, 1.4142135
    %v3430 = vmul.f32 %v3414, 1.4142135
    %v3431 = vmul.f32 %v3415, 1.4142135
    %v3432 = vmul.f32 %v3416, 1.4142135
    %v3433 = vmul.f32 %v3417, 1.4142135
    %v3434 = vmul.f32 %v3418, 1.4142135
    %v3435 = vmul.f32 %v3419, 1.4142135
    %v3436 = vmul.f32 %v3420, 1.4142135
    %v3437 = vmul.f32 %v3421, 1.4142135
    %v3438 = vmul.f32 %v3422, 1.4142135
    %v3439 = vmul.f32 %v3423, 1.4142135
    %v3440 = vmul.f32 %v3424, 1.4142135
    %v3441 = vmul.f32 %v3425, 1.4142135
    %v3442 = vmul.f32 %v3426, 1.4142135
    %v3443 = vmul.f32 %v3427, 1.4142135
    %v3444 = vmul.f32 %v3428, 1.4142135
    %v3445 = vld [vmem:[%s9] sm:$0x3]
    %v3447 = vrot.slane %v3445, 1
    %v3448 = vperm.slane %v3445, 0
    %v3449 = vperm.slane %v3447, 0
    %v3452 = vmul.f32 %v3429, %v3448
    %v3453 = vmul.f32 %v3430, %v3448
    %v3454 = vmul.f32 %v3431, %v3448
    %v3455 = vmul.f32 %v3432, %v3448
    %v3456 = vmul.f32 %v3433, %v3448
    %v3457 = vmul.f32 %v3434, %v3448
    %v3458 = vmul.f32 %v3435, %v3448
    %v3459 = vmul.f32 %v3436, %v3448
    %v3460 = vmul.f32 %v3437, %v3449
    %v3461 = vmul.f32 %v3438, %v3449
    %v3462 = vmul.f32 %v3439, %v3449
    %v3463 = vmul.f32 %v3440, %v3449
    %v3464 = vmul.f32 %v3441, %v3449
    %v3465 = vmul.f32 %v3442, %v3449
    %v3466 = vmul.f32 %v3443, %v3449
    %v3467 = vmul.f32 %v3444, %v3449
    %v3468 = vpack.c.bf16 %v3452, %v3452
    %v3469 = vpack.c.bf16 %v3453, %v3453
    %v3470 = vpack.c.bf16 %v3454, %v3454
    %v3471 = vpack.c.bf16 %v3455, %v3455
    %v3472 = vpack.c.bf16 %v3456, %v3456
    %v3473 = vpack.c.bf16 %v3457, %v3457
    %v3474 = vpack.c.bf16 %v3458, %v3458
    %v3475 = vpack.c.bf16 %v3459, %v3459
    %v3476 = vpack.c.bf16 %v3460, %v3460
    %v3477 = vpack.c.bf16 %v3461, %v3461
    %v3478 = vpack.c.bf16 %v3462, %v3462
    %v3479 = vpack.c.bf16 %v3463, %v3463
    %v3480 = vpack.c.bf16 %v3464, %v3464
    %v3481 = vpack.c.bf16 %v3465, %v3465
    %v3482 = vpack.c.bf16 %v3466, %v3466
    %v3483 = vpack.c.bf16 %v3467, %v3467
    %s3484 = scalar_lea.vmem %s22, 64
    %v3485 = vld [vmem:[%s3484] sm:$0xff]
    %v3486 = vld [vmem:[%s3484 + $0x8] sm:$0xff]
    %v3487 = vld [vmem:[%s3484 + $0x10] sm:$0xff]
    %v3488 = vld [vmem:[%s3484 + $0x18] sm:$0xff]
    %v3489 = vld [vmem:[%s3484 + $0x20] sm:$0xff]
    %v3490 = vld [vmem:[%s3484 + $0x28] sm:$0xff]
    %v3491 = vld [vmem:[%s3484 + $0x30] sm:$0xff]
    %v3492 = vld [vmem:[%s3484 + $0x38] sm:$0xff]
    %v3493 = vld [vmem:[%s10] sm:$0x3]
    %v3494 = vld [vmem:[#allocation9] sm:$0x1]
    %s3495 = sld [smem:[#allocation17 + $0x2]]
    %v3497 = vshrl.u32 %v3468, 16
    %v3499 = vrot.slane %v3497, 7
    %v3500 = vshll.u32 %v3468, 16
    %v3502 = vor.u32 %v3499, %v3500
    %v3504 = vshrl.u32 %v3469, 16
    %v3506 = vrot.slane %v3504, 7
    %v3507 = vshll.u32 %v3469, 16
    %v3509 = vor.u32 %v3506, %v3507
    %v3511 = vshrl.u32 %v3470, 16
    %v3513 = vrot.slane %v3511, 7
    %v3514 = vshll.u32 %v3470, 16
    %v3516 = vor.u32 %v3513, %v3514
    %v3518 = vshrl.u32 %v3471, 16
    %v3520 = vrot.slane %v3518, 7
    %v3521 = vshll.u32 %v3471, 16
    %v3523 = vor.u32 %v3520, %v3521
    %v3525 = vshrl.u32 %v3472, 16
    %v3527 = vrot.slane %v3525, 7
    %v3528 = vshll.u32 %v3472, 16
    %v3530 = vor.u32 %v3527, %v3528
    %v3532 = vshrl.u32 %v3473, 16
    %v3534 = vrot.slane %v3532, 7
    %v3535 = vshll.u32 %v3473, 16
    %v3537 = vor.u32 %v3534, %v3535
    %v3539 = vshrl.u32 %v3474, 16
    %v3541 = vrot.slane %v3539, 7
    %v3542 = vshll.u32 %v3474, 16
    %v3544 = vor.u32 %v3541, %v3542
    %v3546 = vshrl.u32 %v3475, 16
    %v3548 = vrot.slane %v3546, 7
    %v3549 = vshll.u32 %v3475, 16
    %v3551 = vor.u32 %v3548, %v3549
    %v3553 = vshrl.u32 %v3476, 16
    %v3555 = vrot.slane %v3553, 7
    %v3556 = vshll.u32 %v3476, 16
    %v3558 = vor.u32 %v3555, %v3556
    %v3560 = vshrl.u32 %v3477, 16
    %v3562 = vrot.slane %v3560, 7
    %v3563 = vshll.u32 %v3477, 16
    %v3565 = vor.u32 %v3562, %v3563
    %v3567 = vshrl.u32 %v3478, 16
    %v3569 = vrot.slane %v3567, 7
    %v3570 = vshll.u32 %v3478, 16
    %v3572 = vor.u32 %v3569, %v3570
    %v3574 = vshrl.u32 %v3479, 16
    %v3576 = vrot.slane %v3574, 7
    %v3577 = vshll.u32 %v3479, 16
    %v3579 = vor.u32 %v3576, %v3577
    %v3581 = vshrl.u32 %v3480, 16
    %v3583 = vrot.slane %v3581, 7
    %v3584 = vshll.u32 %v3480, 16
    %v3586 = vor.u32 %v3583, %v3584
    %v3588 = vshrl.u32 %v3481, 16
    %v3590 = vrot.slane %v3588, 7
    %v3591 = vshll.u32 %v3481, 16
    %v3593 = vor.u32 %v3590, %v3591
    %v3595 = vshrl.u32 %v3482, 16
    %v3597 = vrot.slane %v3595, 7
    %v3598 = vshll.u32 %v3482, 16
    %v3600 = vor.u32 %v3597, %v3598
    %v3602 = vshrl.u32 %v3483, 16
    %v3604 = vrot.slane %v3602, 7
    %v3605 = vshll.u32 %v3483, 16
    %v3607 = vor.u32 %v3604, %v3605
    %v3624 = vsel %vm316, 0, %v3502
    %v3625 = vsel %vm316, 0, %v3509
    %v3626 = vsel %vm316, 0, %v3516
    %v3627 = vsel %vm316, 0, %v3523
    %v3628 = vsel %vm316, 0, %v3530
    %v3629 = vsel %vm316, 0, %v3537
    %v3630 = vsel %vm316, 0, %v3544
    %v3631 = vsel %vm316, 0, %v3551
    %v3632 = vsel %vm316, 0, %v3558
    %v3633 = vsel %vm316, 0, %v3565
    %v3634 = vsel %vm316, 0, %v3572
    %v3635 = vsel %vm316, 0, %v3579
    %v3636 = vsel %vm316, 0, %v3586
    %v3637 = vsel %vm316, 0, %v3593
    %v3638 = vsel %vm316, 0, %v3600
    %v3639 = vsel %vm316, 0, %v3607
    %v3640 = vsel %vm1928, %v3624, 0
    %v3641 = vsel %vm1928, %v3625, 0
    %v3642 = vsel %vm1928, %v3626, 0
    %v3643 = vsel %vm1928, %v3627, 0
    %v3644 = vsel %vm1928, %v3628, 0
    %v3645 = vsel %vm1928, %v3629, 0
    %v3646 = vsel %vm1928, %v3630, 0
    %v3647 = vsel %vm1928, %v3631, 0
    %v3648 = vsel %vm1928, %v3632, 0
    %v3649 = vsel %vm1928, %v3633, 0
    %v3650 = vsel %vm1928, %v3634, 0
    %v3651 = vsel %vm1928, %v3635, 0
    %v3652 = vsel %vm1928, %v3636, 0
    %v3653 = vsel %vm1928, %v3637, 0
    %v3654 = vsel %vm1928, %v3638, 0
    %v3655 = vsel %vm1928, %v3639, 0
    %v3657 = vshrl.u32 %v3640, 16
    %v3659 = vshll.u32 %v3640, 16
    %v3661 = vrot.slane %v3659, 1
    %v3662 = vor.u32 %v3657, %v3661
    %v3664 = vshrl.u32 %v3641, 16
    %v3666 = vshll.u32 %v3641, 16
    %v3668 = vrot.slane %v3666, 1
    %v3669 = vor.u32 %v3664, %v3668
    %v3671 = vshrl.u32 %v3642, 16
    %v3673 = vshll.u32 %v3642, 16
    %v3675 = vrot.slane %v3673, 1
    %v3676 = vor.u32 %v3671, %v3675
    %v3678 = vshrl.u32 %v3643, 16
    %v3680 = vshll.u32 %v3643, 16
    %v3682 = vrot.slane %v3680, 1
    %v3683 = vor.u32 %v3678, %v3682
    %v3685 = vshrl.u32 %v3644, 16
    %v3687 = vshll.u32 %v3644, 16
    %v3689 = vrot.slane %v3687, 1
    %v3690 = vor.u32 %v3685, %v3689
    %v3692 = vshrl.u32 %v3645, 16
    %v3694 = vshll.u32 %v3645, 16
    %v3696 = vrot.slane %v3694, 1
    %v3697 = vor.u32 %v3692, %v3696
    %v3699 = vshrl.u32 %v3646, 16
    %v3701 = vshll.u32 %v3646, 16
    %v3703 = vrot.slane %v3701, 1
    %v3704 = vor.u32 %v3699, %v3703
    %v3706 = vshrl.u32 %v3648, 16
    %v3708 = vshll.u32 %v3648, 16
    %v3710 = vrot.slane %v3708, 1
    %v3711 = vor.u32 %v3706, %v3710
    %v3713 = vshrl.u32 %v3649, 16
    %v3715 = vshll.u32 %v3649, 16
    %v3717 = vrot.slane %v3715, 1
    %v3718 = vor.u32 %v3713, %v3717
    %v3720 = vshrl.u32 %v3650, 16
    %v3722 = vshll.u32 %v3650, 16
    %v3724 = vrot.slane %v3722, 1
    %v3725 = vor.u32 %v3720, %v3724
    %v3727 = vshrl.u32 %v3651, 16
    %v3729 = vshll.u32 %v3651, 16
    %v3731 = vrot.slane %v3729, 1
    %v3732 = vor.u32 %v3727, %v3731
    %v3734 = vshrl.u32 %v3652, 16
    %v3736 = vshll.u32 %v3652, 16
    %v3738 = vrot.slane %v3736, 1
    %v3739 = vor.u32 %v3734, %v3738
    %v3741 = vshrl.u32 %v3653, 16
    %v3743 = vshll.u32 %v3653, 16
    %v3745 = vrot.slane %v3743, 1
    %v3746 = vor.u32 %v3741, %v3745
    %v3748 = vshrl.u32 %v3654, 16
    %v3750 = vshll.u32 %v3654, 16
    %v3752 = vrot.slane %v3750, 1
    %v3753 = vor.u32 %v3748, %v3752
    %v3768 = vrot.slane %v3640, 1
    %v3769 = vrot.slane %v3641, 1
    %v3770 = vrot.slane %v3642, 1
    %v3771 = vrot.slane %v3643, 1
    %v3772 = vrot.slane %v3644, 1
    %v3773 = vrot.slane %v3645, 1
    %v3774 = vrot.slane %v3646, 1
    %v3775 = vrot.slane %v3648, 1
    %v3776 = vrot.slane %v3649, 1
    %v3777 = vrot.slane %v3650, 1
    %v3778 = vrot.slane %v3651, 1
    %v3779 = vrot.slane %v3652, 1
    %v3780 = vrot.slane %v3653, 1
    %v3781 = vrot.slane %v3654, 1
    %v3783 = vshrl.u32 %v3647, 16
    %v3785 = vshll.u32 %v3647, 16
    %v3787 = vrot.slane %v3785, 1
    %v3788 = vor.u32 %v3783, %v3787
    %v3790 = vshrl.u32 %v3655, 16
    %v3792 = vshll.u32 %v3655, 16
    %v3794 = vrot.slane %v3792, 1
    %v3795 = vor.u32 %v3790, %v3794
    %v3798 = vrot.slane %v3647, 1
    %v3799 = vrot.slane %v3655, 1
    %v3800 = vunpack.c.l.b16 %v3640
    %v3801 = vunpack.c.l.b16 %v3662
    %v3802 = vunpack.c.l.b16 %v3768
    %v3803 = vunpack.c.l.b16 %v3641
    %v3804 = vunpack.c.l.b16 %v3669
    %v3805 = vunpack.c.l.b16 %v3769
    %v3806 = vunpack.c.l.b16 %v3642
    %v3807 = vunpack.c.l.b16 %v3676
    %v3808 = vunpack.c.l.b16 %v3770
    %v3809 = vunpack.c.l.b16 %v3643
    %v3810 = vunpack.c.l.b16 %v3683
    %v3811 = vunpack.c.l.b16 %v3771
    %v3812 = vunpack.c.l.b16 %v3644
    %v3813 = vunpack.c.l.b16 %v3690
    %v3814 = vunpack.c.l.b16 %v3772
    %v3815 = vunpack.c.l.b16 %v3645
    %v3816 = vunpack.c.l.b16 %v3697
    %v3817 = vunpack.c.l.b16 %v3773
    %v3818 = vunpack.c.l.b16 %v3646
    %v3819 = vunpack.c.l.b16 %v3704
    %v3820 = vunpack.c.l.b16 %v3774
    %v3821 = vunpack.c.l.b16 %v3647
    %v3822 = vunpack.c.l.b16 %v3788
    %v3823 = vunpack.c.l.b16 %v3798
    %v3824 = vunpack.c.l.b16 %v3648
    %v3825 = vunpack.c.l.b16 %v3711
    %v3826 = vunpack.c.l.b16 %v3775
    %v3827 = vunpack.c.l.b16 %v3649
    %v3828 = vunpack.c.l.b16 %v3718
    %v3829 = vunpack.c.l.b16 %v3776
    %v3830 = vunpack.c.l.b16 %v3650
    %v3831 = vunpack.c.l.b16 %v3725
    %v3832 = vunpack.c.l.b16 %v3777
    %v3833 = vunpack.c.l.b16 %v3651
    %v3834 = vunpack.c.l.b16 %v3732
    %v3835 = vunpack.c.l.b16 %v3778
    %v3836 = vunpack.c.l.b16 %v3652
    %v3837 = vunpack.c.l.b16 %v3739
    %v3838 = vunpack.c.l.b16 %v3779
    %v3839 = vunpack.c.l.b16 %v3653
    %v3840 = vunpack.c.l.b16 %v3746
    %v3841 = vunpack.c.l.b16 %v3780
    %v3842 = vunpack.c.l.b16 %v3654
    %v3843 = vunpack.c.l.b16 %v3753
    %v3844 = vunpack.c.l.b16 %v3781
    %v3845 = vunpack.c.l.b16 %v3655
    %v3846 = vunpack.c.l.b16 %v3795
    %v3847 = vunpack.c.l.b16 %v3799
    %v3848 = vld [vmem:[%s11] sm:$0xf]
    %v3849 = vld [vmem:[%s11 + $0x4] sm:$0xf]
    %v3850 = vld [vmem:[%s11 + $0x8] sm:$0xf]
    %v3851 = vld [vmem:[%s11 + $0xc] sm:$0xf]
    %v3852 = vld [vmem:[%s11 + $0x10] sm:$0xf]
    %v3853 = vld [vmem:[%s11 + $0x14] sm:$0xf]
    %v3854 = vld [vmem:[%s11 + $0x18] sm:$0xf]
    %v3855 = vld [vmem:[%s11 + $0x1c] sm:$0xf]
    %v3856 = vld [vmem:[%s11 + $0x20] sm:$0xf]
    %v3857 = vld [vmem:[%s11 + $0x24] sm:$0xf]
    %v3858 = vld [vmem:[%s11 + $0x28] sm:$0xf]
    %v3859 = vld [vmem:[%s11 + $0x2c] sm:$0xf]
    %v3860 = vld [vmem:[%s11 + $0x30] sm:$0xf]
    %v3861 = vld [vmem:[%s11 + $0x34] sm:$0xf]
    %v3862 = vld [vmem:[%s11 + $0x38] sm:$0xf]
    %v3863 = vld [vmem:[%s11 + $0x3c] sm:$0xf]
    %v3864 = vld [vmem:[%s11 + $0x40] sm:$0xf]
    %v3865 = vld [vmem:[%s11 + $0x44] sm:$0xf]
    %v3866 = vld [vmem:[%s11 + $0x48] sm:$0xf]
    %v3867 = vld [vmem:[%s11 + $0x4c] sm:$0xf]
    %v3868 = vld [vmem:[%s11 + $0x50] sm:$0xf]
    %v3869 = vld [vmem:[%s11 + $0x54] sm:$0xf]
    %v3870 = vld [vmem:[%s11 + $0x58] sm:$0xf]
    %v3871 = vld [vmem:[%s11 + $0x5c] sm:$0xf]
    %v3872 = vld [vmem:[%s11 + $0x60] sm:$0xf]
    %v3873 = vld [vmem:[%s11 + $0x64] sm:$0xf]
    %v3874 = vld [vmem:[%s11 + $0x68] sm:$0xf]
    %v3875 = vld [vmem:[%s11 + $0x6c] sm:$0xf]
    %v3876 = vld [vmem:[%s11 + $0x70] sm:$0xf]
    %v3877 = vld [vmem:[%s11 + $0x74] sm:$0xf]
    %v3878 = vld [vmem:[%s11 + $0x78] sm:$0xf]
    %v3879 = vld [vmem:[%s11 + $0x7c] sm:$0xf]
    %v3880 = vld [vmem:[%s11 + $0x80] sm:$0xf]
    %v3881 = vld [vmem:[%s11 + $0x84] sm:$0xf]
    %v3882 = vld [vmem:[%s11 + $0x88] sm:$0xf]
    %v3883 = vld [vmem:[%s11 + $0x8c] sm:$0xf]
    %v3884 = vld [vmem:[%s11 + $0x90] sm:$0xf]
    %v3885 = vld [vmem:[%s11 + $0x94] sm:$0xf]
    %v3886 = vld [vmem:[%s11 + $0x98] sm:$0xf]
    %v3887 = vld [vmem:[%s11 + $0x9c] sm:$0xf]
    %v3888 = vld [vmem:[%s11 + $0xa0] sm:$0xf]
    %v3889 = vld [vmem:[%s11 + $0xa4] sm:$0xf]
    %v3890 = vld [vmem:[%s11 + $0xa8] sm:$0xf]
    %v3891 = vld [vmem:[%s11 + $0xac] sm:$0xf]
    %v3892 = vld [vmem:[%s11 + $0xb0] sm:$0xf]
    %v3893 = vld [vmem:[%s11 + $0xb4] sm:$0xf]
    %v3894 = vld [vmem:[%s11 + $0xb8] sm:$0xf]
    %v3895 = vld [vmem:[%s11 + $0xbc] sm:$0xf]
    %v3896 = vld [vmem:[%s11 + $0xc0] sm:$0xf]
    %v3897 = vld [vmem:[%s11 + $0xc4] sm:$0xf]
    %v3898 = vld [vmem:[%s11 + $0xc8] sm:$0xf]
    %v3899 = vld [vmem:[%s11 + $0xcc] sm:$0xf]
    %v3900 = vld [vmem:[%s11 + $0xd0] sm:$0xf]
    %v3901 = vld [vmem:[%s11 + $0xd4] sm:$0xf]
    %v3902 = vld [vmem:[%s11 + $0xd8] sm:$0xf]
    %v3903 = vld [vmem:[%s11 + $0xdc] sm:$0xf]
    %v3904 = vld [vmem:[%s11 + $0xe0] sm:$0xf]
    %v3905 = vld [vmem:[%s11 + $0xe4] sm:$0xf]
    %v3906 = vld [vmem:[%s11 + $0xe8] sm:$0xf]
    %v3907 = vld [vmem:[%s11 + $0xec] sm:$0xf]
    %v3908 = vld [vmem:[%s11 + $0xf0] sm:$0xf]
    %v3909 = vld [vmem:[%s11 + $0xf4] sm:$0xf]
    %v3910 = vld [vmem:[%s11 + $0xf8] sm:$0xf]
    %v3911 = vld [vmem:[%s11 + $0xfc] sm:$0xf]
    %v3912 = vld [vmem:[%s11 + $0x100] sm:$0xf]
    %v3913 = vld [vmem:[%s11 + $0x104] sm:$0xf]
    %v3914 = vld [vmem:[%s11 + $0x108] sm:$0xf]
    %v3915 = vld [vmem:[%s11 + $0x10c] sm:$0xf]
    %v3916 = vld [vmem:[%s11 + $0x110] sm:$0xf]
    %v3917 = vld [vmem:[%s11 + $0x114] sm:$0xf]
    %v3918 = vld [vmem:[%s11 + $0x118] sm:$0xf]
    %v3919 = vld [vmem:[%s11 + $0x11c] sm:$0xf]
    %v3920 = vld [vmem:[%s11 + $0x120] sm:$0xf]
    %v3921 = vld [vmem:[%s11 + $0x124] sm:$0xf]
    %v3922 = vld [vmem:[%s11 + $0x128] sm:$0xf]
    %v3923 = vld [vmem:[%s11 + $0x12c] sm:$0xf]
    %v3924 = vld [vmem:[%s11 + $0x130] sm:$0xf]
    %v3925 = vld [vmem:[%s11 + $0x134] sm:$0xf]
    %v3926 = vld [vmem:[%s11 + $0x138] sm:$0xf]
    %v3927 = vld [vmem:[%s11 + $0x13c] sm:$0xf]
    %v3928 = vld [vmem:[%s11 + $0x140] sm:$0xf]
    %v3929 = vld [vmem:[%s11 + $0x144] sm:$0xf]
    %v3930 = vld [vmem:[%s11 + $0x148] sm:$0xf]
    %v3931 = vld [vmem:[%s11 + $0x14c] sm:$0xf]
    %v3932 = vld [vmem:[%s11 + $0x150] sm:$0xf]
    %v3933 = vld [vmem:[%s11 + $0x154] sm:$0xf]
    %v3934 = vld [vmem:[%s11 + $0x158] sm:$0xf]
    %v3935 = vld [vmem:[%s11 + $0x15c] sm:$0xf]
    %v3936 = vld [vmem:[%s11 + $0x160] sm:$0xf]
    %v3937 = vld [vmem:[%s11 + $0x164] sm:$0xf]
    %v3938 = vld [vmem:[%s11 + $0x168] sm:$0xf]
    %v3939 = vld [vmem:[%s11 + $0x16c] sm:$0xf]
    %v3940 = vld [vmem:[%s11 + $0x170] sm:$0xf]
    %v3941 = vld [vmem:[%s11 + $0x174] sm:$0xf]
    %v3942 = vld [vmem:[%s11 + $0x178] sm:$0xf]
    %v3943 = vld [vmem:[%s11 + $0x17c] sm:$0xf]
    %v3944 = vld [vmem:[%s11 + $0x180] sm:$0xf]
    %v3945 = vld [vmem:[%s11 + $0x184] sm:$0xf]
    %v3946 = vld [vmem:[%s11 + $0x188] sm:$0xf]
    %v3947 = vld [vmem:[%s11 + $0x18c] sm:$0xf]
    %v3948 = vld [vmem:[%s11 + $0x190] sm:$0xf]
    %v3949 = vld [vmem:[%s11 + $0x194] sm:$0xf]
    %v3950 = vld [vmem:[%s11 + $0x198] sm:$0xf]
    %v3951 = vld [vmem:[%s11 + $0x19c] sm:$0xf]
    %v3952 = vld [vmem:[%s11 + $0x1a0] sm:$0xf]
    %v3953 = vld [vmem:[%s11 + $0x1a4] sm:$0xf]
    %v3954 = vld [vmem:[%s11 + $0x1a8] sm:$0xf]
    %v3955 = vld [vmem:[%s11 + $0x1ac] sm:$0xf]
    %v3956 = vld [vmem:[%s11 + $0x1b0] sm:$0xf]
    %v3957 = vld [vmem:[%s11 + $0x1b4] sm:$0xf]
    %v3958 = vld [vmem:[%s11 + $0x1b8] sm:$0xf]
    %v3959 = vld [vmem:[%s11 + $0x1bc] sm:$0xf]
    %v3960 = vld [vmem:[%s11 + $0x1c0] sm:$0xf]
    %v3961 = vld [vmem:[%s11 + $0x1c4] sm:$0xf]
    %v3962 = vld [vmem:[%s11 + $0x1c8] sm:$0xf]
    %v3963 = vld [vmem:[%s11 + $0x1cc] sm:$0xf]
    %v3964 = vld [vmem:[%s11 + $0x1d0] sm:$0xf]
    %v3965 = vld [vmem:[%s11 + $0x1d4] sm:$0xf]
    %v3966 = vld [vmem:[%s11 + $0x1d8] sm:$0xf]
    %v3967 = vld [vmem:[%s11 + $0x1dc] sm:$0xf]
    %v3968 = vld [vmem:[%s11 + $0x1e0] sm:$0xf]
    %v3969 = vld [vmem:[%s11 + $0x1e4] sm:$0xf]
    %v3970 = vld [vmem:[%s11 + $0x1e8] sm:$0xf]
    %v3971 = vld [vmem:[%s11 + $0x1ec] sm:$0xf]
    %v3972 = vld [vmem:[%s11 + $0x1f0] sm:$0xf]
    %v3973 = vld [vmem:[%s11 + $0x1f4] sm:$0xf]
    %v3974 = vld [vmem:[%s11 + $0x1f8] sm:$0xf]
    %v3975 = vld [vmem:[%s11 + $0x1fc] sm:$0xf]
    %v3976 = vld [vmem:[%s11 + $0x200] sm:$0xf]
    %v3977 = vld [vmem:[%s11 + $0x204] sm:$0xf]
    %v3978 = vld [vmem:[%s11 + $0x208] sm:$0xf]
    %v3979 = vld [vmem:[%s11 + $0x20c] sm:$0xf]
    %v3980 = vld [vmem:[%s11 + $0x210] sm:$0xf]
    %v3981 = vld [vmem:[%s11 + $0x214] sm:$0xf]
    %v3982 = vld [vmem:[%s11 + $0x218] sm:$0xf]
    %v3983 = vld [vmem:[%s11 + $0x21c] sm:$0xf]
    %v3984 = vld [vmem:[%s11 + $0x220] sm:$0xf]
    %v3985 = vld [vmem:[%s11 + $0x224] sm:$0xf]
    %v3986 = vld [vmem:[%s11 + $0x228] sm:$0xf]
    %v3987 = vld [vmem:[%s11 + $0x22c] sm:$0xf]
    %v3988 = vld [vmem:[%s11 + $0x230] sm:$0xf]
    %v3989 = vld [vmem:[%s11 + $0x234] sm:$0xf]
    %v3990 = vld [vmem:[%s11 + $0x238] sm:$0xf]
    %v3991 = vld [vmem:[%s11 + $0x23c] sm:$0xf]
    %v3992 = vpack.c.b16 %v3800, %v2099
    %v3993 = vpack.c.b16 %v3801, %v2100
    %v3994 = vpack.c.b16 %v3802, %v2101
    %v3995 = vpack.c.b16 %v3803, %v3800
    %v3996 = vpack.c.b16 %v3804, %v3801
    %v3997 = vpack.c.b16 %v3805, %v3802
    %v3998 = vpack.c.b16 %v3806, %v3803
    %v3999 = vpack.c.b16 %v3807, %v3804
    %v4000 = vpack.c.b16 %v3808, %v3805
    %v4001 = vpack.c.b16 %v3809, %v3806
    %v4002 = vpack.c.b16 %v3810, %v3807
    %v4003 = vpack.c.b16 %v3811, %v3808
    %v4004 = vpack.c.b16 %v3812, %v3809
    %v4005 = vpack.c.b16 %v3813, %v3810
    %v4006 = vpack.c.b16 %v3814, %v3811
    %v4007 = vpack.c.b16 %v3815, %v3812
    %v4008 = vpack.c.b16 %v3816, %v3813
    %v4009 = vpack.c.b16 %v3817, %v3814
    %v4010 = vpack.c.b16 %v3818, %v3815
    %v4011 = vpack.c.b16 %v3819, %v3816
    %v4012 = vpack.c.b16 %v3820, %v3817
    %v4013 = vpack.c.b16 %v3821, %v3818
    %v4014 = vpack.c.b16 %v3822, %v3819
    %v4015 = vpack.c.b16 %v3823, %v3820
    %v4016 = vpack.c.b16 %v2099, %v3821
    %v4017 = vpack.c.b16 %v2100, %v3822
    %v4018 = vpack.c.b16 %v2101, %v3823
    %v4019 = vpack.c.b16 %v3824, %v2099
    %v4020 = vpack.c.b16 %v3825, %v2100
    %v4021 = vpack.c.b16 %v3826, %v2101
    %v4022 = vpack.c.b16 %v3827, %v3824
    %v4023 = vpack.c.b16 %v3828, %v3825
    %v4024 = vpack.c.b16 %v3829, %v3826
    %v4025 = vpack.c.b16 %v3830, %v3827
    %v4026 = vpack.c.b16 %v3831, %v3828
    %v4027 = vpack.c.b16 %v3832, %v3829
    %v4028 = vpack.c.b16 %v3833, %v3830
    %v4029 = vpack.c.b16 %v3834, %v3831
    %v4030 = vpack.c.b16 %v3835, %v3832
    %v4031 = vpack.c.b16 %v3836, %v3833
    %v4032 = vpack.c.b16 %v3837, %v3834
    %v4033 = vpack.c.b16 %v3838, %v3835
    %v4034 = vpack.c.b16 %v3839, %v3836
    %v4035 = vpack.c.b16 %v3840, %v3837
    %v4036 = vpack.c.b16 %v3841, %v3838
    %v4037 = vpack.c.b16 %v3842, %v3839
    %v4038 = vpack.c.b16 %v3843, %v3840
    %v4039 = vpack.c.b16 %v3844, %v3841
    %v4040 = vpack.c.b16 %v3845, %v3842
    %v4041 = vpack.c.b16 %v3846, %v3843
    %v4042 = vpack.c.b16 %v3847, %v3844
    %v4043 = vpack.c.b16 %v2099, %v3845
    %v4044 = vpack.c.b16 %v2100, %v3846
    %v4045 = vpack.c.b16 %v2101, %v3847
    %v4244 = vunpack.c.l.b16 %v3848
    %v4245 = vunpack.c.l.b16 %v3849
    %v4246 = vunpack.c.l.b16 %v3850
    %v4247 = vunpack.c.l.b16 %v3851
    %v4248 = vunpack.c.l.b16 %v3852
    %v4249 = vunpack.c.l.b16 %v3853
    %v4250 = vunpack.c.l.b16 %v3854
    %v4251 = vunpack.c.l.b16 %v3855
    %v4252 = vunpack.c.l.b16 %v3856
    %v4253 = vunpack.c.l.b16 %v3857
    %v4254 = vunpack.c.l.b16 %v3858
    %v4255 = vunpack.c.l.b16 %v3859
    %v4256 = vunpack.c.l.b16 %v3860
    %v4257 = vunpack.c.l.b16 %v3861
    %v4258 = vunpack.c.l.b16 %v3862
    %v4259 = vunpack.c.l.b16 %v3863
    %v4260 = vunpack.c.l.b16 %v3864
    %v4261 = vunpack.c.l.b16 %v3865
    %v4262 = vunpack.c.l.b16 %v3866
    %v4263 = vunpack.c.l.b16 %v3867
    %v4264 = vunpack.c.l.b16 %v3868
    %v4265 = vunpack.c.l.b16 %v3869
    %v4266 = vunpack.c.l.b16 %v3870
    %v4267 = vunpack.c.l.b16 %v3871
    %v4268 = vunpack.c.l.b16 %v3872
    %v4269 = vunpack.c.l.b16 %v3873
    %v4270 = vunpack.c.l.b16 %v3874
    %v4271 = vunpack.c.l.b16 %v3875
    %v4272 = vunpack.c.l.b16 %v3876
    %v4273 = vunpack.c.l.b16 %v3877
    %v4274 = vunpack.c.l.b16 %v3878
    %v4275 = vunpack.c.l.b16 %v3879
    %v4276 = vunpack.c.l.b16 %v3880
    %v4277 = vunpack.c.l.b16 %v3881
    %v4278 = vunpack.c.l.b16 %v3882
    %v4279 = vunpack.c.l.b16 %v3883
    %v4280 = vunpack.c.l.b16 %v3884
    %v4281 = vunpack.c.l.b16 %v3885
    %v4282 = vunpack.c.l.b16 %v3886
    %v4283 = vunpack.c.l.b16 %v3887
    %v4284 = vunpack.c.l.b16 %v3888
    %v4285 = vunpack.c.l.b16 %v3889
    %v4286 = vunpack.c.l.b16 %v3890
    %v4287 = vunpack.c.l.b16 %v3891
    %v4288 = vunpack.c.l.b16 %v3892
    %v4289 = vunpack.c.l.b16 %v3893
    %v4290 = vunpack.c.l.b16 %v3894
    %v4291 = vunpack.c.l.b16 %v3895
    %v4292 = vunpack.c.l.b16 %v3896
    %v4293 = vunpack.c.l.b16 %v3897
    %v4294 = vunpack.c.l.b16 %v3898
    %v4295 = vunpack.c.l.b16 %v3899
    %v4296 = vunpack.c.l.b16 %v3900
    %v4297 = vunpack.c.l.b16 %v3901
    %v4298 = vunpack.c.l.b16 %v3902
    %v4299 = vunpack.c.l.b16 %v3903
    %v4300 = vunpack.c.l.b16 %v3904
    %v4301 = vunpack.c.l.b16 %v3905
    %v4302 = vunpack.c.l.b16 %v3906
    %v4303 = vunpack.c.l.b16 %v3907
    %v4304 = vunpack.c.l.b16 %v3908
    %v4305 = vunpack.c.l.b16 %v3909
    %v4306 = vunpack.c.l.b16 %v3910
    %v4307 = vunpack.c.l.b16 %v3911
    %v4308 = vunpack.c.l.b16 %v3912
    %v4309 = vunpack.c.l.b16 %v3913
    %v4310 = vunpack.c.l.b16 %v3914
    %v4311 = vunpack.c.l.b16 %v3915
    %v4312 = vunpack.c.l.b16 %v3916
    %v4313 = vunpack.c.l.b16 %v3917
    %v4314 = vunpack.c.l.b16 %v3918
    %v4315 = vunpack.c.l.b16 %v3919
    %v4316 = vunpack.c.l.b16 %v3920
    %v4317 = vunpack.c.l.b16 %v3921
    %v4318 = vunpack.c.l.b16 %v3922
    %v4319 = vunpack.c.l.b16 %v3923
    %v4320 = vunpack.c.l.b16 %v3924
    %v4321 = vunpack.c.l.b16 %v3925
    %v4322 = vunpack.c.l.b16 %v3926
    %v4323 = vunpack.c.l.b16 %v3927
    %v4324 = vunpack.c.l.b16 %v3928
    %v4325 = vunpack.c.l.b16 %v3929
    %v4326 = vunpack.c.l.b16 %v3930
    %v4327 = vunpack.c.l.b16 %v3931
    %v4328 = vunpack.c.l.b16 %v3932
    %v4329 = vunpack.c.l.b16 %v3933
    %v4330 = vunpack.c.l.b16 %v3934
    %v4331 = vunpack.c.l.b16 %v3935
    %v4332 = vunpack.c.l.b16 %v3936
    %v4333 = vunpack.c.l.b16 %v3937
    %v4334 = vunpack.c.l.b16 %v3938
    %v4335 = vunpack.c.l.b16 %v3939
    %v4336 = vunpack.c.l.b16 %v3940
    %v4337 = vunpack.c.l.b16 %v3941
    %v4338 = vunpack.c.l.b16 %v3942
    %v4339 = vunpack.c.l.b16 %v3943
    %v4340 = vunpack.c.l.b16 %v3944
    %v4341 = vunpack.c.l.b16 %v3945
    %v4342 = vunpack.c.l.b16 %v3946
    %v4343 = vunpack.c.l.b16 %v3947
    %v4344 = vunpack.c.l.b16 %v3948
    %v4345 = vunpack.c.l.b16 %v3949
    %v4346 = vunpack.c.l.b16 %v3950
    %v4347 = vunpack.c.l.b16 %v3951
    %v4348 = vunpack.c.l.b16 %v3952
    %v4349 = vunpack.c.l.b16 %v3953
    %v4350 = vunpack.c.l.b16 %v3954
    %v4351 = vunpack.c.l.b16 %v3955
    %v4352 = vunpack.c.l.b16 %v3956
    %v4353 = vunpack.c.l.b16 %v3957
    %v4354 = vunpack.c.l.b16 %v3958
    %v4355 = vunpack.c.l.b16 %v3959
    %v4356 = vunpack.c.l.b16 %v3960
    %v4357 = vunpack.c.l.b16 %v3961
    %v4358 = vunpack.c.l.b16 %v3962
    %v4359 = vunpack.c.l.b16 %v3963
    %v4360 = vunpack.c.l.b16 %v3964
    %v4361 = vunpack.c.l.b16 %v3965
    %v4362 = vunpack.c.l.b16 %v3966
    %v4363 = vunpack.c.l.b16 %v3967
    %v4364 = vunpack.c.l.b16 %v3968
    %v4365 = vunpack.c.l.b16 %v3969
    %v4366 = vunpack.c.l.b16 %v3970
    %v4367 = vunpack.c.l.b16 %v3971
    %v4368 = vunpack.c.l.b16 %v3972
    %v4369 = vunpack.c.l.b16 %v3973
    %v4370 = vunpack.c.l.b16 %v3974
    %v4371 = vunpack.c.l.b16 %v3975
    %v4372 = vunpack.c.l.b16 %v3976
    %v4373 = vunpack.c.l.b16 %v3977
    %v4374 = vunpack.c.l.b16 %v3978
    %v4375 = vunpack.c.l.b16 %v3979
    %v4376 = vunpack.c.l.b16 %v3980
    %v4377 = vunpack.c.l.b16 %v3981
    %v4378 = vunpack.c.l.b16 %v3982
    %v4379 = vunpack.c.l.b16 %v3983
    %v4380 = vunpack.c.l.b16 %v3984
    %v4381 = vunpack.c.l.b16 %v3985
    %v4382 = vunpack.c.l.b16 %v3986
    %v4383 = vunpack.c.l.b16 %v3987
    %v4384 = vunpack.c.l.b16 %v3988
    %v4385 = vunpack.c.l.b16 %v3989
    %v4386 = vunpack.c.l.b16 %v3990
    %v4387 = vunpack.c.l.b16 %v3991
    %v4388 = vpack.c.b16 %v4245, %v4244
    %v4389 = vpack.c.b16 %v4247, %v4246
    %v4390 = vpack.c.b16 %v4249, %v4248
    %v4391 = vpack.c.b16 %v4251, %v4250
    %v4392 = vpack.c.b16 %v4253, %v4252
    %v4393 = vpack.c.b16 %v4255, %v4254
    %v4394 = vpack.c.b16 %v4257, %v4256
    %v4395 = vpack.c.b16 %v4259, %v4258
    %v4396 = vpack.c.b16 %v4261, %v4260
    %v4397 = vpack.c.b16 %v4263, %v4262
    %v4398 = vpack.c.b16 %v4265, %v4264
    %v4399 = vpack.c.b16 %v4267, %v4266
    %v4400 = vpack.c.b16 %v4269, %v4268
    %v4401 = vpack.c.b16 %v4271, %v4270
    %v4402 = vpack.c.b16 %v4273, %v4272
    %v4403 = vpack.c.b16 %v4275, %v4274
    %v4404 = vpack.c.b16 %v4277, %v4276
    %v4405 = vpack.c.b16 %v4279, %v4278
    %v4406 = vpack.c.b16 %v4281, %v4280
    %v4407 = vpack.c.b16 %v4283, %v4282
    %v4408 = vpack.c.b16 %v4285, %v4284
    %v4409 = vpack.c.b16 %v4287, %v4286
    %v4410 = vpack.c.b16 %v4289, %v4288
    %v4411 = vpack.c.b16 %v4291, %v4290
    %v4412 = vpack.c.b16 %v4293, %v4292
    %v4413 = vpack.c.b16 %v4295, %v4294
    %v4414 = vpack.c.b16 %v4297, %v4296
    %v4415 = vpack.c.b16 %v4299, %v4298
    %v4416 = vpack.c.b16 %v4301, %v4300
    %v4417 = vpack.c.b16 %v4303, %v4302
    %v4418 = vpack.c.b16 %v4305, %v4304
    %v4419 = vpack.c.b16 %v4307, %v4306
    %v4420 = vpack.c.b16 %v4309, %v4308
    %v4421 = vpack.c.b16 %v4311, %v4310
    %v4422 = vpack.c.b16 %v4313, %v4312
    %v4423 = vpack.c.b16 %v4315, %v4314
    %v4424 = vpack.c.b16 %v4317, %v4316
    %v4425 = vpack.c.b16 %v4319, %v4318
    %v4426 = vpack.c.b16 %v4321, %v4320
    %v4427 = vpack.c.b16 %v4323, %v4322
    %v4428 = vpack.c.b16 %v4325, %v4324
    %v4429 = vpack.c.b16 %v4327, %v4326
    %v4430 = vpack.c.b16 %v4329, %v4328
    %v4431 = vpack.c.b16 %v4331, %v4330
    %v4432 = vpack.c.b16 %v4333, %v4332
    %v4433 = vpack.c.b16 %v4335, %v4334
    %v4434 = vpack.c.b16 %v4337, %v4336
    %v4435 = vpack.c.b16 %v4339, %v4338
    %v4436 = vpack.c.b16 %v4341, %v4340
    %v4437 = vpack.c.b16 %v4343, %v4342
    %v4438 = vpack.c.b16 %v4345, %v4344
    %v4439 = vpack.c.b16 %v4347, %v4346
    %v4440 = vpack.c.b16 %v4349, %v4348
    %v4441 = vpack.c.b16 %v4351, %v4350
    %v4442 = vpack.c.b16 %v4353, %v4352
    %v4443 = vpack.c.b16 %v4355, %v4354
    %v4444 = vpack.c.b16 %v4357, %v4356
    %v4445 = vpack.c.b16 %v4359, %v4358
    %v4446 = vpack.c.b16 %v4361, %v4360
    %v4447 = vpack.c.b16 %v4363, %v4362
    %v4448 = vpack.c.b16 %v4365, %v4364
    %v4449 = vpack.c.b16 %v4367, %v4366
    %v4450 = vpack.c.b16 %v4369, %v4368
    %v4451 = vpack.c.b16 %v4371, %v4370
    %v4452 = vpack.c.b16 %v4373, %v4372
    %v4453 = vpack.c.b16 %v4375, %v4374
    %v4454 = vpack.c.b16 %v4377, %v4376
    %v4455 = vpack.c.b16 %v4379, %v4378
    %v4456 = vpack.c.b16 %v4381, %v4380
    %v4457 = vpack.c.b16 %v4383, %v4382
    %v4458 = vpack.c.b16 %v4385, %v4384
    %v4459 = vpack.c.b16 %v4387, %v4386
    %4532 = vmatpush.bf16.msra.mxu0 %v4395
    %4533 = vmatpush.bf16.msra.mxu0 %v4394
    %4534 = vmatpush.bf16.msra.mxu0 %v4393
    %4535 = vmatpush.bf16.msra.mxu0 %v4392
    %4536 = vmatpush.bf16.msra.mxu0 %v4391
    %4537 = vmatpush.bf16.msra.mxu0 %v4390
    %4538 = vmatpush.bf16.msra.mxu0 %v4389
    %4539 = vmatpush.bf16.msra.mxu0 %v4388
    %4540 = vmatmul.bf16.gmra.mxu0 %v3992
    %v4541 = vpop.f32.mrf.mxu0
    %v4542 = vadd.f32 0.0, %v4541
    %v4543 = vpop.f32.mrf.mxu0
    %v4544 = vadd.f32 0.0, %v4543
    %4545 = vmatmul.bf16.gmra.mxu0 %v3998
    %v4546 = vpop.f32.mrf.mxu0
    %v4547 = vadd.f32 0.0, %v4546
    %v4548 = vpop.f32.mrf.mxu0
    %v4549 = vadd.f32 0.0, %v4548
    %4550 = vmatmul.bf16.gmra.mxu0 %v4004
    %v4551 = vpop.f32.mrf.mxu0
    %v4552 = vadd.f32 0.0, %v4551
    %v4553 = vpop.f32.mrf.mxu0
    %v4554 = vadd.f32 0.0, %v4553
    %4555 = vmatmul.bf16.gmra.mxu0 %v4010
    %v4556 = vpop.f32.mrf.mxu0
    %v4557 = vadd.f32 0.0, %v4556
    %v4558 = vpop.f32.mrf.mxu0
    %v4559 = vadd.f32 0.0, %v4558
    %4560 = vmatmul.bf16.gmra.mxu0 %v4019
    %v4561 = vpop.f32.mrf.mxu0
    %v4562 = vadd.f32 0.0, %v4561
    %v4563 = vpop.f32.mrf.mxu0
    %v4564 = vadd.f32 0.0, %v4563
    %4565 = vmatmul.bf16.gmra.mxu0 %v4025
    %v4566 = vpop.f32.mrf.mxu0
    %v4567 = vadd.f32 0.0, %v4566
    %v4568 = vpop.f32.mrf.mxu0
    %v4569 = vadd.f32 0.0, %v4568
    %4570 = vmatmul.bf16.gmra.mxu0 %v4031
    %v4571 = vpop.f32.mrf.mxu0
    %v4572 = vadd.f32 0.0, %v4571
    %v4573 = vpop.f32.mrf.mxu0
    %v4574 = vadd.f32 0.0, %v4573
    %4575 = vmatmul.bf16.gmra.mxu0 %v4037
    %v4576 = vpop.f32.mrf.mxu0
    %v4577 = vadd.f32 0.0, %v4576
    %v4578 = vpop.f32.mrf.mxu0
    %v4579 = vadd.f32 0.0, %v4578
    %4580 = vdwg.mxu0
    %4581 = vmatpush.bf16.msra.mxu0 %v4403
    %4582 = vmatpush.bf16.msra.mxu0 %v4402
    %4583 = vmatpush.bf16.msra.mxu0 %v4401
    %4584 = vmatpush.bf16.msra.mxu0 %v4400
    %4585 = vmatpush.bf16.msra.mxu0 %v4399
    %4586 = vmatpush.bf16.msra.mxu0 %v4398
    %4587 = vmatpush.bf16.msra.mxu0 %v4397
    %4588 = vmatpush.bf16.msra.mxu0 %v4396
    %4589 = vmatmul.bf16.gmra.mxu0 %v3993
    %v4590 = vpop.f32.mrf.mxu0
    %v4591 = vadd.f32 %v4542, %v4590
    %v4592 = vpop.f32.mrf.mxu0
    %v4593 = vadd.f32 %v4544, %v4592
    %4594 = vmatmul.bf16.gmra.mxu0 %v3999
    %v4595 = vpop.f32.mrf.mxu0
    %v4596 = vadd.f32 %v4547, %v4595
    %v4597 = vpop.f32.mrf.mxu0
    %v4598 = vadd.f32 %v4549, %v4597
    %4599 = vmatmul.bf16.gmra.mxu0 %v4005
    %v4600 = vpop.f32.mrf.mxu0
    %v4601 = vadd.f32 %v4552, %v4600
    %v4602 = vpop.f32.mrf.mxu0
    %v4603 = vadd.f32 %v4554, %v4602
    %4604 = vmatmul.bf16.gmra.mxu0 %v4011
    %v4605 = vpop.f32.mrf.mxu0
    %v4606 = vadd.f32 %v4557, %v4605
    %v4607 = vpop.f32.mrf.mxu0
    %v4608 = vadd.f32 %v4559, %v4607
    %4609 = vmatmul.bf16.gmra.mxu0 %v4020
    %v4610 = vpop.f32.mrf.mxu0
    %v4611 = vadd.f32 %v4562, %v4610
    %v4612 = vpop.f32.mrf.mxu0
    %v4613 = vadd.f32 %v4564, %v4612
    %4614 = vmatmul.bf16.gmra.mxu0 %v4026
    %v4615 = vpop.f32.mrf.mxu0
    %v4616 = vadd.f32 %v4567, %v4615
    %v4617 = vpop.f32.mrf.mxu0
    %v4618 = vadd.f32 %v4569, %v4617
    %4619 = vmatmul.bf16.gmra.mxu0 %v4032
    %v4620 = vpop.f32.mrf.mxu0
    %v4621 = vadd.f32 %v4572, %v4620
    %v4622 = vpop.f32.mrf.mxu0
    %v4623 = vadd.f32 %v4574, %v4622
    %4624 = vmatmul.bf16.gmra.mxu0 %v4038
    %v4625 = vpop.f32.mrf.mxu0
    %v4626 = vadd.f32 %v4577, %v4625
    %v4627 = vpop.f32.mrf.mxu0
    %v4628 = vadd.f32 %v4579, %v4627
    %4629 = vdwg.mxu0
    %4630 = vmatpush.bf16.msra.mxu0 %v4411
    %4631 = vmatpush.bf16.msra.mxu0 %v4410
    %4632 = vmatpush.bf16.msra.mxu0 %v4409
    %4633 = vmatpush.bf16.msra.mxu0 %v4408
    %4634 = vmatpush.bf16.msra.mxu0 %v4407
    %4635 = vmatpush.bf16.msra.mxu0 %v4406
    %4636 = vmatpush.bf16.msra.mxu0 %v4405
    %4637 = vmatpush.bf16.msra.mxu0 %v4404
    %4638 = vmatmul.bf16.gmra.mxu0 %v3994
    %v4639 = vpop.f32.mrf.mxu0
    %v4640 = vadd.f32 %v4591, %v4639
    %v4641 = vpop.f32.mrf.mxu0
    %v4642 = vadd.f32 %v4593, %v4641
    %4643 = vmatmul.bf16.gmra.mxu0 %v4000
    %v4644 = vpop.f32.mrf.mxu0
    %v4645 = vadd.f32 %v4596, %v4644
    %v4646 = vpop.f32.mrf.mxu0
    %v4647 = vadd.f32 %v4598, %v4646
    %4648 = vmatmul.bf16.gmra.mxu0 %v4006
    %v4649 = vpop.f32.mrf.mxu0
    %v4650 = vadd.f32 %v4601, %v4649
    %v4651 = vpop.f32.mrf.mxu0
    %v4652 = vadd.f32 %v4603, %v4651
    %4653 = vmatmul.bf16.gmra.mxu0 %v4012
    %v4654 = vpop.f32.mrf.mxu0
    %v4655 = vadd.f32 %v4606, %v4654
    %v4656 = vpop.f32.mrf.mxu0
    %v4657 = vadd.f32 %v4608, %v4656
    %4658 = vmatmul.bf16.gmra.mxu0 %v4021
    %v4659 = vpop.f32.mrf.mxu0
    %v4660 = vadd.f32 %v4611, %v4659
    %v4661 = vpop.f32.mrf.mxu0
    %v4662 = vadd.f32 %v4613, %v4661
    %4663 = vmatmul.bf16.gmra.mxu0 %v4027
    %v4664 = vpop.f32.mrf.mxu0
    %v4665 = vadd.f32 %v4616, %v4664
    %v4666 = vpop.f32.mrf.mxu0
    %v4667 = vadd.f32 %v4618, %v4666
    %4668 = vmatmul.bf16.gmra.mxu0 %v4033
    %v4669 = vpop.f32.mrf.mxu0
    %v4670 = vadd.f32 %v4621, %v4669
    %v4671 = vpop.f32.mrf.mxu0
    %v4672 = vadd.f32 %v4623, %v4671
    %4673 = vmatmul.bf16.gmra.mxu0 %v4039
    %v4674 = vpop.f32.mrf.mxu0
    %v4675 = vadd.f32 %v4626, %v4674
    %v4676 = vpop.f32.mrf.mxu0
    %v4677 = vadd.f32 %v4628, %v4676
    %4678 = vdwg.mxu0
    %4679 = vmatpush.bf16.msra.mxu0 %v4419
    %4680 = vmatpush.bf16.msra.mxu0 %v4418
    %4681 = vmatpush.bf16.msra.mxu0 %v4417
    %4682 = vmatpush.bf16.msra.mxu0 %v4416
    %4683 = vmatpush.bf16.msra.mxu0 %v4415
    %4684 = vmatpush.bf16.msra.mxu0 %v4414
    %4685 = vmatpush.bf16.msra.mxu0 %v4413
    %4686 = vmatpush.bf16.msra.mxu0 %v4412
    %4687 = vmatmul.bf16.gmra.mxu0 %v3995
    %v4688 = vpop.f32.mrf.mxu0
    %v4689 = vadd.f32 %v4640, %v4688
    %v4690 = vpop.f32.mrf.mxu0
    %v4691 = vadd.f32 %v4642, %v4690
    %4692 = vmatmul.bf16.gmra.mxu0 %v4001
    %v4693 = vpop.f32.mrf.mxu0
    %v4694 = vadd.f32 %v4645, %v4693
    %v4695 = vpop.f32.mrf.mxu0
    %v4696 = vadd.f32 %v4647, %v4695
    %4697 = vmatmul.bf16.gmra.mxu0 %v4007
    %v4698 = vpop.f32.mrf.mxu0
    %v4699 = vadd.f32 %v4650, %v4698
    %v4700 = vpop.f32.mrf.mxu0
    %v4701 = vadd.f32 %v4652, %v4700
    %4702 = vmatmul.bf16.gmra.mxu0 %v4013
    %v4703 = vpop.f32.mrf.mxu0
    %v4704 = vadd.f32 %v4655, %v4703
    %v4705 = vpop.f32.mrf.mxu0
    %v4706 = vadd.f32 %v4657, %v4705
    %4707 = vmatmul.bf16.gmra.mxu0 %v4022
    %v4708 = vpop.f32.mrf.mxu0
    %v4709 = vadd.f32 %v4660, %v4708
    %v4710 = vpop.f32.mrf.mxu0
    %v4711 = vadd.f32 %v4662, %v4710
    %4712 = vmatmul.bf16.gmra.mxu0 %v4028
    %v4713 = vpop.f32.mrf.mxu0
    %v4714 = vadd.f32 %v4665, %v4713
    %v4715 = vpop.f32.mrf.mxu0
    %v4716 = vadd.f32 %v4667, %v4715
    %4717 = vmatmul.bf16.gmra.mxu0 %v4034
    %v4718 = vpop.f32.mrf.mxu0
    %v4719 = vadd.f32 %v4670, %v4718
    %v4720 = vpop.f32.mrf.mxu0
    %v4721 = vadd.f32 %v4672, %v4720
    %4722 = vmatmul.bf16.gmra.mxu0 %v4040
    %v4723 = vpop.f32.mrf.mxu0
    %v4724 = vadd.f32 %v4675, %v4723
    %v4725 = vpop.f32.mrf.mxu0
    %v4726 = vadd.f32 %v4677, %v4725
    %4727 = vdwg.mxu0
    %4728 = vmatpush.bf16.msra.mxu0 %v4427
    %4729 = vmatpush.bf16.msra.mxu0 %v4426
    %4730 = vmatpush.bf16.msra.mxu0 %v4425
    %4731 = vmatpush.bf16.msra.mxu0 %v4424
    %4732 = vmatpush.bf16.msra.mxu0 %v4423
    %4733 = vmatpush.bf16.msra.mxu0 %v4422
    %4734 = vmatpush.bf16.msra.mxu0 %v4421
    %4735 = vmatpush.bf16.msra.mxu0 %v4420
    %4736 = vmatmul.bf16.gmra.mxu0 %v3996
    %v4737 = vpop.f32.mrf.mxu0
    %v4738 = vadd.f32 %v4689, %v4737
    %v4739 = vpop.f32.mrf.mxu0
    %v4740 = vadd.f32 %v4691, %v4739
    %4741 = vmatmul.bf16.gmra.mxu0 %v4002
    %v4742 = vpop.f32.mrf.mxu0
    %v4743 = vadd.f32 %v4694, %v4742
    %v4744 = vpop.f32.mrf.mxu0
    %v4745 = vadd.f32 %v4696, %v4744
    %4746 = vmatmul.bf16.gmra.mxu0 %v4008
    %v4747 = vpop.f32.mrf.mxu0
    %v4748 = vadd.f32 %v4699, %v4747
    %v4749 = vpop.f32.mrf.mxu0
    %v4750 = vadd.f32 %v4701, %v4749
    %4751 = vmatmul.bf16.gmra.mxu0 %v4014
    %v4752 = vpop.f32.mrf.mxu0
    %v4753 = vadd.f32 %v4704, %v4752
    %v4754 = vpop.f32.mrf.mxu0
    %v4755 = vadd.f32 %v4706, %v4754
    %4756 = vmatmul.bf16.gmra.mxu0 %v4023
    %v4757 = vpop.f32.mrf.mxu0
    %v4758 = vadd.f32 %v4709, %v4757
    %v4759 = vpop.f32.mrf.mxu0
    %v4760 = vadd.f32 %v4711, %v4759
    %4761 = vmatmul.bf16.gmra.mxu0 %v4029
    %v4762 = vpop.f32.mrf.mxu0
    %v4763 = vadd.f32 %v4714, %v4762
    %v4764 = vpop.f32.mrf.mxu0
    %v4765 = vadd.f32 %v4716, %v4764
    %4766 = vmatmul.bf16.gmra.mxu0 %v4035
    %v4767 = vpop.f32.mrf.mxu0
    %v4768 = vadd.f32 %v4719, %v4767
    %v4769 = vpop.f32.mrf.mxu0
    %v4770 = vadd.f32 %v4721, %v4769
    %4771 = vmatmul.bf16.gmra.mxu0 %v4041
    %v4772 = vpop.f32.mrf.mxu0
    %v4773 = vadd.f32 %v4724, %v4772
    %v4774 = vpop.f32.mrf.mxu0
    %v4775 = vadd.f32 %v4726, %v4774
    %4776 = vdwg.mxu0
    %4777 = vmatpush.bf16.msra.mxu0 %v4435
    %4778 = vmatpush.bf16.msra.mxu0 %v4434
    %4779 = vmatpush.bf16.msra.mxu0 %v4433
    %4780 = vmatpush.bf16.msra.mxu0 %v4432
    %4781 = vmatpush.bf16.msra.mxu0 %v4431
    %4782 = vmatpush.bf16.msra.mxu0 %v4430
    %4783 = vmatpush.bf16.msra.mxu0 %v4429
    %4784 = vmatpush.bf16.msra.mxu0 %v4428
    %4785 = vmatmul.bf16.gmra.mxu0 %v3997
    %v4786 = vpop.f32.mrf.mxu0
    %v4787 = vadd.f32 %v4738, %v4786
    %v4788 = vpop.f32.mrf.mxu0
    %v4789 = vadd.f32 %v4740, %v4788
    %4790 = vmatmul.bf16.gmra.mxu0 %v4003
    %v4791 = vpop.f32.mrf.mxu0
    %v4792 = vadd.f32 %v4743, %v4791
    %v4793 = vpop.f32.mrf.mxu0
    %v4794 = vadd.f32 %v4745, %v4793
    %4795 = vmatmul.bf16.gmra.mxu0 %v4009
    %v4796 = vpop.f32.mrf.mxu0
    %v4797 = vadd.f32 %v4748, %v4796
    %v4798 = vpop.f32.mrf.mxu0
    %v4799 = vadd.f32 %v4750, %v4798
    %4800 = vmatmul.bf16.gmra.mxu0 %v4015
    %v4801 = vpop.f32.mrf.mxu0
    %v4802 = vadd.f32 %v4753, %v4801
    %v4803 = vpop.f32.mrf.mxu0
    %v4804 = vadd.f32 %v4755, %v4803
    %4805 = vmatmul.bf16.gmra.mxu0 %v4024
    %v4806 = vpop.f32.mrf.mxu0
    %v4807 = vadd.f32 %v4758, %v4806
    %v4808 = vpop.f32.mrf.mxu0
    %v4809 = vadd.f32 %v4760, %v4808
    %4810 = vmatmul.bf16.gmra.mxu0 %v4030
    %v4811 = vpop.f32.mrf.mxu0
    %v4812 = vadd.f32 %v4763, %v4811
    %v4813 = vpop.f32.mrf.mxu0
    %v4814 = vadd.f32 %v4765, %v4813
    %4815 = vmatmul.bf16.gmra.mxu0 %v4036
    %v4816 = vpop.f32.mrf.mxu0
    %v4817 = vadd.f32 %v4768, %v4816
    %v4818 = vpop.f32.mrf.mxu0
    %v4819 = vadd.f32 %v4770, %v4818
    %4820 = vmatmul.bf16.gmra.mxu0 %v4042
    %v4821 = vpop.f32.mrf.mxu0
    %v4822 = vadd.f32 %v4773, %v4821
    %v4823 = vpop.f32.mrf.mxu0
    %v4824 = vadd.f32 %v4775, %v4823
    %4825 = vdwg.mxu0
    %4826 = vmatpush.bf16.msra.mxu0 %v4443
    %4827 = vmatpush.bf16.msra.mxu0 %v4442
    %4828 = vmatpush.bf16.msra.mxu0 %v4441
    %4829 = vmatpush.bf16.msra.mxu0 %v4440
    %4830 = vmatpush.bf16.msra.mxu0 %v4439
    %4831 = vmatpush.bf16.msra.mxu0 %v4438
    %4832 = vmatpush.bf16.msra.mxu0 %v4437
    %4833 = vmatpush.bf16.msra.mxu0 %v4436
    %4834 = vmatmul.bf16.gmra.mxu0 %v3998
    %v4835 = vpop.f32.mrf.mxu0
    %v4836 = vadd.f32 %v4787, %v4835
    %v4837 = vpop.f32.mrf.mxu0
    %v4838 = vadd.f32 %v4789, %v4837
    %4839 = vmatmul.bf16.gmra.mxu0 %v4004
    %v4840 = vpop.f32.mrf.mxu0
    %v4841 = vadd.f32 %v4792, %v4840
    %v4842 = vpop.f32.mrf.mxu0
    %v4843 = vadd.f32 %v4794, %v4842
    %4844 = vmatmul.bf16.gmra.mxu0 %v4010
    %v4845 = vpop.f32.mrf.mxu0
    %v4846 = vadd.f32 %v4797, %v4845
    %v4847 = vpop.f32.mrf.mxu0
    %v4848 = vadd.f32 %v4799, %v4847
    %4849 = vmatmul.bf16.gmra.mxu0 %v4016
    %v4850 = vpop.f32.mrf.mxu0
    %v4851 = vadd.f32 %v4802, %v4850
    %v4852 = vpop.f32.mrf.mxu0
    %v4853 = vadd.f32 %v4804, %v4852
    %4854 = vmatmul.bf16.gmra.mxu0 %v4025
    %v4855 = vpop.f32.mrf.mxu0
    %v4856 = vadd.f32 %v4807, %v4855
    %v4857 = vpop.f32.mrf.mxu0
    %v4858 = vadd.f32 %v4809, %v4857
    %4859 = vmatmul.bf16.gmra.mxu0 %v4031
    %v4860 = vpop.f32.mrf.mxu0
    %v4861 = vadd.f32 %v4812, %v4860
    %v4862 = vpop.f32.mrf.mxu0
    %v4863 = vadd.f32 %v4814, %v4862
    %4864 = vmatmul.bf16.gmra.mxu0 %v4037
    %v4865 = vpop.f32.mrf.mxu0
    %v4866 = vadd.f32 %v4817, %v4865
    %v4867 = vpop.f32.mrf.mxu0
    %v4868 = vadd.f32 %v4819, %v4867
    %4869 = vmatmul.bf16.gmra.mxu0 %v4043
    %v4870 = vpop.f32.mrf.mxu0
    %v4871 = vadd.f32 %v4822, %v4870
    %v4872 = vpop.f32.mrf.mxu0
    %v4873 = vadd.f32 %v4824, %v4872
    %4874 = vdwg.mxu0
    %4875 = vmatpush.bf16.msra.mxu0 %v4451
    %4876 = vmatpush.bf16.msra.mxu0 %v4450
    %4877 = vmatpush.bf16.msra.mxu0 %v4449
    %4878 = vmatpush.bf16.msra.mxu0 %v4448
    %4879 = vmatpush.bf16.msra.mxu0 %v4447
    %4880 = vmatpush.bf16.msra.mxu0 %v4446
    %4881 = vmatpush.bf16.msra.mxu0 %v4445
    %4882 = vmatpush.bf16.msra.mxu0 %v4444
    %4883 = vmatmul.bf16.gmra.mxu0 %v3999
    %v4884 = vpop.f32.mrf.mxu0
    %v4885 = vadd.f32 %v4836, %v4884
    %v4886 = vpop.f32.mrf.mxu0
    %v4887 = vadd.f32 %v4838, %v4886
    %4888 = vmatmul.bf16.gmra.mxu0 %v4005
    %v4889 = vpop.f32.mrf.mxu0
    %v4890 = vadd.f32 %v4841, %v4889
    %v4891 = vpop.f32.mrf.mxu0
    %v4892 = vadd.f32 %v4843, %v4891
    %4893 = vmatmul.bf16.gmra.mxu0 %v4011
    %v4894 = vpop.f32.mrf.mxu0
    %v4895 = vadd.f32 %v4846, %v4894
    %v4896 = vpop.f32.mrf.mxu0
    %v4897 = vadd.f32 %v4848, %v4896
    %4898 = vmatmul.bf16.gmra.mxu0 %v4017
    %v4899 = vpop.f32.mrf.mxu0
    %v4900 = vadd.f32 %v4851, %v4899
    %v4901 = vpop.f32.mrf.mxu0
    %v4902 = vadd.f32 %v4853, %v4901
    %4903 = vmatmul.bf16.gmra.mxu0 %v4026
    %v4904 = vpop.f32.mrf.mxu0
    %v4905 = vadd.f32 %v4856, %v4904
    %v4906 = vpop.f32.mrf.mxu0
    %v4907 = vadd.f32 %v4858, %v4906
    %4908 = vmatmul.bf16.gmra.mxu0 %v4032
    %v4909 = vpop.f32.mrf.mxu0
    %v4910 = vadd.f32 %v4861, %v4909
    %v4911 = vpop.f32.mrf.mxu0
    %v4912 = vadd.f32 %v4863, %v4911
    %4913 = vmatmul.bf16.gmra.mxu0 %v4038
    %v4914 = vpop.f32.mrf.mxu0
    %v4915 = vadd.f32 %v4866, %v4914
    %v4916 = vpop.f32.mrf.mxu0
    %v4917 = vadd.f32 %v4868, %v4916
    %4918 = vmatmul.bf16.gmra.mxu0 %v4044
    %v4919 = vpop.f32.mrf.mxu0
    %v4920 = vadd.f32 %v4871, %v4919
    %v4921 = vpop.f32.mrf.mxu0
    %v4922 = vadd.f32 %v4873, %v4921
    %4923 = vdwg.mxu0
    %4924 = vmatpush.bf16.msra.mxu0 %v4459
    %4925 = vmatpush.bf16.msra.mxu0 %v4458
    %4926 = vmatpush.bf16.msra.mxu0 %v4457
    %4927 = vmatpush.bf16.msra.mxu0 %v4456
    %4928 = vmatpush.bf16.msra.mxu0 %v4455
    %4929 = vmatpush.bf16.msra.mxu0 %v4454
    %4930 = vmatpush.bf16.msra.mxu0 %v4453
    %4931 = vmatpush.bf16.msra.mxu0 %v4452
    %4932 = vmatmul.bf16.gmra.mxu0 %v4000
    %v4933 = vpop.f32.mrf.mxu0
    %v4934 = vadd.f32 %v4885, %v4933
    %v4935 = vpop.f32.mrf.mxu0
    %v4936 = vadd.f32 %v4887, %v4935
    %4937 = vmatmul.bf16.gmra.mxu0 %v4006
    %v4938 = vpop.f32.mrf.mxu0
    %v4939 = vadd.f32 %v4890, %v4938
    %v4940 = vpop.f32.mrf.mxu0
    %v4941 = vadd.f32 %v4892, %v4940
    %4942 = vmatmul.bf16.gmra.mxu0 %v4012
    %v4943 = vpop.f32.mrf.mxu0
    %v4944 = vadd.f32 %v4895, %v4943
    %v4945 = vpop.f32.mrf.mxu0
    %v4946 = vadd.f32 %v4897, %v4945
    %4947 = vmatmul.bf16.gmra.mxu0 %v4018
    %v4948 = vpop.f32.mrf.mxu0
    %v4949 = vadd.f32 %v4900, %v4948
    %v4950 = vpop.f32.mrf.mxu0
    %v4951 = vadd.f32 %v4902, %v4950
    %4952 = vmatmul.bf16.gmra.mxu0 %v4027
    %v4953 = vpop.f32.mrf.mxu0
    %v4954 = vadd.f32 %v4905, %v4953
    %v4955 = vpop.f32.mrf.mxu0
    %v4956 = vadd.f32 %v4907, %v4955
    %4957 = vmatmul.bf16.gmra.mxu0 %v4033
    %v4958 = vpop.f32.mrf.mxu0
    %v4959 = vadd.f32 %v4910, %v4958
    %v4960 = vpop.f32.mrf.mxu0
    %v4961 = vadd.f32 %v4912, %v4960
    %4962 = vmatmul.bf16.gmra.mxu0 %v4039
    %v4963 = vpop.f32.mrf.mxu0
    %v4964 = vadd.f32 %v4915, %v4963
    %v4965 = vpop.f32.mrf.mxu0
    %v4966 = vadd.f32 %v4917, %v4965
    %4967 = vmatmul.bf16.gmra.mxu0 %v4045
    %v4968 = vpop.f32.mrf.mxu0
    %v4969 = vadd.f32 %v4920, %v4968
    %v4970 = vpop.f32.mrf.mxu0
    %v4971 = vadd.f32 %v4922, %v4970
    %4972 = vdwg.mxu0
    %v4974 = vrot.slane %v3493, 1
    %v4975 = vperm.slane %v3493, 0
    %v4976 = vperm.slane %v4974, 0
    %v4979 = vmul.f32 %v4934, %v4975
    %v4980 = vmul.f32 %v4936, %v4975
    %v4981 = vmul.f32 %v4939, %v4975
    %v4982 = vmul.f32 %v4941, %v4975
    %v4983 = vmul.f32 %v4944, %v4975
    %v4984 = vmul.f32 %v4946, %v4975
    %v4985 = vmul.f32 %v4949, %v4975
    %v4986 = vmul.f32 %v4951, %v4975
    %v4987 = vmul.f32 %v4954, %v4976
    %v4988 = vmul.f32 %v4956, %v4976
    %v4989 = vmul.f32 %v4959, %v4976
    %v4990 = vmul.f32 %v4961, %v4976
    %v4991 = vmul.f32 %v4964, %v4976
    %v4992 = vmul.f32 %v4966, %v4976
    %v4993 = vmul.f32 %v4969, %v4976
    %v4994 = vmul.f32 %v4971, %v4976
    %v4995 = vstv %s3495
    %v4996 = vmul.f32 %v4995, %v3485
    %v4997 = vmul.f32 %v4995, %v3486
    %v4998 = vmul.f32 %v4995, %v3487
    %v4999 = vmul.f32 %v4995, %v3488
    %v5000 = vmul.f32 %v4995, %v3489
    %v5001 = vmul.f32 %v4995, %v3490
    %v5002 = vmul.f32 %v4995, %v3491
    %v5003 = vmul.f32 %v4995, %v3492
    %5005 = vset.pattern.permute.xlu0 0
    %5006 = vperm.xlu0 %5005, %v4996
    %v5007 = vpop.permute.xlu0 %5006
    %5010 = vset.pattern.permute.xlu0 0
    %5011 = vperm.xlu0 %5010, %v4997
    %v5012 = vpop.permute.xlu0 %5011
    %5015 = vset.pattern.permute.xlu0 0
    %5016 = vperm.xlu0 %5015, %v4998
    %v5017 = vpop.permute.xlu0 %5016
    %5020 = vset.pattern.permute.xlu0 0
    %5021 = vperm.xlu0 %5020, %v4999
    %v5022 = vpop.permute.xlu0 %5021
    %5025 = vset.pattern.permute.xlu0 0
    %5026 = vperm.xlu0 %5025, %v5000
    %v5027 = vpop.permute.xlu0 %5026
    %5030 = vset.pattern.permute.xlu0 0
    %5031 = vperm.xlu0 %5030, %v5001
    %v5032 = vpop.permute.xlu0 %5031
    %5035 = vset.pattern.permute.xlu0 0
    %5036 = vperm.xlu0 %5035, %v5002
    %v5037 = vpop.permute.xlu0 %5036
    %5040 = vset.pattern.permute.xlu0 0
    %5041 = vperm.xlu0 %5040, %v5003
    %v5042 = vpop.permute.xlu0 %5041
    %v5044 = vadd.f32 %v4979, %v5007
    %v5045 = vadd.f32 %v4980, %v5012
    %v5046 = vadd.f32 %v4981, %v5017
    %v5047 = vadd.f32 %v4982, %v5022
    %v5048 = vadd.f32 %v4983, %v5027
    %v5049 = vadd.f32 %v4984, %v5032
    %v5050 = vadd.f32 %v4985, %v5037
    %v5051 = vadd.f32 %v4986, %v5042
    %v5052 = vadd.f32 %v4987, %v5007
    %v5053 = vadd.f32 %v4988, %v5012
    %v5054 = vadd.f32 %v4989, %v5017
    %v5055 = vadd.f32 %v4990, %v5022
    %v5056 = vadd.f32 %v4991, %v5027
    %v5057 = vadd.f32 %v4992, %v5032
    %v5058 = vadd.f32 %v4993, %v5037
    %v5059 = vadd.f32 %v4994, %v5042
    %v5061 = vperm.slane %v3494, 0
    %v5063 = vadd.f32 %v5044, %v5061
    %v5064 = vadd.f32 %v5045, %v5061
    %v5065 = vadd.f32 %v5046, %v5061
    %v5066 = vadd.f32 %v5047, %v5061
    %v5067 = vadd.f32 %v5048, %v5061
    %v5068 = vadd.f32 %v5049, %v5061
    %v5069 = vadd.f32 %v5050, %v5061
    %v5070 = vadd.f32 %v5051, %v5061
    %v5071 = vadd.f32 %v5052, %v5061
    %v5072 = vadd.f32 %v5053, %v5061
    %v5073 = vadd.f32 %v5054, %v5061
    %v5074 = vadd.f32 %v5055, %v5061
    %v5075 = vadd.f32 %v5056, %v5061
    %v5076 = vadd.f32 %v5057, %v5061
    %v5077 = vadd.f32 %v5058, %v5061
    %v5078 = vadd.f32 %v5059, %v5061
    %vm5079 = vcmp.ge.f32.partialorder %v5063, 0.0
    %vm5080 = vcmp.ge.f32.partialorder %v5064, 0.0
    %vm5081 = vcmp.ge.f32.partialorder %v5065, 0.0
    %vm5082 = vcmp.ge.f32.partialorder %v5066, 0.0
    %vm5083 = vcmp.ge.f32.partialorder %v5067, 0.0
    %vm5084 = vcmp.ge.f32.partialorder %v5068, 0.0
    %vm5085 = vcmp.ge.f32.partialorder %v5069, 0.0
    %vm5086 = vcmp.ge.f32.partialorder %v5070, 0.0
    %vm5087 = vcmp.ge.f32.partialorder %v5071, 0.0
    %vm5088 = vcmp.ge.f32.partialorder %v5072, 0.0
    %vm5089 = vcmp.ge.f32.partialorder %v5073, 0.0
    %vm5090 = vcmp.ge.f32.partialorder %v5074, 0.0
    %vm5091 = vcmp.ge.f32.partialorder %v5075, 0.0
    %vm5092 = vcmp.ge.f32.partialorder %v5076, 0.0
    %vm5093 = vcmp.ge.f32.partialorder %v5077, 0.0
    %vm5094 = vcmp.ge.f32.partialorder %v5078, 0.0
    %v5095 = vmul.f32 %v5063, 0.2
    %v5096 = vmul.f32 %v5064, 0.2
    %v5097 = vmul.f32 %v5065, 0.2
    %v5098 = vmul.f32 %v5066, 0.2
    %v5099 = vmul.f32 %v5067, 0.2
    %v5100 = vmul.f32 %v5068, 0.2
    %v5101 = vmul.f32 %v5069, 0.2
    %v5102 = vmul.f32 %v5070, 0.2
    %v5103 = vmul.f32 %v5071, 0.2
    %v5104 = vmul.f32 %v5072, 0.2
    %v5105 = vmul.f32 %v5073, 0.2
    %v5106 = vmul.f32 %v5074, 0.2
    %v5107 = vmul.f32 %v5075, 0.2
    %v5108 = vmul.f32 %v5076, 0.2
    %v5109 = vmul.f32 %v5077, 0.2
    %v5110 = vmul.f32 %v5078, 0.2
    %v5111 = vsel %vm5079, %v5063, %v5095
    %v5112 = vsel %vm5080, %v5064, %v5096
    %v5113 = vsel %vm5081, %v5065, %v5097
    %v5114 = vsel %vm5082, %v5066, %v5098
    %v5115 = vsel %vm5083, %v5067, %v5099
    %v5116 = vsel %vm5084, %v5068, %v5100
    %v5117 = vsel %vm5085, %v5069, %v5101
    %v5118 = vsel %vm5086, %v5070, %v5102
    %v5119 = vsel %vm5087, %v5071, %v5103
    %v5120 = vsel %vm5088, %v5072, %v5104
    %v5121 = vsel %vm5089, %v5073, %v5105
    %v5122 = vsel %vm5090, %v5074, %v5106
    %v5123 = vsel %vm5091, %v5075, %v5107
    %v5124 = vsel %vm5092, %v5076, %v5108
    %v5125 = vsel %vm5093, %v5077, %v5109
    %v5126 = vsel %vm5094, %v5078, %v5110
    %v5127 = vmul.f32 %v5111, 1.4142135
    %v5128 = vmul.f32 %v5112, 1.4142135
    %v5129 = vmul.f32 %v5113, 1.4142135
    %v5130 = vmul.f32 %v5114, 1.4142135
    %v5131 = vmul.f32 %v5115, 1.4142135
    %v5132 = vmul.f32 %v5116, 1.4142135
    %v5133 = vmul.f32 %v5117, 1.4142135
    %v5134 = vmul.f32 %v5118, 1.4142135
    %v5135 = vmul.f32 %v5119, 1.4142135
    %v5136 = vmul.f32 %v5120, 1.4142135
    %v5137 = vmul.f32 %v5121, 1.4142135
    %v5138 = vmul.f32 %v5122, 1.4142135
    %v5139 = vmul.f32 %v5123, 1.4142135
    %v5140 = vmul.f32 %v5124, 1.4142135
    %v5141 = vmul.f32 %v5125, 1.4142135
    %v5142 = vmul.f32 %v5126, 1.4142135
    %v5143 = vld [vmem:[%s13] sm:$0x3]
    %v5145 = vrot.slane %v5143, 1
    %v5146 = vperm.slane %v5143, 0
    %v5147 = vperm.slane %v5145, 0
    %v5150 = vmul.f32 %v5127, %v5146
    %v5151 = vmul.f32 %v5128, %v5146
    %v5152 = vmul.f32 %v5129, %v5146
    %v5153 = vmul.f32 %v5130, %v5146
    %v5154 = vmul.f32 %v5131, %v5146
    %v5155 = vmul.f32 %v5132, %v5146
    %v5156 = vmul.f32 %v5133, %v5146
    %v5157 = vmul.f32 %v5134, %v5146
    %v5158 = vmul.f32 %v5135, %v5147
    %v5159 = vmul.f32 %v5136, %v5147
    %v5160 = vmul.f32 %v5137, %v5147
    %v5161 = vmul.f32 %v5138, %v5147
    %v5162 = vmul.f32 %v5139, %v5147
    %v5163 = vmul.f32 %v5140, %v5147
    %v5164 = vmul.f32 %v5141, %v5147
    %v5165 = vmul.f32 %v5142, %v5147
    %v5166 = vpack.c.bf16 %v5150, %v5150
    %v5167 = vpack.c.bf16 %v5151, %v5151
    %v5168 = vpack.c.bf16 %v5152, %v5152
    %v5169 = vpack.c.bf16 %v5153, %v5153
    %v5170 = vpack.c.bf16 %v5154, %v5154
    %v5171 = vpack.c.bf16 %v5155, %v5155
    %v5172 = vpack.c.bf16 %v5156, %v5156
    %v5173 = vpack.c.bf16 %v5157, %v5157
    %v5174 = vpack.c.bf16 %v5158, %v5158
    %v5175 = vpack.c.bf16 %v5159, %v5159
    %v5176 = vpack.c.bf16 %v5160, %v5160
    %v5177 = vpack.c.bf16 %v5161, %v5161
    %v5178 = vpack.c.bf16 %v5162, %v5162
    %v5179 = vpack.c.bf16 %v5163, %v5163
    %v5180 = vpack.c.bf16 %v5164, %v5164
    %v5181 = vpack.c.bf16 %v5165, %v5165
    %v5198 = vrot.slane %v5166, 3
    %v5199 = vrot.slane %v5167, 3
    %v5200 = vrot.slane %v5168, 3
    %v5201 = vrot.slane %v5169, 3
    %v5202 = vrot.slane %v5170, 3
    %v5203 = vrot.slane %v5171, 3
    %v5204 = vrot.slane %v5172, 3
    %v5205 = vrot.slane %v5173, 3
    %v5206 = vrot.slane %v5174, 3
    %v5207 = vrot.slane %v5175, 3
    %v5208 = vrot.slane %v5176, 3
    %v5209 = vrot.slane %v5177, 3
    %v5210 = vrot.slane %v5178, 3
    %v5211 = vrot.slane %v5179, 3
    %v5212 = vrot.slane %v5180, 3
    %v5213 = vrot.slane %v5181, 3
    %v5216 = vsel %vm1486, %v5166, %v5198
    %v5218 = vsel %vm1491, %v5166, %v5198
    %v5220 = vrot.slane %v5218, 1
    %vm5221 = vcmask 1042434
    %v5222 = vsel %vm5221, %v5166, %v5198
    %v5224 = vrot.slane %v5222, 2
    %vm5225 = vcmask 1043459
    %v5226 = vsel %vm5225, %v5166, %v5198
    %v5228 = vrot.slane %v5226, 3
    %v5231 = vsel %vm1486, %v5167, %v5199
    %v5233 = vsel %vm1491, %v5167, %v5199
    %v5235 = vrot.slane %v5233, 1
    %v5236 = vsel %vm5221, %v5167, %v5199
    %v5238 = vrot.slane %v5236, 2
    %v5239 = vsel %vm5225, %v5167, %v5199
    %v5241 = vrot.slane %v5239, 3
    %v5244 = vsel %vm1486, %v5168, %v5200
    %v5246 = vsel %vm1491, %v5168, %v5200
    %v5248 = vrot.slane %v5246, 1
    %v5249 = vsel %vm5221, %v5168, %v5200
    %v5251 = vrot.slane %v5249, 2
    %v5252 = vsel %vm5225, %v5168, %v5200
    %v5254 = vrot.slane %v5252, 3
    %v5257 = vsel %vm1486, %v5169, %v5201
    %v5259 = vsel %vm1491, %v5169, %v5201
    %v5261 = vrot.slane %v5259, 1
    %v5262 = vsel %vm5221, %v5169, %v5201
    %v5264 = vrot.slane %v5262, 2
    %v5265 = vsel %vm5225, %v5169, %v5201
    %v5267 = vrot.slane %v5265, 3
    %v5270 = vsel %vm1486, %v5170, %v5202
    %v5272 = vsel %vm1491, %v5170, %v5202
    %v5274 = vrot.slane %v5272, 1
    %v5275 = vsel %vm5221, %v5170, %v5202
    %v5277 = vrot.slane %v5275, 2
    %v5278 = vsel %vm5225, %v5170, %v5202
    %v5280 = vrot.slane %v5278, 3
    %v5283 = vsel %vm1486, %v5171, %v5203
    %v5285 = vsel %vm1491, %v5171, %v5203
    %v5287 = vrot.slane %v5285, 1
    %v5288 = vsel %vm5221, %v5171, %v5203
    %v5290 = vrot.slane %v5288, 2
    %v5291 = vsel %vm5225, %v5171, %v5203
    %v5293 = vrot.slane %v5291, 3
    %v5296 = vsel %vm1486, %v5172, %v5204
    %v5298 = vsel %vm1491, %v5172, %v5204
    %v5300 = vrot.slane %v5298, 1
    %v5301 = vsel %vm5221, %v5172, %v5204
    %v5303 = vrot.slane %v5301, 2
    %v5304 = vsel %vm5225, %v5172, %v5204
    %v5306 = vrot.slane %v5304, 3
    %v5309 = vsel %vm1486, %v5173, %v5205
    %v5311 = vsel %vm1491, %v5173, %v5205
    %v5313 = vrot.slane %v5311, 1
    %v5314 = vsel %vm5221, %v5173, %v5205
    %v5316 = vrot.slane %v5314, 2
    %v5317 = vsel %vm5225, %v5173, %v5205
    %v5319 = vrot.slane %v5317, 3
    %v5322 = vsel %vm1486, %v5174, %v5206
    %v5324 = vsel %vm1491, %v5174, %v5206
    %v5326 = vrot.slane %v5324, 1
    %v5327 = vsel %vm5221, %v5174, %v5206
    %v5329 = vrot.slane %v5327, 2
    %v5330 = vsel %vm5225, %v5174, %v5206
    %v5332 = vrot.slane %v5330, 3
    %v5335 = vsel %vm1486, %v5175, %v5207
    %v5337 = vsel %vm1491, %v5175, %v5207
    %v5339 = vrot.slane %v5337, 1
    %v5340 = vsel %vm5221, %v5175, %v5207
    %v5342 = vrot.slane %v5340, 2
    %v5343 = vsel %vm5225, %v5175, %v5207
    %v5345 = vrot.slane %v5343, 3
    %v5348 = vsel %vm1486, %v5176, %v5208
    %v5350 = vsel %vm1491, %v5176, %v5208
    %v5352 = vrot.slane %v5350, 1
    %v5353 = vsel %vm5221, %v5176, %v5208
    %v5355 = vrot.slane %v5353, 2
    %v5356 = vsel %vm5225, %v5176, %v5208
    %v5358 = vrot.slane %v5356, 3
    %v5361 = vsel %vm1486, %v5177, %v5209
    %v5363 = vsel %vm1491, %v5177, %v5209
    %v5365 = vrot.slane %v5363, 1
    %v5366 = vsel %vm5221, %v5177, %v5209
    %v5368 = vrot.slane %v5366, 2
    %v5369 = vsel %vm5225, %v5177, %v5209
    %v5371 = vrot.slane %v5369, 3
    %v5374 = vsel %vm1486, %v5178, %v5210
    %v5376 = vsel %vm1491, %v5178, %v5210
    %v5378 = vrot.slane %v5376, 1
    %v5379 = vsel %vm5221, %v5178, %v5210
    %v5381 = vrot.slane %v5379, 2
    %v5382 = vsel %vm5225, %v5178, %v5210
    %v5384 = vrot.slane %v5382, 3
    %v5387 = vsel %vm1486, %v5179, %v5211
    %v5389 = vsel %vm1491, %v5179, %v5211
    %v5391 = vrot.slane %v5389, 1
    %v5392 = vsel %vm5221, %v5179, %v5211
    %v5394 = vrot.slane %v5392, 2
    %v5395 = vsel %vm5225, %v5179, %v5211
    %v5397 = vrot.slane %v5395, 3
    %v5400 = vsel %vm1486, %v5180, %v5212
    %v5402 = vsel %vm1491, %v5180, %v5212
    %v5404 = vrot.slane %v5402, 1
    %v5405 = vsel %vm5221, %v5180, %v5212
    %v5407 = vrot.slane %v5405, 2
    %v5408 = vsel %vm5225, %v5180, %v5212
    %v5410 = vrot.slane %v5408, 3
    %v5413 = vsel %vm1486, %v5181, %v5213
    %v5415 = vsel %vm1491, %v5181, %v5213
    %v5417 = vrot.slane %v5415, 1
    %v5418 = vsel %vm5221, %v5181, %v5213
    %v5420 = vrot.slane %v5418, 2
    %v5421 = vsel %vm5225, %v5181, %v5213
    %v5423 = vrot.slane %v5421, 3
    %v5424 = vunpack.i.l.s16 %v5216
    %v5425 = vunpack.i.h.s16 %v5216
    %v5426 = vunpack.i.l.s16 %v5220
    %v5427 = vunpack.i.h.s16 %v5220
    %v5428 = vunpack.i.l.s16 %v5224
    %v5429 = vunpack.i.h.s16 %v5224
    %v5430 = vunpack.i.l.s16 %v5228
    %v5431 = vunpack.i.h.s16 %v5228
    %v5432 = vunpack.i.l.s16 %v5231
    %v5433 = vunpack.i.h.s16 %v5231
    %v5434 = vunpack.i.l.s16 %v5235
    %v5435 = vunpack.i.h.s16 %v5235
    %v5436 = vunpack.i.l.s16 %v5238
    %v5437 = vunpack.i.h.s16 %v5238
    %v5438 = vunpack.i.l.s16 %v5241
    %v5439 = vunpack.i.h.s16 %v5241
    %v5440 = vunpack.i.l.s16 %v5244
    %v5441 = vunpack.i.h.s16 %v5244
    %v5442 = vunpack.i.l.s16 %v5248
    %v5443 = vunpack.i.h.s16 %v5248
    %v5444 = vunpack.i.l.s16 %v5251
    %v5445 = vunpack.i.h.s16 %v5251
    %v5446 = vunpack.i.l.s16 %v5254
    %v5447 = vunpack.i.h.s16 %v5254
    %v5448 = vunpack.i.l.s16 %v5257
    %v5449 = vunpack.i.h.s16 %v5257
    %v5450 = vunpack.i.l.s16 %v5261
    %v5451 = vunpack.i.h.s16 %v5261
    %v5452 = vunpack.i.l.s16 %v5264
    %v5453 = vunpack.i.h.s16 %v5264
    %v5454 = vunpack.i.l.s16 %v5267
    %v5455 = vunpack.i.h.s16 %v5267
    %v5456 = vunpack.i.l.s16 %v5270
    %v5457 = vunpack.i.h.s16 %v5270
    %v5458 = vunpack.i.l.s16 %v5274
    %v5459 = vunpack.i.h.s16 %v5274
    %v5460 = vunpack.i.l.s16 %v5277
    %v5461 = vunpack.i.h.s16 %v5277
    %v5462 = vunpack.i.l.s16 %v5280
    %v5463 = vunpack.i.h.s16 %v5280
    %v5464 = vunpack.i.l.s16 %v5283
    %v5465 = vunpack.i.h.s16 %v5283
    %v5466 = vunpack.i.l.s16 %v5287
    %v5467 = vunpack.i.h.s16 %v5287
    %v5468 = vunpack.i.l.s16 %v5290
    %v5469 = vunpack.i.h.s16 %v5290
    %v5470 = vunpack.i.l.s16 %v5293
    %v5471 = vunpack.i.h.s16 %v5293
    %v5472 = vunpack.i.l.s16 %v5296
    %v5473 = vunpack.i.h.s16 %v5296
    %v5474 = vunpack.i.l.s16 %v5300
    %v5475 = vunpack.i.h.s16 %v5300
    %v5476 = vunpack.i.l.s16 %v5303
    %v5477 = vunpack.i.h.s16 %v5303
    %v5478 = vunpack.i.l.s16 %v5306
    %v5479 = vunpack.i.h.s16 %v5306
    %v5480 = vunpack.i.l.s16 %v5309
    %v5481 = vunpack.i.h.s16 %v5309
    %v5482 = vunpack.i.l.s16 %v5313
    %v5483 = vunpack.i.h.s16 %v5313
    %v5484 = vunpack.i.l.s16 %v5316
    %v5485 = vunpack.i.h.s16 %v5316
    %v5486 = vunpack.i.l.s16 %v5319
    %v5487 = vunpack.i.h.s16 %v5319
    %v5488 = vunpack.i.l.s16 %v5322
    %v5489 = vunpack.i.h.s16 %v5322
    %v5490 = vunpack.i.l.s16 %v5326
    %v5491 = vunpack.i.h.s16 %v5326
    %v5492 = vunpack.i.l.s16 %v5329
    %v5493 = vunpack.i.h.s16 %v5329
    %v5494 = vunpack.i.l.s16 %v5332
    %v5495 = vunpack.i.h.s16 %v5332
    %v5496 = vunpack.i.l.s16 %v5335
    %v5497 = vunpack.i.h.s16 %v5335
    %v5498 = vunpack.i.l.s16 %v5339
    %v5499 = vunpack.i.h.s16 %v5339
    %v5500 = vunpack.i.l.s16 %v5342
    %v5501 = vunpack.i.h.s16 %v5342
    %v5502 = vunpack.i.l.s16 %v5345
    %v5503 = vunpack.i.h.s16 %v5345
    %v5504 = vunpack.i.l.s16 %v5348
    %v5505 = vunpack.i.h.s16 %v5348
    %v5506 = vunpack.i.l.s16 %v5352
    %v5507 = vunpack.i.h.s16 %v5352
    %v5508 = vunpack.i.l.s16 %v5355
    %v5509 = vunpack.i.h.s16 %v5355
    %v5510 = vunpack.i.l.s16 %v5358
    %v5511 = vunpack.i.h.s16 %v5358
    %v5512 = vunpack.i.l.s16 %v5361
    %v5513 = vunpack.i.h.s16 %v5361
    %v5514 = vunpack.i.l.s16 %v5365
    %v5515 = vunpack.i.h.s16 %v5365
    %v5516 = vunpack.i.l.s16 %v5368
    %v5517 = vunpack.i.h.s16 %v5368
    %v5518 = vunpack.i.l.s16 %v5371
    %v5519 = vunpack.i.h.s16 %v5371
    %v5520 = vunpack.i.l.s16 %v5374
    %v5521 = vunpack.i.h.s16 %v5374
    %v5522 = vunpack.i.l.s16 %v5378
    %v5523 = vunpack.i.h.s16 %v5378
    %v5524 = vunpack.i.l.s16 %v5381
    %v5525 = vunpack.i.h.s16 %v5381
    %v5526 = vunpack.i.l.s16 %v5384
    %v5527 = vunpack.i.h.s16 %v5384
    %v5528 = vunpack.i.l.s16 %v5387
    %v5529 = vunpack.i.h.s16 %v5387
    %v5530 = vunpack.i.l.s16 %v5391
    %v5531 = vunpack.i.h.s16 %v5391
    %v5532 = vunpack.i.l.s16 %v5394
    %v5533 = vunpack.i.h.s16 %v5394
    %v5534 = vunpack.i.l.s16 %v5397
    %v5535 = vunpack.i.h.s16 %v5397
    %v5536 = vunpack.i.l.s16 %v5400
    %v5537 = vunpack.i.h.s16 %v5400
    %v5538 = vunpack.i.l.s16 %v5404
    %v5539 = vunpack.i.h.s16 %v5404
    %v5540 = vunpack.i.l.s16 %v5407
    %v5541 = vunpack.i.h.s16 %v5407
    %v5542 = vunpack.i.l.s16 %v5410
    %v5543 = vunpack.i.h.s16 %v5410
    %v5544 = vunpack.i.l.s16 %v5413
    %v5545 = vunpack.i.h.s16 %v5413
    %v5546 = vunpack.i.l.s16 %v5417
    %v5547 = vunpack.i.h.s16 %v5417
    %v5548 = vunpack.i.l.s16 %v5420
    %v5549 = vunpack.i.h.s16 %v5420
    %v5550 = vunpack.i.l.s16 %v5423
    %v5551 = vunpack.i.h.s16 %v5423
    %v5552 = vpack.i.b16 %v5424, %v5424
    %v5553 = vpack.i.b16 %v5425, %v5425
    %v5554 = vpack.i.b16 %v5426, %v5426
    %v5555 = vpack.i.b16 %v5427, %v5427
    %v5556 = vpack.i.b16 %v5428, %v5428
    %v5557 = vpack.i.b16 %v5429, %v5429
    %v5558 = vpack.i.b16 %v5430, %v5430
    %v5559 = vpack.i.b16 %v5431, %v5431
    %v5560 = vpack.i.b16 %v5432, %v5432
    %v5561 = vpack.i.b16 %v5433, %v5433
    %v5562 = vpack.i.b16 %v5434, %v5434
    %v5563 = vpack.i.b16 %v5435, %v5435
    %v5564 = vpack.i.b16 %v5436, %v5436
    %v5565 = vpack.i.b16 %v5437, %v5437
    %v5566 = vpack.i.b16 %v5438, %v5438
    %v5567 = vpack.i.b16 %v5439, %v5439
    %v5568 = vpack.i.b16 %v5440, %v5440
    %v5569 = vpack.i.b16 %v5441, %v5441
    %v5570 = vpack.i.b16 %v5442, %v5442
    %v5571 = vpack.i.b16 %v5443, %v5443
    %v5572 = vpack.i.b16 %v5444, %v5444
    %v5573 = vpack.i.b16 %v5445, %v5445
    %v5574 = vpack.i.b16 %v5446, %v5446
    %v5575 = vpack.i.b16 %v5447, %v5447
    %v5576 = vpack.i.b16 %v5448, %v5448
    %v5577 = vpack.i.b16 %v5449, %v5449
    %v5578 = vpack.i.b16 %v5450, %v5450
    %v5579 = vpack.i.b16 %v5451, %v5451
    %v5580 = vpack.i.b16 %v5452, %v5452
    %v5581 = vpack.i.b16 %v5453, %v5453
    %v5582 = vpack.i.b16 %v5454, %v5454
    %v5583 = vpack.i.b16 %v5455, %v5455
    %v5584 = vpack.i.b16 %v5456, %v5456
    %v5585 = vpack.i.b16 %v5457, %v5457
    %v5586 = vpack.i.b16 %v5458, %v5458
    %v5587 = vpack.i.b16 %v5459, %v5459
    %v5588 = vpack.i.b16 %v5460, %v5460
    %v5589 = vpack.i.b16 %v5461, %v5461
    %v5590 = vpack.i.b16 %v5462, %v5462
    %v5591 = vpack.i.b16 %v5463, %v5463
    %v5592 = vpack.i.b16 %v5464, %v5464
    %v5593 = vpack.i.b16 %v5465, %v5465
    %v5594 = vpack.i.b16 %v5466, %v5466
    %v5595 = vpack.i.b16 %v5467, %v5467
    %v5596 = vpack.i.b16 %v5468, %v5468
    %v5597 = vpack.i.b16 %v5469, %v5469
    %v5598 = vpack.i.b16 %v5470, %v5470
    %v5599 = vpack.i.b16 %v5471, %v5471
    %v5600 = vpack.i.b16 %v5472, %v5472
    %v5601 = vpack.i.b16 %v5473, %v5473
    %v5602 = vpack.i.b16 %v5474, %v5474
    %v5603 = vpack.i.b16 %v5475, %v5475
    %v5604 = vpack.i.b16 %v5476, %v5476
    %v5605 = vpack.i.b16 %v5477, %v5477
    %v5606 = vpack.i.b16 %v5478, %v5478
    %v5607 = vpack.i.b16 %v5479, %v5479
    %v5608 = vpack.i.b16 %v5480, %v5480
    %v5609 = vpack.i.b16 %v5481, %v5481
    %v5610 = vpack.i.b16 %v5482, %v5482
    %v5611 = vpack.i.b16 %v5483, %v5483
    %v5612 = vpack.i.b16 %v5484, %v5484
    %v5613 = vpack.i.b16 %v5485, %v5485
    %v5614 = vpack.i.b16 %v5486, %v5486
    %v5615 = vpack.i.b16 %v5487, %v5487
    %v5616 = vpack.i.b16 %v5488, %v5488
    %v5617 = vpack.i.b16 %v5489, %v5489
    %v5618 = vpack.i.b16 %v5490, %v5490
    %v5619 = vpack.i.b16 %v5491, %v5491
    %v5620 = vpack.i.b16 %v5492, %v5492
    %v5621 = vpack.i.b16 %v5493, %v5493
    %v5622 = vpack.i.b16 %v5494, %v5494
    %v5623 = vpack.i.b16 %v5495, %v5495
    %v5624 = vpack.i.b16 %v5496, %v5496
    %v5625 = vpack.i.b16 %v5497, %v5497
    %v5626 = vpack.i.b16 %v5498, %v5498
    %v5627 = vpack.i.b16 %v5499, %v5499
    %v5628 = vpack.i.b16 %v5500, %v5500
    %v5629 = vpack.i.b16 %v5501, %v5501
    %v5630 = vpack.i.b16 %v5502, %v5502
    %v5631 = vpack.i.b16 %v5503, %v5503
    %v5632 = vpack.i.b16 %v5504, %v5504
    %v5633 = vpack.i.b16 %v5505, %v5505
    %v5634 = vpack.i.b16 %v5506, %v5506
    %v5635 = vpack.i.b16 %v5507, %v5507
    %v5636 = vpack.i.b16 %v5508, %v5508
    %v5637 = vpack.i.b16 %v5509, %v5509
    %v5638 = vpack.i.b16 %v5510, %v5510
    %v5639 = vpack.i.b16 %v5511, %v5511
    %v5640 = vpack.i.b16 %v5512, %v5512
    %v5641 = vpack.i.b16 %v5513, %v5513
    %v5642 = vpack.i.b16 %v5514, %v5514
    %v5643 = vpack.i.b16 %v5515, %v5515
    %v5644 = vpack.i.b16 %v5516, %v5516
    %v5645 = vpack.i.b16 %v5517, %v5517
    %v5646 = vpack.i.b16 %v5518, %v5518
    %v5647 = vpack.i.b16 %v5519, %v5519
    %v5648 = vpack.i.b16 %v5520, %v5520
    %v5649 = vpack.i.b16 %v5521, %v5521
    %v5650 = vpack.i.b16 %v5522, %v5522
    %v5651 = vpack.i.b16 %v5523, %v5523
    %v5652 = vpack.i.b16 %v5524, %v5524
    %v5653 = vpack.i.b16 %v5525, %v5525
    %v5654 = vpack.i.b16 %v5526, %v5526
    %v5655 = vpack.i.b16 %v5527, %v5527
    %v5656 = vpack.i.b16 %v5528, %v5528
    %v5657 = vpack.i.b16 %v5529, %v5529
    %v5658 = vpack.i.b16 %v5530, %v5530
    %v5659 = vpack.i.b16 %v5531, %v5531
    %v5660 = vpack.i.b16 %v5532, %v5532
    %v5661 = vpack.i.b16 %v5533, %v5533
    %v5662 = vpack.i.b16 %v5534, %v5534
    %v5663 = vpack.i.b16 %v5535, %v5535
    %v5664 = vpack.i.b16 %v5536, %v5536
    %v5665 = vpack.i.b16 %v5537, %v5537
    %v5666 = vpack.i.b16 %v5538, %v5538
    %v5667 = vpack.i.b16 %v5539, %v5539
    %v5668 = vpack.i.b16 %v5540, %v5540
    %v5669 = vpack.i.b16 %v5541, %v5541
    %v5670 = vpack.i.b16 %v5542, %v5542
    %v5671 = vpack.i.b16 %v5543, %v5543
    %v5672 = vpack.i.b16 %v5544, %v5544
    %v5673 = vpack.i.b16 %v5545, %v5545
    %v5674 = vpack.i.b16 %v5546, %v5546
    %v5675 = vpack.i.b16 %v5547, %v5547
    %v5676 = vpack.i.b16 %v5548, %v5548
    %v5677 = vpack.i.b16 %v5549, %v5549
    %v5678 = vpack.i.b16 %v5550, %v5550
    %v5679 = vpack.i.b16 %v5551, %v5551
    %v5680 = vperm.slane %v5552, 0
    %v5681 = vperm.slane %v5553, 0
    %v5682 = vperm.slane %v5554, 0
    %v5683 = vperm.slane %v5555, 0
    %v5684 = vperm.slane %v5556, 0
    %v5685 = vperm.slane %v5557, 0
    %v5686 = vperm.slane %v5558, 0
    %v5687 = vperm.slane %v5559, 0
    %v5688 = vperm.slane %v5560, 0
    %v5689 = vperm.slane %v5561, 0
    %v5690 = vperm.slane %v5562, 0
    %v5691 = vperm.slane %v5563, 0
    %v5692 = vperm.slane %v5564, 0
    %v5693 = vperm.slane %v5565, 0
    %v5694 = vperm.slane %v5566, 0
    %v5695 = vperm.slane %v5567, 0
    %v5696 = vperm.slane %v5568, 0
    %v5697 = vperm.slane %v5569, 0
    %v5698 = vperm.slane %v5570, 0
    %v5699 = vperm.slane %v5571, 0
    %v5700 = vperm.slane %v5572, 0
    %v5701 = vperm.slane %v5573, 0
    %v5702 = vperm.slane %v5574, 0
    %v5703 = vperm.slane %v5575, 0
    %v5704 = vperm.slane %v5576, 0
    %v5705 = vperm.slane %v5577, 0
    %v5706 = vperm.slane %v5578, 0
    %v5707 = vperm.slane %v5579, 0
    %v5708 = vperm.slane %v5580, 0
    %v5709 = vperm.slane %v5581, 0
    %v5710 = vperm.slane %v5582, 0
    %v5711 = vperm.slane %v5583, 0
    %v5712 = vperm.slane %v5584, 0
    %v5713 = vperm.slane %v5585, 0
    %v5714 = vperm.slane %v5586, 0
    %v5715 = vperm.slane %v5587, 0
    %v5716 = vperm.slane %v5588, 0
    %v5717 = vperm.slane %v5589, 0
    %v5718 = vperm.slane %v5590, 0
    %v5719 = vperm.slane %v5591, 0
    %v5720 = vperm.slane %v5592, 0
    %v5721 = vperm.slane %v5593, 0
    %v5722 = vperm.slane %v5594, 0
    %v5723 = vperm.slane %v5595, 0
    %v5724 = vperm.slane %v5596, 0
    %v5725 = vperm.slane %v5597, 0
    %v5726 = vperm.slane %v5598, 0
    %v5727 = vperm.slane %v5599, 0
    %v5728 = vperm.slane %v5600, 0
    %v5729 = vperm.slane %v5601, 0
    %v5730 = vperm.slane %v5602, 0
    %v5731 = vperm.slane %v5603, 0
    %v5732 = vperm.slane %v5604, 0
    %v5733 = vperm.slane %v5605, 0
    %v5734 = vperm.slane %v5606, 0
    %v5735 = vperm.slane %v5607, 0
    %v5736 = vperm.slane %v5608, 0
    %v5737 = vperm.slane %v5609, 0
    %v5738 = vperm.slane %v5610, 0
    %v5739 = vperm.slane %v5611, 0
    %v5740 = vperm.slane %v5612, 0
    %v5741 = vperm.slane %v5613, 0
    %v5742 = vperm.slane %v5614, 0
    %v5743 = vperm.slane %v5615, 0
    %v5744 = vperm.slane %v5616, 0
    %v5745 = vperm.slane %v5617, 0
    %v5746 = vperm.slane %v5618, 0
    %v5747 = vperm.slane %v5619, 0
    %v5748 = vperm.slane %v5620, 0
    %v5749 = vperm.slane %v5621, 0
    %v5750 = vperm.slane %v5622, 0
    %v5751 = vperm.slane %v5623, 0
    %v5752 = vperm.slane %v5624, 0
    %v5753 = vperm.slane %v5625, 0
    %v5754 = vperm.slane %v5626, 0
    %v5755 = vperm.slane %v5627, 0
    %v5756 = vperm.slane %v5628, 0
    %v5757 = vperm.slane %v5629, 0
    %v5758 = vperm.slane %v5630, 0
    %v5759 = vperm.slane %v5631, 0
    %v5760 = vperm.slane %v5632, 0
    %v5761 = vperm.slane %v5633, 0
    %v5762 = vperm.slane %v5634, 0
    %v5763 = vperm.slane %v5635, 0
    %v5764 = vperm.slane %v5636, 0
    %v5765 = vperm.slane %v5637, 0
    %v5766 = vperm.slane %v5638, 0
    %v5767 = vperm.slane %v5639, 0
    %v5768 = vperm.slane %v5640, 0
    %v5769 = vperm.slane %v5641, 0
    %v5770 = vperm.slane %v5642, 0
    %v5771 = vperm.slane %v5643, 0
    %v5772 = vperm.slane %v5644, 0
    %v5773 = vperm.slane %v5645, 0
    %v5774 = vperm.slane %v5646, 0
    %v5775 = vperm.slane %v5647, 0
    %v5776 = vperm.slane %v5648, 0
    %v5777 = vperm.slane %v5649, 0
    %v5778 = vperm.slane %v5650, 0
    %v5779 = vperm.slane %v5651, 0
    %v5780 = vperm.slane %v5652, 0
    %v5781 = vperm.slane %v5653, 0
    %v5782 = vperm.slane %v5654, 0
    %v5783 = vperm.slane %v5655, 0
    %v5784 = vperm.slane %v5656, 0
    %v5785 = vperm.slane %v5657, 0
    %v5786 = vperm.slane %v5658, 0
    %v5787 = vperm.slane %v5659, 0
    %v5788 = vperm.slane %v5660, 0
    %v5789 = vperm.slane %v5661, 0
    %v5790 = vperm.slane %v5662, 0
    %v5791 = vperm.slane %v5663, 0
    %v5792 = vperm.slane %v5664, 0
    %v5793 = vperm.slane %v5665, 0
    %v5794 = vperm.slane %v5666, 0
    %v5795 = vperm.slane %v5667, 0
    %v5796 = vperm.slane %v5668, 0
    %v5797 = vperm.slane %v5669, 0
    %v5798 = vperm.slane %v5670, 0
    %v5799 = vperm.slane %v5671, 0
    %v5800 = vperm.slane %v5672, 0
    %v5801 = vperm.slane %v5673, 0
    %v5802 = vperm.slane %v5674, 0
    %v5803 = vperm.slane %v5675, 0
    %v5804 = vperm.slane %v5676, 0
    %v5805 = vperm.slane %v5677, 0
    %v5806 = vperm.slane %v5678, 0
    %v5807 = vperm.slane %v5679, 0
    %v5936 = vld [vmem:[%s23] sm:$0xff]
    %v5937 = vld [vmem:[%s23 + $0x8] sm:$0xff]
    %v5938 = vld [vmem:[%s23 + $0x10] sm:$0xff]
    %v5939 = vld [vmem:[%s23 + $0x18] sm:$0xff]
    %v5940 = vld [vmem:[%s23 + $0x20] sm:$0xff]
    %v5941 = vld [vmem:[%s23 + $0x28] sm:$0xff]
    %v5942 = vld [vmem:[%s23 + $0x30] sm:$0xff]
    %v5943 = vld [vmem:[%s23 + $0x38] sm:$0xff]
    %v5944 = vld [vmem:[%s23 + $0x40] sm:$0xff]
    %v5945 = vld [vmem:[%s23 + $0x48] sm:$0xff]
    %v5946 = vld [vmem:[%s23 + $0x50] sm:$0xff]
    %v5947 = vld [vmem:[%s23 + $0x58] sm:$0xff]
    %v5948 = vld [vmem:[%s23 + $0x60] sm:$0xff]
    %v5949 = vld [vmem:[%s23 + $0x68] sm:$0xff]
    %v5950 = vld [vmem:[%s23 + $0x70] sm:$0xff]
    %v5951 = vld [vmem:[%s23 + $0x78] sm:$0xff]
    %v5952 = vld [vmem:[%s23 + $0x80] sm:$0xff]
    %v5953 = vld [vmem:[%s23 + $0x88] sm:$0xff]
    %v5954 = vld [vmem:[%s23 + $0x90] sm:$0xff]
    %v5955 = vld [vmem:[%s23 + $0x98] sm:$0xff]
    %v5956 = vld [vmem:[%s23 + $0xa0] sm:$0xff]
    %v5957 = vld [vmem:[%s23 + $0xa8] sm:$0xff]
    %v5958 = vld [vmem:[%s23 + $0xb0] sm:$0xff]
    %v5959 = vld [vmem:[%s23 + $0xb8] sm:$0xff]
    %v5960 = vld [vmem:[%s23 + $0xc0] sm:$0xff]
    %v5961 = vld [vmem:[%s23 + $0xc8] sm:$0xff]
    %v5962 = vld [vmem:[%s23 + $0xd0] sm:$0xff]
    %v5963 = vld [vmem:[%s23 + $0xd8] sm:$0xff]
    %v5964 = vld [vmem:[%s23 + $0xe0] sm:$0xff]
    %v5965 = vld [vmem:[%s23 + $0xe8] sm:$0xff]
    %v5966 = vld [vmem:[%s23 + $0xf0] sm:$0xff]
    %v5967 = vld [vmem:[%s23 + $0xf8] sm:$0xff]
    %v5968 = vld [vmem:[%s14] sm:$0x3]
    %v5969 = vld [vmem:[#allocation12] sm:$0x1]
    %s5970 = sld [smem:[#allocation17 + $0x3]]
    %5972 = vst [vmem:[#allocation1] ss:$9 sm:$0xff] %v5680
    %s5974 = scalar_lea.vmem [#allocation1], 1
    %5975 = vst [vmem:[%s5974] ss:$9 sm:$0xff] %v5681
    %s5977 = scalar_lea.vmem [#allocation1], 2
    %5978 = vst [vmem:[%s5977] ss:$9 sm:$0xff] %v5682
    %s5980 = scalar_lea.vmem [#allocation1], 3
    %5981 = vst [vmem:[%s5980] ss:$9 sm:$0xff] %v5683
    %s5983 = scalar_lea.vmem [#allocation1], 4
    %5984 = vst [vmem:[%s5983] ss:$9 sm:$0xff] %v5684
    %s5986 = scalar_lea.vmem [#allocation1], 5
    %5987 = vst [vmem:[%s5986] ss:$9 sm:$0xff] %v5685
    %s5989 = scalar_lea.vmem [#allocation1], 6
    %5990 = vst [vmem:[%s5989] ss:$9 sm:$0xff] %v5686
    %s5992 = scalar_lea.vmem [#allocation1], 7
    %5993 = vst [vmem:[%s5992] ss:$9 sm:$0xff] %v5687
    %v5994 = vld [vmem:[#allocation1] sm:$0xff]
    %5995 = vst [vmem:[#allocation1] ss:$9 sm:$0xff] %v5680
    %5996 = vst [vmem:[%s5974] ss:$9 sm:$0xff] %v5681
    %5997 = vst [vmem:[%s5977] ss:$9 sm:$0xff] %v5682
    %5998 = vst [vmem:[%s5980] ss:$9 sm:$0xff] %v5683
    %5999 = vst [vmem:[%s5983] ss:$9 sm:$0xff] %v5684
    %6000 = vst [vmem:[%s5986] ss:$9 sm:$0xff] %v5685
    %6001 = vst [vmem:[%s5989] ss:$9 sm:$0xff] %v5686
    %6002 = vst [vmem:[%s5992] ss:$9 sm:$0xff] %v5687
    %v6003 = vld [vmem:[#allocation1] sm:$0xff]
    %6005 = vst [vmem:[#allocation1] ss:$9 sm:$0xff] %v5688
    %6007 = vst [vmem:[%s5974] ss:$9 sm:$0xff] %v5689
    %6009 = vst [vmem:[%s5977] ss:$9 sm:$0xff] %v5690
    %6011 = vst [vmem:[%s5980] ss:$9 sm:$0xff] %v5691
    %6013 = vst [vmem:[%s5983] ss:$9 sm:$0xff] %v5692
    %6015 = vst [vmem:[%s5986] ss:$9 sm:$0xff] %v5693
    %6017 = vst [vmem:[%s5989] ss:$9 sm:$0xff] %v5694
    %6019 = vst [vmem:[%s5992] ss:$9 sm:$0xff] %v5695
    %v6020 = vld [vmem:[#allocation1] sm:$0xff]
    %6021 = vst [vmem:[#allocation1] ss:$9 sm:$0xff] %v5688
    %6022 = vst [vmem:[%s5974] ss:$9 sm:$0xff] %v5689
    %6023 = vst [vmem:[%s5977] ss:$9 sm:$0xff] %v5690
    %6024 = vst [vmem:[%s5980] ss:$9 sm:$0xff] %v5691
    %6025 = vst [vmem:[%s5983] ss:$9 sm:$0xff] %v5692
    %6026 = vst [vmem:[%s5986] ss:$9 sm:$0xff] %v5693
    %6027 = vst [vmem:[%s5989] ss:$9 sm:$0xff] %v5694
    %6028 = vst [vmem:[%s5992] ss:$9 sm:$0xff] %v5695
    %v6029 = vld [vmem:[#allocation1] sm:$0xff]
    %6031 = vst [vmem:[#allocation1] ss:$9 sm:$0xff] %v5696
    %6033 = vst [vmem:[%s5974] ss:$9 sm:$0xff] %v5697
    %6035 = vst [vmem:[%s5977] ss:$9 sm:$0xff] %v5698
    %6037 = vst [vmem:[%s5980] ss:$9 sm:$0xff] %v5699
    %6039 = vst [vmem:[%s5983] ss:$9 sm:$0xff] %v5700
    %6041 = vst [vmem:[%s5986] ss:$9 sm:$0xff] %v5701
    %6043 = vst [vmem:[%s5989] ss:$9 sm:$0xff] %v5702
    %6045 = vst [vmem:[%s5992] ss:$9 sm:$0xff] %v5703
    %v6046 = vld [vmem:[#allocation1] sm:$0xff]
    %6047 = vst [vmem:[#allocation1] ss:$9 sm:$0xff] %v5696
    %6048 = vst [vmem:[%s5974] ss:$9 sm:$0xff] %v5697
    %6049 = vst [vmem:[%s5977] ss:$9 sm:$0xff] %v5698
    %6050 = vst [vmem:[%s5980] ss:$9 sm:$0xff] %v5699
    %6051 = vst [vmem:[%s5983] ss:$9 sm:$0xff] %v5700
    %6052 = vst [vmem:[%s5986] ss:$9 sm:$0xff] %v5701
    %6053 = vst [vmem:[%s5989] ss:$9 sm:$0xff] %v5702
    %6054 = vst [vmem:[%s5992] ss:$9 sm:$0xff] %v5703
    %v6055 = vld [vmem:[#allocation1] sm:$0xff]
    %6057 = vst [vmem:[#allocation1] ss:$9 sm:$0xff] %v5704
    %6059 = vst [vmem:[%s5974] ss:$9 sm:$0xff] %v5705
    %6061 = vst [vmem:[%s5977] ss:$9 sm:$0xff] %v5706
    %6063 = vst [vmem:[%s5980] ss:$9 sm:$0xff] %v5707
    %6065 = vst [vmem:[%s5983] ss:$9 sm:$0xff] %v5708
    %6067 = vst [vmem:[%s5986] ss:$9 sm:$0xff] %v5709
    %6069 = vst [vmem:[%s5989] ss:$9 sm:$0xff] %v5710
    %6071 = vst [vmem:[%s5992] ss:$9 sm:$0xff] %v5711
    %v6072 = vld [vmem:[#allocation1] sm:$0xff]
    %6073 = vst [vmem:[#allocation1] ss:$9 sm:$0xff] %v5704
    %6074 = vst [vmem:[%s5974] ss:$9 sm:$0xff] %v5705
    %6075 = vst [vmem:[%s5977] ss:$9 sm:$0xff] %v5706
    %6076 = vst [vmem:[%s5980] ss:$9 sm:$0xff] %v5707
    %6077 = vst [vmem:[%s5983] ss:$9 sm:$0xff] %v5708
    %6078 = vst [vmem:[%s5986] ss:$9 sm:$0xff] %v5709
    %6079 = vst [vmem:[%s5989] ss:$9 sm:$0xff] %v5710
    %6080 = vst [vmem:[%s5992] ss:$9 sm:$0xff] %v5711
    %v6081 = vld [vmem:[#allocation1] sm:$0xff]
    %6083 = vst [vmem:[#allocation1] ss:$9 sm:$0xff] %v5712
    %6085 = vst [vmem:[%s5974] ss:$9 sm:$0xff] %v5713
    %6087 = vst [vmem:[%s5977] ss:$9 sm:$0xff] %v5714
    %6089 = vst [vmem:[%s5980] ss:$9 sm:$0xff] %v5715
    %6091 = vst [vmem:[%s5983] ss:$9 sm:$0xff] %v5716
    %6093 = vst [vmem:[%s5986] ss:$9 sm:$0xff] %v5717
    %6095 = vst [vmem:[%s5989] ss:$9 sm:$0xff] %v5718
    %6097 = vst [vmem:[%s5992] ss:$9 sm:$0xff] %v5719
    %v6098 = vld [vmem:[#allocation1] sm:$0xff]
    %6099 = vst [vmem:[#allocation1] ss:$9 sm:$0xff] %v5712
    %6100 = vst [vmem:[%s5974] ss:$9 sm:$0xff] %v5713
    %6101 = vst [vmem:[%s5977] ss:$9 sm:$0xff] %v5714
    %6102 = vst [vmem:[%s5980] ss:$9 sm:$0xff] %v5715
    %6103 = vst [vmem:[%s5983] ss:$9 sm:$0xff] %v5716
    %6104 = vst [vmem:[%s5986] ss:$9 sm:$0xff] %v5717
    %6105 = vst [vmem:[%s5989] ss:$9 sm:$0xff] %v5718
    %6106 = vst [vmem:[%s5992] ss:$9 sm:$0xff] %v5719
    %v6107 = vld [vmem:[#allocation1] sm:$0xff]
    %6109 = vst [vmem:[#allocation1] ss:$9 sm:$0xff] %v5720
    %6111 = vst [vmem:[%s5974] ss:$9 sm:$0xff] %v5721
    %6113 = vst [vmem:[%s5977] ss:$9 sm:$0xff] %v5722
    %6115 = vst [vmem:[%s5980] ss:$9 sm:$0xff] %v5723
    %6117 = vst [vmem:[%s5983] ss:$9 sm:$0xff] %v5724
    %6119 = vst [vmem:[%s5986] ss:$9 sm:$0xff] %v5725
    %6121 = vst [vmem:[%s5989] ss:$9 sm:$0xff] %v5726
    %6123 = vst [vmem:[%s5992] ss:$9 sm:$0xff] %v5727
    %v6124 = vld [vmem:[#allocation1] sm:$0xff]
    %6125 = vst [vmem:[#allocation1] ss:$9 sm:$0xff] %v5720
    %6126 = vst [vmem:[%s5974] ss:$9 sm:$0xff] %v5721
    %6127 = vst [vmem:[%s5977] ss:$9 sm:$0xff] %v5722
    %6128 = vst [vmem:[%s5980] ss:$9 sm:$0xff] %v5723
    %6129 = vst [vmem:[%s5983] ss:$9 sm:$0xff] %v5724
    %6130 = vst [vmem:[%s5986] ss:$9 sm:$0xff] %v5725
    %6131 = vst [vmem:[%s5989] ss:$9 sm:$0xff] %v5726
    %6132 = vst [vmem:[%s5992] ss:$9 sm:$0xff] %v5727
    %v6133 = vld [vmem:[#allocation1] sm:$0xff]
    %6135 = vst [vmem:[#allocation1] ss:$9 sm:$0xff] %v5728
    %6137 = vst [vmem:[%s5974] ss:$9 sm:$0xff] %v5729
    %6139 = vst [vmem:[%s5977] ss:$9 sm:$0xff] %v5730
    %6141 = vst [vmem:[%s5980] ss:$9 sm:$0xff] %v5731
    %6143 = vst [vmem:[%s5983] ss:$9 sm:$0xff] %v5732
    %6145 = vst [vmem:[%s5986] ss:$9 sm:$0xff] %v5733
    %6147 = vst [vmem:[%s5989] ss:$9 sm:$0xff] %v5734
    %6149 = vst [vmem:[%s5992] ss:$9 sm:$0xff] %v5735
    %v6150 = vld [vmem:[#allocation1] sm:$0xff]
    %6151 = vst [vmem:[#allocation1] ss:$9 sm:$0xff] %v5728
    %6152 = vst [vmem:[%s5974] ss:$9 sm:$0xff] %v5729
    %6153 = vst [vmem:[%s5977] ss:$9 sm:$0xff] %v5730
    %6154 = vst [vmem:[%s5980] ss:$9 sm:$0xff] %v5731
    %6155 = vst [vmem:[%s5983] ss:$9 sm:$0xff] %v5732
    %6156 = vst [vmem:[%s5986] ss:$9 sm:$0xff] %v5733
    %6157 = vst [vmem:[%s5989] ss:$9 sm:$0xff] %v5734
    %6158 = vst [vmem:[%s5992] ss:$9 sm:$0xff] %v5735
    %v6159 = vld [vmem:[#allocation1] sm:$0xff]
    %6161 = vst [vmem:[#allocation1] ss:$9 sm:$0xff] %v5736
    %6163 = vst [vmem:[%s5974] ss:$9 sm:$0xff] %v5737
    %6165 = vst [vmem:[%s5977] ss:$9 sm:$0xff] %v5738
    %6167 = vst [vmem:[%s5980] ss:$9 sm:$0xff] %v5739
    %6169 = vst [vmem:[%s5983] ss:$9 sm:$0xff] %v5740
    %6171 = vst [vmem:[%s5986] ss:$9 sm:$0xff] %v5741
    %6173 = vst [vmem:[%s5989] ss:$9 sm:$0xff] %v5742
    %6175 = vst [vmem:[%s5992] ss:$9 sm:$0xff] %v5743
    %v6176 = vld [vmem:[#allocation1] sm:$0xff]
    %6177 = vst [vmem:[#allocation1] ss:$9 sm:$0xff] %v5736
    %6178 = vst [vmem:[%s5974] ss:$9 sm:$0xff] %v5737
    %6179 = vst [vmem:[%s5977] ss:$9 sm:$0xff] %v5738
    %6180 = vst [vmem:[%s5980] ss:$9 sm:$0xff] %v5739
    %6181 = vst [vmem:[%s5983] ss:$9 sm:$0xff] %v5740
    %6182 = vst [vmem:[%s5986] ss:$9 sm:$0xff] %v5741
    %6183 = vst [vmem:[%s5989] ss:$9 sm:$0xff] %v5742
    %6184 = vst [vmem:[%s5992] ss:$9 sm:$0xff] %v5743
    %v6185 = vld [vmem:[#allocation1] sm:$0xff]
    %6187 = vst [vmem:[#allocation1] ss:$9 sm:$0xff] %v5744
    %6189 = vst [vmem:[%s5974] ss:$9 sm:$0xff] %v5745
    %6191 = vst [vmem:[%s5977] ss:$9 sm:$0xff] %v5746
    %6193 = vst [vmem:[%s5980] ss:$9 sm:$0xff] %v5747
    %6195 = vst [vmem:[%s5983] ss:$9 sm:$0xff] %v5748
    %6197 = vst [vmem:[%s5986] ss:$9 sm:$0xff] %v5749
    %6199 = vst [vmem:[%s5989] ss:$9 sm:$0xff] %v5750
    %6201 = vst [vmem:[%s5992] ss:$9 sm:$0xff] %v5751
    %v6202 = vld [vmem:[#allocation1] sm:$0xff]
    %6203 = vst [vmem:[#allocation1] ss:$9 sm:$0xff] %v5744
    %6204 = vst [vmem:[%s5974] ss:$9 sm:$0xff] %v5745
    %6205 = vst [vmem:[%s5977] ss:$9 sm:$0xff] %v5746
    %6206 = vst [vmem:[%s5980] ss:$9 sm:$0xff] %v5747
    %6207 = vst [vmem:[%s5983] ss:$9 sm:$0xff] %v5748
    %6208 = vst [vmem:[%s5986] ss:$9 sm:$0xff] %v5749
    %6209 = vst [vmem:[%s5989] ss:$9 sm:$0xff] %v5750
    %6210 = vst [vmem:[%s5992] ss:$9 sm:$0xff] %v5751
    %v6211 = vld [vmem:[#allocation1] sm:$0xff]
    %6213 = vst [vmem:[#allocation1] ss:$9 sm:$0xff] %v5752
    %6215 = vst [vmem:[%s5974] ss:$9 sm:$0xff] %v5753
    %6217 = vst [vmem:[%s5977] ss:$9 sm:$0xff] %v5754
    %6219 = vst [vmem:[%s5980] ss:$9 sm:$0xff] %v5755
    %6221 = vst [vmem:[%s5983] ss:$9 sm:$0xff] %v5756
    %6223 = vst [vmem:[%s5986] ss:$9 sm:$0xff] %v5757
    %6225 = vst [vmem:[%s5989] ss:$9 sm:$0xff] %v5758
    %6227 = vst [vmem:[%s5992] ss:$9 sm:$0xff] %v5759
    %v6228 = vld [vmem:[#allocation1] sm:$0xff]
    %6229 = vst [vmem:[#allocation1] ss:$9 sm:$0xff] %v5752
    %6230 = vst [vmem:[%s5974] ss:$9 sm:$0xff] %v5753
    %6231 = vst [vmem:[%s5977] ss:$9 sm:$0xff] %v5754
    %6232 = vst [vmem:[%s5980] ss:$9 sm:$0xff] %v5755
    %6233 = vst [vmem:[%s5983] ss:$9 sm:$0xff] %v5756
    %6234 = vst [vmem:[%s5986] ss:$9 sm:$0xff] %v5757
    %6235 = vst [vmem:[%s5989] ss:$9 sm:$0xff] %v5758
    %6236 = vst [vmem:[%s5992] ss:$9 sm:$0xff] %v5759
    %v6237 = vld [vmem:[#allocation1] sm:$0xff]
    %6239 = vst [vmem:[#allocation1] ss:$9 sm:$0xff] %v5760
    %6241 = vst [vmem:[%s5974] ss:$9 sm:$0xff] %v5761
    %6243 = vst [vmem:[%s5977] ss:$9 sm:$0xff] %v5762
    %6245 = vst [vmem:[%s5980] ss:$9 sm:$0xff] %v5763
    %6247 = vst [vmem:[%s5983] ss:$9 sm:$0xff] %v5764
    %6249 = vst [vmem:[%s5986] ss:$9 sm:$0xff] %v5765
    %6251 = vst [vmem:[%s5989] ss:$9 sm:$0xff] %v5766
    %6253 = vst [vmem:[%s5992] ss:$9 sm:$0xff] %v5767
    %v6254 = vld [vmem:[#allocation1] sm:$0xff]
    %6255 = vst [vmem:[#allocation1] ss:$9 sm:$0xff] %v5760
    %6256 = vst [vmem:[%s5974] ss:$9 sm:$0xff] %v5761
    %6257 = vst [vmem:[%s5977] ss:$9 sm:$0xff] %v5762
    %6258 = vst [vmem:[%s5980] ss:$9 sm:$0xff] %v5763
    %6259 = vst [vmem:[%s5983] ss:$9 sm:$0xff] %v5764
    %6260 = vst [vmem:[%s5986] ss:$9 sm:$0xff] %v5765
    %6261 = vst [vmem:[%s5989] ss:$9 sm:$0xff] %v5766
    %6262 = vst [vmem:[%s5992] ss:$9 sm:$0xff] %v5767
    %v6263 = vld [vmem:[#allocation1] sm:$0xff]
    %6265 = vst [vmem:[#allocation1] ss:$9 sm:$0xff] %v5768
    %6267 = vst [vmem:[%s5974] ss:$9 sm:$0xff] %v5769
    %6269 = vst [vmem:[%s5977] ss:$9 sm:$0xff] %v5770
    %6271 = vst [vmem:[%s5980] ss:$9 sm:$0xff] %v5771
    %6273 = vst [vmem:[%s5983] ss:$9 sm:$0xff] %v5772
    %6275 = vst [vmem:[%s5986] ss:$9 sm:$0xff] %v5773
    %6277 = vst [vmem:[%s5989] ss:$9 sm:$0xff] %v5774
    %6279 = vst [vmem:[%s5992] ss:$9 sm:$0xff] %v5775
    %v6280 = vld [vmem:[#allocation1] sm:$0xff]
    %6281 = vst [vmem:[#allocation1] ss:$9 sm:$0xff] %v5768
    %6282 = vst [vmem:[%s5974] ss:$9 sm:$0xff] %v5769
    %6283 = vst [vmem:[%s5977] ss:$9 sm:$0xff] %v5770
    %6284 = vst [vmem:[%s5980] ss:$9 sm:$0xff] %v5771
    %6285 = vst [vmem:[%s5983] ss:$9 sm:$0xff] %v5772
    %6286 = vst [vmem:[%s5986] ss:$9 sm:$0xff] %v5773
    %6287 = vst [vmem:[%s5989] ss:$9 sm:$0xff] %v5774
    %6288 = vst [vmem:[%s5992] ss:$9 sm:$0xff] %v5775
    %v6289 = vld [vmem:[#allocation1] sm:$0xff]
    %6291 = vst [vmem:[#allocation1] ss:$9 sm:$0xff] %v5776
    %6293 = vst [vmem:[%s5974] ss:$9 sm:$0xff] %v5777
    %6295 = vst [vmem:[%s5977] ss:$9 sm:$0xff] %v5778
    %6297 = vst [vmem:[%s5980] ss:$9 sm:$0xff] %v5779
    %6299 = vst [vmem:[%s5983] ss:$9 sm:$0xff] %v5780
    %6301 = vst [vmem:[%s5986] ss:$9 sm:$0xff] %v5781
    %6303 = vst [vmem:[%s5989] ss:$9 sm:$0xff] %v5782
    %6305 = vst [vmem:[%s5992] ss:$9 sm:$0xff] %v5783
    %v6306 = vld [vmem:[#allocation1] sm:$0xff]
    %6307 = vst [vmem:[#allocation1] ss:$9 sm:$0xff] %v5776
    %6308 = vst [vmem:[%s5974] ss:$9 sm:$0xff] %v5777
    %6309 = vst [vmem:[%s5977] ss:$9 sm:$0xff] %v5778
    %6310 = vst [vmem:[%s5980] ss:$9 sm:$0xff] %v5779
    %6311 = vst [vmem:[%s5983] ss:$9 sm:$0xff] %v5780
    %6312 = vst [vmem:[%s5986] ss:$9 sm:$0xff] %v5781
    %6313 = vst [vmem:[%s5989] ss:$9 sm:$0xff] %v5782
    %6314 = vst [vmem:[%s5992] ss:$9 sm:$0xff] %v5783
    %v6315 = vld [vmem:[#allocation1] sm:$0xff]
    %6317 = vst [vmem:[#allocation1] ss:$9 sm:$0xff] %v5784
    %6319 = vst [vmem:[%s5974] ss:$9 sm:$0xff] %v5785
    %6321 = vst [vmem:[%s5977] ss:$9 sm:$0xff] %v5786
    %6323 = vst [vmem:[%s5980] ss:$9 sm:$0xff] %v5787
    %6325 = vst [vmem:[%s5983] ss:$9 sm:$0xff] %v5788
    %6327 = vst [vmem:[%s5986] ss:$9 sm:$0xff] %v5789
    %6329 = vst [vmem:[%s5989] ss:$9 sm:$0xff] %v5790
    %6331 = vst [vmem:[%s5992] ss:$9 sm:$0xff] %v5791
    %v6332 = vld [vmem:[#allocation1] sm:$0xff]
    %6333 = vst [vmem:[#allocation1] ss:$9 sm:$0xff] %v5784
    %6334 = vst [vmem:[%s5974] ss:$9 sm:$0xff] %v5785
    %6335 = vst [vmem:[%s5977] ss:$9 sm:$0xff] %v5786
    %6336 = vst [vmem:[%s5980] ss:$9 sm:$0xff] %v5787
    %6337 = vst [vmem:[%s5983] ss:$9 sm:$0xff] %v5788
    %6338 = vst [vmem:[%s5986] ss:$9 sm:$0xff] %v5789
    %6339 = vst [vmem:[%s5989] ss:$9 sm:$0xff] %v5790
    %6340 = vst [vmem:[%s5992] ss:$9 sm:$0xff] %v5791
    %v6341 = vld [vmem:[#allocation1] sm:$0xff]
    %6343 = vst [vmem:[#allocation1] ss:$9 sm:$0xff] %v5792
    %6345 = vst [vmem:[%s5974] ss:$9 sm:$0xff] %v5793
    %6347 = vst [vmem:[%s5977] ss:$9 sm:$0xff] %v5794
    %6349 = vst [vmem:[%s5980] ss:$9 sm:$0xff] %v5795
    %6351 = vst [vmem:[%s5983] ss:$9 sm:$0xff] %v5796
    %6353 = vst [vmem:[%s5986] ss:$9 sm:$0xff] %v5797
    %6355 = vst [vmem:[%s5989] ss:$9 sm:$0xff] %v5798
    %6357 = vst [vmem:[%s5992] ss:$9 sm:$0xff] %v5799
    %v6358 = vld [vmem:[#allocation1] sm:$0xff]
    %6359 = vst [vmem:[#allocation1] ss:$9 sm:$0xff] %v5792
    %6360 = vst [vmem:[%s5974] ss:$9 sm:$0xff] %v5793
    %6361 = vst [vmem:[%s5977] ss:$9 sm:$0xff] %v5794
    %6362 = vst [vmem:[%s5980] ss:$9 sm:$0xff] %v5795
    %6363 = vst [vmem:[%s5983] ss:$9 sm:$0xff] %v5796
    %6364 = vst [vmem:[%s5986] ss:$9 sm:$0xff] %v5797
    %6365 = vst [vmem:[%s5989] ss:$9 sm:$0xff] %v5798
    %6366 = vst [vmem:[%s5992] ss:$9 sm:$0xff] %v5799
    %v6367 = vld [vmem:[#allocation1] sm:$0xff]
    %6369 = vst [vmem:[#allocation1] ss:$9 sm:$0xff] %v5800
    %6371 = vst [vmem:[%s5974] ss:$9 sm:$0xff] %v5801
    %6373 = vst [vmem:[%s5977] ss:$9 sm:$0xff] %v5802
    %6375 = vst [vmem:[%s5980] ss:$9 sm:$0xff] %v5803
    %6377 = vst [vmem:[%s5983] ss:$9 sm:$0xff] %v5804
    %6379 = vst [vmem:[%s5986] ss:$9 sm:$0xff] %v5805
    %6381 = vst [vmem:[%s5989] ss:$9 sm:$0xff] %v5806
    %6383 = vst [vmem:[%s5992] ss:$9 sm:$0xff] %v5807
    %v6384 = vld [vmem:[#allocation1] sm:$0xff]
    %6385 = vst [vmem:[#allocation1] ss:$9 sm:$0xff] %v5800
    %6386 = vst [vmem:[%s5974] ss:$9 sm:$0xff] %v5801
    %6387 = vst [vmem:[%s5977] ss:$9 sm:$0xff] %v5802
    %6388 = vst [vmem:[%s5980] ss:$9 sm:$0xff] %v5803
    %6389 = vst [vmem:[%s5983] ss:$9 sm:$0xff] %v5804
    %6390 = vst [vmem:[%s5986] ss:$9 sm:$0xff] %v5805
    %6391 = vst [vmem:[%s5989] ss:$9 sm:$0xff] %v5806
    %6392 = vst [vmem:[%s5992] ss:$9 sm:$0xff] %v5807
    %v6393 = vld [vmem:[#allocation1] sm:$0xff]
    %v6394 = vshrl.u32 %v5994, 16
    %v6396 = vrot.slane %v6394, 7
    %v6397 = vshll.u32 %v5994, 16
    %v6399 = vor.u32 %v6396, %v6397
    %v6400 = vshrl.u32 %v6003, 16
    %v6402 = vrot.slane %v6400, 7
    %v6403 = vshll.u32 %v6003, 16
    %v6405 = vor.u32 %v6402, %v6403
    %v6406 = vshrl.u32 %v6020, 16
    %v6408 = vrot.slane %v6406, 7
    %v6409 = vshll.u32 %v6020, 16
    %v6411 = vor.u32 %v6408, %v6409
    %v6412 = vshrl.u32 %v6029, 16
    %v6414 = vrot.slane %v6412, 7
    %v6415 = vshll.u32 %v6029, 16
    %v6417 = vor.u32 %v6414, %v6415
    %v6418 = vshrl.u32 %v6046, 16
    %v6420 = vrot.slane %v6418, 7
    %v6421 = vshll.u32 %v6046, 16
    %v6423 = vor.u32 %v6420, %v6421
    %v6424 = vshrl.u32 %v6055, 16
    %v6426 = vrot.slane %v6424, 7
    %v6427 = vshll.u32 %v6055, 16
    %v6429 = vor.u32 %v6426, %v6427
    %v6430 = vshrl.u32 %v6072, 16
    %v6432 = vrot.slane %v6430, 7
    %v6433 = vshll.u32 %v6072, 16
    %v6435 = vor.u32 %v6432, %v6433
    %v6436 = vshrl.u32 %v6081, 16
    %v6438 = vrot.slane %v6436, 7
    %v6439 = vshll.u32 %v6081, 16
    %v6441 = vor.u32 %v6438, %v6439
    %v6442 = vshrl.u32 %v6098, 16
    %v6444 = vrot.slane %v6442, 7
    %v6445 = vshll.u32 %v6098, 16
    %v6447 = vor.u32 %v6444, %v6445
    %v6448 = vshrl.u32 %v6107, 16
    %v6450 = vrot.slane %v6448, 7
    %v6451 = vshll.u32 %v6107, 16
    %v6453 = vor.u32 %v6450, %v6451
    %v6454 = vshrl.u32 %v6124, 16
    %v6456 = vrot.slane %v6454, 7
    %v6457 = vshll.u32 %v6124, 16
    %v6459 = vor.u32 %v6456, %v6457
    %v6460 = vshrl.u32 %v6133, 16
    %v6462 = vrot.slane %v6460, 7
    %v6463 = vshll.u32 %v6133, 16
    %v6465 = vor.u32 %v6462, %v6463
    %v6466 = vshrl.u32 %v6150, 16
    %v6468 = vrot.slane %v6466, 7
    %v6469 = vshll.u32 %v6150, 16
    %v6471 = vor.u32 %v6468, %v6469
    %v6472 = vshrl.u32 %v6159, 16
    %v6474 = vrot.slane %v6472, 7
    %v6475 = vshll.u32 %v6159, 16
    %v6477 = vor.u32 %v6474, %v6475
    %v6478 = vshrl.u32 %v6176, 16
    %v6480 = vrot.slane %v6478, 7
    %v6481 = vshll.u32 %v6176, 16
    %v6483 = vor.u32 %v6480, %v6481
    %v6484 = vshrl.u32 %v6185, 16
    %v6486 = vrot.slane %v6484, 7
    %v6487 = vshll.u32 %v6185, 16
    %v6489 = vor.u32 %v6486, %v6487
    %v6490 = vshrl.u32 %v6202, 16
    %v6492 = vrot.slane %v6490, 7
    %v6493 = vshll.u32 %v6202, 16
    %v6495 = vor.u32 %v6492, %v6493
    %v6496 = vshrl.u32 %v6211, 16
    %v6498 = vrot.slane %v6496, 7
    %v6499 = vshll.u32 %v6211, 16
    %v6501 = vor.u32 %v6498, %v6499
    %v6502 = vshrl.u32 %v6228, 16
    %v6504 = vrot.slane %v6502, 7
    %v6505 = vshll.u32 %v6228, 16
    %v6507 = vor.u32 %v6504, %v6505
    %v6508 = vshrl.u32 %v6237, 16
    %v6510 = vrot.slane %v6508, 7
    %v6511 = vshll.u32 %v6237, 16
    %v6513 = vor.u32 %v6510, %v6511
    %v6514 = vshrl.u32 %v6254, 16
    %v6516 = vrot.slane %v6514, 7
    %v6517 = vshll.u32 %v6254, 16
    %v6519 = vor.u32 %v6516, %v6517
    %v6520 = vshrl.u32 %v6263, 16
    %v6522 = vrot.slane %v6520, 7
    %v6523 = vshll.u32 %v6263, 16
    %v6525 = vor.u32 %v6522, %v6523
    %v6526 = vshrl.u32 %v6280, 16
    %v6528 = vrot.slane %v6526, 7
    %v6529 = vshll.u32 %v6280, 16
    %v6531 = vor.u32 %v6528, %v6529
    %v6532 = vshrl.u32 %v6289, 16
    %v6534 = vrot.slane %v6532, 7
    %v6535 = vshll.u32 %v6289, 16
    %v6537 = vor.u32 %v6534, %v6535
    %v6538 = vshrl.u32 %v6306, 16
    %v6540 = vrot.slane %v6538, 7
    %v6541 = vshll.u32 %v6306, 16
    %v6543 = vor.u32 %v6540, %v6541
    %v6544 = vshrl.u32 %v6315, 16
    %v6546 = vrot.slane %v6544, 7
    %v6547 = vshll.u32 %v6315, 16
    %v6549 = vor.u32 %v6546, %v6547
    %v6550 = vshrl.u32 %v6332, 16
    %v6552 = vrot.slane %v6550, 7
    %v6553 = vshll.u32 %v6332, 16
    %v6555 = vor.u32 %v6552, %v6553
    %v6556 = vshrl.u32 %v6341, 16
    %v6558 = vrot.slane %v6556, 7
    %v6559 = vshll.u32 %v6341, 16
    %v6561 = vor.u32 %v6558, %v6559
    %v6562 = vshrl.u32 %v6358, 16
    %v6564 = vrot.slane %v6562, 7
    %v6565 = vshll.u32 %v6358, 16
    %v6567 = vor.u32 %v6564, %v6565
    %v6568 = vshrl.u32 %v6367, 16
    %v6570 = vrot.slane %v6568, 7
    %v6571 = vshll.u32 %v6367, 16
    %v6573 = vor.u32 %v6570, %v6571
    %v6574 = vshrl.u32 %v6384, 16
    %v6576 = vrot.slane %v6574, 7
    %v6577 = vshll.u32 %v6384, 16
    %v6579 = vor.u32 %v6576, %v6577
    %v6580 = vshrl.u32 %v6393, 16
    %v6582 = vrot.slane %v6580, 7
    %v6583 = vshll.u32 %v6393, 16
    %v6585 = vor.u32 %v6582, %v6583
    %v6651 = vsel %vm316, 0, %v6399
    %v6652 = vsel %vm316, 0, %v6405
    %v6653 = vsel %vm316, 0, %v6411
    %v6654 = vsel %vm316, 0, %v6417
    %v6655 = vsel %vm316, 0, %v6423
    %v6656 = vsel %vm316, 0, %v6429
    %v6657 = vsel %vm316, 0, %v6435
    %v6658 = vsel %vm316, 0, %v6441
    %v6659 = vsel %vm316, 0, %v6447
    %v6660 = vsel %vm316, 0, %v6453
    %v6661 = vsel %vm316, 0, %v6459
    %v6662 = vsel %vm316, 0, %v6465
    %v6663 = vsel %vm316, 0, %v6471
    %v6664 = vsel %vm316, 0, %v6477
    %v6665 = vsel %vm316, 0, %v6483
    %v6666 = vsel %vm316, 0, %v6489
    %v6667 = vsel %vm316, 0, %v6495
    %v6668 = vsel %vm316, 0, %v6501
    %v6669 = vsel %vm316, 0, %v6507
    %v6670 = vsel %vm316, 0, %v6513
    %v6671 = vsel %vm316, 0, %v6519
    %v6672 = vsel %vm316, 0, %v6525
    %v6673 = vsel %vm316, 0, %v6531
    %v6674 = vsel %vm316, 0, %v6537
    %v6675 = vsel %vm316, 0, %v6543
    %v6676 = vsel %vm316, 0, %v6549
    %v6677 = vsel %vm316, 0, %v6555
    %v6678 = vsel %vm316, 0, %v6561
    %v6679 = vsel %vm316, 0, %v6567
    %v6680 = vsel %vm316, 0, %v6573
    %v6681 = vsel %vm316, 0, %v6579
    %v6682 = vsel %vm316, 0, %v6585
    %v6683 = vsel %vm316, %v245, 0
    %v6684 = vsel %vm316, %v6396, 0
    %v6685 = vsel %vm316, %v6402, 0
    %v6686 = vsel %vm316, %v6408, 0
    %v6687 = vsel %vm316, %v6414, 0
    %v6688 = vsel %vm316, %v6420, 0
    %v6689 = vsel %vm316, %v6426, 0
    %v6690 = vsel %vm316, %v6432, 0
    %v6691 = vsel %vm316, %v6438, 0
    %v6692 = vsel %vm316, %v6444, 0
    %v6693 = vsel %vm316, %v6450, 0
    %v6694 = vsel %vm316, %v6456, 0
    %v6695 = vsel %vm316, %v6462, 0
    %v6696 = vsel %vm316, %v6468, 0
    %v6697 = vsel %vm316, %v6474, 0
    %v6698 = vsel %vm316, %v6480, 0
    %v6699 = vsel %vm316, %v6486, 0
    %v6700 = vsel %vm316, %v6492, 0
    %v6701 = vsel %vm316, %v6498, 0
    %v6702 = vsel %vm316, %v6504, 0
    %v6703 = vsel %vm316, %v6510, 0
    %v6704 = vsel %vm316, %v6516, 0
    %v6705 = vsel %vm316, %v6522, 0
    %v6706 = vsel %vm316, %v6528, 0
    %v6707 = vsel %vm316, %v6534, 0
    %v6708 = vsel %vm316, %v6540, 0
    %v6709 = vsel %vm316, %v6546, 0
    %v6710 = vsel %vm316, %v6552, 0
    %v6711 = vsel %vm316, %v6558, 0
    %v6712 = vsel %vm316, %v6564, 0
    %v6713 = vsel %vm316, %v6570, 0
    %v6714 = vsel %vm316, %v6576, 0
    %v6715 = vsel %vm316, %v6582, 0
    %vm6716 = vsmask.f32 7424
    %v6718 = vshrl.u32 %v317, 16
    %v6720 = vshll.u32 %v317, 16
    %v6722 = vrot.slane %v6720, 1
    %v6723 = vor.u32 %v6718, %v6722
    %v6725 = vshll.u32 %v6683, 16
    %v6727 = vrot.slane %v6725, 1
    %v6728 = vsel %vm6716, %v6723, %v6727
    %v6730 = vshrl.u32 %v6651, 16
    %v6732 = vshll.u32 %v6651, 16
    %v6734 = vrot.slane %v6732, 1
    %v6735 = vor.u32 %v6730, %v6734
    %v6737 = vshll.u32 %v6684, 16
    %v6739 = vrot.slane %v6737, 1
    %v6740 = vsel %vm6716, %v6735, %v6739
    %v6742 = vshrl.u32 %v6652, 16
    %v6744 = vshll.u32 %v6652, 16
    %v6746 = vrot.slane %v6744, 1
    %v6747 = vor.u32 %v6742, %v6746
    %v6749 = vshll.u32 %v6685, 16
    %v6751 = vrot.slane %v6749, 1
    %v6752 = vsel %vm6716, %v6747, %v6751
    %v6754 = vshrl.u32 %v6653, 16
    %v6756 = vshll.u32 %v6653, 16
    %v6758 = vrot.slane %v6756, 1
    %v6759 = vor.u32 %v6754, %v6758
    %v6761 = vshll.u32 %v6686, 16
    %v6763 = vrot.slane %v6761, 1
    %v6764 = vsel %vm6716, %v6759, %v6763
    %v6766 = vshrl.u32 %v6654, 16
    %v6768 = vshll.u32 %v6654, 16
    %v6770 = vrot.slane %v6768, 1
    %v6771 = vor.u32 %v6766, %v6770
    %v6773 = vshll.u32 %v6687, 16
    %v6775 = vrot.slane %v6773, 1
    %v6776 = vsel %vm6716, %v6771, %v6775
    %v6778 = vshrl.u32 %v6655, 16
    %v6780 = vshll.u32 %v6655, 16
    %v6782 = vrot.slane %v6780, 1
    %v6783 = vor.u32 %v6778, %v6782
    %v6785 = vshll.u32 %v6688, 16
    %v6787 = vrot.slane %v6785, 1
    %v6788 = vsel %vm6716, %v6783, %v6787
    %v6790 = vshrl.u32 %v6656, 16
    %v6792 = vshll.u32 %v6656, 16
    %v6794 = vrot.slane %v6792, 1
    %v6795 = vor.u32 %v6790, %v6794
    %v6797 = vshll.u32 %v6689, 16
    %v6799 = vrot.slane %v6797, 1
    %v6800 = vsel %vm6716, %v6795, %v6799
    %v6802 = vshrl.u32 %v6657, 16
    %v6804 = vshll.u32 %v6657, 16
    %v6806 = vrot.slane %v6804, 1
    %v6807 = vor.u32 %v6802, %v6806
    %v6809 = vshll.u32 %v6690, 16
    %v6811 = vrot.slane %v6809, 1
    %v6812 = vsel %vm6716, %v6807, %v6811
    %v6814 = vshrl.u32 %v6658, 16
    %v6816 = vshll.u32 %v6658, 16
    %v6818 = vrot.slane %v6816, 1
    %v6819 = vor.u32 %v6814, %v6818
    %v6821 = vshll.u32 %v6691, 16
    %v6823 = vrot.slane %v6821, 1
    %v6824 = vsel %vm6716, %v6819, %v6823
    %v6826 = vshrl.u32 %v6659, 16
    %v6828 = vshll.u32 %v6659, 16
    %v6830 = vrot.slane %v6828, 1
    %v6831 = vor.u32 %v6826, %v6830
    %v6833 = vshll.u32 %v6692, 16
    %v6835 = vrot.slane %v6833, 1
    %v6836 = vsel %vm6716, %v6831, %v6835
    %v6838 = vshrl.u32 %v6660, 16
    %v6840 = vshll.u32 %v6660, 16
    %v6842 = vrot.slane %v6840, 1
    %v6843 = vor.u32 %v6838, %v6842
    %v6845 = vshll.u32 %v6693, 16
    %v6847 = vrot.slane %v6845, 1
    %v6848 = vsel %vm6716, %v6843, %v6847
    %v6850 = vshrl.u32 %v6661, 16
    %v6852 = vshll.u32 %v6661, 16
    %v6854 = vrot.slane %v6852, 1
    %v6855 = vor.u32 %v6850, %v6854
    %v6857 = vshll.u32 %v6694, 16
    %v6859 = vrot.slane %v6857, 1
    %v6860 = vsel %vm6716, %v6855, %v6859
    %v6862 = vshrl.u32 %v6662, 16
    %v6864 = vshll.u32 %v6662, 16
    %v6866 = vrot.slane %v6864, 1
    %v6867 = vor.u32 %v6862, %v6866
    %v6869 = vshll.u32 %v6695, 16
    %v6871 = vrot.slane %v6869, 1
    %v6872 = vsel %vm6716, %v6867, %v6871
    %v6874 = vshrl.u32 %v6663, 16
    %v6876 = vshll.u32 %v6663, 16
    %v6878 = vrot.slane %v6876, 1
    %v6879 = vor.u32 %v6874, %v6878
    %v6881 = vshll.u32 %v6696, 16
    %v6883 = vrot.slane %v6881, 1
    %v6884 = vsel %vm6716, %v6879, %v6883
    %v6886 = vshrl.u32 %v6664, 16
    %v6888 = vshll.u32 %v6664, 16
    %v6890 = vrot.slane %v6888, 1
    %v6891 = vor.u32 %v6886, %v6890
    %v6893 = vshll.u32 %v6697, 16
    %v6895 = vrot.slane %v6893, 1
    %v6896 = vsel %vm6716, %v6891, %v6895
    %v6898 = vshrl.u32 %v6665, 16
    %v6900 = vshll.u32 %v6665, 16
    %v6902 = vrot.slane %v6900, 1
    %v6903 = vor.u32 %v6898, %v6902
    %v6905 = vshll.u32 %v6698, 16
    %v6907 = vrot.slane %v6905, 1
    %v6908 = vsel %vm6716, %v6903, %v6907
    %v6910 = vshrl.u32 %v6667, 16
    %v6912 = vshll.u32 %v6667, 16
    %v6914 = vrot.slane %v6912, 1
    %v6915 = vor.u32 %v6910, %v6914
    %v6917 = vshll.u32 %v6700, 16
    %v6919 = vrot.slane %v6917, 1
    %v6920 = vsel %vm6716, %v6915, %v6919
    %v6922 = vshrl.u32 %v6668, 16
    %v6924 = vshll.u32 %v6668, 16
    %v6926 = vrot.slane %v6924, 1
    %v6927 = vor.u32 %v6922, %v6926
    %v6929 = vshll.u32 %v6701, 16
    %v6931 = vrot.slane %v6929, 1
    %v6932 = vsel %vm6716, %v6927, %v6931
    %v6934 = vshrl.u32 %v6669, 16
    %v6936 = vshll.u32 %v6669, 16
    %v6938 = vrot.slane %v6936, 1
    %v6939 = vor.u32 %v6934, %v6938
    %v6941 = vshll.u32 %v6702, 16
    %v6943 = vrot.slane %v6941, 1
    %v6944 = vsel %vm6716, %v6939, %v6943
    %v6946 = vshrl.u32 %v6670, 16
    %v6948 = vshll.u32 %v6670, 16
    %v6950 = vrot.slane %v6948, 1
    %v6951 = vor.u32 %v6946, %v6950
    %v6953 = vshll.u32 %v6703, 16
    %v6955 = vrot.slane %v6953, 1
    %v6956 = vsel %vm6716, %v6951, %v6955
    %v6958 = vshrl.u32 %v6671, 16
    %v6960 = vshll.u32 %v6671, 16
    %v6962 = vrot.slane %v6960, 1
    %v6963 = vor.u32 %v6958, %v6962
    %v6965 = vshll.u32 %v6704, 16
    %v6967 = vrot.slane %v6965, 1
    %v6968 = vsel %vm6716, %v6963, %v6967
    %v6970 = vshrl.u32 %v6672, 16
    %v6972 = vshll.u32 %v6672, 16
    %v6974 = vrot.slane %v6972, 1
    %v6975 = vor.u32 %v6970, %v6974
    %v6977 = vshll.u32 %v6705, 16
    %v6979 = vrot.slane %v6977, 1
    %v6980 = vsel %vm6716, %v6975, %v6979
    %v6982 = vshrl.u32 %v6673, 16
    %v6984 = vshll.u32 %v6673, 16
    %v6986 = vrot.slane %v6984, 1
    %v6987 = vor.u32 %v6982, %v6986
    %v6989 = vshll.u32 %v6706, 16
    %v6991 = vrot.slane %v6989, 1
    %v6992 = vsel %vm6716, %v6987, %v6991
    %v6994 = vshrl.u32 %v6674, 16
    %v6996 = vshll.u32 %v6674, 16
    %v6998 = vrot.slane %v6996, 1
    %v6999 = vor.u32 %v6994, %v6998
    %v7001 = vshll.u32 %v6707, 16
    %v7003 = vrot.slane %v7001, 1
    %v7004 = vsel %vm6716, %v6999, %v7003
    %v7006 = vshrl.u32 %v6675, 16
    %v7008 = vshll.u32 %v6675, 16
    %v7010 = vrot.slane %v7008, 1
    %v7011 = vor.u32 %v7006, %v7010
    %v7013 = vshll.u32 %v6708, 16
    %v7015 = vrot.slane %v7013, 1
    %v7016 = vsel %vm6716, %v7011, %v7015
    %v7018 = vshrl.u32 %v6676, 16
    %v7020 = vshll.u32 %v6676, 16
    %v7022 = vrot.slane %v7020, 1
    %v7023 = vor.u32 %v7018, %v7022
    %v7025 = vshll.u32 %v6709, 16
    %v7027 = vrot.slane %v7025, 1
    %v7028 = vsel %vm6716, %v7023, %v7027
    %v7030 = vshrl.u32 %v6677, 16
    %v7032 = vshll.u32 %v6677, 16
    %v7034 = vrot.slane %v7032, 1
    %v7035 = vor.u32 %v7030, %v7034
    %v7037 = vshll.u32 %v6710, 16
    %v7039 = vrot.slane %v7037, 1
    %v7040 = vsel %vm6716, %v7035, %v7039
    %v7042 = vshrl.u32 %v6678, 16
    %v7044 = vshll.u32 %v6678, 16
    %v7046 = vrot.slane %v7044, 1
    %v7047 = vor.u32 %v7042, %v7046
    %v7049 = vshll.u32 %v6711, 16
    %v7051 = vrot.slane %v7049, 1
    %v7052 = vsel %vm6716, %v7047, %v7051
    %v7054 = vshrl.u32 %v6679, 16
    %v7056 = vshll.u32 %v6679, 16
    %v7058 = vrot.slane %v7056, 1
    %v7059 = vor.u32 %v7054, %v7058
    %v7061 = vshll.u32 %v6712, 16
    %v7063 = vrot.slane %v7061, 1
    %v7064 = vsel %vm6716, %v7059, %v7063
    %v7066 = vshrl.u32 %v6680, 16
    %v7068 = vshll.u32 %v6680, 16
    %v7070 = vrot.slane %v7068, 1
    %v7071 = vor.u32 %v7066, %v7070
    %v7073 = vshll.u32 %v6713, 16
    %v7075 = vrot.slane %v7073, 1
    %v7076 = vsel %vm6716, %v7071, %v7075
    %v7078 = vshrl.u32 %v6681, 16
    %v7080 = vshll.u32 %v6681, 16
    %v7082 = vrot.slane %v7080, 1
    %v7083 = vor.u32 %v7078, %v7082
    %v7085 = vshll.u32 %v6714, 16
    %v7087 = vrot.slane %v7085, 1
    %v7088 = vsel %vm6716, %v7083, %v7087
    %vm7182 = vcmask 1046528
    %v7183 = vrot.slane %v317, 1
    %v7184 = vrot.slane %v6683, 1
    %v7185 = vsel %vm7182, %v7183, %v7184
    %v7186 = vrot.slane %v6651, 1
    %v7187 = vrot.slane %v6684, 1
    %v7188 = vsel %vm7182, %v7186, %v7187
    %v7189 = vrot.slane %v6652, 1
    %v7190 = vrot.slane %v6685, 1
    %v7191 = vsel %vm7182, %v7189, %v7190
    %v7192 = vrot.slane %v6653, 1
    %v7193 = vrot.slane %v6686, 1
    %v7194 = vsel %vm7182, %v7192, %v7193
    %v7195 = vrot.slane %v6654, 1
    %v7196 = vrot.slane %v6687, 1
    %v7197 = vsel %vm7182, %v7195, %v7196
    %v7198 = vrot.slane %v6655, 1
    %v7199 = vrot.slane %v6688, 1
    %v7200 = vsel %vm7182, %v7198, %v7199
    %v7201 = vrot.slane %v6656, 1
    %v7202 = vrot.slane %v6689, 1
    %v7203 = vsel %vm7182, %v7201, %v7202
    %v7204 = vrot.slane %v6657, 1
    %v7205 = vrot.slane %v6690, 1
    %v7206 = vsel %vm7182, %v7204, %v7205
    %v7207 = vrot.slane %v6658, 1
    %v7208 = vrot.slane %v6691, 1
    %v7209 = vsel %vm7182, %v7207, %v7208
    %v7210 = vrot.slane %v6659, 1
    %v7211 = vrot.slane %v6692, 1
    %v7212 = vsel %vm7182, %v7210, %v7211
    %v7213 = vrot.slane %v6660, 1
    %v7214 = vrot.slane %v6693, 1
    %v7215 = vsel %vm7182, %v7213, %v7214
    %v7216 = vrot.slane %v6661, 1
    %v7217 = vrot.slane %v6694, 1
    %v7218 = vsel %vm7182, %v7216, %v7217
    %v7219 = vrot.slane %v6662, 1
    %v7220 = vrot.slane %v6695, 1
    %v7221 = vsel %vm7182, %v7219, %v7220
    %v7222 = vrot.slane %v6663, 1
    %v7223 = vrot.slane %v6696, 1
    %v7224 = vsel %vm7182, %v7222, %v7223
    %v7225 = vrot.slane %v6664, 1
    %v7226 = vrot.slane %v6697, 1
    %v7227 = vsel %vm7182, %v7225, %v7226
    %v7228 = vrot.slane %v6665, 1
    %v7229 = vrot.slane %v6698, 1
    %v7230 = vsel %vm7182, %v7228, %v7229
    %v7231 = vrot.slane %v6667, 1
    %v7232 = vrot.slane %v6700, 1
    %v7233 = vsel %vm7182, %v7231, %v7232
    %v7234 = vrot.slane %v6668, 1
    %v7235 = vrot.slane %v6701, 1
    %v7236 = vsel %vm7182, %v7234, %v7235
    %v7237 = vrot.slane %v6669, 1
    %v7238 = vrot.slane %v6702, 1
    %v7239 = vsel %vm7182, %v7237, %v7238
    %v7240 = vrot.slane %v6670, 1
    %v7241 = vrot.slane %v6703, 1
    %v7242 = vsel %vm7182, %v7240, %v7241
    %v7243 = vrot.slane %v6671, 1
    %v7244 = vrot.slane %v6704, 1
    %v7245 = vsel %vm7182, %v7243, %v7244
    %v7246 = vrot.slane %v6672, 1
    %v7247 = vrot.slane %v6705, 1
    %v7248 = vsel %vm7182, %v7246, %v7247
    %v7249 = vrot.slane %v6673, 1
    %v7250 = vrot.slane %v6706, 1
    %v7251 = vsel %vm7182, %v7249, %v7250
    %v7252 = vrot.slane %v6674, 1
    %v7253 = vrot.slane %v6707, 1
    %v7254 = vsel %vm7182, %v7252, %v7253
    %v7255 = vrot.slane %v6675, 1
    %v7256 = vrot.slane %v6708, 1
    %v7257 = vsel %vm7182, %v7255, %v7256
    %v7258 = vrot.slane %v6676, 1
    %v7259 = vrot.slane %v6709, 1
    %v7260 = vsel %vm7182, %v7258, %v7259
    %v7261 = vrot.slane %v6677, 1
    %v7262 = vrot.slane %v6710, 1
    %v7263 = vsel %vm7182, %v7261, %v7262
    %v7264 = vrot.slane %v6678, 1
    %v7265 = vrot.slane %v6711, 1
    %v7266 = vsel %vm7182, %v7264, %v7265
    %v7267 = vrot.slane %v6679, 1
    %v7268 = vrot.slane %v6712, 1
    %v7269 = vsel %vm7182, %v7267, %v7268
    %v7270 = vrot.slane %v6680, 1
    %v7271 = vrot.slane %v6713, 1
    %v7272 = vsel %vm7182, %v7270, %v7271
    %v7273 = vrot.slane %v6681, 1
    %v7274 = vrot.slane %v6714, 1
    %v7275 = vsel %vm7182, %v7273, %v7274
    %v7308 = vshrl.u32 %v6666, 16
    %v7310 = vshll.u32 %v6666, 16
    %v7312 = vrot.slane %v7310, 1
    %v7313 = vor.u32 %v7308, %v7312
    %v7315 = vshll.u32 %v6699, 16
    %v7317 = vrot.slane %v7315, 1
    %v7318 = vsel %vm6716, %v7313, %v7317
    %v7320 = vshrl.u32 %v6682, 16
    %v7322 = vshll.u32 %v6682, 16
    %v7324 = vrot.slane %v7322, 1
    %v7325 = vor.u32 %v7320, %v7324
    %v7327 = vshll.u32 %v6715, 16
    %v7329 = vrot.slane %v7327, 1
    %v7330 = vsel %vm6716, %v7325, %v7329
    %v7337 = vrot.slane %v6666, 1
    %v7338 = vrot.slane %v6699, 1
    %v7339 = vsel %vm7182, %v7337, %v7338
    %v7340 = vrot.slane %v6682, 1
    %v7341 = vrot.slane %v6715, 1
    %v7342 = vsel %vm7182, %v7340, %v7341
    %v7345 = vld [vmem:[#allocation11] sm:$0xf]
    %v7346 = vld [vmem:[#allocation11 + $0x4] sm:$0xf]
    %v7347 = vld [vmem:[#allocation11 + $0x8] sm:$0xf]
    %v7348 = vld [vmem:[#allocation11 + $0xc] sm:$0xf]
    %v7349 = vld [vmem:[#allocation11 + $0x10] sm:$0xf]
    %v7350 = vld [vmem:[#allocation11 + $0x14] sm:$0xf]
    %v7351 = vld [vmem:[#allocation11 + $0x18] sm:$0xf]
    %v7352 = vld [vmem:[#allocation11 + $0x1c] sm:$0xf]
    %v7353 = vld [vmem:[#allocation11 + $0x20] sm:$0xf]
    %v7354 = vld [vmem:[#allocation11 + $0x24] sm:$0xf]
    %v7355 = vld [vmem:[#allocation11 + $0x28] sm:$0xf]
    %v7356 = vld [vmem:[#allocation11 + $0x2c] sm:$0xf]
    %v7357 = vld [vmem:[#allocation11 + $0x30] sm:$0xf]
    %v7358 = vld [vmem:[#allocation11 + $0x34] sm:$0xf]
    %v7359 = vld [vmem:[#allocation11 + $0x38] sm:$0xf]
    %v7360 = vld [vmem:[#allocation11 + $0x3c] sm:$0xf]
    %v7361 = vld [vmem:[#allocation11 + $0x40] sm:$0xf]
    %v7362 = vld [vmem:[#allocation11 + $0x44] sm:$0xf]
    %v7363 = vld [vmem:[#allocation11 + $0x48] sm:$0xf]
    %v7364 = vld [vmem:[#allocation11 + $0x4c] sm:$0xf]
    %v7365 = vld [vmem:[#allocation11 + $0x50] sm:$0xf]
    %v7366 = vld [vmem:[#allocation11 + $0x54] sm:$0xf]
    %v7367 = vld [vmem:[#allocation11 + $0x58] sm:$0xf]
    %v7368 = vld [vmem:[#allocation11 + $0x5c] sm:$0xf]
    %v7369 = vld [vmem:[#allocation11 + $0x60] sm:$0xf]
    %v7370 = vld [vmem:[#allocation11 + $0x64] sm:$0xf]
    %v7371 = vld [vmem:[#allocation11 + $0x68] sm:$0xf]
    %v7372 = vld [vmem:[#allocation11 + $0x6c] sm:$0xf]
    %v7373 = vld [vmem:[#allocation11 + $0x70] sm:$0xf]
    %v7374 = vld [vmem:[#allocation11 + $0x74] sm:$0xf]
    %v7375 = vld [vmem:[#allocation11 + $0x78] sm:$0xf]
    %v7376 = vld [vmem:[#allocation11 + $0x7c] sm:$0xf]
    %v7377 = vld [vmem:[#allocation11 + $0x80] sm:$0xf]
    %v7378 = vld [vmem:[#allocation11 + $0x84] sm:$0xf]
    %v7379 = vld [vmem:[#allocation11 + $0x88] sm:$0xf]
    %v7380 = vld [vmem:[#allocation11 + $0x8c] sm:$0xf]
    %v7381 = vld [vmem:[#allocation11 + $0x90] sm:$0xf]
    %v7382 = vld [vmem:[#allocation11 + $0x94] sm:$0xf]
    %v7383 = vld [vmem:[#allocation11 + $0x98] sm:$0xf]
    %v7384 = vld [vmem:[#allocation11 + $0x9c] sm:$0xf]
    %v7385 = vld [vmem:[#allocation11 + $0xa0] sm:$0xf]
    %v7386 = vld [vmem:[#allocation11 + $0xa4] sm:$0xf]
    %v7387 = vld [vmem:[#allocation11 + $0xa8] sm:$0xf]
    %v7388 = vld [vmem:[#allocation11 + $0xac] sm:$0xf]
    %v7389 = vld [vmem:[#allocation11 + $0xb0] sm:$0xf]
    %v7390 = vld [vmem:[#allocation11 + $0xb4] sm:$0xf]
    %v7391 = vld [vmem:[#allocation11 + $0xb8] sm:$0xf]
    %v7392 = vld [vmem:[#allocation11 + $0xbc] sm:$0xf]
    %v7393 = vld [vmem:[#allocation11 + $0xc0] sm:$0xf]
    %v7394 = vld [vmem:[#allocation11 + $0xc4] sm:$0xf]
    %v7395 = vld [vmem:[#allocation11 + $0xc8] sm:$0xf]
    %v7396 = vld [vmem:[#allocation11 + $0xcc] sm:$0xf]
    %v7397 = vld [vmem:[#allocation11 + $0xd0] sm:$0xf]
    %v7398 = vld [vmem:[#allocation11 + $0xd4] sm:$0xf]
    %v7399 = vld [vmem:[#allocation11 + $0xd8] sm:$0xf]
    %v7400 = vld [vmem:[#allocation11 + $0xdc] sm:$0xf]
    %v7401 = vld [vmem:[#allocation11 + $0xe0] sm:$0xf]
    %v7402 = vld [vmem:[#allocation11 + $0xe4] sm:$0xf]
    %v7403 = vld [vmem:[#allocation11 + $0xe8] sm:$0xf]
    %v7404 = vld [vmem:[#allocation11 + $0xec] sm:$0xf]
    %v7405 = vld [vmem:[#allocation11 + $0xf0] sm:$0xf]
    %v7406 = vld [vmem:[#allocation11 + $0xf4] sm:$0xf]
    %v7407 = vld [vmem:[#allocation11 + $0xf8] sm:$0xf]
    %v7408 = vld [vmem:[#allocation11 + $0xfc] sm:$0xf]
    %v7409 = vld [vmem:[#allocation11 + $0x100] sm:$0xf]
    %v7410 = vld [vmem:[#allocation11 + $0x104] sm:$0xf]
    %v7411 = vld [vmem:[#allocation11 + $0x108] sm:$0xf]
    %v7412 = vld [vmem:[#allocation11 + $0x10c] sm:$0xf]
    %v7413 = vld [vmem:[#allocation11 + $0x110] sm:$0xf]
    %v7414 = vld [vmem:[#allocation11 + $0x114] sm:$0xf]
    %v7415 = vld [vmem:[#allocation11 + $0x118] sm:$0xf]
    %v7416 = vld [vmem:[#allocation11 + $0x11c] sm:$0xf]
    %v7417 = vld [vmem:[#allocation11 + $0x120] sm:$0xf]
    %v7418 = vld [vmem:[#allocation11 + $0x124] sm:$0xf]
    %v7419 = vld [vmem:[#allocation11 + $0x128] sm:$0xf]
    %v7420 = vld [vmem:[#allocation11 + $0x12c] sm:$0xf]
    %v7421 = vld [vmem:[#allocation11 + $0x130] sm:$0xf]
    %v7422 = vld [vmem:[#allocation11 + $0x134] sm:$0xf]
    %v7423 = vld [vmem:[#allocation11 + $0x138] sm:$0xf]
    %v7424 = vld [vmem:[#allocation11 + $0x13c] sm:$0xf]
    %v7425 = vld [vmem:[#allocation11 + $0x140] sm:$0xf]
    %v7426 = vld [vmem:[#allocation11 + $0x144] sm:$0xf]
    %v7427 = vld [vmem:[#allocation11 + $0x148] sm:$0xf]
    %v7428 = vld [vmem:[#allocation11 + $0x14c] sm:$0xf]
    %v7429 = vld [vmem:[#allocation11 + $0x150] sm:$0xf]
    %v7430 = vld [vmem:[#allocation11 + $0x154] sm:$0xf]
    %v7431 = vld [vmem:[#allocation11 + $0x158] sm:$0xf]
    %v7432 = vld [vmem:[#allocation11 + $0x15c] sm:$0xf]
    %v7433 = vld [vmem:[#allocation11 + $0x160] sm:$0xf]
    %v7434 = vld [vmem:[#allocation11 + $0x164] sm:$0xf]
    %v7435 = vld [vmem:[#allocation11 + $0x168] sm:$0xf]
    %v7436 = vld [vmem:[#allocation11 + $0x16c] sm:$0xf]
    %v7437 = vld [vmem:[#allocation11 + $0x170] sm:$0xf]
    %v7438 = vld [vmem:[#allocation11 + $0x174] sm:$0xf]
    %v7439 = vld [vmem:[#allocation11 + $0x178] sm:$0xf]
    %v7440 = vld [vmem:[#allocation11 + $0x17c] sm:$0xf]
    %v7441 = vld [vmem:[#allocation11 + $0x180] sm:$0xf]
    %v7442 = vld [vmem:[#allocation11 + $0x184] sm:$0xf]
    %v7443 = vld [vmem:[#allocation11 + $0x188] sm:$0xf]
    %v7444 = vld [vmem:[#allocation11 + $0x18c] sm:$0xf]
    %v7445 = vld [vmem:[#allocation11 + $0x190] sm:$0xf]
    %v7446 = vld [vmem:[#allocation11 + $0x194] sm:$0xf]
    %v7447 = vld [vmem:[#allocation11 + $0x198] sm:$0xf]
    %v7448 = vld [vmem:[#allocation11 + $0x19c] sm:$0xf]
    %v7449 = vld [vmem:[#allocation11 + $0x1a0] sm:$0xf]
    %v7450 = vld [vmem:[#allocation11 + $0x1a4] sm:$0xf]
    %v7451 = vld [vmem:[#allocation11 + $0x1a8] sm:$0xf]
    %v7452 = vld [vmem:[#allocation11 + $0x1ac] sm:$0xf]
    %v7453 = vld [vmem:[#allocation11 + $0x1b0] sm:$0xf]
    %v7454 = vld [vmem:[#allocation11 + $0x1b4] sm:$0xf]
    %v7455 = vld [vmem:[#allocation11 + $0x1b8] sm:$0xf]
    %v7456 = vld [vmem:[#allocation11 + $0x1bc] sm:$0xf]
    %v7457 = vld [vmem:[#allocation11 + $0x1c0] sm:$0xf]
    %v7458 = vld [vmem:[#allocation11 + $0x1c4] sm:$0xf]
    %v7459 = vld [vmem:[#allocation11 + $0x1c8] sm:$0xf]
    %v7460 = vld [vmem:[#allocation11 + $0x1cc] sm:$0xf]
    %v7461 = vld [vmem:[#allocation11 + $0x1d0] sm:$0xf]
    %v7462 = vld [vmem:[#allocation11 + $0x1d4] sm:$0xf]
    %v7463 = vld [vmem:[#allocation11 + $0x1d8] sm:$0xf]
    %v7464 = vld [vmem:[#allocation11 + $0x1dc] sm:$0xf]
    %v7465 = vld [vmem:[#allocation11 + $0x1e0] sm:$0xf]
    %v7466 = vld [vmem:[#allocation11 + $0x1e4] sm:$0xf]
    %v7467 = vld [vmem:[#allocation11 + $0x1e8] sm:$0xf]
    %v7468 = vld [vmem:[#allocation11 + $0x1ec] sm:$0xf]
    %v7469 = vld [vmem:[#allocation11 + $0x1f0] sm:$0xf]
    %v7470 = vld [vmem:[#allocation11 + $0x1f4] sm:$0xf]
    %v7471 = vld [vmem:[#allocation11 + $0x1f8] sm:$0xf]
    %v7472 = vld [vmem:[#allocation11 + $0x1fc] sm:$0xf]
    %v7473 = vld [vmem:[#allocation11 + $0x200] sm:$0xf]
    %v7474 = vld [vmem:[#allocation11 + $0x204] sm:$0xf]
    %v7475 = vld [vmem:[#allocation11 + $0x208] sm:$0xf]
    %v7476 = vld [vmem:[#allocation11 + $0x20c] sm:$0xf]
    %v7477 = vld [vmem:[#allocation11 + $0x210] sm:$0xf]
    %v7478 = vld [vmem:[#allocation11 + $0x214] sm:$0xf]
    %v7479 = vld [vmem:[#allocation11 + $0x218] sm:$0xf]
    %v7480 = vld [vmem:[#allocation11 + $0x21c] sm:$0xf]
    %v7481 = vld [vmem:[#allocation11 + $0x220] sm:$0xf]
    %v7482 = vld [vmem:[#allocation11 + $0x224] sm:$0xf]
    %v7483 = vld [vmem:[#allocation11 + $0x228] sm:$0xf]
    %v7484 = vld [vmem:[#allocation11 + $0x22c] sm:$0xf]
    %v7485 = vld [vmem:[#allocation11 + $0x230] sm:$0xf]
    %v7486 = vld [vmem:[#allocation11 + $0x234] sm:$0xf]
    %v7487 = vld [vmem:[#allocation11 + $0x238] sm:$0xf]
    %v7488 = vld [vmem:[#allocation11 + $0x23c] sm:$0xf]
    %v7633 = vunpack.c.l.b16 %v7345
    %v7634 = vunpack.c.l.b16 %v7346
    %v7635 = vunpack.c.l.b16 %v7347
    %v7636 = vunpack.c.l.b16 %v7348
    %v7637 = vunpack.c.l.b16 %v7349
    %v7638 = vunpack.c.l.b16 %v7350
    %v7639 = vunpack.c.l.b16 %v7351
    %v7640 = vunpack.c.l.b16 %v7352
    %v7641 = vunpack.c.l.b16 %v7353
    %v7642 = vunpack.c.l.b16 %v7354
    %v7643 = vunpack.c.l.b16 %v7355
    %v7644 = vunpack.c.l.b16 %v7356
    %v7645 = vunpack.c.l.b16 %v7357
    %v7646 = vunpack.c.l.b16 %v7358
    %v7647 = vunpack.c.l.b16 %v7359
    %v7648 = vunpack.c.l.b16 %v7360
    %v7649 = vunpack.c.l.b16 %v7361
    %v7650 = vunpack.c.l.b16 %v7362
    %v7651 = vunpack.c.l.b16 %v7363
    %v7652 = vunpack.c.l.b16 %v7364
    %v7653 = vunpack.c.l.b16 %v7365
    %v7654 = vunpack.c.l.b16 %v7366
    %v7655 = vunpack.c.l.b16 %v7367
    %v7656 = vunpack.c.l.b16 %v7368
    %v7657 = vunpack.c.l.b16 %v7369
    %v7658 = vunpack.c.l.b16 %v7370
    %v7659 = vunpack.c.l.b16 %v7371
    %v7660 = vunpack.c.l.b16 %v7372
    %v7661 = vunpack.c.l.b16 %v7373
    %v7662 = vunpack.c.l.b16 %v7374
    %v7663 = vunpack.c.l.b16 %v7375
    %v7664 = vunpack.c.l.b16 %v7376
    %v7665 = vunpack.c.l.b16 %v7377
    %v7666 = vunpack.c.l.b16 %v7378
    %v7667 = vunpack.c.l.b16 %v7379
    %v7668 = vunpack.c.l.b16 %v7380
    %v7669 = vunpack.c.l.b16 %v7381
    %v7670 = vunpack.c.l.b16 %v7382
    %v7671 = vunpack.c.l.b16 %v7383
    %v7672 = vunpack.c.l.b16 %v7384
    %v7673 = vunpack.c.l.b16 %v7385
    %v7674 = vunpack.c.l.b16 %v7386
    %v7675 = vunpack.c.l.b16 %v7387
    %v7676 = vunpack.c.l.b16 %v7388
    %v7677 = vunpack.c.l.b16 %v7389
    %v7678 = vunpack.c.l.b16 %v7390
    %v7679 = vunpack.c.l.b16 %v7391
    %v7680 = vunpack.c.l.b16 %v7392
    %v7681 = vunpack.c.l.b16 %v7393
    %v7682 = vunpack.c.l.b16 %v7394
    %v7683 = vunpack.c.l.b16 %v7395
    %v7684 = vunpack.c.l.b16 %v7396
    %v7685 = vunpack.c.l.b16 %v7397
    %v7686 = vunpack.c.l.b16 %v7398
    %v7687 = vunpack.c.l.b16 %v7399
    %v7688 = vunpack.c.l.b16 %v7400
    %v7689 = vunpack.c.l.b16 %v7401
    %v7690 = vunpack.c.l.b16 %v7402
    %v7691 = vunpack.c.l.b16 %v7403
    %v7692 = vunpack.c.l.b16 %v7404
    %v7693 = vunpack.c.l.b16 %v7405
    %v7694 = vunpack.c.l.b16 %v7406
    %v7695 = vunpack.c.l.b16 %v7407
    %v7696 = vunpack.c.l.b16 %v7408
    %v7697 = vunpack.c.l.b16 %v7409
    %v7698 = vunpack.c.l.b16 %v7410
    %v7699 = vunpack.c.l.b16 %v7411
    %v7700 = vunpack.c.l.b16 %v7412
    %v7701 = vunpack.c.l.b16 %v7413
    %v7702 = vunpack.c.l.b16 %v7414
    %v7703 = vunpack.c.l.b16 %v7415
    %v7704 = vunpack.c.l.b16 %v7416
    %v7705 = vunpack.c.l.b16 %v7417
    %v7706 = vunpack.c.l.b16 %v7418
    %v7707 = vunpack.c.l.b16 %v7419
    %v7708 = vunpack.c.l.b16 %v7420
    %v7709 = vunpack.c.l.b16 %v7421
    %v7710 = vunpack.c.l.b16 %v7422
    %v7711 = vunpack.c.l.b16 %v7423
    %v7712 = vunpack.c.l.b16 %v7424
    %v7713 = vunpack.c.l.b16 %v7425
    %v7714 = vunpack.c.l.b16 %v7426
    %v7715 = vunpack.c.l.b16 %v7427
    %v7716 = vunpack.c.l.b16 %v7428
    %v7717 = vunpack.c.l.b16 %v7429
    %v7718 = vunpack.c.l.b16 %v7430
    %v7719 = vunpack.c.l.b16 %v7431
    %v7720 = vunpack.c.l.b16 %v7432
    %v7721 = vunpack.c.l.b16 %v7433
    %v7722 = vunpack.c.l.b16 %v7434
    %v7723 = vunpack.c.l.b16 %v7435
    %v7724 = vunpack.c.l.b16 %v7436
    %v7725 = vunpack.c.l.b16 %v7437
    %v7726 = vunpack.c.l.b16 %v7438
    %v7727 = vunpack.c.l.b16 %v7439
    %v7728 = vunpack.c.l.b16 %v7440
    %v7729 = vunpack.c.l.b16 %v7441
    %v7730 = vunpack.c.l.b16 %v7442
    %v7731 = vunpack.c.l.b16 %v7443
    %v7732 = vunpack.c.l.b16 %v7444
    %v7733 = vunpack.c.l.b16 %v7445
    %v7734 = vunpack.c.l.b16 %v7446
    %v7735 = vunpack.c.l.b16 %v7447
    %v7736 = vunpack.c.l.b16 %v7448
    %v7737 = vunpack.c.l.b16 %v7449
    %v7738 = vunpack.c.l.b16 %v7450
    %v7739 = vunpack.c.l.b16 %v7451
    %v7740 = vunpack.c.l.b16 %v7452
    %v7741 = vunpack.c.l.b16 %v7453
    %v7742 = vunpack.c.l.b16 %v7454
    %v7743 = vunpack.c.l.b16 %v7455
    %v7744 = vunpack.c.l.b16 %v7456
    %v7745 = vunpack.c.l.b16 %v7457
    %v7746 = vunpack.c.l.b16 %v7458
    %v7747 = vunpack.c.l.b16 %v7459
    %v7748 = vunpack.c.l.b16 %v7460
    %v7749 = vunpack.c.l.b16 %v7461
    %v7750 = vunpack.c.l.b16 %v7462
    %v7751 = vunpack.c.l.b16 %v7463
    %v7752 = vunpack.c.l.b16 %v7464
    %v7753 = vunpack.c.l.b16 %v7465
    %v7754 = vunpack.c.l.b16 %v7466
    %v7755 = vunpack.c.l.b16 %v7467
    %v7756 = vunpack.c.l.b16 %v7468
    %v7757 = vunpack.c.l.b16 %v7469
    %v7758 = vunpack.c.l.b16 %v7470
    %v7759 = vunpack.c.l.b16 %v7471
    %v7760 = vunpack.c.l.b16 %v7472
    %v7761 = vunpack.c.l.b16 %v7473
    %v7762 = vunpack.c.l.b16 %v7474
    %v7763 = vunpack.c.l.b16 %v7475
    %v7764 = vunpack.c.l.b16 %v7476
    %v7765 = vunpack.c.l.b16 %v7477
    %v7766 = vunpack.c.l.b16 %v7478
    %v7767 = vunpack.c.l.b16 %v7479
    %v7768 = vunpack.c.l.b16 %v7480
    %v7769 = vunpack.c.l.b16 %v7481
    %v7770 = vunpack.c.l.b16 %v7482
    %v7771 = vunpack.c.l.b16 %v7483
    %v7772 = vunpack.c.l.b16 %v7484
    %v7773 = vunpack.c.l.b16 %v7485
    %v7774 = vunpack.c.l.b16 %v7486
    %v7775 = vunpack.c.l.b16 %v7487
    %v7776 = vunpack.c.l.b16 %v7488
    %v7777 = vpack.c.b16 %v7634, %v7633
    %v7778 = vpack.c.b16 %v7636, %v7635
    %v7779 = vpack.c.b16 %v7638, %v7637
    %v7780 = vpack.c.b16 %v7640, %v7639
    %v7781 = vpack.c.b16 %v7642, %v7641
    %v7782 = vpack.c.b16 %v7644, %v7643
    %v7783 = vpack.c.b16 %v7646, %v7645
    %v7784 = vpack.c.b16 %v7648, %v7647
    %v7785 = vpack.c.b16 %v7650, %v7649
    %v7786 = vpack.c.b16 %v7652, %v7651
    %v7787 = vpack.c.b16 %v7654, %v7653
    %v7788 = vpack.c.b16 %v7656, %v7655
    %v7789 = vpack.c.b16 %v7658, %v7657
    %v7790 = vpack.c.b16 %v7660, %v7659
    %v7791 = vpack.c.b16 %v7662, %v7661
    %v7792 = vpack.c.b16 %v7664, %v7663
    %v7793 = vpack.c.b16 %v7666, %v7665
    %v7794 = vpack.c.b16 %v7668, %v7667
    %v7795 = vpack.c.b16 %v7670, %v7669
    %v7796 = vpack.c.b16 %v7672, %v7671
    %v7797 = vpack.c.b16 %v7674, %v7673
    %v7798 = vpack.c.b16 %v7676, %v7675
    %v7799 = vpack.c.b16 %v7678, %v7677
    %v7800 = vpack.c.b16 %v7680, %v7679
    %v7801 = vpack.c.b16 %v7682, %v7681
    %v7802 = vpack.c.b16 %v7684, %v7683
    %v7803 = vpack.c.b16 %v7686, %v7685
    %v7804 = vpack.c.b16 %v7688, %v7687
    %v7805 = vpack.c.b16 %v7690, %v7689
    %v7806 = vpack.c.b16 %v7692, %v7691
    %v7807 = vpack.c.b16 %v7694, %v7693
    %v7808 = vpack.c.b16 %v7696, %v7695
    %v7809 = vpack.c.b16 %v7698, %v7697
    %v7810 = vpack.c.b16 %v7700, %v7699
    %v7811 = vpack.c.b16 %v7702, %v7701
    %v7812 = vpack.c.b16 %v7704, %v7703
    %v7813 = vpack.c.b16 %v7706, %v7705
    %v7814 = vpack.c.b16 %v7708, %v7707
    %v7815 = vpack.c.b16 %v7710, %v7709
    %v7816 = vpack.c.b16 %v7712, %v7711
    %v7817 = vpack.c.b16 %v7714, %v7713
    %v7818 = vpack.c.b16 %v7716, %v7715
    %v7819 = vpack.c.b16 %v7718, %v7717
    %v7820 = vpack.c.b16 %v7720, %v7719
    %v7821 = vpack.c.b16 %v7722, %v7721
    %v7822 = vpack.c.b16 %v7724, %v7723
    %v7823 = vpack.c.b16 %v7726, %v7725
    %v7824 = vpack.c.b16 %v7728, %v7727
    %v7825 = vpack.c.b16 %v7730, %v7729
    %v7826 = vpack.c.b16 %v7732, %v7731
    %v7827 = vpack.c.b16 %v7734, %v7733
    %v7828 = vpack.c.b16 %v7736, %v7735
    %v7829 = vpack.c.b16 %v7738, %v7737
    %v7830 = vpack.c.b16 %v7740, %v7739
    %v7831 = vpack.c.b16 %v7742, %v7741
    %v7832 = vpack.c.b16 %v7744, %v7743
    %v7833 = vpack.c.b16 %v7746, %v7745
    %v7834 = vpack.c.b16 %v7748, %v7747
    %v7835 = vpack.c.b16 %v7750, %v7749
    %v7836 = vpack.c.b16 %v7752, %v7751
    %v7837 = vpack.c.b16 %v7754, %v7753
    %v7838 = vpack.c.b16 %v7756, %v7755
    %v7839 = vpack.c.b16 %v7758, %v7757
    %v7840 = vpack.c.b16 %v7760, %v7759
    %v7841 = vpack.c.b16 %v7762, %v7761
    %v7842 = vpack.c.b16 %v7764, %v7763
    %v7843 = vpack.c.b16 %v7766, %v7765
    %v7844 = vpack.c.b16 %v7768, %v7767
    %v7845 = vpack.c.b16 %v7770, %v7769
    %v7846 = vpack.c.b16 %v7772, %v7771
    %v7847 = vpack.c.b16 %v7774, %v7773
    %v7848 = vpack.c.b16 %v7776, %v7775
    %7921 = vmatpush.bf16.msra.mxu0 %v7784
    %7922 = vmatpush.bf16.msra.mxu0 %v7783
    %7923 = vmatpush.bf16.msra.mxu0 %v7782
    %7924 = vmatpush.bf16.msra.mxu0 %v7781
    %7925 = vmatpush.bf16.msra.mxu0 %v7780
    %7926 = vmatpush.bf16.msra.mxu0 %v7779
    %7927 = vmatpush.bf16.msra.mxu0 %v7778
    %7928 = vmatpush.bf16.msra.mxu0 %v7777
    %7929 = vmatmul.bf16.gmra.mxu0 %v317
    %v7930 = vpop.f32.mrf.mxu0
    %v7931 = vadd.f32 0.0, %v7930
    %v7932 = vpop.f32.mrf.mxu0
    %v7933 = vadd.f32 0.0, %v7932
    %7934 = vmatmul.bf16.gmra.mxu0 %v6651
    %v7935 = vpop.f32.mrf.mxu0
    %v7936 = vadd.f32 0.0, %v7935
    %v7937 = vpop.f32.mrf.mxu0
    %v7938 = vadd.f32 0.0, %v7937
    %7939 = vmatmul.bf16.gmra.mxu0 %v6652
    %v7940 = vpop.f32.mrf.mxu0
    %v7941 = vadd.f32 0.0, %v7940
    %v7942 = vpop.f32.mrf.mxu0
    %v7943 = vadd.f32 0.0, %v7942
    %7944 = vmatmul.bf16.gmra.mxu0 %v6653
    %v7945 = vpop.f32.mrf.mxu0
    %v7946 = vadd.f32 0.0, %v7945
    %v7947 = vpop.f32.mrf.mxu0
    %v7948 = vadd.f32 0.0, %v7947
    %7949 = vmatmul.bf16.gmra.mxu0 %v6654
    %v7950 = vpop.f32.mrf.mxu0
    %v7951 = vadd.f32 0.0, %v7950
    %v7952 = vpop.f32.mrf.mxu0
    %v7953 = vadd.f32 0.0, %v7952
    %7954 = vmatmul.bf16.gmra.mxu0 %v6655
    %v7955 = vpop.f32.mrf.mxu0
    %v7956 = vadd.f32 0.0, %v7955
    %v7957 = vpop.f32.mrf.mxu0
    %v7958 = vadd.f32 0.0, %v7957
    %7959 = vmatmul.bf16.gmra.mxu0 %v6656
    %v7960 = vpop.f32.mrf.mxu0
    %v7961 = vadd.f32 0.0, %v7960
    %v7962 = vpop.f32.mrf.mxu0
    %v7963 = vadd.f32 0.0, %v7962
    %7964 = vmatmul.bf16.gmra.mxu0 %v6657
    %v7965 = vpop.f32.mrf.mxu0
    %v7966 = vadd.f32 0.0, %v7965
    %v7967 = vpop.f32.mrf.mxu0
    %v7968 = vadd.f32 0.0, %v7967
    %7969 = vmatmul.bf16.gmra.mxu0 %v6658
    %v7970 = vpop.f32.mrf.mxu0
    %v7971 = vadd.f32 0.0, %v7970
    %v7972 = vpop.f32.mrf.mxu0
    %v7973 = vadd.f32 0.0, %v7972
    %7974 = vmatmul.bf16.gmra.mxu0 %v6659
    %v7975 = vpop.f32.mrf.mxu0
    %v7976 = vadd.f32 0.0, %v7975
    %v7977 = vpop.f32.mrf.mxu0
    %v7978 = vadd.f32 0.0, %v7977
    %7979 = vmatmul.bf16.gmra.mxu0 %v6660
    %v7980 = vpop.f32.mrf.mxu0
    %v7981 = vadd.f32 0.0, %v7980
    %v7982 = vpop.f32.mrf.mxu0
    %v7983 = vadd.f32 0.0, %v7982
    %7984 = vmatmul.bf16.gmra.mxu0 %v6661
    %v7985 = vpop.f32.mrf.mxu0
    %v7986 = vadd.f32 0.0, %v7985
    %v7987 = vpop.f32.mrf.mxu0
    %v7988 = vadd.f32 0.0, %v7987
    %7989 = vmatmul.bf16.gmra.mxu0 %v6662
    %v7990 = vpop.f32.mrf.mxu0
    %v7991 = vadd.f32 0.0, %v7990
    %v7992 = vpop.f32.mrf.mxu0
    %v7993 = vadd.f32 0.0, %v7992
    %7994 = vmatmul.bf16.gmra.mxu0 %v6663
    %v7995 = vpop.f32.mrf.mxu0
    %v7996 = vadd.f32 0.0, %v7995
    %v7997 = vpop.f32.mrf.mxu0
    %v7998 = vadd.f32 0.0, %v7997
    %7999 = vmatmul.bf16.gmra.mxu0 %v6664
    %v8000 = vpop.f32.mrf.mxu0
    %v8001 = vadd.f32 0.0, %v8000
    %v8002 = vpop.f32.mrf.mxu0
    %v8003 = vadd.f32 0.0, %v8002
    %8004 = vmatmul.bf16.gmra.mxu0 %v6665
    %v8005 = vpop.f32.mrf.mxu0
    %v8006 = vadd.f32 0.0, %v8005
    %v8007 = vpop.f32.mrf.mxu0
    %v8008 = vadd.f32 0.0, %v8007
    %8009 = vmatmul.bf16.gmra.mxu0 %v317
    %v8010 = vpop.f32.mrf.mxu0
    %v8011 = vadd.f32 0.0, %v8010
    %v8012 = vpop.f32.mrf.mxu0
    %v8013 = vadd.f32 0.0, %v8012
    %8014 = vmatmul.bf16.gmra.mxu0 %v6667
    %v8015 = vpop.f32.mrf.mxu0
    %v8016 = vadd.f32 0.0, %v8015
    %v8017 = vpop.f32.mrf.mxu0
    %v8018 = vadd.f32 0.0, %v8017
    %8019 = vmatmul.bf16.gmra.mxu0 %v6668
    %v8020 = vpop.f32.mrf.mxu0
    %v8021 = vadd.f32 0.0, %v8020
    %v8022 = vpop.f32.mrf.mxu0
    %v8023 = vadd.f32 0.0, %v8022
    %8024 = vmatmul.bf16.gmra.mxu0 %v6669
    %v8025 = vpop.f32.mrf.mxu0
    %v8026 = vadd.f32 0.0, %v8025
    %v8027 = vpop.f32.mrf.mxu0
    %v8028 = vadd.f32 0.0, %v8027
    %8029 = vmatmul.bf16.gmra.mxu0 %v6670
    %v8030 = vpop.f32.mrf.mxu0
    %v8031 = vadd.f32 0.0, %v8030
    %v8032 = vpop.f32.mrf.mxu0
    %v8033 = vadd.f32 0.0, %v8032
    %8034 = vmatmul.bf16.gmra.mxu0 %v6671
    %v8035 = vpop.f32.mrf.mxu0
    %v8036 = vadd.f32 0.0, %v8035
    %v8037 = vpop.f32.mrf.mxu0
    %v8038 = vadd.f32 0.0, %v8037
    %8039 = vmatmul.bf16.gmra.mxu0 %v6672
    %v8040 = vpop.f32.mrf.mxu0
    %v8041 = vadd.f32 0.0, %v8040
    %v8042 = vpop.f32.mrf.mxu0
    %v8043 = vadd.f32 0.0, %v8042
    %8044 = vmatmul.bf16.gmra.mxu0 %v6673
    %v8045 = vpop.f32.mrf.mxu0
    %v8046 = vadd.f32 0.0, %v8045
    %v8047 = vpop.f32.mrf.mxu0
    %v8048 = vadd.f32 0.0, %v8047
    %8049 = vmatmul.bf16.gmra.mxu0 %v6674
    %v8050 = vpop.f32.mrf.mxu0
    %v8051 = vadd.f32 0.0, %v8050
    %v8052 = vpop.f32.mrf.mxu0
    %v8053 = vadd.f32 0.0, %v8052
    %8054 = vmatmul.bf16.gmra.mxu0 %v6675
    %v8055 = vpop.f32.mrf.mxu0
    %v8056 = vadd.f32 0.0, %v8055
    %v8057 = vpop.f32.mrf.mxu0
    %v8058 = vadd.f32 0.0, %v8057
    %8059 = vmatmul.bf16.gmra.mxu0 %v6676
    %v8060 = vpop.f32.mrf.mxu0
    %v8061 = vadd.f32 0.0, %v8060
    %v8062 = vpop.f32.mrf.mxu0
    %v8063 = vadd.f32 0.0, %v8062
    %8064 = vmatmul.bf16.gmra.mxu0 %v6677
    %v8065 = vpop.f32.mrf.mxu0
    %v8066 = vadd.f32 0.0, %v8065
    %v8067 = vpop.f32.mrf.mxu0
    %v8068 = vadd.f32 0.0, %v8067
    %8069 = vmatmul.bf16.gmra.mxu0 %v6678
    %v8070 = vpop.f32.mrf.mxu0
    %v8071 = vadd.f32 0.0, %v8070
    %v8072 = vpop.f32.mrf.mxu0
    %v8073 = vadd.f32 0.0, %v8072
    %8074 = vmatmul.bf16.gmra.mxu0 %v6679
    %v8075 = vpop.f32.mrf.mxu0
    %v8076 = vadd.f32 0.0, %v8075
    %v8077 = vpop.f32.mrf.mxu0
    %v8078 = vadd.f32 0.0, %v8077
    %8079 = vmatmul.bf16.gmra.mxu0 %v6680
    %v8080 = vpop.f32.mrf.mxu0
    %v8081 = vadd.f32 0.0, %v8080
    %v8082 = vpop.f32.mrf.mxu0
    %v8083 = vadd.f32 0.0, %v8082
    %8084 = vmatmul.bf16.gmra.mxu0 %v6681
    %v8085 = vpop.f32.mrf.mxu0
    %v8086 = vadd.f32 0.0, %v8085
    %v8087 = vpop.f32.mrf.mxu0
    %v8088 = vadd.f32 0.0, %v8087
    %8089 = vdwg.mxu0
    %8090 = vmatpush.bf16.msra.mxu0 %v7792
    %8091 = vmatpush.bf16.msra.mxu0 %v7791
    %8092 = vmatpush.bf16.msra.mxu0 %v7790
    %8093 = vmatpush.bf16.msra.mxu0 %v7789
    %8094 = vmatpush.bf16.msra.mxu0 %v7788
    %8095 = vmatpush.bf16.msra.mxu0 %v7787
    %8096 = vmatpush.bf16.msra.mxu0 %v7786
    %8097 = vmatpush.bf16.msra.mxu0 %v7785
    %8098 = vmatmul.bf16.gmra.mxu0 %v6728
    %v8099 = vpop.f32.mrf.mxu0
    %v8100 = vadd.f32 %v7931, %v8099
    %v8101 = vpop.f32.mrf.mxu0
    %v8102 = vadd.f32 %v7933, %v8101
    %8103 = vmatmul.bf16.gmra.mxu0 %v6740
    %v8104 = vpop.f32.mrf.mxu0
    %v8105 = vadd.f32 %v7936, %v8104
    %v8106 = vpop.f32.mrf.mxu0
    %v8107 = vadd.f32 %v7938, %v8106
    %8108 = vmatmul.bf16.gmra.mxu0 %v6752
    %v8109 = vpop.f32.mrf.mxu0
    %v8110 = vadd.f32 %v7941, %v8109
    %v8111 = vpop.f32.mrf.mxu0
    %v8112 = vadd.f32 %v7943, %v8111
    %8113 = vmatmul.bf16.gmra.mxu0 %v6764
    %v8114 = vpop.f32.mrf.mxu0
    %v8115 = vadd.f32 %v7946, %v8114
    %v8116 = vpop.f32.mrf.mxu0
    %v8117 = vadd.f32 %v7948, %v8116
    %8118 = vmatmul.bf16.gmra.mxu0 %v6776
    %v8119 = vpop.f32.mrf.mxu0
    %v8120 = vadd.f32 %v7951, %v8119
    %v8121 = vpop.f32.mrf.mxu0
    %v8122 = vadd.f32 %v7953, %v8121
    %8123 = vmatmul.bf16.gmra.mxu0 %v6788
    %v8124 = vpop.f32.mrf.mxu0
    %v8125 = vadd.f32 %v7956, %v8124
    %v8126 = vpop.f32.mrf.mxu0
    %v8127 = vadd.f32 %v7958, %v8126
    %8128 = vmatmul.bf16.gmra.mxu0 %v6800
    %v8129 = vpop.f32.mrf.mxu0
    %v8130 = vadd.f32 %v7961, %v8129
    %v8131 = vpop.f32.mrf.mxu0
    %v8132 = vadd.f32 %v7963, %v8131
    %8133 = vmatmul.bf16.gmra.mxu0 %v6812
    %v8134 = vpop.f32.mrf.mxu0
    %v8135 = vadd.f32 %v7966, %v8134
    %v8136 = vpop.f32.mrf.mxu0
    %v8137 = vadd.f32 %v7968, %v8136
    %8138 = vmatmul.bf16.gmra.mxu0 %v6824
    %v8139 = vpop.f32.mrf.mxu0
    %v8140 = vadd.f32 %v7971, %v8139
    %v8141 = vpop.f32.mrf.mxu0
    %v8142 = vadd.f32 %v7973, %v8141
    %8143 = vmatmul.bf16.gmra.mxu0 %v6836
    %v8144 = vpop.f32.mrf.mxu0
    %v8145 = vadd.f32 %v7976, %v8144
    %v8146 = vpop.f32.mrf.mxu0
    %v8147 = vadd.f32 %v7978, %v8146
    %8148 = vmatmul.bf16.gmra.mxu0 %v6848
    %v8149 = vpop.f32.mrf.mxu0
    %v8150 = vadd.f32 %v7981, %v8149
    %v8151 = vpop.f32.mrf.mxu0
    %v8152 = vadd.f32 %v7983, %v8151
    %8153 = vmatmul.bf16.gmra.mxu0 %v6860
    %v8154 = vpop.f32.mrf.mxu0
    %v8155 = vadd.f32 %v7986, %v8154
    %v8156 = vpop.f32.mrf.mxu0
    %v8157 = vadd.f32 %v7988, %v8156
    %8158 = vmatmul.bf16.gmra.mxu0 %v6872
    %v8159 = vpop.f32.mrf.mxu0
    %v8160 = vadd.f32 %v7991, %v8159
    %v8161 = vpop.f32.mrf.mxu0
    %v8162 = vadd.f32 %v7993, %v8161
    %8163 = vmatmul.bf16.gmra.mxu0 %v6884
    %v8164 = vpop.f32.mrf.mxu0
    %v8165 = vadd.f32 %v7996, %v8164
    %v8166 = vpop.f32.mrf.mxu0
    %v8167 = vadd.f32 %v7998, %v8166
    %8168 = vmatmul.bf16.gmra.mxu0 %v6896
    %v8169 = vpop.f32.mrf.mxu0
    %v8170 = vadd.f32 %v8001, %v8169
    %v8171 = vpop.f32.mrf.mxu0
    %v8172 = vadd.f32 %v8003, %v8171
    %8173 = vmatmul.bf16.gmra.mxu0 %v6908
    %v8174 = vpop.f32.mrf.mxu0
    %v8175 = vadd.f32 %v8006, %v8174
    %v8176 = vpop.f32.mrf.mxu0
    %v8177 = vadd.f32 %v8008, %v8176
    %8178 = vmatmul.bf16.gmra.mxu0 %v6728
    %v8179 = vpop.f32.mrf.mxu0
    %v8180 = vadd.f32 %v8011, %v8179
    %v8181 = vpop.f32.mrf.mxu0
    %v8182 = vadd.f32 %v8013, %v8181
    %8183 = vmatmul.bf16.gmra.mxu0 %v6920
    %v8184 = vpop.f32.mrf.mxu0
    %v8185 = vadd.f32 %v8016, %v8184
    %v8186 = vpop.f32.mrf.mxu0
    %v8187 = vadd.f32 %v8018, %v8186
    %8188 = vmatmul.bf16.gmra.mxu0 %v6932
    %v8189 = vpop.f32.mrf.mxu0
    %v8190 = vadd.f32 %v8021, %v8189
    %v8191 = vpop.f32.mrf.mxu0
    %v8192 = vadd.f32 %v8023, %v8191
    %8193 = vmatmul.bf16.gmra.mxu0 %v6944
    %v8194 = vpop.f32.mrf.mxu0
    %v8195 = vadd.f32 %v8026, %v8194
    %v8196 = vpop.f32.mrf.mxu0
    %v8197 = vadd.f32 %v8028, %v8196
    %8198 = vmatmul.bf16.gmra.mxu0 %v6956
    %v8199 = vpop.f32.mrf.mxu0
    %v8200 = vadd.f32 %v8031, %v8199
    %v8201 = vpop.f32.mrf.mxu0
    %v8202 = vadd.f32 %v8033, %v8201
    %8203 = vmatmul.bf16.gmra.mxu0 %v6968
    %v8204 = vpop.f32.mrf.mxu0
    %v8205 = vadd.f32 %v8036, %v8204
    %v8206 = vpop.f32.mrf.mxu0
    %v8207 = vadd.f32 %v8038, %v8206
    %8208 = vmatmul.bf16.gmra.mxu0 %v6980
    %v8209 = vpop.f32.mrf.mxu0
    %v8210 = vadd.f32 %v8041, %v8209
    %v8211 = vpop.f32.mrf.mxu0
    %v8212 = vadd.f32 %v8043, %v8211
    %8213 = vmatmul.bf16.gmra.mxu0 %v6992
    %v8214 = vpop.f32.mrf.mxu0
    %v8215 = vadd.f32 %v8046, %v8214
    %v8216 = vpop.f32.mrf.mxu0
    %v8217 = vadd.f32 %v8048, %v8216
    %8218 = vmatmul.bf16.gmra.mxu0 %v7004
    %v8219 = vpop.f32.mrf.mxu0
    %v8220 = vadd.f32 %v8051, %v8219
    %v8221 = vpop.f32.mrf.mxu0
    %v8222 = vadd.f32 %v8053, %v8221
    %8223 = vmatmul.bf16.gmra.mxu0 %v7016
    %v8224 = vpop.f32.mrf.mxu0
    %v8225 = vadd.f32 %v8056, %v8224
    %v8226 = vpop.f32.mrf.mxu0
    %v8227 = vadd.f32 %v8058, %v8226
    %8228 = vmatmul.bf16.gmra.mxu0 %v7028
    %v8229 = vpop.f32.mrf.mxu0
    %v8230 = vadd.f32 %v8061, %v8229
    %v8231 = vpop.f32.mrf.mxu0
    %v8232 = vadd.f32 %v8063, %v8231
    %8233 = vmatmul.bf16.gmra.mxu0 %v7040
    %v8234 = vpop.f32.mrf.mxu0
    %v8235 = vadd.f32 %v8066, %v8234
    %v8236 = vpop.f32.mrf.mxu0
    %v8237 = vadd.f32 %v8068, %v8236
    %8238 = vmatmul.bf16.gmra.mxu0 %v7052
    %v8239 = vpop.f32.mrf.mxu0
    %v8240 = vadd.f32 %v8071, %v8239
    %v8241 = vpop.f32.mrf.mxu0
    %v8242 = vadd.f32 %v8073, %v8241
    %8243 = vmatmul.bf16.gmra.mxu0 %v7064
    %v8244 = vpop.f32.mrf.mxu0
    %v8245 = vadd.f32 %v8076, %v8244
    %v8246 = vpop.f32.mrf.mxu0
    %v8247 = vadd.f32 %v8078, %v8246
    %8248 = vmatmul.bf16.gmra.mxu0 %v7076
    %v8249 = vpop.f32.mrf.mxu0
    %v8250 = vadd.f32 %v8081, %v8249
    %v8251 = vpop.f32.mrf.mxu0
    %v8252 = vadd.f32 %v8083, %v8251
    %8253 = vmatmul.bf16.gmra.mxu0 %v7088
    %v8254 = vpop.f32.mrf.mxu0
    %v8255 = vadd.f32 %v8086, %v8254
    %v8256 = vpop.f32.mrf.mxu0
    %v8257 = vadd.f32 %v8088, %v8256
    %8258 = vdwg.mxu0
    %8259 = vmatpush.bf16.msra.mxu0 %v7800
    %8260 = vmatpush.bf16.msra.mxu0 %v7799
    %8261 = vmatpush.bf16.msra.mxu0 %v7798
    %8262 = vmatpush.bf16.msra.mxu0 %v7797
    %8263 = vmatpush.bf16.msra.mxu0 %v7796
    %8264 = vmatpush.bf16.msra.mxu0 %v7795
    %8265 = vmatpush.bf16.msra.mxu0 %v7794
    %8266 = vmatpush.bf16.msra.mxu0 %v7793
    %8267 = vmatmul.bf16.gmra.mxu0 %v7185
    %v8268 = vpop.f32.mrf.mxu0
    %v8269 = vadd.f32 %v8100, %v8268
    %v8270 = vpop.f32.mrf.mxu0
    %v8271 = vadd.f32 %v8102, %v8270
    %8272 = vmatmul.bf16.gmra.mxu0 %v7188
    %v8273 = vpop.f32.mrf.mxu0
    %v8274 = vadd.f32 %v8105, %v8273
    %v8275 = vpop.f32.mrf.mxu0
    %v8276 = vadd.f32 %v8107, %v8275
    %8277 = vmatmul.bf16.gmra.mxu0 %v7191
    %v8278 = vpop.f32.mrf.mxu0
    %v8279 = vadd.f32 %v8110, %v8278
    %v8280 = vpop.f32.mrf.mxu0
    %v8281 = vadd.f32 %v8112, %v8280
    %8282 = vmatmul.bf16.gmra.mxu0 %v7194
    %v8283 = vpop.f32.mrf.mxu0
    %v8284 = vadd.f32 %v8115, %v8283
    %v8285 = vpop.f32.mrf.mxu0
    %v8286 = vadd.f32 %v8117, %v8285
    %8287 = vmatmul.bf16.gmra.mxu0 %v7197
    %v8288 = vpop.f32.mrf.mxu0
    %v8289 = vadd.f32 %v8120, %v8288
    %v8290 = vpop.f32.mrf.mxu0
    %v8291 = vadd.f32 %v8122, %v8290
    %8292 = vmatmul.bf16.gmra.mxu0 %v7200
    %v8293 = vpop.f32.mrf.mxu0
    %v8294 = vadd.f32 %v8125, %v8293
    %v8295 = vpop.f32.mrf.mxu0
    %v8296 = vadd.f32 %v8127, %v8295
    %8297 = vmatmul.bf16.gmra.mxu0 %v7203
    %v8298 = vpop.f32.mrf.mxu0
    %v8299 = vadd.f32 %v8130, %v8298
    %v8300 = vpop.f32.mrf.mxu0
    %v8301 = vadd.f32 %v8132, %v8300
    %8302 = vmatmul.bf16.gmra.mxu0 %v7206
    %v8303 = vpop.f32.mrf.mxu0
    %v8304 = vadd.f32 %v8135, %v8303
    %v8305 = vpop.f32.mrf.mxu0
    %v8306 = vadd.f32 %v8137, %v8305
    %8307 = vmatmul.bf16.gmra.mxu0 %v7209
    %v8308 = vpop.f32.mrf.mxu0
    %v8309 = vadd.f32 %v8140, %v8308
    %v8310 = vpop.f32.mrf.mxu0
    %v8311 = vadd.f32 %v8142, %v8310
    %8312 = vmatmul.bf16.gmra.mxu0 %v7212
    %v8313 = vpop.f32.mrf.mxu0
    %v8314 = vadd.f32 %v8145, %v8313
    %v8315 = vpop.f32.mrf.mxu0
    %v8316 = vadd.f32 %v8147, %v8315
    %8317 = vmatmul.bf16.gmra.mxu0 %v7215
    %v8318 = vpop.f32.mrf.mxu0
    %v8319 = vadd.f32 %v8150, %v8318
    %v8320 = vpop.f32.mrf.mxu0
    %v8321 = vadd.f32 %v8152, %v8320
    %8322 = vmatmul.bf16.gmra.mxu0 %v7218
    %v8323 = vpop.f32.mrf.mxu0
    %v8324 = vadd.f32 %v8155, %v8323
    %v8325 = vpop.f32.mrf.mxu0
    %v8326 = vadd.f32 %v8157, %v8325
    %8327 = vmatmul.bf16.gmra.mxu0 %v7221
    %v8328 = vpop.f32.mrf.mxu0
    %v8329 = vadd.f32 %v8160, %v8328
    %v8330 = vpop.f32.mrf.mxu0
    %v8331 = vadd.f32 %v8162, %v8330
    %8332 = vmatmul.bf16.gmra.mxu0 %v7224
    %v8333 = vpop.f32.mrf.mxu0
    %v8334 = vadd.f32 %v8165, %v8333
    %v8335 = vpop.f32.mrf.mxu0
    %v8336 = vadd.f32 %v8167, %v8335
    %8337 = vmatmul.bf16.gmra.mxu0 %v7227
    %v8338 = vpop.f32.mrf.mxu0
    %v8339 = vadd.f32 %v8170, %v8338
    %v8340 = vpop.f32.mrf.mxu0
    %v8341 = vadd.f32 %v8172, %v8340
    %8342 = vmatmul.bf16.gmra.mxu0 %v7230
    %v8343 = vpop.f32.mrf.mxu0
    %v8344 = vadd.f32 %v8175, %v8343
    %v8345 = vpop.f32.mrf.mxu0
    %v8346 = vadd.f32 %v8177, %v8345
    %8347 = vmatmul.bf16.gmra.mxu0 %v7185
    %v8348 = vpop.f32.mrf.mxu0
    %v8349 = vadd.f32 %v8180, %v8348
    %v8350 = vpop.f32.mrf.mxu0
    %v8351 = vadd.f32 %v8182, %v8350
    %8352 = vmatmul.bf16.gmra.mxu0 %v7233
    %v8353 = vpop.f32.mrf.mxu0
    %v8354 = vadd.f32 %v8185, %v8353
    %v8355 = vpop.f32.mrf.mxu0
    %v8356 = vadd.f32 %v8187, %v8355
    %8357 = vmatmul.bf16.gmra.mxu0 %v7236
    %v8358 = vpop.f32.mrf.mxu0
    %v8359 = vadd.f32 %v8190, %v8358
    %v8360 = vpop.f32.mrf.mxu0
    %v8361 = vadd.f32 %v8192, %v8360
    %8362 = vmatmul.bf16.gmra.mxu0 %v7239
    %v8363 = vpop.f32.mrf.mxu0
    %v8364 = vadd.f32 %v8195, %v8363
    %v8365 = vpop.f32.mrf.mxu0
    %v8366 = vadd.f32 %v8197, %v8365
    %8367 = vmatmul.bf16.gmra.mxu0 %v7242
    %v8368 = vpop.f32.mrf.mxu0
    %v8369 = vadd.f32 %v8200, %v8368
    %v8370 = vpop.f32.mrf.mxu0
    %v8371 = vadd.f32 %v8202, %v8370
    %8372 = vmatmul.bf16.gmra.mxu0 %v7245
    %v8373 = vpop.f32.mrf.mxu0
    %v8374 = vadd.f32 %v8205, %v8373
    %v8375 = vpop.f32.mrf.mxu0
    %v8376 = vadd.f32 %v8207, %v8375
    %8377 = vmatmul.bf16.gmra.mxu0 %v7248
    %v8378 = vpop.f32.mrf.mxu0
    %v8379 = vadd.f32 %v8210, %v8378
    %v8380 = vpop.f32.mrf.mxu0
    %v8381 = vadd.f32 %v8212, %v8380
    %8382 = vmatmul.bf16.gmra.mxu0 %v7251
    %v8383 = vpop.f32.mrf.mxu0
    %v8384 = vadd.f32 %v8215, %v8383
    %v8385 = vpop.f32.mrf.mxu0
    %v8386 = vadd.f32 %v8217, %v8385
    %8387 = vmatmul.bf16.gmra.mxu0 %v7254
    %v8388 = vpop.f32.mrf.mxu0
    %v8389 = vadd.f32 %v8220, %v8388
    %v8390 = vpop.f32.mrf.mxu0
    %v8391 = vadd.f32 %v8222, %v8390
    %8392 = vmatmul.bf16.gmra.mxu0 %v7257
    %v8393 = vpop.f32.mrf.mxu0
    %v8394 = vadd.f32 %v8225, %v8393
    %v8395 = vpop.f32.mrf.mxu0
    %v8396 = vadd.f32 %v8227, %v8395
    %8397 = vmatmul.bf16.gmra.mxu0 %v7260
    %v8398 = vpop.f32.mrf.mxu0
    %v8399 = vadd.f32 %v8230, %v8398
    %v8400 = vpop.f32.mrf.mxu0
    %v8401 = vadd.f32 %v8232, %v8400
    %8402 = vmatmul.bf16.gmra.mxu0 %v7263
    %v8403 = vpop.f32.mrf.mxu0
    %v8404 = vadd.f32 %v8235, %v8403
    %v8405 = vpop.f32.mrf.mxu0
    %v8406 = vadd.f32 %v8237, %v8405
    %8407 = vmatmul.bf16.gmra.mxu0 %v7266
    %v8408 = vpop.f32.mrf.mxu0
    %v8409 = vadd.f32 %v8240, %v8408
    %v8410 = vpop.f32.mrf.mxu0
    %v8411 = vadd.f32 %v8242, %v8410
    %8412 = vmatmul.bf16.gmra.mxu0 %v7269
    %v8413 = vpop.f32.mrf.mxu0
    %v8414 = vadd.f32 %v8245, %v8413
    %v8415 = vpop.f32.mrf.mxu0
    %v8416 = vadd.f32 %v8247, %v8415
    %8417 = vmatmul.bf16.gmra.mxu0 %v7272
    %v8418 = vpop.f32.mrf.mxu0
    %v8419 = vadd.f32 %v8250, %v8418
    %v8420 = vpop.f32.mrf.mxu0
    %v8421 = vadd.f32 %v8252, %v8420
    %8422 = vmatmul.bf16.gmra.mxu0 %v7275
    %v8423 = vpop.f32.mrf.mxu0
    %v8424 = vadd.f32 %v8255, %v8423
    %v8425 = vpop.f32.mrf.mxu0
    %v8426 = vadd.f32 %v8257, %v8425
    %8427 = vdwg.mxu0
    %8428 = vmatpush.bf16.msra.mxu0 %v7808
    %8429 = vmatpush.bf16.msra.mxu0 %v7807
    %8430 = vmatpush.bf16.msra.mxu0 %v7806
    %8431 = vmatpush.bf16.msra.mxu0 %v7805
    %8432 = vmatpush.bf16.msra.mxu0 %v7804
    %8433 = vmatpush.bf16.msra.mxu0 %v7803
    %8434 = vmatpush.bf16.msra.mxu0 %v7802
    %8435 = vmatpush.bf16.msra.mxu0 %v7801
    %8436 = vmatmul.bf16.gmra.mxu0 %v6651
    %v8437 = vpop.f32.mrf.mxu0
    %v8438 = vadd.f32 %v8269, %v8437
    %v8439 = vpop.f32.mrf.mxu0
    %v8440 = vadd.f32 %v8271, %v8439
    %8441 = vmatmul.bf16.gmra.mxu0 %v6652
    %v8442 = vpop.f32.mrf.mxu0
    %v8443 = vadd.f32 %v8274, %v8442
    %v8444 = vpop.f32.mrf.mxu0
    %v8445 = vadd.f32 %v8276, %v8444
    %8446 = vmatmul.bf16.gmra.mxu0 %v6653
    %v8447 = vpop.f32.mrf.mxu0
    %v8448 = vadd.f32 %v8279, %v8447
    %v8449 = vpop.f32.mrf.mxu0
    %v8450 = vadd.f32 %v8281, %v8449
    %8451 = vmatmul.bf16.gmra.mxu0 %v6654
    %v8452 = vpop.f32.mrf.mxu0
    %v8453 = vadd.f32 %v8284, %v8452
    %v8454 = vpop.f32.mrf.mxu0
    %v8455 = vadd.f32 %v8286, %v8454
    %8456 = vmatmul.bf16.gmra.mxu0 %v6655
    %v8457 = vpop.f32.mrf.mxu0
    %v8458 = vadd.f32 %v8289, %v8457
    %v8459 = vpop.f32.mrf.mxu0
    %v8460 = vadd.f32 %v8291, %v8459
    %8461 = vmatmul.bf16.gmra.mxu0 %v6656
    %v8462 = vpop.f32.mrf.mxu0
    %v8463 = vadd.f32 %v8294, %v8462
    %v8464 = vpop.f32.mrf.mxu0
    %v8465 = vadd.f32 %v8296, %v8464
    %8466 = vmatmul.bf16.gmra.mxu0 %v6657
    %v8467 = vpop.f32.mrf.mxu0
    %v8468 = vadd.f32 %v8299, %v8467
    %v8469 = vpop.f32.mrf.mxu0
    %v8470 = vadd.f32 %v8301, %v8469
    %8471 = vmatmul.bf16.gmra.mxu0 %v6658
    %v8472 = vpop.f32.mrf.mxu0
    %v8473 = vadd.f32 %v8304, %v8472
    %v8474 = vpop.f32.mrf.mxu0
    %v8475 = vadd.f32 %v8306, %v8474
    %8476 = vmatmul.bf16.gmra.mxu0 %v6659
    %v8477 = vpop.f32.mrf.mxu0
    %v8478 = vadd.f32 %v8309, %v8477
    %v8479 = vpop.f32.mrf.mxu0
    %v8480 = vadd.f32 %v8311, %v8479
    %8481 = vmatmul.bf16.gmra.mxu0 %v6660
    %v8482 = vpop.f32.mrf.mxu0
    %v8483 = vadd.f32 %v8314, %v8482
    %v8484 = vpop.f32.mrf.mxu0
    %v8485 = vadd.f32 %v8316, %v8484
    %8486 = vmatmul.bf16.gmra.mxu0 %v6661
    %v8487 = vpop.f32.mrf.mxu0
    %v8488 = vadd.f32 %v8319, %v8487
    %v8489 = vpop.f32.mrf.mxu0
    %v8490 = vadd.f32 %v8321, %v8489
    %8491 = vmatmul.bf16.gmra.mxu0 %v6662
    %v8492 = vpop.f32.mrf.mxu0
    %v8493 = vadd.f32 %v8324, %v8492
    %v8494 = vpop.f32.mrf.mxu0
    %v8495 = vadd.f32 %v8326, %v8494
    %8496 = vmatmul.bf16.gmra.mxu0 %v6663
    %v8497 = vpop.f32.mrf.mxu0
    %v8498 = vadd.f32 %v8329, %v8497
    %v8499 = vpop.f32.mrf.mxu0
    %v8500 = vadd.f32 %v8331, %v8499
    %8501 = vmatmul.bf16.gmra.mxu0 %v6664
    %v8502 = vpop.f32.mrf.mxu0
    %v8503 = vadd.f32 %v8334, %v8502
    %v8504 = vpop.f32.mrf.mxu0
    %v8505 = vadd.f32 %v8336, %v8504
    %8506 = vmatmul.bf16.gmra.mxu0 %v6665
    %v8507 = vpop.f32.mrf.mxu0
    %v8508 = vadd.f32 %v8339, %v8507
    %v8509 = vpop.f32.mrf.mxu0
    %v8510 = vadd.f32 %v8341, %v8509
    %8511 = vmatmul.bf16.gmra.mxu0 %v6666
    %v8512 = vpop.f32.mrf.mxu0
    %v8513 = vadd.f32 %v8344, %v8512
    %v8514 = vpop.f32.mrf.mxu0
    %v8515 = vadd.f32 %v8346, %v8514
    %8516 = vmatmul.bf16.gmra.mxu0 %v6667
    %v8517 = vpop.f32.mrf.mxu0
    %v8518 = vadd.f32 %v8349, %v8517
    %v8519 = vpop.f32.mrf.mxu0
    %v8520 = vadd.f32 %v8351, %v8519
    %8521 = vmatmul.bf16.gmra.mxu0 %v6668
    %v8522 = vpop.f32.mrf.mxu0
    %v8523 = vadd.f32 %v8354, %v8522
    %v8524 = vpop.f32.mrf.mxu0
    %v8525 = vadd.f32 %v8356, %v8524
    %8526 = vmatmul.bf16.gmra.mxu0 %v6669
    %v8527 = vpop.f32.mrf.mxu0
    %v8528 = vadd.f32 %v8359, %v8527
    %v8529 = vpop.f32.mrf.mxu0
    %v8530 = vadd.f32 %v8361, %v8529
    %8531 = vmatmul.bf16.gmra.mxu0 %v6670
    %v8532 = vpop.f32.mrf.mxu0
    %v8533 = vadd.f32 %v8364, %v8532
    %v8534 = vpop.f32.mrf.mxu0
    %v8535 = vadd.f32 %v8366, %v8534
    %8536 = vmatmul.bf16.gmra.mxu0 %v6671
    %v8537 = vpop.f32.mrf.mxu0
    %v8538 = vadd.f32 %v8369, %v8537
    %v8539 = vpop.f32.mrf.mxu0
    %v8540 = vadd.f32 %v8371, %v8539
    %8541 = vmatmul.bf16.gmra.mxu0 %v6672
    %v8542 = vpop.f32.mrf.mxu0
    %v8543 = vadd.f32 %v8374, %v8542
    %v8544 = vpop.f32.mrf.mxu0
    %v8545 = vadd.f32 %v8376, %v8544
    %8546 = vmatmul.bf16.gmra.mxu0 %v6673
    %v8547 = vpop.f32.mrf.mxu0
    %v8548 = vadd.f32 %v8379, %v8547
    %v8549 = vpop.f32.mrf.mxu0
    %v8550 = vadd.f32 %v8381, %v8549
    %8551 = vmatmul.bf16.gmra.mxu0 %v6674
    %v8552 = vpop.f32.mrf.mxu0
    %v8553 = vadd.f32 %v8384, %v8552
    %v8554 = vpop.f32.mrf.mxu0
    %v8555 = vadd.f32 %v8386, %v8554
    %8556 = vmatmul.bf16.gmra.mxu0 %v6675
    %v8557 = vpop.f32.mrf.mxu0
    %v8558 = vadd.f32 %v8389, %v8557
    %v8559 = vpop.f32.mrf.mxu0
    %v8560 = vadd.f32 %v8391, %v8559
    %8561 = vmatmul.bf16.gmra.mxu0 %v6676
    %v8562 = vpop.f32.mrf.mxu0
    %v8563 = vadd.f32 %v8394, %v8562
    %v8564 = vpop.f32.mrf.mxu0
    %v8565 = vadd.f32 %v8396, %v8564
    %8566 = vmatmul.bf16.gmra.mxu0 %v6677
    %v8567 = vpop.f32.mrf.mxu0
    %v8568 = vadd.f32 %v8399, %v8567
    %v8569 = vpop.f32.mrf.mxu0
    %v8570 = vadd.f32 %v8401, %v8569
    %8571 = vmatmul.bf16.gmra.mxu0 %v6678
    %v8572 = vpop.f32.mrf.mxu0
    %v8573 = vadd.f32 %v8404, %v8572
    %v8574 = vpop.f32.mrf.mxu0
    %v8575 = vadd.f32 %v8406, %v8574
    %8576 = vmatmul.bf16.gmra.mxu0 %v6679
    %v8577 = vpop.f32.mrf.mxu0
    %v8578 = vadd.f32 %v8409, %v8577
    %v8579 = vpop.f32.mrf.mxu0
    %v8580 = vadd.f32 %v8411, %v8579
    %8581 = vmatmul.bf16.gmra.mxu0 %v6680
    %v8582 = vpop.f32.mrf.mxu0
    %v8583 = vadd.f32 %v8414, %v8582
    %v8584 = vpop.f32.mrf.mxu0
    %v8585 = vadd.f32 %v8416, %v8584
    %8586 = vmatmul.bf16.gmra.mxu0 %v6681
    %v8587 = vpop.f32.mrf.mxu0
    %v8588 = vadd.f32 %v8419, %v8587
    %v8589 = vpop.f32.mrf.mxu0
    %v8590 = vadd.f32 %v8421, %v8589
    %8591 = vmatmul.bf16.gmra.mxu0 %v6682
    %v8592 = vpop.f32.mrf.mxu0
    %v8593 = vadd.f32 %v8424, %v8592
    %v8594 = vpop.f32.mrf.mxu0
    %v8595 = vadd.f32 %v8426, %v8594
    %8596 = vdwg.mxu0
    %8597 = vmatpush.bf16.msra.mxu0 %v7816
    %8598 = vmatpush.bf16.msra.mxu0 %v7815
    %8599 = vmatpush.bf16.msra.mxu0 %v7814
    %8600 = vmatpush.bf16.msra.mxu0 %v7813
    %8601 = vmatpush.bf16.msra.mxu0 %v7812
    %8602 = vmatpush.bf16.msra.mxu0 %v7811
    %8603 = vmatpush.bf16.msra.mxu0 %v7810
    %8604 = vmatpush.bf16.msra.mxu0 %v7809
    %8605 = vmatmul.bf16.gmra.mxu0 %v6740
    %v8606 = vpop.f32.mrf.mxu0
    %v8607 = vadd.f32 %v8438, %v8606
    %v8608 = vpop.f32.mrf.mxu0
    %v8609 = vadd.f32 %v8440, %v8608
    %8610 = vmatmul.bf16.gmra.mxu0 %v6752
    %v8611 = vpop.f32.mrf.mxu0
    %v8612 = vadd.f32 %v8443, %v8611
    %v8613 = vpop.f32.mrf.mxu0
    %v8614 = vadd.f32 %v8445, %v8613
    %8615 = vmatmul.bf16.gmra.mxu0 %v6764
    %v8616 = vpop.f32.mrf.mxu0
    %v8617 = vadd.f32 %v8448, %v8616
    %v8618 = vpop.f32.mrf.mxu0
    %v8619 = vadd.f32 %v8450, %v8618
    %8620 = vmatmul.bf16.gmra.mxu0 %v6776
    %v8621 = vpop.f32.mrf.mxu0
    %v8622 = vadd.f32 %v8453, %v8621
    %v8623 = vpop.f32.mrf.mxu0
    %v8624 = vadd.f32 %v8455, %v8623
    %8625 = vmatmul.bf16.gmra.mxu0 %v6788
    %v8626 = vpop.f32.mrf.mxu0
    %v8627 = vadd.f32 %v8458, %v8626
    %v8628 = vpop.f32.mrf.mxu0
    %v8629 = vadd.f32 %v8460, %v8628
    %8630 = vmatmul.bf16.gmra.mxu0 %v6800
    %v8631 = vpop.f32.mrf.mxu0
    %v8632 = vadd.f32 %v8463, %v8631
    %v8633 = vpop.f32.mrf.mxu0
    %v8634 = vadd.f32 %v8465, %v8633
    %8635 = vmatmul.bf16.gmra.mxu0 %v6812
    %v8636 = vpop.f32.mrf.mxu0
    %v8637 = vadd.f32 %v8468, %v8636
    %v8638 = vpop.f32.mrf.mxu0
    %v8639 = vadd.f32 %v8470, %v8638
    %8640 = vmatmul.bf16.gmra.mxu0 %v6824
    %v8641 = vpop.f32.mrf.mxu0
    %v8642 = vadd.f32 %v8473, %v8641
    %v8643 = vpop.f32.mrf.mxu0
    %v8644 = vadd.f32 %v8475, %v8643
    %8645 = vmatmul.bf16.gmra.mxu0 %v6836
    %v8646 = vpop.f32.mrf.mxu0
    %v8647 = vadd.f32 %v8478, %v8646
    %v8648 = vpop.f32.mrf.mxu0
    %v8649 = vadd.f32 %v8480, %v8648
    %8650 = vmatmul.bf16.gmra.mxu0 %v6848
    %v8651 = vpop.f32.mrf.mxu0
    %v8652 = vadd.f32 %v8483, %v8651
    %v8653 = vpop.f32.mrf.mxu0
    %v8654 = vadd.f32 %v8485, %v8653
    %8655 = vmatmul.bf16.gmra.mxu0 %v6860
    %v8656 = vpop.f32.mrf.mxu0
    %v8657 = vadd.f32 %v8488, %v8656
    %v8658 = vpop.f32.mrf.mxu0
    %v8659 = vadd.f32 %v8490, %v8658
    %8660 = vmatmul.bf16.gmra.mxu0 %v6872
    %v8661 = vpop.f32.mrf.mxu0
    %v8662 = vadd.f32 %v8493, %v8661
    %v8663 = vpop.f32.mrf.mxu0
    %v8664 = vadd.f32 %v8495, %v8663
    %8665 = vmatmul.bf16.gmra.mxu0 %v6884
    %v8666 = vpop.f32.mrf.mxu0
    %v8667 = vadd.f32 %v8498, %v8666
    %v8668 = vpop.f32.mrf.mxu0
    %v8669 = vadd.f32 %v8500, %v8668
    %8670 = vmatmul.bf16.gmra.mxu0 %v6896
    %v8671 = vpop.f32.mrf.mxu0
    %v8672 = vadd.f32 %v8503, %v8671
    %v8673 = vpop.f32.mrf.mxu0
    %v8674 = vadd.f32 %v8505, %v8673
    %8675 = vmatmul.bf16.gmra.mxu0 %v6908
    %v8676 = vpop.f32.mrf.mxu0
    %v8677 = vadd.f32 %v8508, %v8676
    %v8678 = vpop.f32.mrf.mxu0
    %v8679 = vadd.f32 %v8510, %v8678
    %8680 = vmatmul.bf16.gmra.mxu0 %v7318
    %v8681 = vpop.f32.mrf.mxu0
    %v8682 = vadd.f32 %v8513, %v8681
    %v8683 = vpop.f32.mrf.mxu0
    %v8684 = vadd.f32 %v8515, %v8683
    %8685 = vmatmul.bf16.gmra.mxu0 %v6920
    %v8686 = vpop.f32.mrf.mxu0
    %v8687 = vadd.f32 %v8518, %v8686
    %v8688 = vpop.f32.mrf.mxu0
    %v8689 = vadd.f32 %v8520, %v8688
    %8690 = vmatmul.bf16.gmra.mxu0 %v6932
    %v8691 = vpop.f32.mrf.mxu0
    %v8692 = vadd.f32 %v8523, %v8691
    %v8693 = vpop.f32.mrf.mxu0
    %v8694 = vadd.f32 %v8525, %v8693
    %8695 = vmatmul.bf16.gmra.mxu0 %v6944
    %v8696 = vpop.f32.mrf.mxu0
    %v8697 = vadd.f32 %v8528, %v8696
    %v8698 = vpop.f32.mrf.mxu0
    %v8699 = vadd.f32 %v8530, %v8698
    %8700 = vmatmul.bf16.gmra.mxu0 %v6956
    %v8701 = vpop.f32.mrf.mxu0
    %v8702 = vadd.f32 %v8533, %v8701
    %v8703 = vpop.f32.mrf.mxu0
    %v8704 = vadd.f32 %v8535, %v8703
    %8705 = vmatmul.bf16.gmra.mxu0 %v6968
    %v8706 = vpop.f32.mrf.mxu0
    %v8707 = vadd.f32 %v8538, %v8706
    %v8708 = vpop.f32.mrf.mxu0
    %v8709 = vadd.f32 %v8540, %v8708
    %8710 = vmatmul.bf16.gmra.mxu0 %v6980
    %v8711 = vpop.f32.mrf.mxu0
    %v8712 = vadd.f32 %v8543, %v8711
    %v8713 = vpop.f32.mrf.mxu0
    %v8714 = vadd.f32 %v8545, %v8713
    %8715 = vmatmul.bf16.gmra.mxu0 %v6992
    %v8716 = vpop.f32.mrf.mxu0
    %v8717 = vadd.f32 %v8548, %v8716
    %v8718 = vpop.f32.mrf.mxu0
    %v8719 = vadd.f32 %v8550, %v8718
    %8720 = vmatmul.bf16.gmra.mxu0 %v7004
    %v8721 = vpop.f32.mrf.mxu0
    %v8722 = vadd.f32 %v8553, %v8721
    %v8723 = vpop.f32.mrf.mxu0
    %v8724 = vadd.f32 %v8555, %v8723
    %8725 = vmatmul.bf16.gmra.mxu0 %v7016
    %v8726 = vpop.f32.mrf.mxu0
    %v8727 = vadd.f32 %v8558, %v8726
    %v8728 = vpop.f32.mrf.mxu0
    %v8729 = vadd.f32 %v8560, %v8728
    %8730 = vmatmul.bf16.gmra.mxu0 %v7028
    %v8731 = vpop.f32.mrf.mxu0
    %v8732 = vadd.f32 %v8563, %v8731
    %v8733 = vpop.f32.mrf.mxu0
    %v8734 = vadd.f32 %v8565, %v8733
    %8735 = vmatmul.bf16.gmra.mxu0 %v7040
    %v8736 = vpop.f32.mrf.mxu0
    %v8737 = vadd.f32 %v8568, %v8736
    %v8738 = vpop.f32.mrf.mxu0
    %v8739 = vadd.f32 %v8570, %v8738
    %8740 = vmatmul.bf16.gmra.mxu0 %v7052
    %v8741 = vpop.f32.mrf.mxu0
    %v8742 = vadd.f32 %v8573, %v8741
    %v8743 = vpop.f32.mrf.mxu0
    %v8744 = vadd.f32 %v8575, %v8743
    %8745 = vmatmul.bf16.gmra.mxu0 %v7064
    %v8746 = vpop.f32.mrf.mxu0
    %v8747 = vadd.f32 %v8578, %v8746
    %v8748 = vpop.f32.mrf.mxu0
    %v8749 = vadd.f32 %v8580, %v8748
    %8750 = vmatmul.bf16.gmra.mxu0 %v7076
    %v8751 = vpop.f32.mrf.mxu0
    %v8752 = vadd.f32 %v8583, %v8751
    %v8753 = vpop.f32.mrf.mxu0
    %v8754 = vadd.f32 %v8585, %v8753
    %8755 = vmatmul.bf16.gmra.mxu0 %v7088
    %v8756 = vpop.f32.mrf.mxu0
    %v8757 = vadd.f32 %v8588, %v8756
    %v8758 = vpop.f32.mrf.mxu0
    %v8759 = vadd.f32 %v8590, %v8758
    %8760 = vmatmul.bf16.gmra.mxu0 %v7330
    %v8761 = vpop.f32.mrf.mxu0
    %v8762 = vadd.f32 %v8593, %v8761
    %v8763 = vpop.f32.mrf.mxu0
    %v8764 = vadd.f32 %v8595, %v8763
    %8765 = vdwg.mxu0
    %8766 = vmatpush.bf16.msra.mxu0 %v7824
    %8767 = vmatpush.bf16.msra.mxu0 %v7823
    %8768 = vmatpush.bf16.msra.mxu0 %v7822
    %8769 = vmatpush.bf16.msra.mxu0 %v7821
    %8770 = vmatpush.bf16.msra.mxu0 %v7820
    %8771 = vmatpush.bf16.msra.mxu0 %v7819
    %8772 = vmatpush.bf16.msra.mxu0 %v7818
    %8773 = vmatpush.bf16.msra.mxu0 %v7817
    %8774 = vmatmul.bf16.gmra.mxu0 %v7188
    %v8775 = vpop.f32.mrf.mxu0
    %v8776 = vadd.f32 %v8607, %v8775
    %v8777 = vpop.f32.mrf.mxu0
    %v8778 = vadd.f32 %v8609, %v8777
    %8779 = vmatmul.bf16.gmra.mxu0 %v7191
    %v8780 = vpop.f32.mrf.mxu0
    %v8781 = vadd.f32 %v8612, %v8780
    %v8782 = vpop.f32.mrf.mxu0
    %v8783 = vadd.f32 %v8614, %v8782
    %8784 = vmatmul.bf16.gmra.mxu0 %v7194
    %v8785 = vpop.f32.mrf.mxu0
    %v8786 = vadd.f32 %v8617, %v8785
    %v8787 = vpop.f32.mrf.mxu0
    %v8788 = vadd.f32 %v8619, %v8787
    %8789 = vmatmul.bf16.gmra.mxu0 %v7197
    %v8790 = vpop.f32.mrf.mxu0
    %v8791 = vadd.f32 %v8622, %v8790
    %v8792 = vpop.f32.mrf.mxu0
    %v8793 = vadd.f32 %v8624, %v8792
    %8794 = vmatmul.bf16.gmra.mxu0 %v7200
    %v8795 = vpop.f32.mrf.mxu0
    %v8796 = vadd.f32 %v8627, %v8795
    %v8797 = vpop.f32.mrf.mxu0
    %v8798 = vadd.f32 %v8629, %v8797
    %8799 = vmatmul.bf16.gmra.mxu0 %v7203
    %v8800 = vpop.f32.mrf.mxu0
    %v8801 = vadd.f32 %v8632, %v8800
    %v8802 = vpop.f32.mrf.mxu0
    %v8803 = vadd.f32 %v8634, %v8802
    %8804 = vmatmul.bf16.gmra.mxu0 %v7206
    %v8805 = vpop.f32.mrf.mxu0
    %v8806 = vadd.f32 %v8637, %v8805
    %v8807 = vpop.f32.mrf.mxu0
    %v8808 = vadd.f32 %v8639, %v8807
    %8809 = vmatmul.bf16.gmra.mxu0 %v7209
    %v8810 = vpop.f32.mrf.mxu0
    %v8811 = vadd.f32 %v8642, %v8810
    %v8812 = vpop.f32.mrf.mxu0
    %v8813 = vadd.f32 %v8644, %v8812
    %8814 = vmatmul.bf16.gmra.mxu0 %v7212
    %v8815 = vpop.f32.mrf.mxu0
    %v8816 = vadd.f32 %v8647, %v8815
    %v8817 = vpop.f32.mrf.mxu0
    %v8818 = vadd.f32 %v8649, %v8817
    %8819 = vmatmul.bf16.gmra.mxu0 %v7215
    %v8820 = vpop.f32.mrf.mxu0
    %v8821 = vadd.f32 %v8652, %v8820
    %v8822 = vpop.f32.mrf.mxu0
    %v8823 = vadd.f32 %v8654, %v8822
    %8824 = vmatmul.bf16.gmra.mxu0 %v7218
    %v8825 = vpop.f32.mrf.mxu0
    %v8826 = vadd.f32 %v8657, %v8825
    %v8827 = vpop.f32.mrf.mxu0
    %v8828 = vadd.f32 %v8659, %v8827
    %8829 = vmatmul.bf16.gmra.mxu0 %v7221
    %v8830 = vpop.f32.mrf.mxu0
    %v8831 = vadd.f32 %v8662, %v8830
    %v8832 = vpop.f32.mrf.mxu0
    %v8833 = vadd.f32 %v8664, %v8832
    %8834 = vmatmul.bf16.gmra.mxu0 %v7224
    %v8835 = vpop.f32.mrf.mxu0
    %v8836 = vadd.f32 %v8667, %v8835
    %v8837 = vpop.f32.mrf.mxu0
    %v8838 = vadd.f32 %v8669, %v8837
    %8839 = vmatmul.bf16.gmra.mxu0 %v7227
    %v8840 = vpop.f32.mrf.mxu0
    %v8841 = vadd.f32 %v8672, %v8840
    %v8842 = vpop.f32.mrf.mxu0
    %v8843 = vadd.f32 %v8674, %v8842
    %8844 = vmatmul.bf16.gmra.mxu0 %v7230
    %v8845 = vpop.f32.mrf.mxu0
    %v8846 = vadd.f32 %v8677, %v8845
    %v8847 = vpop.f32.mrf.mxu0
    %v8848 = vadd.f32 %v8679, %v8847
    %8849 = vmatmul.bf16.gmra.mxu0 %v7339
    %v8850 = vpop.f32.mrf.mxu0
    %v8851 = vadd.f32 %v8682, %v8850
    %v8852 = vpop.f32.mrf.mxu0
    %v8853 = vadd.f32 %v8684, %v8852
    %8854 = vmatmul.bf16.gmra.mxu0 %v7233
    %v8855 = vpop.f32.mrf.mxu0
    %v8856 = vadd.f32 %v8687, %v8855
    %v8857 = vpop.f32.mrf.mxu0
    %v8858 = vadd.f32 %v8689, %v8857
    %8859 = vmatmul.bf16.gmra.mxu0 %v7236
    %v8860 = vpop.f32.mrf.mxu0
    %v8861 = vadd.f32 %v8692, %v8860
    %v8862 = vpop.f32.mrf.mxu0
    %v8863 = vadd.f32 %v8694, %v8862
    %8864 = vmatmul.bf16.gmra.mxu0 %v7239
    %v8865 = vpop.f32.mrf.mxu0
    %v8866 = vadd.f32 %v8697, %v8865
    %v8867 = vpop.f32.mrf.mxu0
    %v8868 = vadd.f32 %v8699, %v8867
    %8869 = vmatmul.bf16.gmra.mxu0 %v7242
    %v8870 = vpop.f32.mrf.mxu0
    %v8871 = vadd.f32 %v8702, %v8870
    %v8872 = vpop.f32.mrf.mxu0
    %v8873 = vadd.f32 %v8704, %v8872
    %8874 = vmatmul.bf16.gmra.mxu0 %v7245
    %v8875 = vpop.f32.mrf.mxu0
    %v8876 = vadd.f32 %v8707, %v8875
    %v8877 = vpop.f32.mrf.mxu0
    %v8878 = vadd.f32 %v8709, %v8877
    %8879 = vmatmul.bf16.gmra.mxu0 %v7248
    %v8880 = vpop.f32.mrf.mxu0
    %v8881 = vadd.f32 %v8712, %v8880
    %v8882 = vpop.f32.mrf.mxu0
    %v8883 = vadd.f32 %v8714, %v8882
    %8884 = vmatmul.bf16.gmra.mxu0 %v7251
    %v8885 = vpop.f32.mrf.mxu0
    %v8886 = vadd.f32 %v8717, %v8885
    %v8887 = vpop.f32.mrf.mxu0
    %v8888 = vadd.f32 %v8719, %v8887
    %8889 = vmatmul.bf16.gmra.mxu0 %v7254
    %v8890 = vpop.f32.mrf.mxu0
    %v8891 = vadd.f32 %v8722, %v8890
    %v8892 = vpop.f32.mrf.mxu0
    %v8893 = vadd.f32 %v8724, %v8892
    %8894 = vmatmul.bf16.gmra.mxu0 %v7257
    %v8895 = vpop.f32.mrf.mxu0
    %v8896 = vadd.f32 %v8727, %v8895
    %v8897 = vpop.f32.mrf.mxu0
    %v8898 = vadd.f32 %v8729, %v8897
    %8899 = vmatmul.bf16.gmra.mxu0 %v7260
    %v8900 = vpop.f32.mrf.mxu0
    %v8901 = vadd.f32 %v8732, %v8900
    %v8902 = vpop.f32.mrf.mxu0
    %v8903 = vadd.f32 %v8734, %v8902
    %8904 = vmatmul.bf16.gmra.mxu0 %v7263
    %v8905 = vpop.f32.mrf.mxu0
    %v8906 = vadd.f32 %v8737, %v8905
    %v8907 = vpop.f32.mrf.mxu0
    %v8908 = vadd.f32 %v8739, %v8907
    %8909 = vmatmul.bf16.gmra.mxu0 %v7266
    %v8910 = vpop.f32.mrf.mxu0
    %v8911 = vadd.f32 %v8742, %v8910
    %v8912 = vpop.f32.mrf.mxu0
    %v8913 = vadd.f32 %v8744, %v8912
    %8914 = vmatmul.bf16.gmra.mxu0 %v7269
    %v8915 = vpop.f32.mrf.mxu0
    %v8916 = vadd.f32 %v8747, %v8915
    %v8917 = vpop.f32.mrf.mxu0
    %v8918 = vadd.f32 %v8749, %v8917
    %8919 = vmatmul.bf16.gmra.mxu0 %v7272
    %v8920 = vpop.f32.mrf.mxu0
    %v8921 = vadd.f32 %v8752, %v8920
    %v8922 = vpop.f32.mrf.mxu0
    %v8923 = vadd.f32 %v8754, %v8922
    %8924 = vmatmul.bf16.gmra.mxu0 %v7275
    %v8925 = vpop.f32.mrf.mxu0
    %v8926 = vadd.f32 %v8757, %v8925
    %v8927 = vpop.f32.mrf.mxu0
    %v8928 = vadd.f32 %v8759, %v8927
    %8929 = vmatmul.bf16.gmra.mxu0 %v7342
    %v8930 = vpop.f32.mrf.mxu0
    %v8931 = vadd.f32 %v8762, %v8930
    %v8932 = vpop.f32.mrf.mxu0
    %v8933 = vadd.f32 %v8764, %v8932
    %8934 = vdwg.mxu0
    %8935 = vmatpush.bf16.msra.mxu0 %v7832
    %8936 = vmatpush.bf16.msra.mxu0 %v7831
    %8937 = vmatpush.bf16.msra.mxu0 %v7830
    %8938 = vmatpush.bf16.msra.mxu0 %v7829
    %8939 = vmatpush.bf16.msra.mxu0 %v7828
    %8940 = vmatpush.bf16.msra.mxu0 %v7827
    %8941 = vmatpush.bf16.msra.mxu0 %v7826
    %8942 = vmatpush.bf16.msra.mxu0 %v7825
    %8943 = vmatmul.bf16.gmra.mxu0 %v6652
    %v8944 = vpop.f32.mrf.mxu0
    %v8945 = vadd.f32 %v8776, %v8944
    %v8946 = vpop.f32.mrf.mxu0
    %v8947 = vadd.f32 %v8778, %v8946
    %8948 = vmatmul.bf16.gmra.mxu0 %v6653
    %v8949 = vpop.f32.mrf.mxu0
    %v8950 = vadd.f32 %v8781, %v8949
    %v8951 = vpop.f32.mrf.mxu0
    %v8952 = vadd.f32 %v8783, %v8951
    %8953 = vmatmul.bf16.gmra.mxu0 %v6654
    %v8954 = vpop.f32.mrf.mxu0
    %v8955 = vadd.f32 %v8786, %v8954
    %v8956 = vpop.f32.mrf.mxu0
    %v8957 = vadd.f32 %v8788, %v8956
    %8958 = vmatmul.bf16.gmra.mxu0 %v6655
    %v8959 = vpop.f32.mrf.mxu0
    %v8960 = vadd.f32 %v8791, %v8959
    %v8961 = vpop.f32.mrf.mxu0
    %v8962 = vadd.f32 %v8793, %v8961
    %8963 = vmatmul.bf16.gmra.mxu0 %v6656
    %v8964 = vpop.f32.mrf.mxu0
    %v8965 = vadd.f32 %v8796, %v8964
    %v8966 = vpop.f32.mrf.mxu0
    %v8967 = vadd.f32 %v8798, %v8966
    %8968 = vmatmul.bf16.gmra.mxu0 %v6657
    %v8969 = vpop.f32.mrf.mxu0
    %v8970 = vadd.f32 %v8801, %v8969
    %v8971 = vpop.f32.mrf.mxu0
    %v8972 = vadd.f32 %v8803, %v8971
    %8973 = vmatmul.bf16.gmra.mxu0 %v6658
    %v8974 = vpop.f32.mrf.mxu0
    %v8975 = vadd.f32 %v8806, %v8974
    %v8976 = vpop.f32.mrf.mxu0
    %v8977 = vadd.f32 %v8808, %v8976
    %8978 = vmatmul.bf16.gmra.mxu0 %v6659
    %v8979 = vpop.f32.mrf.mxu0
    %v8980 = vadd.f32 %v8811, %v8979
    %v8981 = vpop.f32.mrf.mxu0
    %v8982 = vadd.f32 %v8813, %v8981
    %8983 = vmatmul.bf16.gmra.mxu0 %v6660
    %v8984 = vpop.f32.mrf.mxu0
    %v8985 = vadd.f32 %v8816, %v8984
    %v8986 = vpop.f32.mrf.mxu0
    %v8987 = vadd.f32 %v8818, %v8986
    %8988 = vmatmul.bf16.gmra.mxu0 %v6661
    %v8989 = vpop.f32.mrf.mxu0
    %v8990 = vadd.f32 %v8821, %v8989
    %v8991 = vpop.f32.mrf.mxu0
    %v8992 = vadd.f32 %v8823, %v8991
    %8993 = vmatmul.bf16.gmra.mxu0 %v6662
    %v8994 = vpop.f32.mrf.mxu0
    %v8995 = vadd.f32 %v8826, %v8994
    %v8996 = vpop.f32.mrf.mxu0
    %v8997 = vadd.f32 %v8828, %v8996
    %8998 = vmatmul.bf16.gmra.mxu0 %v6663
    %v8999 = vpop.f32.mrf.mxu0
    %v9000 = vadd.f32 %v8831, %v8999
    %v9001 = vpop.f32.mrf.mxu0
    %v9002 = vadd.f32 %v8833, %v9001
    %9003 = vmatmul.bf16.gmra.mxu0 %v6664
    %v9004 = vpop.f32.mrf.mxu0
    %v9005 = vadd.f32 %v8836, %v9004
    %v9006 = vpop.f32.mrf.mxu0
    %v9007 = vadd.f32 %v8838, %v9006
    %9008 = vmatmul.bf16.gmra.mxu0 %v6665
    %v9009 = vpop.f32.mrf.mxu0
    %v9010 = vadd.f32 %v8841, %v9009
    %v9011 = vpop.f32.mrf.mxu0
    %v9012 = vadd.f32 %v8843, %v9011
    %9013 = vmatmul.bf16.gmra.mxu0 %v6666
    %v9014 = vpop.f32.mrf.mxu0
    %v9015 = vadd.f32 %v8846, %v9014
    %v9016 = vpop.f32.mrf.mxu0
    %v9017 = vadd.f32 %v8848, %v9016
    %9018 = vmatmul.bf16.gmra.mxu0 %v317
    %v9019 = vpop.f32.mrf.mxu0
    %v9020 = vadd.f32 %v8851, %v9019
    %v9021 = vpop.f32.mrf.mxu0
    %v9022 = vadd.f32 %v8853, %v9021
    %9023 = vmatmul.bf16.gmra.mxu0 %v6668
    %v9024 = vpop.f32.mrf.mxu0
    %v9025 = vadd.f32 %v8856, %v9024
    %v9026 = vpop.f32.mrf.mxu0
    %v9027 = vadd.f32 %v8858, %v9026
    %9028 = vmatmul.bf16.gmra.mxu0 %v6669
    %v9029 = vpop.f32.mrf.mxu0
    %v9030 = vadd.f32 %v8861, %v9029
    %v9031 = vpop.f32.mrf.mxu0
    %v9032 = vadd.f32 %v8863, %v9031
    %9033 = vmatmul.bf16.gmra.mxu0 %v6670
    %v9034 = vpop.f32.mrf.mxu0
    %v9035 = vadd.f32 %v8866, %v9034
    %v9036 = vpop.f32.mrf.mxu0
    %v9037 = vadd.f32 %v8868, %v9036
    %9038 = vmatmul.bf16.gmra.mxu0 %v6671
    %v9039 = vpop.f32.mrf.mxu0
    %v9040 = vadd.f32 %v8871, %v9039
    %v9041 = vpop.f32.mrf.mxu0
    %v9042 = vadd.f32 %v8873, %v9041
    %9043 = vmatmul.bf16.gmra.mxu0 %v6672
    %v9044 = vpop.f32.mrf.mxu0
    %v9045 = vadd.f32 %v8876, %v9044
    %v9046 = vpop.f32.mrf.mxu0
    %v9047 = vadd.f32 %v8878, %v9046
    %9048 = vmatmul.bf16.gmra.mxu0 %v6673
    %v9049 = vpop.f32.mrf.mxu0
    %v9050 = vadd.f32 %v8881, %v9049
    %v9051 = vpop.f32.mrf.mxu0
    %v9052 = vadd.f32 %v8883, %v9051
    %9053 = vmatmul.bf16.gmra.mxu0 %v6674
    %v9054 = vpop.f32.mrf.mxu0
    %v9055 = vadd.f32 %v8886, %v9054
    %v9056 = vpop.f32.mrf.mxu0
    %v9057 = vadd.f32 %v8888, %v9056
    %9058 = vmatmul.bf16.gmra.mxu0 %v6675
    %v9059 = vpop.f32.mrf.mxu0
    %v9060 = vadd.f32 %v8891, %v9059
    %v9061 = vpop.f32.mrf.mxu0
    %v9062 = vadd.f32 %v8893, %v9061
    %9063 = vmatmul.bf16.gmra.mxu0 %v6676
    %v9064 = vpop.f32.mrf.mxu0
    %v9065 = vadd.f32 %v8896, %v9064
    %v9066 = vpop.f32.mrf.mxu0
    %v9067 = vadd.f32 %v8898, %v9066
    %9068 = vmatmul.bf16.gmra.mxu0 %v6677
    %v9069 = vpop.f32.mrf.mxu0
    %v9070 = vadd.f32 %v8901, %v9069
    %v9071 = vpop.f32.mrf.mxu0
    %v9072 = vadd.f32 %v8903, %v9071
    %9073 = vmatmul.bf16.gmra.mxu0 %v6678
    %v9074 = vpop.f32.mrf.mxu0
    %v9075 = vadd.f32 %v8906, %v9074
    %v9076 = vpop.f32.mrf.mxu0
    %v9077 = vadd.f32 %v8908, %v9076
    %9078 = vmatmul.bf16.gmra.mxu0 %v6679
    %v9079 = vpop.f32.mrf.mxu0
    %v9080 = vadd.f32 %v8911, %v9079
    %v9081 = vpop.f32.mrf.mxu0
    %v9082 = vadd.f32 %v8913, %v9081
    %9083 = vmatmul.bf16.gmra.mxu0 %v6680
    %v9084 = vpop.f32.mrf.mxu0
    %v9085 = vadd.f32 %v8916, %v9084
    %v9086 = vpop.f32.mrf.mxu0
    %v9087 = vadd.f32 %v8918, %v9086
    %9088 = vmatmul.bf16.gmra.mxu0 %v6681
    %v9089 = vpop.f32.mrf.mxu0
    %v9090 = vadd.f32 %v8921, %v9089
    %v9091 = vpop.f32.mrf.mxu0
    %v9092 = vadd.f32 %v8923, %v9091
    %9093 = vmatmul.bf16.gmra.mxu0 %v6682
    %v9094 = vpop.f32.mrf.mxu0
    %v9095 = vadd.f32 %v8926, %v9094
    %v9096 = vpop.f32.mrf.mxu0
    %v9097 = vadd.f32 %v8928, %v9096
    %9098 = vmatmul.bf16.gmra.mxu0 %v317
    %v9099 = vpop.f32.mrf.mxu0
    %v9100 = vadd.f32 %v8931, %v9099
    %v9101 = vpop.f32.mrf.mxu0
    %v9102 = vadd.f32 %v8933, %v9101
    %9103 = vdwg.mxu0
    %9104 = vmatpush.bf16.msra.mxu0 %v7840
    %9105 = vmatpush.bf16.msra.mxu0 %v7839
    %9106 = vmatpush.bf16.msra.mxu0 %v7838
    %9107 = vmatpush.bf16.msra.mxu0 %v7837
    %9108 = vmatpush.bf16.msra.mxu0 %v7836
    %9109 = vmatpush.bf16.msra.mxu0 %v7835
    %9110 = vmatpush.bf16.msra.mxu0 %v7834
    %9111 = vmatpush.bf16.msra.mxu0 %v7833
    %9112 = vmatmul.bf16.gmra.mxu0 %v6752
    %v9113 = vpop.f32.mrf.mxu0
    %v9114 = vadd.f32 %v8945, %v9113
    %v9115 = vpop.f32.mrf.mxu0
    %v9116 = vadd.f32 %v8947, %v9115
    %9117 = vmatmul.bf16.gmra.mxu0 %v6764
    %v9118 = vpop.f32.mrf.mxu0
    %v9119 = vadd.f32 %v8950, %v9118
    %v9120 = vpop.f32.mrf.mxu0
    %v9121 = vadd.f32 %v8952, %v9120
    %9122 = vmatmul.bf16.gmra.mxu0 %v6776
    %v9123 = vpop.f32.mrf.mxu0
    %v9124 = vadd.f32 %v8955, %v9123
    %v9125 = vpop.f32.mrf.mxu0
    %v9126 = vadd.f32 %v8957, %v9125
    %9127 = vmatmul.bf16.gmra.mxu0 %v6788
    %v9128 = vpop.f32.mrf.mxu0
    %v9129 = vadd.f32 %v8960, %v9128
    %v9130 = vpop.f32.mrf.mxu0
    %v9131 = vadd.f32 %v8962, %v9130
    %9132 = vmatmul.bf16.gmra.mxu0 %v6800
    %v9133 = vpop.f32.mrf.mxu0
    %v9134 = vadd.f32 %v8965, %v9133
    %v9135 = vpop.f32.mrf.mxu0
    %v9136 = vadd.f32 %v8967, %v9135
    %9137 = vmatmul.bf16.gmra.mxu0 %v6812
    %v9138 = vpop.f32.mrf.mxu0
    %v9139 = vadd.f32 %v8970, %v9138
    %v9140 = vpop.f32.mrf.mxu0
    %v9141 = vadd.f32 %v8972, %v9140
    %9142 = vmatmul.bf16.gmra.mxu0 %v6824
    %v9143 = vpop.f32.mrf.mxu0
    %v9144 = vadd.f32 %v8975, %v9143
    %v9145 = vpop.f32.mrf.mxu0
    %v9146 = vadd.f32 %v8977, %v9145
    %9147 = vmatmul.bf16.gmra.mxu0 %v6836
    %v9148 = vpop.f32.mrf.mxu0
    %v9149 = vadd.f32 %v8980, %v9148
    %v9150 = vpop.f32.mrf.mxu0
    %v9151 = vadd.f32 %v8982, %v9150
    %9152 = vmatmul.bf16.gmra.mxu0 %v6848
    %v9153 = vpop.f32.mrf.mxu0
    %v9154 = vadd.f32 %v8985, %v9153
    %v9155 = vpop.f32.mrf.mxu0
    %v9156 = vadd.f32 %v8987, %v9155
    %9157 = vmatmul.bf16.gmra.mxu0 %v6860
    %v9158 = vpop.f32.mrf.mxu0
    %v9159 = vadd.f32 %v8990, %v9158
    %v9160 = vpop.f32.mrf.mxu0
    %v9161 = vadd.f32 %v8992, %v9160
    %9162 = vmatmul.bf16.gmra.mxu0 %v6872
    %v9163 = vpop.f32.mrf.mxu0
    %v9164 = vadd.f32 %v8995, %v9163
    %v9165 = vpop.f32.mrf.mxu0
    %v9166 = vadd.f32 %v8997, %v9165
    %9167 = vmatmul.bf16.gmra.mxu0 %v6884
    %v9168 = vpop.f32.mrf.mxu0
    %v9169 = vadd.f32 %v9000, %v9168
    %v9170 = vpop.f32.mrf.mxu0
    %v9171 = vadd.f32 %v9002, %v9170
    %9172 = vmatmul.bf16.gmra.mxu0 %v6896
    %v9173 = vpop.f32.mrf.mxu0
    %v9174 = vadd.f32 %v9005, %v9173
    %v9175 = vpop.f32.mrf.mxu0
    %v9176 = vadd.f32 %v9007, %v9175
    %9177 = vmatmul.bf16.gmra.mxu0 %v6908
    %v9178 = vpop.f32.mrf.mxu0
    %v9179 = vadd.f32 %v9010, %v9178
    %v9180 = vpop.f32.mrf.mxu0
    %v9181 = vadd.f32 %v9012, %v9180
    %9182 = vmatmul.bf16.gmra.mxu0 %v7318
    %v9183 = vpop.f32.mrf.mxu0
    %v9184 = vadd.f32 %v9015, %v9183
    %v9185 = vpop.f32.mrf.mxu0
    %v9186 = vadd.f32 %v9017, %v9185
    %9187 = vmatmul.bf16.gmra.mxu0 %v6728
    %v9188 = vpop.f32.mrf.mxu0
    %v9189 = vadd.f32 %v9020, %v9188
    %v9190 = vpop.f32.mrf.mxu0
    %v9191 = vadd.f32 %v9022, %v9190
    %9192 = vmatmul.bf16.gmra.mxu0 %v6932
    %v9193 = vpop.f32.mrf.mxu0
    %v9194 = vadd.f32 %v9025, %v9193
    %v9195 = vpop.f32.mrf.mxu0
    %v9196 = vadd.f32 %v9027, %v9195
    %9197 = vmatmul.bf16.gmra.mxu0 %v6944
    %v9198 = vpop.f32.mrf.mxu0
    %v9199 = vadd.f32 %v9030, %v9198
    %v9200 = vpop.f32.mrf.mxu0
    %v9201 = vadd.f32 %v9032, %v9200
    %9202 = vmatmul.bf16.gmra.mxu0 %v6956
    %v9203 = vpop.f32.mrf.mxu0
    %v9204 = vadd.f32 %v9035, %v9203
    %v9205 = vpop.f32.mrf.mxu0
    %v9206 = vadd.f32 %v9037, %v9205
    %9207 = vmatmul.bf16.gmra.mxu0 %v6968
    %v9208 = vpop.f32.mrf.mxu0
    %v9209 = vadd.f32 %v9040, %v9208
    %v9210 = vpop.f32.mrf.mxu0
    %v9211 = vadd.f32 %v9042, %v9210
    %9212 = vmatmul.bf16.gmra.mxu0 %v6980
    %v9213 = vpop.f32.mrf.mxu0
    %v9214 = vadd.f32 %v9045, %v9213
    %v9215 = vpop.f32.mrf.mxu0
    %v9216 = vadd.f32 %v9047, %v9215
    %9217 = vmatmul.bf16.gmra.mxu0 %v6992
    %v9218 = vpop.f32.mrf.mxu0
    %v9219 = vadd.f32 %v9050, %v9218
    %v9220 = vpop.f32.mrf.mxu0
    %v9221 = vadd.f32 %v9052, %v9220
    %9222 = vmatmul.bf16.gmra.mxu0 %v7004
    %v9223 = vpop.f32.mrf.mxu0
    %v9224 = vadd.f32 %v9055, %v9223
    %v9225 = vpop.f32.mrf.mxu0
    %v9226 = vadd.f32 %v9057, %v9225
    %9227 = vmatmul.bf16.gmra.mxu0 %v7016
    %v9228 = vpop.f32.mrf.mxu0
    %v9229 = vadd.f32 %v9060, %v9228
    %v9230 = vpop.f32.mrf.mxu0
    %v9231 = vadd.f32 %v9062, %v9230
    %9232 = vmatmul.bf16.gmra.mxu0 %v7028
    %v9233 = vpop.f32.mrf.mxu0
    %v9234 = vadd.f32 %v9065, %v9233
    %v9235 = vpop.f32.mrf.mxu0
    %v9236 = vadd.f32 %v9067, %v9235
    %9237 = vmatmul.bf16.gmra.mxu0 %v7040
    %v9238 = vpop.f32.mrf.mxu0
    %v9239 = vadd.f32 %v9070, %v9238
    %v9240 = vpop.f32.mrf.mxu0
    %v9241 = vadd.f32 %v9072, %v9240
    %9242 = vmatmul.bf16.gmra.mxu0 %v7052
    %v9243 = vpop.f32.mrf.mxu0
    %v9244 = vadd.f32 %v9075, %v9243
    %v9245 = vpop.f32.mrf.mxu0
    %v9246 = vadd.f32 %v9077, %v9245
    %9247 = vmatmul.bf16.gmra.mxu0 %v7064
    %v9248 = vpop.f32.mrf.mxu0
    %v9249 = vadd.f32 %v9080, %v9248
    %v9250 = vpop.f32.mrf.mxu0
    %v9251 = vadd.f32 %v9082, %v9250
    %9252 = vmatmul.bf16.gmra.mxu0 %v7076
    %v9253 = vpop.f32.mrf.mxu0
    %v9254 = vadd.f32 %v9085, %v9253
    %v9255 = vpop.f32.mrf.mxu0
    %v9256 = vadd.f32 %v9087, %v9255
    %9257 = vmatmul.bf16.gmra.mxu0 %v7088
    %v9258 = vpop.f32.mrf.mxu0
    %v9259 = vadd.f32 %v9090, %v9258
    %v9260 = vpop.f32.mrf.mxu0
    %v9261 = vadd.f32 %v9092, %v9260
    %9262 = vmatmul.bf16.gmra.mxu0 %v7330
    %v9263 = vpop.f32.mrf.mxu0
    %v9264 = vadd.f32 %v9095, %v9263
    %v9265 = vpop.f32.mrf.mxu0
    %v9266 = vadd.f32 %v9097, %v9265
    %9267 = vmatmul.bf16.gmra.mxu0 %v6728
    %v9268 = vpop.f32.mrf.mxu0
    %v9269 = vadd.f32 %v9100, %v9268
    %v9270 = vpop.f32.mrf.mxu0
    %v9271 = vadd.f32 %v9102, %v9270
    %9272 = vdwg.mxu0
    %9273 = vmatpush.bf16.msra.mxu0 %v7848
    %9274 = vmatpush.bf16.msra.mxu0 %v7847
    %9275 = vmatpush.bf16.msra.mxu0 %v7846
    %9276 = vmatpush.bf16.msra.mxu0 %v7845
    %9277 = vmatpush.bf16.msra.mxu0 %v7844
    %9278 = vmatpush.bf16.msra.mxu0 %v7843
    %9279 = vmatpush.bf16.msra.mxu0 %v7842
    %9280 = vmatpush.bf16.msra.mxu0 %v7841
    %9281 = vmatmul.bf16.gmra.mxu0 %v7191
    %v9282 = vpop.f32.mrf.mxu0
    %v9283 = vadd.f32 %v9114, %v9282
    %v9284 = vpop.f32.mrf.mxu0
    %v9285 = vadd.f32 %v9116, %v9284
    %9286 = vmatmul.bf16.gmra.mxu0 %v7194
    %v9287 = vpop.f32.mrf.mxu0
    %v9288 = vadd.f32 %v9119, %v9287
    %v9289 = vpop.f32.mrf.mxu0
    %v9290 = vadd.f32 %v9121, %v9289
    %9291 = vmatmul.bf16.gmra.mxu0 %v7197
    %v9292 = vpop.f32.mrf.mxu0
    %v9293 = vadd.f32 %v9124, %v9292
    %v9294 = vpop.f32.mrf.mxu0
    %v9295 = vadd.f32 %v9126, %v9294
    %9296 = vmatmul.bf16.gmra.mxu0 %v7200
    %v9297 = vpop.f32.mrf.mxu0
    %v9298 = vadd.f32 %v9129, %v9297
    %v9299 = vpop.f32.mrf.mxu0
    %v9300 = vadd.f32 %v9131, %v9299
    %9301 = vmatmul.bf16.gmra.mxu0 %v7203
    %v9302 = vpop.f32.mrf.mxu0
    %v9303 = vadd.f32 %v9134, %v9302
    %v9304 = vpop.f32.mrf.mxu0
    %v9305 = vadd.f32 %v9136, %v9304
    %9306 = vmatmul.bf16.gmra.mxu0 %v7206
    %v9307 = vpop.f32.mrf.mxu0
    %v9308 = vadd.f32 %v9139, %v9307
    %v9309 = vpop.f32.mrf.mxu0
    %v9310 = vadd.f32 %v9141, %v9309
    %9311 = vmatmul.bf16.gmra.mxu0 %v7209
    %v9312 = vpop.f32.mrf.mxu0
    %v9313 = vadd.f32 %v9144, %v9312
    %v9314 = vpop.f32.mrf.mxu0
    %v9315 = vadd.f32 %v9146, %v9314
    %9316 = vmatmul.bf16.gmra.mxu0 %v7212
    %v9317 = vpop.f32.mrf.mxu0
    %v9318 = vadd.f32 %v9149, %v9317
    %v9319 = vpop.f32.mrf.mxu0
    %v9320 = vadd.f32 %v9151, %v9319
    %9321 = vmatmul.bf16.gmra.mxu0 %v7215
    %v9322 = vpop.f32.mrf.mxu0
    %v9323 = vadd.f32 %v9154, %v9322
    %v9324 = vpop.f32.mrf.mxu0
    %v9325 = vadd.f32 %v9156, %v9324
    %9326 = vmatmul.bf16.gmra.mxu0 %v7218
    %v9327 = vpop.f32.mrf.mxu0
    %v9328 = vadd.f32 %v9159, %v9327
    %v9329 = vpop.f32.mrf.mxu0
    %v9330 = vadd.f32 %v9161, %v9329
    %9331 = vmatmul.bf16.gmra.mxu0 %v7221
    %v9332 = vpop.f32.mrf.mxu0
    %v9333 = vadd.f32 %v9164, %v9332
    %v9334 = vpop.f32.mrf.mxu0
    %v9335 = vadd.f32 %v9166, %v9334
    %9336 = vmatmul.bf16.gmra.mxu0 %v7224
    %v9337 = vpop.f32.mrf.mxu0
    %v9338 = vadd.f32 %v9169, %v9337
    %v9339 = vpop.f32.mrf.mxu0
    %v9340 = vadd.f32 %v9171, %v9339
    %9341 = vmatmul.bf16.gmra.mxu0 %v7227
    %v9342 = vpop.f32.mrf.mxu0
    %v9343 = vadd.f32 %v9174, %v9342
    %v9344 = vpop.f32.mrf.mxu0
    %v9345 = vadd.f32 %v9176, %v9344
    %9346 = vmatmul.bf16.gmra.mxu0 %v7230
    %v9347 = vpop.f32.mrf.mxu0
    %v9348 = vadd.f32 %v9179, %v9347
    %v9349 = vpop.f32.mrf.mxu0
    %v9350 = vadd.f32 %v9181, %v9349
    %9351 = vmatmul.bf16.gmra.mxu0 %v7339
    %v9352 = vpop.f32.mrf.mxu0
    %v9353 = vadd.f32 %v9184, %v9352
    %v9354 = vpop.f32.mrf.mxu0
    %v9355 = vadd.f32 %v9186, %v9354
    %9356 = vmatmul.bf16.gmra.mxu0 %v7185
    %v9357 = vpop.f32.mrf.mxu0
    %v9358 = vadd.f32 %v9189, %v9357
    %v9359 = vpop.f32.mrf.mxu0
    %v9360 = vadd.f32 %v9191, %v9359
    %9361 = vmatmul.bf16.gmra.mxu0 %v7236
    %v9362 = vpop.f32.mrf.mxu0
    %v9363 = vadd.f32 %v9194, %v9362
    %v9364 = vpop.f32.mrf.mxu0
    %v9365 = vadd.f32 %v9196, %v9364
    %9366 = vmatmul.bf16.gmra.mxu0 %v7239
    %v9367 = vpop.f32.mrf.mxu0
    %v9368 = vadd.f32 %v9199, %v9367
    %v9369 = vpop.f32.mrf.mxu0
    %v9370 = vadd.f32 %v9201, %v9369
    %9371 = vmatmul.bf16.gmra.mxu0 %v7242
    %v9372 = vpop.f32.mrf.mxu0
    %v9373 = vadd.f32 %v9204, %v9372
    %v9374 = vpop.f32.mrf.mxu0
    %v9375 = vadd.f32 %v9206, %v9374
    %9376 = vmatmul.bf16.gmra.mxu0 %v7245
    %v9377 = vpop.f32.mrf.mxu0
    %v9378 = vadd.f32 %v9209, %v9377
    %v9379 = vpop.f32.mrf.mxu0
    %v9380 = vadd.f32 %v9211, %v9379
    %9381 = vmatmul.bf16.gmra.mxu0 %v7248
    %v9382 = vpop.f32.mrf.mxu0
    %v9383 = vadd.f32 %v9214, %v9382
    %v9384 = vpop.f32.mrf.mxu0
    %v9385 = vadd.f32 %v9216, %v9384
    %9386 = vmatmul.bf16.gmra.mxu0 %v7251
    %v9387 = vpop.f32.mrf.mxu0
    %v9388 = vadd.f32 %v9219, %v9387
    %v9389 = vpop.f32.mrf.mxu0
    %v9390 = vadd.f32 %v9221, %v9389
    %9391 = vmatmul.bf16.gmra.mxu0 %v7254
    %v9392 = vpop.f32.mrf.mxu0
    %v9393 = vadd.f32 %v9224, %v9392
    %v9394 = vpop.f32.mrf.mxu0
    %v9395 = vadd.f32 %v9226, %v9394
    %9396 = vmatmul.bf16.gmra.mxu0 %v7257
    %v9397 = vpop.f32.mrf.mxu0
    %v9398 = vadd.f32 %v9229, %v9397
    %v9399 = vpop.f32.mrf.mxu0
    %v9400 = vadd.f32 %v9231, %v9399
    %9401 = vmatmul.bf16.gmra.mxu0 %v7260
    %v9402 = vpop.f32.mrf.mxu0
    %v9403 = vadd.f32 %v9234, %v9402
    %v9404 = vpop.f32.mrf.mxu0
    %v9405 = vadd.f32 %v9236, %v9404
    %9406 = vmatmul.bf16.gmra.mxu0 %v7263
    %v9407 = vpop.f32.mrf.mxu0
    %v9408 = vadd.f32 %v9239, %v9407
    %v9409 = vpop.f32.mrf.mxu0
    %v9410 = vadd.f32 %v9241, %v9409
    %9411 = vmatmul.bf16.gmra.mxu0 %v7266
    %v9412 = vpop.f32.mrf.mxu0
    %v9413 = vadd.f32 %v9244, %v9412
    %v9414 = vpop.f32.mrf.mxu0
    %v9415 = vadd.f32 %v9246, %v9414
    %9416 = vmatmul.bf16.gmra.mxu0 %v7269
    %v9417 = vpop.f32.mrf.mxu0
    %v9418 = vadd.f32 %v9249, %v9417
    %v9419 = vpop.f32.mrf.mxu0
    %v9420 = vadd.f32 %v9251, %v9419
    %9421 = vmatmul.bf16.gmra.mxu0 %v7272
    %v9422 = vpop.f32.mrf.mxu0
    %v9423 = vadd.f32 %v9254, %v9422
    %v9424 = vpop.f32.mrf.mxu0
    %v9425 = vadd.f32 %v9256, %v9424
    %9426 = vmatmul.bf16.gmra.mxu0 %v7275
    %v9427 = vpop.f32.mrf.mxu0
    %v9428 = vadd.f32 %v9259, %v9427
    %v9429 = vpop.f32.mrf.mxu0
    %v9430 = vadd.f32 %v9261, %v9429
    %9431 = vmatmul.bf16.gmra.mxu0 %v7342
    %v9432 = vpop.f32.mrf.mxu0
    %v9433 = vadd.f32 %v9264, %v9432
    %v9434 = vpop.f32.mrf.mxu0
    %v9435 = vadd.f32 %v9266, %v9434
    %9436 = vmatmul.bf16.gmra.mxu0 %v7185
    %v9437 = vpop.f32.mrf.mxu0
    %v9438 = vadd.f32 %v9269, %v9437
    %v9439 = vpop.f32.mrf.mxu0
    %v9440 = vadd.f32 %v9271, %v9439
    %9441 = vdwg.mxu0
    %v9443 = vrot.slane %v5968, 1
    %v9444 = vperm.slane %v5968, 0
    %v9445 = vperm.slane %v9443, 0
    %v9448 = vmul.f32 %v9283, %v9444
    %v9449 = vmul.f32 %v9285, %v9444
    %v9450 = vmul.f32 %v9288, %v9444
    %v9451 = vmul.f32 %v9290, %v9444
    %v9452 = vmul.f32 %v9293, %v9444
    %v9453 = vmul.f32 %v9295, %v9444
    %v9454 = vmul.f32 %v9298, %v9444
    %v9455 = vmul.f32 %v9300, %v9444
    %v9456 = vmul.f32 %v9303, %v9444
    %v9457 = vmul.f32 %v9305, %v9444
    %v9458 = vmul.f32 %v9308, %v9444
    %v9459 = vmul.f32 %v9310, %v9444
    %v9460 = vmul.f32 %v9313, %v9444
    %v9461 = vmul.f32 %v9315, %v9444
    %v9462 = vmul.f32 %v9318, %v9444
    %v9463 = vmul.f32 %v9320, %v9444
    %v9464 = vmul.f32 %v9323, %v9444
    %v9465 = vmul.f32 %v9325, %v9444
    %v9466 = vmul.f32 %v9328, %v9444
    %v9467 = vmul.f32 %v9330, %v9444
    %v9468 = vmul.f32 %v9333, %v9444
    %v9469 = vmul.f32 %v9335, %v9444
    %v9470 = vmul.f32 %v9338, %v9444
    %v9471 = vmul.f32 %v9340, %v9444
    %v9472 = vmul.f32 %v9343, %v9444
    %v9473 = vmul.f32 %v9345, %v9444
    %v9474 = vmul.f32 %v9348, %v9444
    %v9475 = vmul.f32 %v9350, %v9444
    %v9476 = vmul.f32 %v9353, %v9444
    %v9477 = vmul.f32 %v9355, %v9444
    %v9478 = vmul.f32 %v9358, %v9444
    %v9479 = vmul.f32 %v9360, %v9444
    %v9480 = vmul.f32 %v9363, %v9445
    %v9481 = vmul.f32 %v9365, %v9445
    %v9482 = vmul.f32 %v9368, %v9445
    %v9483 = vmul.f32 %v9370, %v9445
    %v9484 = vmul.f32 %v9373, %v9445
    %v9485 = vmul.f32 %v9375, %v9445
    %v9486 = vmul.f32 %v9378, %v9445
    %v9487 = vmul.f32 %v9380, %v9445
    %v9488 = vmul.f32 %v9383, %v9445
    %v9489 = vmul.f32 %v9385, %v9445
    %v9490 = vmul.f32 %v9388, %v9445
    %v9491 = vmul.f32 %v9390, %v9445
    %v9492 = vmul.f32 %v9393, %v9445
    %v9493 = vmul.f32 %v9395, %v9445
    %v9494 = vmul.f32 %v9398, %v9445
    %v9495 = vmul.f32 %v9400, %v9445
    %v9496 = vmul.f32 %v9403, %v9445
    %v9497 = vmul.f32 %v9405, %v9445
    %v9498 = vmul.f32 %v9408, %v9445
    %v9499 = vmul.f32 %v9410, %v9445
    %v9500 = vmul.f32 %v9413, %v9445
    %v9501 = vmul.f32 %v9415, %v9445
    %v9502 = vmul.f32 %v9418, %v9445
    %v9503 = vmul.f32 %v9420, %v9445
    %v9504 = vmul.f32 %v9423, %v9445
    %v9505 = vmul.f32 %v9425, %v9445
    %v9506 = vmul.f32 %v9428, %v9445
    %v9507 = vmul.f32 %v9430, %v9445
    %v9508 = vmul.f32 %v9433, %v9445
    %v9509 = vmul.f32 %v9435, %v9445
    %v9510 = vmul.f32 %v9438, %v9445
    %v9511 = vmul.f32 %v9440, %v9445
    %v9512 = vstv %s5970
    %v9513 = vmul.f32 %v9512, %v5936
    %v9514 = vmul.f32 %v9512, %v5937
    %v9515 = vmul.f32 %v9512, %v5938
    %v9516 = vmul.f32 %v9512, %v5939
    %v9517 = vmul.f32 %v9512, %v5940
    %v9518 = vmul.f32 %v9512, %v5941
    %v9519 = vmul.f32 %v9512, %v5942
    %v9520 = vmul.f32 %v9512, %v5943
    %v9521 = vmul.f32 %v9512, %v5944
    %v9522 = vmul.f32 %v9512, %v5945
    %v9523 = vmul.f32 %v9512, %v5946
    %v9524 = vmul.f32 %v9512, %v5947
    %v9525 = vmul.f32 %v9512, %v5948
    %v9526 = vmul.f32 %v9512, %v5949
    %v9527 = vmul.f32 %v9512, %v5950
    %v9528 = vmul.f32 %v9512, %v5951
    %v9529 = vmul.f32 %v9512, %v5952
    %v9530 = vmul.f32 %v9512, %v5953
    %v9531 = vmul.f32 %v9512, %v5954
    %v9532 = vmul.f32 %v9512, %v5955
    %v9533 = vmul.f32 %v9512, %v5956
    %v9534 = vmul.f32 %v9512, %v5957
    %v9535 = vmul.f32 %v9512, %v5958
    %v9536 = vmul.f32 %v9512, %v5959
    %v9537 = vmul.f32 %v9512, %v5960
    %v9538 = vmul.f32 %v9512, %v5961
    %v9539 = vmul.f32 %v9512, %v5962
    %v9540 = vmul.f32 %v9512, %v5963
    %v9541 = vmul.f32 %v9512, %v5964
    %v9542 = vmul.f32 %v9512, %v5965
    %v9543 = vmul.f32 %v9512, %v5966
    %v9544 = vmul.f32 %v9512, %v5967
    %9546 = vset.pattern.permute.xlu0 0
    %9547 = vperm.xlu0 %9546, %v9513
    %v9548 = vpop.permute.xlu0 %9547
    %9551 = vset.pattern.permute.xlu0 0
    %9552 = vperm.xlu0 %9551, %v9514
    %v9553 = vpop.permute.xlu0 %9552
    %9556 = vset.pattern.permute.xlu0 0
    %9557 = vperm.xlu0 %9556, %v9515
    %v9558 = vpop.permute.xlu0 %9557
    %9561 = vset.pattern.permute.xlu0 0
    %9562 = vperm.xlu0 %9561, %v9516
    %v9563 = vpop.permute.xlu0 %9562
    %9566 = vset.pattern.permute.xlu0 0
    %9567 = vperm.xlu0 %9566, %v9517
    %v9568 = vpop.permute.xlu0 %9567
    %9571 = vset.pattern.permute.xlu0 0
    %9572 = vperm.xlu0 %9571, %v9518
    %v9573 = vpop.permute.xlu0 %9572
    %9576 = vset.pattern.permute.xlu0 0
    %9577 = vperm.xlu0 %9576, %v9519
    %v9578 = vpop.permute.xlu0 %9577
    %9581 = vset.pattern.permute.xlu0 0
    %9582 = vperm.xlu0 %9581, %v9520
    %v9583 = vpop.permute.xlu0 %9582
    %9586 = vset.pattern.permute.xlu0 0
    %9587 = vperm.xlu0 %9586, %v9521
    %v9588 = vpop.permute.xlu0 %9587
    %9591 = vset.pattern.permute.xlu0 0
    %9592 = vperm.xlu0 %9591, %v9522
    %v9593 = vpop.permute.xlu0 %9592
    %9596 = vset.pattern.permute.xlu0 0
    %9597 = vperm.xlu0 %9596, %v9523
    %v9598 = vpop.permute.xlu0 %9597
    %9601 = vset.pattern.permute.xlu0 0
    %9602 = vperm.xlu0 %9601, %v9524
    %v9603 = vpop.permute.xlu0 %9602
    %9606 = vset.pattern.permute.xlu0 0
    %9607 = vperm.xlu0 %9606, %v9525
    %v9608 = vpop.permute.xlu0 %9607
    %9611 = vset.pattern.permute.xlu0 0
    %9612 = vperm.xlu0 %9611, %v9526
    %v9613 = vpop.permute.xlu0 %9612
    %9616 = vset.pattern.permute.xlu0 0
    %9617 = vperm.xlu0 %9616, %v9527
    %v9618 = vpop.permute.xlu0 %9617
    %9621 = vset.pattern.permute.xlu0 0
    %9622 = vperm.xlu0 %9621, %v9528
    %v9623 = vpop.permute.xlu0 %9622
    %9626 = vset.pattern.permute.xlu0 0
    %9627 = vperm.xlu0 %9626, %v9529
    %v9628 = vpop.permute.xlu0 %9627
    %9631 = vset.pattern.permute.xlu0 0
    %9632 = vperm.xlu0 %9631, %v9530
    %v9633 = vpop.permute.xlu0 %9632
    %9636 = vset.pattern.permute.xlu0 0
    %9637 = vperm.xlu0 %9636, %v9531
    %v9638 = vpop.permute.xlu0 %9637
    %9641 = vset.pattern.permute.xlu0 0
    %9642 = vperm.xlu0 %9641, %v9532
    %v9643 = vpop.permute.xlu0 %9642
    %9646 = vset.pattern.permute.xlu0 0
    %9647 = vperm.xlu0 %9646, %v9533
    %v9648 = vpop.permute.xlu0 %9647
    %9651 = vset.pattern.permute.xlu0 0
    %9652 = vperm.xlu0 %9651, %v9534
    %v9653 = vpop.permute.xlu0 %9652
    %9656 = vset.pattern.permute.xlu0 0
    %9657 = vperm.xlu0 %9656, %v9535
    %v9658 = vpop.permute.xlu0 %9657
    %9661 = vset.pattern.permute.xlu0 0
    %9662 = vperm.xlu0 %9661, %v9536
    %v9663 = vpop.permute.xlu0 %9662
    %9666 = vset.pattern.permute.xlu0 0
    %9667 = vperm.xlu0 %9666, %v9537
    %v9668 = vpop.permute.xlu0 %9667
    %9671 = vset.pattern.permute.xlu0 0
    %9672 = vperm.xlu0 %9671, %v9538
    %v9673 = vpop.permute.xlu0 %9672
    %9676 = vset.pattern.permute.xlu0 0
    %9677 = vperm.xlu0 %9676, %v9539
    %v9678 = vpop.permute.xlu0 %9677
    %9681 = vset.pattern.permute.xlu0 0
    %9682 = vperm.xlu0 %9681, %v9540
    %v9683 = vpop.permute.xlu0 %9682
    %9686 = vset.pattern.permute.xlu0 0
    %9687 = vperm.xlu0 %9686, %v9541
    %v9688 = vpop.permute.xlu0 %9687
    %9691 = vset.pattern.permute.xlu0 0
    %9692 = vperm.xlu0 %9691, %v9542
    %v9693 = vpop.permute.xlu0 %9692
    %9696 = vset.pattern.permute.xlu0 0
    %9697 = vperm.xlu0 %9696, %v9543
    %v9698 = vpop.permute.xlu0 %9697
    %9701 = vset.pattern.permute.xlu0 0
    %9702 = vperm.xlu0 %9701, %v9544
    %v9703 = vpop.permute.xlu0 %9702
    %v9705 = vadd.f32 %v9448, %v9548
    %v9706 = vadd.f32 %v9449, %v9553
    %v9707 = vadd.f32 %v9450, %v9558
    %v9708 = vadd.f32 %v9451, %v9563
    %v9709 = vadd.f32 %v9452, %v9568
    %v9710 = vadd.f32 %v9453, %v9573
    %v9711 = vadd.f32 %v9454, %v9578
    %v9712 = vadd.f32 %v9455, %v9583
    %v9713 = vadd.f32 %v9456, %v9588
    %v9714 = vadd.f32 %v9457, %v9593
    %v9715 = vadd.f32 %v9458, %v9598
    %v9716 = vadd.f32 %v9459, %v9603
    %v9717 = vadd.f32 %v9460, %v9608
    %v9718 = vadd.f32 %v9461, %v9613
    %v9719 = vadd.f32 %v9462, %v9618
    %v9720 = vadd.f32 %v9463, %v9623
    %v9721 = vadd.f32 %v9464, %v9628
    %v9722 = vadd.f32 %v9465, %v9633
    %v9723 = vadd.f32 %v9466, %v9638
    %v9724 = vadd.f32 %v9467, %v9643
    %v9725 = vadd.f32 %v9468, %v9648
    %v9726 = vadd.f32 %v9469, %v9653
    %v9727 = vadd.f32 %v9470, %v9658
    %v9728 = vadd.f32 %v9471, %v9663
    %v9729 = vadd.f32 %v9472, %v9668
    %v9730 = vadd.f32 %v9473, %v9673
    %v9731 = vadd.f32 %v9474, %v9678
    %v9732 = vadd.f32 %v9475, %v9683
    %v9733 = vadd.f32 %v9476, %v9688
    %v9734 = vadd.f32 %v9477, %v9693
    %v9735 = vadd.f32 %v9478, %v9698
    %v9736 = vadd.f32 %v9479, %v9703
    %v9737 = vadd.f32 %v9480, %v9548
    %v9738 = vadd.f32 %v9481, %v9553
    %v9739 = vadd.f32 %v9482, %v9558
    %v9740 = vadd.f32 %v9483, %v9563
    %v9741 = vadd.f32 %v9484, %v9568
    %v9742 = vadd.f32 %v9485, %v9573
    %v9743 = vadd.f32 %v9486, %v9578
    %v9744 = vadd.f32 %v9487, %v9583
    %v9745 = vadd.f32 %v9488, %v9588
    %v9746 = vadd.f32 %v9489, %v9593
    %v9747 = vadd.f32 %v9490, %v9598
    %v9748 = vadd.f32 %v9491, %v9603
    %v9749 = vadd.f32 %v9492, %v9608
    %v9750 = vadd.f32 %v9493, %v9613
    %v9751 = vadd.f32 %v9494, %v9618
    %v9752 = vadd.f32 %v9495, %v9623
    %v9753 = vadd.f32 %v9496, %v9628
    %v9754 = vadd.f32 %v9497, %v9633
    %v9755 = vadd.f32 %v9498, %v9638
    %v9756 = vadd.f32 %v9499, %v9643
    %v9757 = vadd.f32 %v9500, %v9648
    %v9758 = vadd.f32 %v9501, %v9653
    %v9759 = vadd.f32 %v9502, %v9658
    %v9760 = vadd.f32 %v9503, %v9663
    %v9761 = vadd.f32 %v9504, %v9668
    %v9762 = vadd.f32 %v9505, %v9673
    %v9763 = vadd.f32 %v9506, %v9678
    %v9764 = vadd.f32 %v9507, %v9683
    %v9765 = vadd.f32 %v9508, %v9688
    %v9766 = vadd.f32 %v9509, %v9693
    %v9767 = vadd.f32 %v9510, %v9698
    %v9768 = vadd.f32 %v9511, %v9703
    %v9770 = vperm.slane %v5969, 0
    %v9772 = vadd.f32 %v9705, %v9770
    %v9773 = vadd.f32 %v9706, %v9770
    %v9774 = vadd.f32 %v9707, %v9770
    %v9775 = vadd.f32 %v9708, %v9770
    %v9776 = vadd.f32 %v9709, %v9770
    %v9777 = vadd.f32 %v9710, %v9770
    %v9778 = vadd.f32 %v9711, %v9770
    %v9779 = vadd.f32 %v9712, %v9770
    %v9780 = vadd.f32 %v9713, %v9770
    %v9781 = vadd.f32 %v9714, %v9770
    %v9782 = vadd.f32 %v9715, %v9770
    %v9783 = vadd.f32 %v9716, %v9770
    %v9784 = vadd.f32 %v9717, %v9770
    %v9785 = vadd.f32 %v9718, %v9770
    %v9786 = vadd.f32 %v9719, %v9770
    %v9787 = vadd.f32 %v9720, %v9770
    %v9788 = vadd.f32 %v9721, %v9770
    %v9789 = vadd.f32 %v9722, %v9770
    %v9790 = vadd.f32 %v9723, %v9770
    %v9791 = vadd.f32 %v9724, %v9770
    %v9792 = vadd.f32 %v9725, %v9770
    %v9793 = vadd.f32 %v9726, %v9770
    %v9794 = vadd.f32 %v9727, %v9770
    %v9795 = vadd.f32 %v9728, %v9770
    %v9796 = vadd.f32 %v9729, %v9770
    %v9797 = vadd.f32 %v9730, %v9770
    %v9798 = vadd.f32 %v9731, %v9770
    %v9799 = vadd.f32 %v9732, %v9770
    %v9800 = vadd.f32 %v9733, %v9770
    %v9801 = vadd.f32 %v9734, %v9770
    %v9802 = vadd.f32 %v9735, %v9770
    %v9803 = vadd.f32 %v9736, %v9770
    %v9804 = vadd.f32 %v9737, %v9770
    %v9805 = vadd.f32 %v9738, %v9770
    %v9806 = vadd.f32 %v9739, %v9770
    %v9807 = vadd.f32 %v9740, %v9770
    %v9808 = vadd.f32 %v9741, %v9770
    %v9809 = vadd.f32 %v9742, %v9770
    %v9810 = vadd.f32 %v9743, %v9770
    %v9811 = vadd.f32 %v9744, %v9770
    %v9812 = vadd.f32 %v9745, %v9770
    %v9813 = vadd.f32 %v9746, %v9770
    %v9814 = vadd.f32 %v9747, %v9770
    %v9815 = vadd.f32 %v9748, %v9770
    %v9816 = vadd.f32 %v9749, %v9770
    %v9817 = vadd.f32 %v9750, %v9770
    %v9818 = vadd.f32 %v9751, %v9770
    %v9819 = vadd.f32 %v9752, %v9770
    %v9820 = vadd.f32 %v9753, %v9770
    %v9821 = vadd.f32 %v9754, %v9770
    %v9822 = vadd.f32 %v9755, %v9770
    %v9823 = vadd.f32 %v9756, %v9770
    %v9824 = vadd.f32 %v9757, %v9770
    %v9825 = vadd.f32 %v9758, %v9770
    %v9826 = vadd.f32 %v9759, %v9770
    %v9827 = vadd.f32 %v9760, %v9770
    %v9828 = vadd.f32 %v9761, %v9770
    %v9829 = vadd.f32 %v9762, %v9770
    %v9830 = vadd.f32 %v9763, %v9770
    %v9831 = vadd.f32 %v9764, %v9770
    %v9832 = vadd.f32 %v9765, %v9770
    %v9833 = vadd.f32 %v9766, %v9770
    %v9834 = vadd.f32 %v9767, %v9770
    %v9835 = vadd.f32 %v9768, %v9770
    %vm9836 = vcmp.ge.f32.partialorder %v9772, 0.0
    %vm9837 = vcmp.ge.f32.partialorder %v9773, 0.0
    %vm9838 = vcmp.ge.f32.partialorder %v9774, 0.0
    %vm9839 = vcmp.ge.f32.partialorder %v9775, 0.0
    %vm9840 = vcmp.ge.f32.partialorder %v9776, 0.0
    %vm9841 = vcmp.ge.f32.partialorder %v9777, 0.0
    %vm9842 = vcmp.ge.f32.partialorder %v9778, 0.0
    %vm9843 = vcmp.ge.f32.partialorder %v9779, 0.0
    %vm9844 = vcmp.ge.f32.partialorder %v9780, 0.0
    %vm9845 = vcmp.ge.f32.partialorder %v9781, 0.0
    %vm9846 = vcmp.ge.f32.partialorder %v9782, 0.0
    %vm9847 = vcmp.ge.f32.partialorder %v9783, 0.0
    %vm9848 = vcmp.ge.f32.partialorder %v9784, 0.0
    %vm9849 = vcmp.ge.f32.partialorder %v9785, 0.0
    %vm9850 = vcmp.ge.f32.partialorder %v9786, 0.0
    %vm9851 = vcmp.ge.f32.partialorder %v9787, 0.0
    %vm9852 = vcmp.ge.f32.partialorder %v9788, 0.0
    %vm9853 = vcmp.ge.f32.partialorder %v9789, 0.0
    %vm9854 = vcmp.ge.f32.partialorder %v9790, 0.0
    %vm9855 = vcmp.ge.f32.partialorder %v9791, 0.0
    %vm9856 = vcmp.ge.f32.partialorder %v9792, 0.0
    %vm9857 = vcmp.ge.f32.partialorder %v9793, 0.0
    %vm9858 = vcmp.ge.f32.partialorder %v9794, 0.0
    %vm9859 = vcmp.ge.f32.partialorder %v9795, 0.0
    %vm9860 = vcmp.ge.f32.partialorder %v9796, 0.0
    %vm9861 = vcmp.ge.f32.partialorder %v9797, 0.0
    %vm9862 = vcmp.ge.f32.partialorder %v9798, 0.0
    %vm9863 = vcmp.ge.f32.partialorder %v9799, 0.0
    %vm9864 = vcmp.ge.f32.partialorder %v9800, 0.0
    %vm9865 = vcmp.ge.f32.partialorder %v9801, 0.0
    %vm9866 = vcmp.ge.f32.partialorder %v9802, 0.0
    %vm9867 = vcmp.ge.f32.partialorder %v9803, 0.0
    %vm9868 = vcmp.ge.f32.partialorder %v9804, 0.0
    %vm9869 = vcmp.ge.f32.partialorder %v9805, 0.0
    %vm9870 = vcmp.ge.f32.partialorder %v9806, 0.0
    %vm9871 = vcmp.ge.f32.partialorder %v9807, 0.0
    %vm9872 = vcmp.ge.f32.partialorder %v9808, 0.0
    %vm9873 = vcmp.ge.f32.partialorder %v9809, 0.0
    %vm9874 = vcmp.ge.f32.partialorder %v9810, 0.0
    %vm9875 = vcmp.ge.f32.partialorder %v9811, 0.0
    %vm9876 = vcmp.ge.f32.partialorder %v9812, 0.0
    %vm9877 = vcmp.ge.f32.partialorder %v9813, 0.0
    %vm9878 = vcmp.ge.f32.partialorder %v9814, 0.0
    %vm9879 = vcmp.ge.f32.partialorder %v9815, 0.0
    %vm9880 = vcmp.ge.f32.partialorder %v9816, 0.0
    %vm9881 = vcmp.ge.f32.partialorder %v9817, 0.0
    %vm9882 = vcmp.ge.f32.partialorder %v9818, 0.0
    %vm9883 = vcmp.ge.f32.partialorder %v9819, 0.0
    %vm9884 = vcmp.ge.f32.partialorder %v9820, 0.0
    %vm9885 = vcmp.ge.f32.partialorder %v9821, 0.0
    %vm9886 = vcmp.ge.f32.partialorder %v9822, 0.0
    %vm9887 = vcmp.ge.f32.partialorder %v9823, 0.0
    %vm9888 = vcmp.ge.f32.partialorder %v9824, 0.0
    %vm9889 = vcmp.ge.f32.partialorder %v9825, 0.0
    %vm9890 = vcmp.ge.f32.partialorder %v9826, 0.0
    %vm9891 = vcmp.ge.f32.partialorder %v9827, 0.0
    %vm9892 = vcmp.ge.f32.partialorder %v9828, 0.0
    %vm9893 = vcmp.ge.f32.partialorder %v9829, 0.0
    %vm9894 = vcmp.ge.f32.partialorder %v9830, 0.0
    %vm9895 = vcmp.ge.f32.partialorder %v9831, 0.0
    %vm9896 = vcmp.ge.f32.partialorder %v9832, 0.0
    %vm9897 = vcmp.ge.f32.partialorder %v9833, 0.0
    %vm9898 = vcmp.ge.f32.partialorder %v9834, 0.0
    %vm9899 = vcmp.ge.f32.partialorder %v9835, 0.0
    %v9900 = vmul.f32 %v9772, 0.2
    %v9901 = vmul.f32 %v9773, 0.2
    %v9902 = vmul.f32 %v9774, 0.2
    %v9903 = vmul.f32 %v9775, 0.2
    %v9904 = vmul.f32 %v9776, 0.2
    %v9905 = vmul.f32 %v9777, 0.2
    %v9906 = vmul.f32 %v9778, 0.2
    %v9907 = vmul.f32 %v9779, 0.2
    %v9908 = vmul.f32 %v9780, 0.2
    %v9909 = vmul.f32 %v9781, 0.2
    %v9910 = vmul.f32 %v9782, 0.2
    %v9911 = vmul.f32 %v9783, 0.2
    %v9912 = vmul.f32 %v9784, 0.2
    %v9913 = vmul.f32 %v9785, 0.2
    %v9914 = vmul.f32 %v9786, 0.2
    %v9915 = vmul.f32 %v9787, 0.2
    %v9916 = vmul.f32 %v9788, 0.2
    %v9917 = vmul.f32 %v9789, 0.2
    %v9918 = vmul.f32 %v9790, 0.2
    %v9919 = vmul.f32 %v9791, 0.2
    %v9920 = vmul.f32 %v9792, 0.2
    %v9921 = vmul.f32 %v9793, 0.2
    %v9922 = vmul.f32 %v9794, 0.2
    %v9923 = vmul.f32 %v9795, 0.2
    %v9924 = vmul.f32 %v9796, 0.2
    %v9925 = vmul.f32 %v9797, 0.2
    %v9926 = vmul.f32 %v9798, 0.2
    %v9927 = vmul.f32 %v9799, 0.2
    %v9928 = vmul.f32 %v9800, 0.2
    %v9929 = vmul.f32 %v9801, 0.2
    %v9930 = vmul.f32 %v9802, 0.2
    %v9931 = vmul.f32 %v9803, 0.2
    %v9932 = vmul.f32 %v9804, 0.2
    %v9933 = vmul.f32 %v9805, 0.2
    %v9934 = vmul.f32 %v9806, 0.2
    %v9935 = vmul.f32 %v9807, 0.2
    %v9936 = vmul.f32 %v9808, 0.2
    %v9937 = vmul.f32 %v9809, 0.2
    %v9938 = vmul.f32 %v9810, 0.2
    %v9939 = vmul.f32 %v9811, 0.2
    %v9940 = vmul.f32 %v9812, 0.2
    %v9941 = vmul.f32 %v9813, 0.2
    %v9942 = vmul.f32 %v9814, 0.2
    %v9943 = vmul.f32 %v9815, 0.2
    %v9944 = vmul.f32 %v9816, 0.2
    %v9945 = vmul.f32 %v9817, 0.2
    %v9946 = vmul.f32 %v9818, 0.2
    %v9947 = vmul.f32 %v9819, 0.2
    %v9948 = vmul.f32 %v9820, 0.2
    %v9949 = vmul.f32 %v9821, 0.2
    %v9950 = vmul.f32 %v9822, 0.2
    %v9951 = vmul.f32 %v9823, 0.2
    %v9952 = vmul.f32 %v9824, 0.2
    %v9953 = vmul.f32 %v9825, 0.2
    %v9954 = vmul.f32 %v9826, 0.2
    %v9955 = vmul.f32 %v9827, 0.2
    %v9956 = vmul.f32 %v9828, 0.2
    %v9957 = vmul.f32 %v9829, 0.2
    %v9958 = vmul.f32 %v9830, 0.2
    %v9959 = vmul.f32 %v9831, 0.2
    %v9960 = vmul.f32 %v9832, 0.2
    %v9961 = vmul.f32 %v9833, 0.2
    %v9962 = vmul.f32 %v9834, 0.2
    %v9963 = vmul.f32 %v9835, 0.2
    %v9964 = vsel %vm9836, %v9772, %v9900
    %v9965 = vsel %vm9837, %v9773, %v9901
    %v9966 = vsel %vm9838, %v9774, %v9902
    %v9967 = vsel %vm9839, %v9775, %v9903
    %v9968 = vsel %vm9840, %v9776, %v9904
    %v9969 = vsel %vm9841, %v9777, %v9905
    %v9970 = vsel %vm9842, %v9778, %v9906
    %v9971 = vsel %vm9843, %v9779, %v9907
    %v9972 = vsel %vm9844, %v9780, %v9908
    %v9973 = vsel %vm9845, %v9781, %v9909
    %v9974 = vsel %vm9846, %v9782, %v9910
    %v9975 = vsel %vm9847, %v9783, %v9911
    %v9976 = vsel %vm9848, %v9784, %v9912
    %v9977 = vsel %vm9849, %v9785, %v9913
    %v9978 = vsel %vm9850, %v9786, %v9914
    %v9979 = vsel %vm9851, %v9787, %v9915
    %v9980 = vsel %vm9852, %v9788, %v9916
    %v9981 = vsel %vm9853, %v9789, %v9917
    %v9982 = vsel %vm9854, %v9790, %v9918
    %v9983 = vsel %vm9855, %v9791, %v9919
    %v9984 = vsel %vm9856, %v9792, %v9920
    %v9985 = vsel %vm9857, %v9793, %v9921
    %v9986 = vsel %vm9858, %v9794, %v9922
    %v9987 = vsel %vm9859, %v9795, %v9923
    %v9988 = vsel %vm9860, %v9796, %v9924
    %v9989 = vsel %vm9861, %v9797, %v9925
    %v9990 = vsel %vm9862, %v9798, %v9926
    %v9991 = vsel %vm9863, %v9799, %v9927
    %v9992 = vsel %vm9864, %v9800, %v9928
    %v9993 = vsel %vm9865, %v9801, %v9929
    %v9994 = vsel %vm9866, %v9802, %v9930
    %v9995 = vsel %vm9867, %v9803, %v9931
    %v9996 = vsel %vm9868, %v9804, %v9932
    %v9997 = vsel %vm9869, %v9805, %v9933
    %v9998 = vsel %vm9870, %v9806, %v9934
    %v9999 = vsel %vm9871, %v9807, %v9935
    %v10000 = vsel %vm9872, %v9808, %v9936
    %v10001 = vsel %vm9873, %v9809, %v9937
    %v10002 = vsel %vm9874, %v9810, %v9938
    %v10003 = vsel %vm9875, %v9811, %v9939
    %v10004 = vsel %vm9876, %v9812, %v9940
    %v10005 = vsel %vm9877, %v9813, %v9941
    %v10006 = vsel %vm9878, %v9814, %v9942
    %v10007 = vsel %vm9879, %v9815, %v9943
    %v10008 = vsel %vm9880, %v9816, %v9944
    %v10009 = vsel %vm9881, %v9817, %v9945
    %v10010 = vsel %vm9882, %v9818, %v9946
    %v10011 = vsel %vm9883, %v9819, %v9947
    %v10012 = vsel %vm9884, %v9820, %v9948
    %v10013 = vsel %vm9885, %v9821, %v9949
    %v10014 = vsel %vm9886, %v9822, %v9950
    %v10015 = vsel %vm9887, %v9823, %v9951
    %v10016 = vsel %vm9888, %v9824, %v9952
    %v10017 = vsel %vm9889, %v9825, %v9953
    %v10018 = vsel %vm9890, %v9826, %v9954
    %v10019 = vsel %vm9891, %v9827, %v9955
    %v10020 = vsel %vm9892, %v9828, %v9956
    %v10021 = vsel %vm9893, %v9829, %v9957
    %v10022 = vsel %vm9894, %v9830, %v9958
    %v10023 = vsel %vm9895, %v9831, %v9959
    %v10024 = vsel %vm9896, %v9832, %v9960
    %v10025 = vsel %vm9897, %v9833, %v9961
    %v10026 = vsel %vm9898, %v9834, %v9962
    %v10027 = vsel %vm9899, %v9835, %v9963
    %v10028 = vmul.f32 %v9964, 1.4142135
    %v10029 = vmul.f32 %v9965, 1.4142135
    %v10030 = vmul.f32 %v9966, 1.4142135
    %v10031 = vmul.f32 %v9967, 1.4142135
    %v10032 = vmul.f32 %v9968, 1.4142135
    %v10033 = vmul.f32 %v9969, 1.4142135
    %v10034 = vmul.f32 %v9970, 1.4142135
    %v10035 = vmul.f32 %v9971, 1.4142135
    %v10036 = vmul.f32 %v9972, 1.4142135
    %v10037 = vmul.f32 %v9973, 1.4142135
    %v10038 = vmul.f32 %v9974, 1.4142135
    %v10039 = vmul.f32 %v9975, 1.4142135
    %v10040 = vmul.f32 %v9976, 1.4142135
    %v10041 = vmul.f32 %v9977, 1.4142135
    %v10042 = vmul.f32 %v9978, 1.4142135
    %v10043 = vmul.f32 %v9979, 1.4142135
    %v10044 = vmul.f32 %v9980, 1.4142135
    %v10045 = vmul.f32 %v9981, 1.4142135
    %v10046 = vmul.f32 %v9982, 1.4142135
    %v10047 = vmul.f32 %v9983, 1.4142135
    %v10048 = vmul.f32 %v9984, 1.4142135
    %v10049 = vmul.f32 %v9985, 1.4142135
    %v10050 = vmul.f32 %v9986, 1.4142135
    %v10051 = vmul.f32 %v9987, 1.4142135
    %v10052 = vmul.f32 %v9988, 1.4142135
    %v10053 = vmul.f32 %v9989, 1.4142135
    %v10054 = vmul.f32 %v9990, 1.4142135
    %v10055 = vmul.f32 %v9991, 1.4142135
    %v10056 = vmul.f32 %v9992, 1.4142135
    %v10057 = vmul.f32 %v9993, 1.4142135
    %v10058 = vmul.f32 %v9994, 1.4142135
    %v10059 = vmul.f32 %v9995, 1.4142135
    %v10060 = vmul.f32 %v9996, 1.4142135
    %v10061 = vmul.f32 %v9997, 1.4142135
    %v10062 = vmul.f32 %v9998, 1.4142135
    %v10063 = vmul.f32 %v9999, 1.4142135
    %v10064 = vmul.f32 %v10000, 1.4142135
    %v10065 = vmul.f32 %v10001, 1.4142135
    %v10066 = vmul.f32 %v10002, 1.4142135
    %v10067 = vmul.f32 %v10003, 1.4142135
    %v10068 = vmul.f32 %v10004, 1.4142135
    %v10069 = vmul.f32 %v10005, 1.4142135
    %v10070 = vmul.f32 %v10006, 1.4142135
    %v10071 = vmul.f32 %v10007, 1.4142135
    %v10072 = vmul.f32 %v10008, 1.4142135
    %v10073 = vmul.f32 %v10009, 1.4142135
    %v10074 = vmul.f32 %v10010, 1.4142135
    %v10075 = vmul.f32 %v10011, 1.4142135
    %v10076 = vmul.f32 %v10012, 1.4142135
    %v10077 = vmul.f32 %v10013, 1.4142135
    %v10078 = vmul.f32 %v10014, 1.4142135
    %v10079 = vmul.f32 %v10015, 1.4142135
    %v10080 = vmul.f32 %v10016, 1.4142135
    %v10081 = vmul.f32 %v10017, 1.4142135
    %v10082 = vmul.f32 %v10018, 1.4142135
    %v10083 = vmul.f32 %v10019, 1.4142135
    %v10084 = vmul.f32 %v10020, 1.4142135
    %v10085 = vmul.f32 %v10021, 1.4142135
    %v10086 = vmul.f32 %v10022, 1.4142135
    %v10087 = vmul.f32 %v10023, 1.4142135
    %v10088 = vmul.f32 %v10024, 1.4142135
    %v10089 = vmul.f32 %v10025, 1.4142135
    %v10090 = vmul.f32 %v10026, 1.4142135
    %v10091 = vmul.f32 %v10027, 1.4142135
    %v10092 = vld [vmem:[%s17] sm:$0x3]
    %v10094 = vrot.slane %v10092, 1
    %v10095 = vperm.slane %v10092, 0
    %v10096 = vperm.slane %v10094, 0
    %v10099 = vmul.f32 %v10028, %v10095
    %v10100 = vmul.f32 %v10029, %v10095
    %v10101 = vmul.f32 %v10030, %v10095
    %v10102 = vmul.f32 %v10031, %v10095
    %v10103 = vmul.f32 %v10032, %v10095
    %v10104 = vmul.f32 %v10033, %v10095
    %v10105 = vmul.f32 %v10034, %v10095
    %v10106 = vmul.f32 %v10035, %v10095
    %v10107 = vmul.f32 %v10036, %v10095
    %v10108 = vmul.f32 %v10037, %v10095
    %v10109 = vmul.f32 %v10038, %v10095
    %v10110 = vmul.f32 %v10039, %v10095
    %v10111 = vmul.f32 %v10040, %v10095
    %v10112 = vmul.f32 %v10041, %v10095
    %v10113 = vmul.f32 %v10042, %v10095
    %v10114 = vmul.f32 %v10043, %v10095
    %v10115 = vmul.f32 %v10044, %v10095
    %v10116 = vmul.f32 %v10045, %v10095
    %v10117 = vmul.f32 %v10046, %v10095
    %v10118 = vmul.f32 %v10047, %v10095
    %v10119 = vmul.f32 %v10048, %v10095
    %v10120 = vmul.f32 %v10049, %v10095
    %v10121 = vmul.f32 %v10050, %v10095
    %v10122 = vmul.f32 %v10051, %v10095
    %v10123 = vmul.f32 %v10052, %v10095
    %v10124 = vmul.f32 %v10053, %v10095
    %v10125 = vmul.f32 %v10054, %v10095
    %v10126 = vmul.f32 %v10055, %v10095
    %v10127 = vmul.f32 %v10056, %v10095
    %v10128 = vmul.f32 %v10057, %v10095
    %v10129 = vmul.f32 %v10058, %v10095
    %v10130 = vmul.f32 %v10059, %v10095
    %v10131 = vmul.f32 %v10060, %v10096
    %v10132 = vmul.f32 %v10061, %v10096
    %v10133 = vmul.f32 %v10062, %v10096
    %v10134 = vmul.f32 %v10063, %v10096
    %v10135 = vmul.f32 %v10064, %v10096
    %v10136 = vmul.f32 %v10065, %v10096
    %v10137 = vmul.f32 %v10066, %v10096
    %v10138 = vmul.f32 %v10067, %v10096
    %v10139 = vmul.f32 %v10068, %v10096
    %v10140 = vmul.f32 %v10069, %v10096
    %v10141 = vmul.f32 %v10070, %v10096
    %v10142 = vmul.f32 %v10071, %v10096
    %v10143 = vmul.f32 %v10072, %v10096
    %v10144 = vmul.f32 %v10073, %v10096
    %v10145 = vmul.f32 %v10074, %v10096
    %v10146 = vmul.f32 %v10075, %v10096
    %v10147 = vmul.f32 %v10076, %v10096
    %v10148 = vmul.f32 %v10077, %v10096
    %v10149 = vmul.f32 %v10078, %v10096
    %v10150 = vmul.f32 %v10079, %v10096
    %v10151 = vmul.f32 %v10080, %v10096
    %v10152 = vmul.f32 %v10081, %v10096
    %v10153 = vmul.f32 %v10082, %v10096
    %v10154 = vmul.f32 %v10083, %v10096
    %v10155 = vmul.f32 %v10084, %v10096
    %v10156 = vmul.f32 %v10085, %v10096
    %v10157 = vmul.f32 %v10086, %v10096
    %v10158 = vmul.f32 %v10087, %v10096
    %v10159 = vmul.f32 %v10088, %v10096
    %v10160 = vmul.f32 %v10089, %v10096
    %v10161 = vmul.f32 %v10090, %v10096
    %v10162 = vmul.f32 %v10091, %v10096
    %v10163 = vpack.c.bf16 %v10099, %v10099
    %v10164 = vpack.c.bf16 %v10100, %v10100
    %v10165 = vpack.c.bf16 %v10101, %v10101
    %v10166 = vpack.c.bf16 %v10102, %v10102
    %v10167 = vpack.c.bf16 %v10103, %v10103
    %v10168 = vpack.c.bf16 %v10104, %v10104
    %v10169 = vpack.c.bf16 %v10105, %v10105
    %v10170 = vpack.c.bf16 %v10106, %v10106
    %v10171 = vpack.c.bf16 %v10107, %v10107
    %v10172 = vpack.c.bf16 %v10108, %v10108
    %v10173 = vpack.c.bf16 %v10109, %v10109
    %v10174 = vpack.c.bf16 %v10110, %v10110
    %v10175 = vpack.c.bf16 %v10111, %v10111
    %v10176 = vpack.c.bf16 %v10112, %v10112
    %v10177 = vpack.c.bf16 %v10113, %v10113
    %v10178 = vpack.c.bf16 %v10114, %v10114
    %v10179 = vpack.c.bf16 %v10115, %v10115
    %v10180 = vpack.c.bf16 %v10116, %v10116
    %v10181 = vpack.c.bf16 %v10117, %v10117
    %v10182 = vpack.c.bf16 %v10118, %v10118
    %v10183 = vpack.c.bf16 %v10119, %v10119
    %v10184 = vpack.c.bf16 %v10120, %v10120
    %v10185 = vpack.c.bf16 %v10121, %v10121
    %v10186 = vpack.c.bf16 %v10122, %v10122
    %v10187 = vpack.c.bf16 %v10123, %v10123
    %v10188 = vpack.c.bf16 %v10124, %v10124
    %v10189 = vpack.c.bf16 %v10125, %v10125
    %v10190 = vpack.c.bf16 %v10126, %v10126
    %v10191 = vpack.c.bf16 %v10127, %v10127
    %v10192 = vpack.c.bf16 %v10128, %v10128
    %v10193 = vpack.c.bf16 %v10129, %v10129
    %v10194 = vpack.c.bf16 %v10130, %v10130
    %v10195 = vpack.c.bf16 %v10131, %v10131
    %v10196 = vpack.c.bf16 %v10132, %v10132
    %v10197 = vpack.c.bf16 %v10133, %v10133
    %v10198 = vpack.c.bf16 %v10134, %v10134
    %v10199 = vpack.c.bf16 %v10135, %v10135
    %v10200 = vpack.c.bf16 %v10136, %v10136
    %v10201 = vpack.c.bf16 %v10137, %v10137
    %v10202 = vpack.c.bf16 %v10138, %v10138
    %v10203 = vpack.c.bf16 %v10139, %v10139
    %v10204 = vpack.c.bf16 %v10140, %v10140
    %v10205 = vpack.c.bf16 %v10141, %v10141
    %v10206 = vpack.c.bf16 %v10142, %v10142
    %v10207 = vpack.c.bf16 %v10143, %v10143
    %v10208 = vpack.c.bf16 %v10144, %v10144
    %v10209 = vpack.c.bf16 %v10145, %v10145
    %v10210 = vpack.c.bf16 %v10146, %v10146
    %v10211 = vpack.c.bf16 %v10147, %v10147
    %v10212 = vpack.c.bf16 %v10148, %v10148
    %v10213 = vpack.c.bf16 %v10149, %v10149
    %v10214 = vpack.c.bf16 %v10150, %v10150
    %v10215 = vpack.c.bf16 %v10151, %v10151
    %v10216 = vpack.c.bf16 %v10152, %v10152
    %v10217 = vpack.c.bf16 %v10153, %v10153
    %v10218 = vpack.c.bf16 %v10154, %v10154
    %v10219 = vpack.c.bf16 %v10155, %v10155
    %v10220 = vpack.c.bf16 %v10156, %v10156
    %v10221 = vpack.c.bf16 %v10157, %v10157
    %v10222 = vpack.c.bf16 %v10158, %v10158
    %v10223 = vpack.c.bf16 %v10159, %v10159
    %v10224 = vpack.c.bf16 %v10160, %v10160
    %v10225 = vpack.c.bf16 %v10161, %v10161
    %v10226 = vpack.c.bf16 %v10162, %v10162
    %s10227 = scalar_lea.vmem %s23, 256
    %v10228 = vld [vmem:[%s10227] sm:$0xff]
    %v10229 = vld [vmem:[%s10227 + $0x8] sm:$0xff]
    %v10230 = vld [vmem:[%s10227 + $0x10] sm:$0xff]
    %v10231 = vld [vmem:[%s10227 + $0x18] sm:$0xff]
    %v10232 = vld [vmem:[%s10227 + $0x20] sm:$0xff]
    %v10233 = vld [vmem:[%s10227 + $0x28] sm:$0xff]
    %v10234 = vld [vmem:[%s10227 + $0x30] sm:$0xff]
    %v10235 = vld [vmem:[%s10227 + $0x38] sm:$0xff]
    %v10236 = vld [vmem:[%s10227 + $0x40] sm:$0xff]
    %v10237 = vld [vmem:[%s10227 + $0x48] sm:$0xff]
    %v10238 = vld [vmem:[%s10227 + $0x50] sm:$0xff]
    %v10239 = vld [vmem:[%s10227 + $0x58] sm:$0xff]
    %v10240 = vld [vmem:[%s10227 + $0x60] sm:$0xff]
    %v10241 = vld [vmem:[%s10227 + $0x68] sm:$0xff]
    %v10242 = vld [vmem:[%s10227 + $0x70] sm:$0xff]
    %v10243 = vld [vmem:[%s10227 + $0x78] sm:$0xff]
    %v10244 = vld [vmem:[%s10227 + $0x80] sm:$0xff]
    %v10245 = vld [vmem:[%s10227 + $0x88] sm:$0xff]
    %v10246 = vld [vmem:[%s10227 + $0x90] sm:$0xff]
    %v10247 = vld [vmem:[%s10227 + $0x98] sm:$0xff]
    %v10248 = vld [vmem:[%s10227 + $0xa0] sm:$0xff]
    %v10249 = vld [vmem:[%s10227 + $0xa8] sm:$0xff]
    %v10250 = vld [vmem:[%s10227 + $0xb0] sm:$0xff]
    %v10251 = vld [vmem:[%s10227 + $0xb8] sm:$0xff]
    %v10252 = vld [vmem:[%s10227 + $0xc0] sm:$0xff]
    %v10253 = vld [vmem:[%s10227 + $0xc8] sm:$0xff]
    %v10254 = vld [vmem:[%s10227 + $0xd0] sm:$0xff]
    %v10255 = vld [vmem:[%s10227 + $0xd8] sm:$0xff]
    %v10256 = vld [vmem:[%s10227 + $0xe0] sm:$0xff]
    %v10257 = vld [vmem:[%s10227 + $0xe8] sm:$0xff]
    %v10258 = vld [vmem:[%s10227 + $0xf0] sm:$0xff]
    %v10259 = vld [vmem:[%s10227 + $0xf8] sm:$0xff]
    %v10260 = vld [vmem:[%s18] sm:$0x3]
    %v10261 = vld [vmem:[#allocation15] sm:$0x1]
    %s10262 = sld [smem:[#allocation17 + $0x4]]
    %v10327 = vunpack.c.l.b16 %v10163
    %v10328 = vunpack.c.l.b16 %v10164
    %v10329 = vunpack.c.l.b16 %v10165
    %v10330 = vunpack.c.l.b16 %v10166
    %v10331 = vunpack.c.l.b16 %v10167
    %v10332 = vunpack.c.l.b16 %v10168
    %v10333 = vunpack.c.l.b16 %v10169
    %v10334 = vunpack.c.l.b16 %v10170
    %v10335 = vunpack.c.l.b16 %v10171
    %v10336 = vunpack.c.l.b16 %v10172
    %v10337 = vunpack.c.l.b16 %v10173
    %v10338 = vunpack.c.l.b16 %v10174
    %v10339 = vunpack.c.l.b16 %v10175
    %v10340 = vunpack.c.l.b16 %v10176
    %v10341 = vunpack.c.l.b16 %v10177
    %v10342 = vunpack.c.l.b16 %v10178
    %v10343 = vunpack.c.l.b16 %v10179
    %v10344 = vunpack.c.l.b16 %v10180
    %v10345 = vunpack.c.l.b16 %v10181
    %v10346 = vunpack.c.l.b16 %v10182
    %v10347 = vunpack.c.l.b16 %v10183
    %v10348 = vunpack.c.l.b16 %v10184
    %v10349 = vunpack.c.l.b16 %v10185
    %v10350 = vunpack.c.l.b16 %v10186
    %v10351 = vunpack.c.l.b16 %v10187
    %v10352 = vunpack.c.l.b16 %v10188
    %v10353 = vunpack.c.l.b16 %v10189
    %v10354 = vunpack.c.l.b16 %v10190
    %v10355 = vunpack.c.l.b16 %v10191
    %v10356 = vunpack.c.l.b16 %v10192
    %v10357 = vunpack.c.l.b16 %v10193
    %v10358 = vunpack.c.l.b16 %v10194
    %v10359 = vunpack.c.l.b16 %v10195
    %v10360 = vunpack.c.l.b16 %v10196
    %v10361 = vunpack.c.l.b16 %v10197
    %v10362 = vunpack.c.l.b16 %v10198
    %v10363 = vunpack.c.l.b16 %v10199
    %v10364 = vunpack.c.l.b16 %v10200
    %v10365 = vunpack.c.l.b16 %v10201
    %v10366 = vunpack.c.l.b16 %v10202
    %v10367 = vunpack.c.l.b16 %v10203
    %v10368 = vunpack.c.l.b16 %v10204
    %v10369 = vunpack.c.l.b16 %v10205
    %v10370 = vunpack.c.l.b16 %v10206
    %v10371 = vunpack.c.l.b16 %v10207
    %v10372 = vunpack.c.l.b16 %v10208
    %v10373 = vunpack.c.l.b16 %v10209
    %v10374 = vunpack.c.l.b16 %v10210
    %v10375 = vunpack.c.l.b16 %v10211
    %v10376 = vunpack.c.l.b16 %v10212
    %v10377 = vunpack.c.l.b16 %v10213
    %v10378 = vunpack.c.l.b16 %v10214
    %v10379 = vunpack.c.l.b16 %v10215
    %v10380 = vunpack.c.l.b16 %v10216
    %v10381 = vunpack.c.l.b16 %v10217
    %v10382 = vunpack.c.l.b16 %v10218
    %v10383 = vunpack.c.l.b16 %v10219
    %v10384 = vunpack.c.l.b16 %v10220
    %v10385 = vunpack.c.l.b16 %v10221
    %v10386 = vunpack.c.l.b16 %v10222
    %v10387 = vunpack.c.l.b16 %v10223
    %v10388 = vunpack.c.l.b16 %v10224
    %v10389 = vunpack.c.l.b16 %v10225
    %v10390 = vunpack.c.l.b16 %v10226
    %v10391 = vpack.c.b16 %v10328, %v10327
    %v10392 = vpack.c.b16 %v10330, %v10329
    %v10393 = vpack.c.b16 %v10332, %v10331
    %v10394 = vpack.c.b16 %v10334, %v10333
    %v10395 = vpack.c.b16 %v10336, %v10335
    %v10396 = vpack.c.b16 %v10338, %v10337
    %v10397 = vpack.c.b16 %v10340, %v10339
    %v10398 = vpack.c.b16 %v10342, %v10341
    %v10399 = vpack.c.b16 %v10344, %v10343
    %v10400 = vpack.c.b16 %v10346, %v10345
    %v10401 = vpack.c.b16 %v10348, %v10347
    %v10402 = vpack.c.b16 %v10350, %v10349
    %v10403 = vpack.c.b16 %v10352, %v10351
    %v10404 = vpack.c.b16 %v10354, %v10353
    %v10405 = vpack.c.b16 %v10356, %v10355
    %v10406 = vpack.c.b16 %v10358, %v10357
    %v10407 = vpack.c.b16 %v10360, %v10359
    %v10408 = vpack.c.b16 %v10362, %v10361
    %v10409 = vpack.c.b16 %v10364, %v10363
    %v10410 = vpack.c.b16 %v10366, %v10365
    %v10411 = vpack.c.b16 %v10368, %v10367
    %v10412 = vpack.c.b16 %v10370, %v10369
    %v10413 = vpack.c.b16 %v10372, %v10371
    %v10414 = vpack.c.b16 %v10374, %v10373
    %v10415 = vpack.c.b16 %v10376, %v10375
    %v10416 = vpack.c.b16 %v10378, %v10377
    %v10417 = vpack.c.b16 %v10380, %v10379
    %v10418 = vpack.c.b16 %v10382, %v10381
    %v10419 = vpack.c.b16 %v10384, %v10383
    %v10420 = vpack.c.b16 %v10386, %v10385
    %v10421 = vpack.c.b16 %v10388, %v10387
    %v10422 = vpack.c.b16 %v10390, %v10389
    %v10424 = vshrl.u32 %v10391, 16
    %v10426 = vrot.slane %v10424, 7
    %v10427 = vshll.u32 %v10391, 16
    %v10429 = vor.u32 %v10426, %v10427
    %v10431 = vshrl.u32 %v10392, 16
    %v10433 = vrot.slane %v10431, 7
    %v10434 = vshll.u32 %v10392, 16
    %v10436 = vor.u32 %v10433, %v10434
    %v10438 = vshrl.u32 %v10393, 16
    %v10440 = vrot.slane %v10438, 7
    %v10441 = vshll.u32 %v10393, 16
    %v10443 = vor.u32 %v10440, %v10441
    %v10445 = vshrl.u32 %v10394, 16
    %v10447 = vrot.slane %v10445, 7
    %v10448 = vshll.u32 %v10394, 16
    %v10450 = vor.u32 %v10447, %v10448
    %v10452 = vshrl.u32 %v10395, 16
    %v10454 = vrot.slane %v10452, 7
    %v10455 = vshll.u32 %v10395, 16
    %v10457 = vor.u32 %v10454, %v10455
    %v10459 = vshrl.u32 %v10396, 16
    %v10461 = vrot.slane %v10459, 7
    %v10462 = vshll.u32 %v10396, 16
    %v10464 = vor.u32 %v10461, %v10462
    %v10466 = vshrl.u32 %v10397, 16
    %v10468 = vrot.slane %v10466, 7
    %v10469 = vshll.u32 %v10397, 16
    %v10471 = vor.u32 %v10468, %v10469
    %v10473 = vshrl.u32 %v10398, 16
    %v10475 = vrot.slane %v10473, 7
    %v10476 = vshll.u32 %v10398, 16
    %v10478 = vor.u32 %v10475, %v10476
    %v10480 = vshrl.u32 %v10399, 16
    %v10482 = vrot.slane %v10480, 7
    %v10483 = vshll.u32 %v10399, 16
    %v10485 = vor.u32 %v10482, %v10483
    %v10487 = vshrl.u32 %v10400, 16
    %v10489 = vrot.slane %v10487, 7
    %v10490 = vshll.u32 %v10400, 16
    %v10492 = vor.u32 %v10489, %v10490
    %v10494 = vshrl.u32 %v10401, 16
    %v10496 = vrot.slane %v10494, 7
    %v10497 = vshll.u32 %v10401, 16
    %v10499 = vor.u32 %v10496, %v10497
    %v10501 = vshrl.u32 %v10402, 16
    %v10503 = vrot.slane %v10501, 7
    %v10504 = vshll.u32 %v10402, 16
    %v10506 = vor.u32 %v10503, %v10504
    %v10508 = vshrl.u32 %v10403, 16
    %v10510 = vrot.slane %v10508, 7
    %v10511 = vshll.u32 %v10403, 16
    %v10513 = vor.u32 %v10510, %v10511
    %v10515 = vshrl.u32 %v10404, 16
    %v10517 = vrot.slane %v10515, 7
    %v10518 = vshll.u32 %v10404, 16
    %v10520 = vor.u32 %v10517, %v10518
    %v10522 = vshrl.u32 %v10405, 16
    %v10524 = vrot.slane %v10522, 7
    %v10525 = vshll.u32 %v10405, 16
    %v10527 = vor.u32 %v10524, %v10525
    %v10529 = vshrl.u32 %v10406, 16
    %v10531 = vrot.slane %v10529, 7
    %v10532 = vshll.u32 %v10406, 16
    %v10534 = vor.u32 %v10531, %v10532
    %v10536 = vshrl.u32 %v10407, 16
    %v10538 = vrot.slane %v10536, 7
    %v10539 = vshll.u32 %v10407, 16
    %v10541 = vor.u32 %v10538, %v10539
    %v10543 = vshrl.u32 %v10408, 16
    %v10545 = vrot.slane %v10543, 7
    %v10546 = vshll.u32 %v10408, 16
    %v10548 = vor.u32 %v10545, %v10546
    %v10550 = vshrl.u32 %v10409, 16
    %v10552 = vrot.slane %v10550, 7
    %v10553 = vshll.u32 %v10409, 16
    %v10555 = vor.u32 %v10552, %v10553
    %v10557 = vshrl.u32 %v10410, 16
    %v10559 = vrot.slane %v10557, 7
    %v10560 = vshll.u32 %v10410, 16
    %v10562 = vor.u32 %v10559, %v10560
    %v10564 = vshrl.u32 %v10411, 16
    %v10566 = vrot.slane %v10564, 7
    %v10567 = vshll.u32 %v10411, 16
    %v10569 = vor.u32 %v10566, %v10567
    %v10571 = vshrl.u32 %v10412, 16
    %v10573 = vrot.slane %v10571, 7
    %v10574 = vshll.u32 %v10412, 16
    %v10576 = vor.u32 %v10573, %v10574
    %v10578 = vshrl.u32 %v10413, 16
    %v10580 = vrot.slane %v10578, 7
    %v10581 = vshll.u32 %v10413, 16
    %v10583 = vor.u32 %v10580, %v10581
    %v10585 = vshrl.u32 %v10414, 16
    %v10587 = vrot.slane %v10585, 7
    %v10588 = vshll.u32 %v10414, 16
    %v10590 = vor.u32 %v10587, %v10588
    %v10592 = vshrl.u32 %v10415, 16
    %v10594 = vrot.slane %v10592, 7
    %v10595 = vshll.u32 %v10415, 16
    %v10597 = vor.u32 %v10594, %v10595
    %v10599 = vshrl.u32 %v10416, 16
    %v10601 = vrot.slane %v10599, 7
    %v10602 = vshll.u32 %v10416, 16
    %v10604 = vor.u32 %v10601, %v10602
    %v10606 = vshrl.u32 %v10417, 16
    %v10608 = vrot.slane %v10606, 7
    %v10609 = vshll.u32 %v10417, 16
    %v10611 = vor.u32 %v10608, %v10609
    %v10613 = vshrl.u32 %v10418, 16
    %v10615 = vrot.slane %v10613, 7
    %v10616 = vshll.u32 %v10418, 16
    %v10618 = vor.u32 %v10615, %v10616
    %v10620 = vshrl.u32 %v10419, 16
    %v10622 = vrot.slane %v10620, 7
    %v10623 = vshll.u32 %v10419, 16
    %v10625 = vor.u32 %v10622, %v10623
    %v10627 = vshrl.u32 %v10420, 16
    %v10629 = vrot.slane %v10627, 7
    %v10630 = vshll.u32 %v10420, 16
    %v10632 = vor.u32 %v10629, %v10630
    %v10634 = vshrl.u32 %v10421, 16
    %v10636 = vrot.slane %v10634, 7
    %v10637 = vshll.u32 %v10421, 16
    %v10639 = vor.u32 %v10636, %v10637
    %v10641 = vshrl.u32 %v10422, 16
    %v10643 = vrot.slane %v10641, 7
    %v10644 = vshll.u32 %v10422, 16
    %v10646 = vor.u32 %v10643, %v10644
    %v10711 = vsel %vm316, 0, %v10429
    %v10712 = vsel %vm316, 0, %v10436
    %v10713 = vsel %vm316, 0, %v10443
    %v10714 = vsel %vm316, 0, %v10450
    %v10715 = vsel %vm316, 0, %v10457
    %v10716 = vsel %vm316, 0, %v10464
    %v10717 = vsel %vm316, 0, %v10471
    %v10718 = vsel %vm316, 0, %v10478
    %v10719 = vsel %vm316, 0, %v10485
    %v10720 = vsel %vm316, 0, %v10492
    %v10721 = vsel %vm316, 0, %v10499
    %v10722 = vsel %vm316, 0, %v10506
    %v10723 = vsel %vm316, 0, %v10513
    %v10724 = vsel %vm316, 0, %v10520
    %v10725 = vsel %vm316, 0, %v10527
    %v10726 = vsel %vm316, 0, %v10534
    %v10727 = vsel %vm316, 0, %v10541
    %v10728 = vsel %vm316, 0, %v10548
    %v10729 = vsel %vm316, 0, %v10555
    %v10730 = vsel %vm316, 0, %v10562
    %v10731 = vsel %vm316, 0, %v10569
    %v10732 = vsel %vm316, 0, %v10576
    %v10733 = vsel %vm316, 0, %v10583
    %v10734 = vsel %vm316, 0, %v10590
    %v10735 = vsel %vm316, 0, %v10597
    %v10736 = vsel %vm316, 0, %v10604
    %v10737 = vsel %vm316, 0, %v10611
    %v10738 = vsel %vm316, 0, %v10618
    %v10739 = vsel %vm316, 0, %v10625
    %v10740 = vsel %vm316, 0, %v10632
    %v10741 = vsel %vm316, 0, %v10639
    %v10742 = vsel %vm316, 0, %v10646
    %v10743 = vsel %vm316, %v10426, 0
    %v10744 = vsel %vm316, %v10433, 0
    %v10745 = vsel %vm316, %v10440, 0
    %v10746 = vsel %vm316, %v10447, 0
    %v10747 = vsel %vm316, %v10454, 0
    %v10748 = vsel %vm316, %v10461, 0
    %v10749 = vsel %vm316, %v10468, 0
    %v10750 = vsel %vm316, %v10475, 0
    %v10751 = vsel %vm316, %v10482, 0
    %v10752 = vsel %vm316, %v10489, 0
    %v10753 = vsel %vm316, %v10496, 0
    %v10754 = vsel %vm316, %v10503, 0
    %v10755 = vsel %vm316, %v10510, 0
    %v10756 = vsel %vm316, %v10517, 0
    %v10757 = vsel %vm316, %v10524, 0
    %v10758 = vsel %vm316, %v10531, 0
    %v10759 = vsel %vm316, %v10538, 0
    %v10760 = vsel %vm316, %v10545, 0
    %v10761 = vsel %vm316, %v10552, 0
    %v10762 = vsel %vm316, %v10559, 0
    %v10763 = vsel %vm316, %v10566, 0
    %v10764 = vsel %vm316, %v10573, 0
    %v10765 = vsel %vm316, %v10580, 0
    %v10766 = vsel %vm316, %v10587, 0
    %v10767 = vsel %vm316, %v10594, 0
    %v10768 = vsel %vm316, %v10601, 0
    %v10769 = vsel %vm316, %v10608, 0
    %v10770 = vsel %vm316, %v10615, 0
    %v10771 = vsel %vm316, %v10622, 0
    %v10772 = vsel %vm316, %v10629, 0
    %v10773 = vsel %vm316, %v10636, 0
    %v10774 = vsel %vm316, %v10643, 0
    %v10776 = vshrl.u32 %v10711, 16
    %v10778 = vshll.u32 %v10711, 16
    %v10780 = vrot.slane %v10778, 1
    %v10781 = vor.u32 %v10776, %v10780
    %v10783 = vshll.u32 %v10743, 16
    %v10785 = vrot.slane %v10783, 1
    %v10786 = vsel %vm6716, %v10781, %v10785
    %v10788 = vshrl.u32 %v10712, 16
    %v10790 = vshll.u32 %v10712, 16
    %v10792 = vrot.slane %v10790, 1
    %v10793 = vor.u32 %v10788, %v10792
    %v10795 = vshll.u32 %v10744, 16
    %v10797 = vrot.slane %v10795, 1
    %v10798 = vsel %vm6716, %v10793, %v10797
    %v10800 = vshrl.u32 %v10713, 16
    %v10802 = vshll.u32 %v10713, 16
    %v10804 = vrot.slane %v10802, 1
    %v10805 = vor.u32 %v10800, %v10804
    %v10807 = vshll.u32 %v10745, 16
    %v10809 = vrot.slane %v10807, 1
    %v10810 = vsel %vm6716, %v10805, %v10809
    %v10812 = vshrl.u32 %v10714, 16
    %v10814 = vshll.u32 %v10714, 16
    %v10816 = vrot.slane %v10814, 1
    %v10817 = vor.u32 %v10812, %v10816
    %v10819 = vshll.u32 %v10746, 16
    %v10821 = vrot.slane %v10819, 1
    %v10822 = vsel %vm6716, %v10817, %v10821
    %v10824 = vshrl.u32 %v10715, 16
    %v10826 = vshll.u32 %v10715, 16
    %v10828 = vrot.slane %v10826, 1
    %v10829 = vor.u32 %v10824, %v10828
    %v10831 = vshll.u32 %v10747, 16
    %v10833 = vrot.slane %v10831, 1
    %v10834 = vsel %vm6716, %v10829, %v10833
    %v10836 = vshrl.u32 %v10716, 16
    %v10838 = vshll.u32 %v10716, 16
    %v10840 = vrot.slane %v10838, 1
    %v10841 = vor.u32 %v10836, %v10840
    %v10843 = vshll.u32 %v10748, 16
    %v10845 = vrot.slane %v10843, 1
    %v10846 = vsel %vm6716, %v10841, %v10845
    %v10848 = vshrl.u32 %v10717, 16
    %v10850 = vshll.u32 %v10717, 16
    %v10852 = vrot.slane %v10850, 1
    %v10853 = vor.u32 %v10848, %v10852
    %v10855 = vshll.u32 %v10749, 16
    %v10857 = vrot.slane %v10855, 1
    %v10858 = vsel %vm6716, %v10853, %v10857
    %v10860 = vshrl.u32 %v10718, 16
    %v10862 = vshll.u32 %v10718, 16
    %v10864 = vrot.slane %v10862, 1
    %v10865 = vor.u32 %v10860, %v10864
    %v10867 = vshll.u32 %v10750, 16
    %v10869 = vrot.slane %v10867, 1
    %v10870 = vsel %vm6716, %v10865, %v10869
    %v10872 = vshrl.u32 %v10719, 16
    %v10874 = vshll.u32 %v10719, 16
    %v10876 = vrot.slane %v10874, 1
    %v10877 = vor.u32 %v10872, %v10876
    %v10879 = vshll.u32 %v10751, 16
    %v10881 = vrot.slane %v10879, 1
    %v10882 = vsel %vm6716, %v10877, %v10881
    %v10884 = vshrl.u32 %v10720, 16
    %v10886 = vshll.u32 %v10720, 16
    %v10888 = vrot.slane %v10886, 1
    %v10889 = vor.u32 %v10884, %v10888
    %v10891 = vshll.u32 %v10752, 16
    %v10893 = vrot.slane %v10891, 1
    %v10894 = vsel %vm6716, %v10889, %v10893
    %v10896 = vshrl.u32 %v10721, 16
    %v10898 = vshll.u32 %v10721, 16
    %v10900 = vrot.slane %v10898, 1
    %v10901 = vor.u32 %v10896, %v10900
    %v10903 = vshll.u32 %v10753, 16
    %v10905 = vrot.slane %v10903, 1
    %v10906 = vsel %vm6716, %v10901, %v10905
    %v10908 = vshrl.u32 %v10722, 16
    %v10910 = vshll.u32 %v10722, 16
    %v10912 = vrot.slane %v10910, 1
    %v10913 = vor.u32 %v10908, %v10912
    %v10915 = vshll.u32 %v10754, 16
    %v10917 = vrot.slane %v10915, 1
    %v10918 = vsel %vm6716, %v10913, %v10917
    %v10920 = vshrl.u32 %v10723, 16
    %v10922 = vshll.u32 %v10723, 16
    %v10924 = vrot.slane %v10922, 1
    %v10925 = vor.u32 %v10920, %v10924
    %v10927 = vshll.u32 %v10755, 16
    %v10929 = vrot.slane %v10927, 1
    %v10930 = vsel %vm6716, %v10925, %v10929
    %v10932 = vshrl.u32 %v10724, 16
    %v10934 = vshll.u32 %v10724, 16
    %v10936 = vrot.slane %v10934, 1
    %v10937 = vor.u32 %v10932, %v10936
    %v10939 = vshll.u32 %v10756, 16
    %v10941 = vrot.slane %v10939, 1
    %v10942 = vsel %vm6716, %v10937, %v10941
    %v10944 = vshrl.u32 %v10725, 16
    %v10946 = vshll.u32 %v10725, 16
    %v10948 = vrot.slane %v10946, 1
    %v10949 = vor.u32 %v10944, %v10948
    %v10951 = vshll.u32 %v10757, 16
    %v10953 = vrot.slane %v10951, 1
    %v10954 = vsel %vm6716, %v10949, %v10953
    %v10956 = vshrl.u32 %v10727, 16
    %v10958 = vshll.u32 %v10727, 16
    %v10960 = vrot.slane %v10958, 1
    %v10961 = vor.u32 %v10956, %v10960
    %v10963 = vshll.u32 %v10759, 16
    %v10965 = vrot.slane %v10963, 1
    %v10966 = vsel %vm6716, %v10961, %v10965
    %v10968 = vshrl.u32 %v10728, 16
    %v10970 = vshll.u32 %v10728, 16
    %v10972 = vrot.slane %v10970, 1
    %v10973 = vor.u32 %v10968, %v10972
    %v10975 = vshll.u32 %v10760, 16
    %v10977 = vrot.slane %v10975, 1
    %v10978 = vsel %vm6716, %v10973, %v10977
    %v10980 = vshrl.u32 %v10729, 16
    %v10982 = vshll.u32 %v10729, 16
    %v10984 = vrot.slane %v10982, 1
    %v10985 = vor.u32 %v10980, %v10984
    %v10987 = vshll.u32 %v10761, 16
    %v10989 = vrot.slane %v10987, 1
    %v10990 = vsel %vm6716, %v10985, %v10989
    %v10992 = vshrl.u32 %v10730, 16
    %v10994 = vshll.u32 %v10730, 16
    %v10996 = vrot.slane %v10994, 1
    %v10997 = vor.u32 %v10992, %v10996
    %v10999 = vshll.u32 %v10762, 16
    %v11001 = vrot.slane %v10999, 1
    %v11002 = vsel %vm6716, %v10997, %v11001
    %v11004 = vshrl.u32 %v10731, 16
    %v11006 = vshll.u32 %v10731, 16
    %v11008 = vrot.slane %v11006, 1
    %v11009 = vor.u32 %v11004, %v11008
    %v11011 = vshll.u32 %v10763, 16
    %v11013 = vrot.slane %v11011, 1
    %v11014 = vsel %vm6716, %v11009, %v11013
    %v11016 = vshrl.u32 %v10732, 16
    %v11018 = vshll.u32 %v10732, 16
    %v11020 = vrot.slane %v11018, 1
    %v11021 = vor.u32 %v11016, %v11020
    %v11023 = vshll.u32 %v10764, 16
    %v11025 = vrot.slane %v11023, 1
    %v11026 = vsel %vm6716, %v11021, %v11025
    %v11028 = vshrl.u32 %v10733, 16
    %v11030 = vshll.u32 %v10733, 16
    %v11032 = vrot.slane %v11030, 1
    %v11033 = vor.u32 %v11028, %v11032
    %v11035 = vshll.u32 %v10765, 16
    %v11037 = vrot.slane %v11035, 1
    %v11038 = vsel %vm6716, %v11033, %v11037
    %v11040 = vshrl.u32 %v10734, 16
    %v11042 = vshll.u32 %v10734, 16
    %v11044 = vrot.slane %v11042, 1
    %v11045 = vor.u32 %v11040, %v11044
    %v11047 = vshll.u32 %v10766, 16
    %v11049 = vrot.slane %v11047, 1
    %v11050 = vsel %vm6716, %v11045, %v11049
    %v11052 = vshrl.u32 %v10735, 16
    %v11054 = vshll.u32 %v10735, 16
    %v11056 = vrot.slane %v11054, 1
    %v11057 = vor.u32 %v11052, %v11056
    %v11059 = vshll.u32 %v10767, 16
    %v11061 = vrot.slane %v11059, 1
    %v11062 = vsel %vm6716, %v11057, %v11061
    %v11064 = vshrl.u32 %v10736, 16
    %v11066 = vshll.u32 %v10736, 16
    %v11068 = vrot.slane %v11066, 1
    %v11069 = vor.u32 %v11064, %v11068
    %v11071 = vshll.u32 %v10768, 16
    %v11073 = vrot.slane %v11071, 1
    %v11074 = vsel %vm6716, %v11069, %v11073
    %v11076 = vshrl.u32 %v10737, 16
    %v11078 = vshll.u32 %v10737, 16
    %v11080 = vrot.slane %v11078, 1
    %v11081 = vor.u32 %v11076, %v11080
    %v11083 = vshll.u32 %v10769, 16
    %v11085 = vrot.slane %v11083, 1
    %v11086 = vsel %vm6716, %v11081, %v11085
    %v11088 = vshrl.u32 %v10738, 16
    %v11090 = vshll.u32 %v10738, 16
    %v11092 = vrot.slane %v11090, 1
    %v11093 = vor.u32 %v11088, %v11092
    %v11095 = vshll.u32 %v10770, 16
    %v11097 = vrot.slane %v11095, 1
    %v11098 = vsel %vm6716, %v11093, %v11097
    %v11100 = vshrl.u32 %v10739, 16
    %v11102 = vshll.u32 %v10739, 16
    %v11104 = vrot.slane %v11102, 1
    %v11105 = vor.u32 %v11100, %v11104
    %v11107 = vshll.u32 %v10771, 16
    %v11109 = vrot.slane %v11107, 1
    %v11110 = vsel %vm6716, %v11105, %v11109
    %v11112 = vshrl.u32 %v10740, 16
    %v11114 = vshll.u32 %v10740, 16
    %v11116 = vrot.slane %v11114, 1
    %v11117 = vor.u32 %v11112, %v11116
    %v11119 = vshll.u32 %v10772, 16
    %v11121 = vrot.slane %v11119, 1
    %v11122 = vsel %vm6716, %v11117, %v11121
    %v11124 = vshrl.u32 %v10741, 16
    %v11126 = vshll.u32 %v10741, 16
    %v11128 = vrot.slane %v11126, 1
    %v11129 = vor.u32 %v11124, %v11128
    %v11131 = vshll.u32 %v10773, 16
    %v11133 = vrot.slane %v11131, 1
    %v11134 = vsel %vm6716, %v11129, %v11133
    %v11225 = vrot.slane %v10711, 1
    %v11226 = vrot.slane %v10743, 1
    %v11227 = vsel %vm7182, %v11225, %v11226
    %v11228 = vrot.slane %v10712, 1
    %v11229 = vrot.slane %v10744, 1
    %v11230 = vsel %vm7182, %v11228, %v11229
    %v11231 = vrot.slane %v10713, 1
    %v11232 = vrot.slane %v10745, 1
    %v11233 = vsel %vm7182, %v11231, %v11232
    %v11234 = vrot.slane %v10714, 1
    %v11235 = vrot.slane %v10746, 1
    %v11236 = vsel %vm7182, %v11234, %v11235
    %v11237 = vrot.slane %v10715, 1
    %v11238 = vrot.slane %v10747, 1
    %v11239 = vsel %vm7182, %v11237, %v11238
    %v11240 = vrot.slane %v10716, 1
    %v11241 = vrot.slane %v10748, 1
    %v11242 = vsel %vm7182, %v11240, %v11241
    %v11243 = vrot.slane %v10717, 1
    %v11244 = vrot.slane %v10749, 1
    %v11245 = vsel %vm7182, %v11243, %v11244
    %v11246 = vrot.slane %v10718, 1
    %v11247 = vrot.slane %v10750, 1
    %v11248 = vsel %vm7182, %v11246, %v11247
    %v11249 = vrot.slane %v10719, 1
    %v11250 = vrot.slane %v10751, 1
    %v11251 = vsel %vm7182, %v11249, %v11250
    %v11252 = vrot.slane %v10720, 1
    %v11253 = vrot.slane %v10752, 1
    %v11254 = vsel %vm7182, %v11252, %v11253
    %v11255 = vrot.slane %v10721, 1
    %v11256 = vrot.slane %v10753, 1
    %v11257 = vsel %vm7182, %v11255, %v11256
    %v11258 = vrot.slane %v10722, 1
    %v11259 = vrot.slane %v10754, 1
    %v11260 = vsel %vm7182, %v11258, %v11259
    %v11261 = vrot.slane %v10723, 1
    %v11262 = vrot.slane %v10755, 1
    %v11263 = vsel %vm7182, %v11261, %v11262
    %v11264 = vrot.slane %v10724, 1
    %v11265 = vrot.slane %v10756, 1
    %v11266 = vsel %vm7182, %v11264, %v11265
    %v11267 = vrot.slane %v10725, 1
    %v11268 = vrot.slane %v10757, 1
    %v11269 = vsel %vm7182, %v11267, %v11268
    %v11270 = vrot.slane %v10727, 1
    %v11271 = vrot.slane %v10759, 1
    %v11272 = vsel %vm7182, %v11270, %v11271
    %v11273 = vrot.slane %v10728, 1
    %v11274 = vrot.slane %v10760, 1
    %v11275 = vsel %vm7182, %v11273, %v11274
    %v11276 = vrot.slane %v10729, 1
    %v11277 = vrot.slane %v10761, 1
    %v11278 = vsel %vm7182, %v11276, %v11277
    %v11279 = vrot.slane %v10730, 1
    %v11280 = vrot.slane %v10762, 1
    %v11281 = vsel %vm7182, %v11279, %v11280
    %v11282 = vrot.slane %v10731, 1
    %v11283 = vrot.slane %v10763, 1
    %v11284 = vsel %vm7182, %v11282, %v11283
    %v11285 = vrot.slane %v10732, 1
    %v11286 = vrot.slane %v10764, 1
    %v11287 = vsel %vm7182, %v11285, %v11286
    %v11288 = vrot.slane %v10733, 1
    %v11289 = vrot.slane %v10765, 1
    %v11290 = vsel %vm7182, %v11288, %v11289
    %v11291 = vrot.slane %v10734, 1
    %v11292 = vrot.slane %v10766, 1
    %v11293 = vsel %vm7182, %v11291, %v11292
    %v11294 = vrot.slane %v10735, 1
    %v11295 = vrot.slane %v10767, 1
    %v11296 = vsel %vm7182, %v11294, %v11295
    %v11297 = vrot.slane %v10736, 1
    %v11298 = vrot.slane %v10768, 1
    %v11299 = vsel %vm7182, %v11297, %v11298
    %v11300 = vrot.slane %v10737, 1
    %v11301 = vrot.slane %v10769, 1
    %v11302 = vsel %vm7182, %v11300, %v11301
    %v11303 = vrot.slane %v10738, 1
    %v11304 = vrot.slane %v10770, 1
    %v11305 = vsel %vm7182, %v11303, %v11304
    %v11306 = vrot.slane %v10739, 1
    %v11307 = vrot.slane %v10771, 1
    %v11308 = vsel %vm7182, %v11306, %v11307
    %v11309 = vrot.slane %v10740, 1
    %v11310 = vrot.slane %v10772, 1
    %v11311 = vsel %vm7182, %v11309, %v11310
    %v11312 = vrot.slane %v10741, 1
    %v11313 = vrot.slane %v10773, 1
    %v11314 = vsel %vm7182, %v11312, %v11313
    %v11346 = vshrl.u32 %v10726, 16
    %v11348 = vshll.u32 %v10726, 16
    %v11350 = vrot.slane %v11348, 1
    %v11351 = vor.u32 %v11346, %v11350
    %v11353 = vshll.u32 %v10758, 16
    %v11355 = vrot.slane %v11353, 1
    %v11356 = vsel %vm6716, %v11351, %v11355
    %v11358 = vshrl.u32 %v10742, 16
    %v11360 = vshll.u32 %v10742, 16
    %v11362 = vrot.slane %v11360, 1
    %v11363 = vor.u32 %v11358, %v11362
    %v11365 = vshll.u32 %v10774, 16
    %v11367 = vrot.slane %v11365, 1
    %v11368 = vsel %vm6716, %v11363, %v11367
    %v11375 = vrot.slane %v10726, 1
    %v11376 = vrot.slane %v10758, 1
    %v11377 = vsel %vm7182, %v11375, %v11376
    %v11378 = vrot.slane %v10742, 1
    %v11379 = vrot.slane %v10774, 1
    %v11380 = vsel %vm7182, %v11378, %v11379
    %v11383 = vld [vmem:[#allocation14] sm:$0xf]
    %v11384 = vld [vmem:[#allocation14 + $0x4] sm:$0xf]
    %v11385 = vld [vmem:[#allocation14 + $0x8] sm:$0xf]
    %v11386 = vld [vmem:[#allocation14 + $0xc] sm:$0xf]
    %v11387 = vld [vmem:[#allocation14 + $0x10] sm:$0xf]
    %v11388 = vld [vmem:[#allocation14 + $0x14] sm:$0xf]
    %v11389 = vld [vmem:[#allocation14 + $0x18] sm:$0xf]
    %v11390 = vld [vmem:[#allocation14 + $0x1c] sm:$0xf]
    %v11391 = vld [vmem:[#allocation14 + $0x20] sm:$0xf]
    %v11392 = vld [vmem:[#allocation14 + $0x24] sm:$0xf]
    %v11393 = vld [vmem:[#allocation14 + $0x28] sm:$0xf]
    %v11394 = vld [vmem:[#allocation14 + $0x2c] sm:$0xf]
    %v11395 = vld [vmem:[#allocation14 + $0x30] sm:$0xf]
    %v11396 = vld [vmem:[#allocation14 + $0x34] sm:$0xf]
    %v11397 = vld [vmem:[#allocation14 + $0x38] sm:$0xf]
    %v11398 = vld [vmem:[#allocation14 + $0x3c] sm:$0xf]
    %v11399 = vld [vmem:[#allocation14 + $0x40] sm:$0xf]
    %v11400 = vld [vmem:[#allocation14 + $0x44] sm:$0xf]
    %v11401 = vld [vmem:[#allocation14 + $0x48] sm:$0xf]
    %v11402 = vld [vmem:[#allocation14 + $0x4c] sm:$0xf]
    %v11403 = vld [vmem:[#allocation14 + $0x50] sm:$0xf]
    %v11404 = vld [vmem:[#allocation14 + $0x54] sm:$0xf]
    %v11405 = vld [vmem:[#allocation14 + $0x58] sm:$0xf]
    %v11406 = vld [vmem:[#allocation14 + $0x5c] sm:$0xf]
    %v11407 = vld [vmem:[#allocation14 + $0x60] sm:$0xf]
    %v11408 = vld [vmem:[#allocation14 + $0x64] sm:$0xf]
    %v11409 = vld [vmem:[#allocation14 + $0x68] sm:$0xf]
    %v11410 = vld [vmem:[#allocation14 + $0x6c] sm:$0xf]
    %v11411 = vld [vmem:[#allocation14 + $0x70] sm:$0xf]
    %v11412 = vld [vmem:[#allocation14 + $0x74] sm:$0xf]
    %v11413 = vld [vmem:[#allocation14 + $0x78] sm:$0xf]
    %v11414 = vld [vmem:[#allocation14 + $0x7c] sm:$0xf]
    %v11415 = vld [vmem:[#allocation14 + $0x80] sm:$0xf]
    %v11416 = vld [vmem:[#allocation14 + $0x84] sm:$0xf]
    %v11417 = vld [vmem:[#allocation14 + $0x88] sm:$0xf]
    %v11418 = vld [vmem:[#allocation14 + $0x8c] sm:$0xf]
    %v11419 = vld [vmem:[#allocation14 + $0x90] sm:$0xf]
    %v11420 = vld [vmem:[#allocation14 + $0x94] sm:$0xf]
    %v11421 = vld [vmem:[#allocation14 + $0x98] sm:$0xf]
    %v11422 = vld [vmem:[#allocation14 + $0x9c] sm:$0xf]
    %v11423 = vld [vmem:[#allocation14 + $0xa0] sm:$0xf]
    %v11424 = vld [vmem:[#allocation14 + $0xa4] sm:$0xf]
    %v11425 = vld [vmem:[#allocation14 + $0xa8] sm:$0xf]
    %v11426 = vld [vmem:[#allocation14 + $0xac] sm:$0xf]
    %v11427 = vld [vmem:[#allocation14 + $0xb0] sm:$0xf]
    %v11428 = vld [vmem:[#allocation14 + $0xb4] sm:$0xf]
    %v11429 = vld [vmem:[#allocation14 + $0xb8] sm:$0xf]
    %v11430 = vld [vmem:[#allocation14 + $0xbc] sm:$0xf]
    %v11431 = vld [vmem:[#allocation14 + $0xc0] sm:$0xf]
    %v11432 = vld [vmem:[#allocation14 + $0xc4] sm:$0xf]
    %v11433 = vld [vmem:[#allocation14 + $0xc8] sm:$0xf]
    %v11434 = vld [vmem:[#allocation14 + $0xcc] sm:$0xf]
    %v11435 = vld [vmem:[#allocation14 + $0xd0] sm:$0xf]
    %v11436 = vld [vmem:[#allocation14 + $0xd4] sm:$0xf]
    %v11437 = vld [vmem:[#allocation14 + $0xd8] sm:$0xf]
    %v11438 = vld [vmem:[#allocation14 + $0xdc] sm:$0xf]
    %v11439 = vld [vmem:[#allocation14 + $0xe0] sm:$0xf]
    %v11440 = vld [vmem:[#allocation14 + $0xe4] sm:$0xf]
    %v11441 = vld [vmem:[#allocation14 + $0xe8] sm:$0xf]
    %v11442 = vld [vmem:[#allocation14 + $0xec] sm:$0xf]
    %v11443 = vld [vmem:[#allocation14 + $0xf0] sm:$0xf]
    %v11444 = vld [vmem:[#allocation14 + $0xf4] sm:$0xf]
    %v11445 = vld [vmem:[#allocation14 + $0xf8] sm:$0xf]
    %v11446 = vld [vmem:[#allocation14 + $0xfc] sm:$0xf]
    %v11447 = vld [vmem:[#allocation14 + $0x100] sm:$0xf]
    %v11448 = vld [vmem:[#allocation14 + $0x104] sm:$0xf]
    %v11449 = vld [vmem:[#allocation14 + $0x108] sm:$0xf]
    %v11450 = vld [vmem:[#allocation14 + $0x10c] sm:$0xf]
    %v11451 = vld [vmem:[#allocation14 + $0x110] sm:$0xf]
    %v11452 = vld [vmem:[#allocation14 + $0x114] sm:$0xf]
    %v11453 = vld [vmem:[#allocation14 + $0x118] sm:$0xf]
    %v11454 = vld [vmem:[#allocation14 + $0x11c] sm:$0xf]
    %v11455 = vld [vmem:[#allocation14 + $0x120] sm:$0xf]
    %v11456 = vld [vmem:[#allocation14 + $0x124] sm:$0xf]
    %v11457 = vld [vmem:[#allocation14 + $0x128] sm:$0xf]
    %v11458 = vld [vmem:[#allocation14 + $0x12c] sm:$0xf]
    %v11459 = vld [vmem:[#allocation14 + $0x130] sm:$0xf]
    %v11460 = vld [vmem:[#allocation14 + $0x134] sm:$0xf]
    %v11461 = vld [vmem:[#allocation14 + $0x138] sm:$0xf]
    %v11462 = vld [vmem:[#allocation14 + $0x13c] sm:$0xf]
    %v11463 = vld [vmem:[#allocation14 + $0x140] sm:$0xf]
    %v11464 = vld [vmem:[#allocation14 + $0x144] sm:$0xf]
    %v11465 = vld [vmem:[#allocation14 + $0x148] sm:$0xf]
    %v11466 = vld [vmem:[#allocation14 + $0x14c] sm:$0xf]
    %v11467 = vld [vmem:[#allocation14 + $0x150] sm:$0xf]
    %v11468 = vld [vmem:[#allocation14 + $0x154] sm:$0xf]
    %v11469 = vld [vmem:[#allocation14 + $0x158] sm:$0xf]
    %v11470 = vld [vmem:[#allocation14 + $0x15c] sm:$0xf]
    %v11471 = vld [vmem:[#allocation14 + $0x160] sm:$0xf]
    %v11472 = vld [vmem:[#allocation14 + $0x164] sm:$0xf]
    %v11473 = vld [vmem:[#allocation14 + $0x168] sm:$0xf]
    %v11474 = vld [vmem:[#allocation14 + $0x16c] sm:$0xf]
    %v11475 = vld [vmem:[#allocation14 + $0x170] sm:$0xf]
    %v11476 = vld [vmem:[#allocation14 + $0x174] sm:$0xf]
    %v11477 = vld [vmem:[#allocation14 + $0x178] sm:$0xf]
    %v11478 = vld [vmem:[#allocation14 + $0x17c] sm:$0xf]
    %v11479 = vld [vmem:[#allocation14 + $0x180] sm:$0xf]
    %v11480 = vld [vmem:[#allocation14 + $0x184] sm:$0xf]
    %v11481 = vld [vmem:[#allocation14 + $0x188] sm:$0xf]
    %v11482 = vld [vmem:[#allocation14 + $0x18c] sm:$0xf]
    %v11483 = vld [vmem:[#allocation14 + $0x190] sm:$0xf]
    %v11484 = vld [vmem:[#allocation14 + $0x194] sm:$0xf]
    %v11485 = vld [vmem:[#allocation14 + $0x198] sm:$0xf]
    %v11486 = vld [vmem:[#allocation14 + $0x19c] sm:$0xf]
    %v11487 = vld [vmem:[#allocation14 + $0x1a0] sm:$0xf]
    %v11488 = vld [vmem:[#allocation14 + $0x1a4] sm:$0xf]
    %v11489 = vld [vmem:[#allocation14 + $0x1a8] sm:$0xf]
    %v11490 = vld [vmem:[#allocation14 + $0x1ac] sm:$0xf]
    %v11491 = vld [vmem:[#allocation14 + $0x1b0] sm:$0xf]
    %v11492 = vld [vmem:[#allocation14 + $0x1b4] sm:$0xf]
    %v11493 = vld [vmem:[#allocation14 + $0x1b8] sm:$0xf]
    %v11494 = vld [vmem:[#allocation14 + $0x1bc] sm:$0xf]
    %v11495 = vld [vmem:[#allocation14 + $0x1c0] sm:$0xf]
    %v11496 = vld [vmem:[#allocation14 + $0x1c4] sm:$0xf]
    %v11497 = vld [vmem:[#allocation14 + $0x1c8] sm:$0xf]
    %v11498 = vld [vmem:[#allocation14 + $0x1cc] sm:$0xf]
    %v11499 = vld [vmem:[#allocation14 + $0x1d0] sm:$0xf]
    %v11500 = vld [vmem:[#allocation14 + $0x1d4] sm:$0xf]
    %v11501 = vld [vmem:[#allocation14 + $0x1d8] sm:$0xf]
    %v11502 = vld [vmem:[#allocation14 + $0x1dc] sm:$0xf]
    %v11503 = vld [vmem:[#allocation14 + $0x1e0] sm:$0xf]
    %v11504 = vld [vmem:[#allocation14 + $0x1e4] sm:$0xf]
    %v11505 = vld [vmem:[#allocation14 + $0x1e8] sm:$0xf]
    %v11506 = vld [vmem:[#allocation14 + $0x1ec] sm:$0xf]
    %v11507 = vld [vmem:[#allocation14 + $0x1f0] sm:$0xf]
    %v11508 = vld [vmem:[#allocation14 + $0x1f4] sm:$0xf]
    %v11509 = vld [vmem:[#allocation14 + $0x1f8] sm:$0xf]
    %v11510 = vld [vmem:[#allocation14 + $0x1fc] sm:$0xf]
    %v11511 = vld [vmem:[#allocation14 + $0x200] sm:$0xf]
    %v11512 = vld [vmem:[#allocation14 + $0x204] sm:$0xf]
    %v11513 = vld [vmem:[#allocation14 + $0x208] sm:$0xf]
    %v11514 = vld [vmem:[#allocation14 + $0x20c] sm:$0xf]
    %v11515 = vld [vmem:[#allocation14 + $0x210] sm:$0xf]
    %v11516 = vld [vmem:[#allocation14 + $0x214] sm:$0xf]
    %v11517 = vld [vmem:[#allocation14 + $0x218] sm:$0xf]
    %v11518 = vld [vmem:[#allocation14 + $0x21c] sm:$0xf]
    %v11519 = vld [vmem:[#allocation14 + $0x220] sm:$0xf]
    %v11520 = vld [vmem:[#allocation14 + $0x224] sm:$0xf]
    %v11521 = vld [vmem:[#allocation14 + $0x228] sm:$0xf]
    %v11522 = vld [vmem:[#allocation14 + $0x22c] sm:$0xf]
    %v11523 = vld [vmem:[#allocation14 + $0x230] sm:$0xf]
    %v11524 = vld [vmem:[#allocation14 + $0x234] sm:$0xf]
    %v11525 = vld [vmem:[#allocation14 + $0x238] sm:$0xf]
    %v11526 = vld [vmem:[#allocation14 + $0x23c] sm:$0xf]
    %v11671 = vunpack.c.l.b16 %v11383
    %v11672 = vunpack.c.l.b16 %v11384
    %v11673 = vunpack.c.l.b16 %v11385
    %v11674 = vunpack.c.l.b16 %v11386
    %v11675 = vunpack.c.l.b16 %v11387
    %v11676 = vunpack.c.l.b16 %v11388
    %v11677 = vunpack.c.l.b16 %v11389
    %v11678 = vunpack.c.l.b16 %v11390
    %v11679 = vunpack.c.l.b16 %v11391
    %v11680 = vunpack.c.l.b16 %v11392
    %v11681 = vunpack.c.l.b16 %v11393
    %v11682 = vunpack.c.l.b16 %v11394
    %v11683 = vunpack.c.l.b16 %v11395
    %v11684 = vunpack.c.l.b16 %v11396
    %v11685 = vunpack.c.l.b16 %v11397
    %v11686 = vunpack.c.l.b16 %v11398
    %v11687 = vunpack.c.l.b16 %v11399
    %v11688 = vunpack.c.l.b16 %v11400
    %v11689 = vunpack.c.l.b16 %v11401
    %v11690 = vunpack.c.l.b16 %v11402
    %v11691 = vunpack.c.l.b16 %v11403
    %v11692 = vunpack.c.l.b16 %v11404
    %v11693 = vunpack.c.l.b16 %v11405
    %v11694 = vunpack.c.l.b16 %v11406
    %v11695 = vunpack.c.l.b16 %v11407
    %v11696 = vunpack.c.l.b16 %v11408
    %v11697 = vunpack.c.l.b16 %v11409
    %v11698 = vunpack.c.l.b16 %v11410
    %v11699 = vunpack.c.l.b16 %v11411
    %v11700 = vunpack.c.l.b16 %v11412
    %v11701 = vunpack.c.l.b16 %v11413
    %v11702 = vunpack.c.l.b16 %v11414
    %v11703 = vunpack.c.l.b16 %v11415
    %v11704 = vunpack.c.l.b16 %v11416
    %v11705 = vunpack.c.l.b16 %v11417
    %v11706 = vunpack.c.l.b16 %v11418
    %v11707 = vunpack.c.l.b16 %v11419
    %v11708 = vunpack.c.l.b16 %v11420
    %v11709 = vunpack.c.l.b16 %v11421
    %v11710 = vunpack.c.l.b16 %v11422
    %v11711 = vunpack.c.l.b16 %v11423
    %v11712 = vunpack.c.l.b16 %v11424
    %v11713 = vunpack.c.l.b16 %v11425
    %v11714 = vunpack.c.l.b16 %v11426
    %v11715 = vunpack.c.l.b16 %v11427
    %v11716 = vunpack.c.l.b16 %v11428
    %v11717 = vunpack.c.l.b16 %v11429
    %v11718 = vunpack.c.l.b16 %v11430
    %v11719 = vunpack.c.l.b16 %v11431
    %v11720 = vunpack.c.l.b16 %v11432
    %v11721 = vunpack.c.l.b16 %v11433
    %v11722 = vunpack.c.l.b16 %v11434
    %v11723 = vunpack.c.l.b16 %v11435
    %v11724 = vunpack.c.l.b16 %v11436
    %v11725 = vunpack.c.l.b16 %v11437
    %v11726 = vunpack.c.l.b16 %v11438
    %v11727 = vunpack.c.l.b16 %v11439
    %v11728 = vunpack.c.l.b16 %v11440
    %v11729 = vunpack.c.l.b16 %v11441
    %v11730 = vunpack.c.l.b16 %v11442
    %v11731 = vunpack.c.l.b16 %v11443
    %v11732 = vunpack.c.l.b16 %v11444
    %v11733 = vunpack.c.l.b16 %v11445
    %v11734 = vunpack.c.l.b16 %v11446
    %v11735 = vunpack.c.l.b16 %v11447
    %v11736 = vunpack.c.l.b16 %v11448
    %v11737 = vunpack.c.l.b16 %v11449
    %v11738 = vunpack.c.l.b16 %v11450
    %v11739 = vunpack.c.l.b16 %v11451
    %v11740 = vunpack.c.l.b16 %v11452
    %v11741 = vunpack.c.l.b16 %v11453
    %v11742 = vunpack.c.l.b16 %v11454
    %v11743 = vunpack.c.l.b16 %v11455
    %v11744 = vunpack.c.l.b16 %v11456
    %v11745 = vunpack.c.l.b16 %v11457
    %v11746 = vunpack.c.l.b16 %v11458
    %v11747 = vunpack.c.l.b16 %v11459
    %v11748 = vunpack.c.l.b16 %v11460
    %v11749 = vunpack.c.l.b16 %v11461
    %v11750 = vunpack.c.l.b16 %v11462
    %v11751 = vunpack.c.l.b16 %v11463
    %v11752 = vunpack.c.l.b16 %v11464
    %v11753 = vunpack.c.l.b16 %v11465
    %v11754 = vunpack.c.l.b16 %v11466
    %v11755 = vunpack.c.l.b16 %v11467
    %v11756 = vunpack.c.l.b16 %v11468
    %v11757 = vunpack.c.l.b16 %v11469
    %v11758 = vunpack.c.l.b16 %v11470
    %v11759 = vunpack.c.l.b16 %v11471
    %v11760 = vunpack.c.l.b16 %v11472
    %v11761 = vunpack.c.l.b16 %v11473
    %v11762 = vunpack.c.l.b16 %v11474
    %v11763 = vunpack.c.l.b16 %v11475
    %v11764 = vunpack.c.l.b16 %v11476
    %v11765 = vunpack.c.l.b16 %v11477
    %v11766 = vunpack.c.l.b16 %v11478
    %v11767 = vunpack.c.l.b16 %v11479
    %v11768 = vunpack.c.l.b16 %v11480
    %v11769 = vunpack.c.l.b16 %v11481
    %v11770 = vunpack.c.l.b16 %v11482
    %v11771 = vunpack.c.l.b16 %v11483
    %v11772 = vunpack.c.l.b16 %v11484
    %v11773 = vunpack.c.l.b16 %v11485
    %v11774 = vunpack.c.l.b16 %v11486
    %v11775 = vunpack.c.l.b16 %v11487
    %v11776 = vunpack.c.l.b16 %v11488
    %v11777 = vunpack.c.l.b16 %v11489
    %v11778 = vunpack.c.l.b16 %v11490
    %v11779 = vunpack.c.l.b16 %v11491
    %v11780 = vunpack.c.l.b16 %v11492
    %v11781 = vunpack.c.l.b16 %v11493
    %v11782 = vunpack.c.l.b16 %v11494
    %v11783 = vunpack.c.l.b16 %v11495
    %v11784 = vunpack.c.l.b16 %v11496
    %v11785 = vunpack.c.l.b16 %v11497
    %v11786 = vunpack.c.l.b16 %v11498
    %v11787 = vunpack.c.l.b16 %v11499
    %v11788 = vunpack.c.l.b16 %v11500
    %v11789 = vunpack.c.l.b16 %v11501
    %v11790 = vunpack.c.l.b16 %v11502
    %v11791 = vunpack.c.l.b16 %v11503
    %v11792 = vunpack.c.l.b16 %v11504
    %v11793 = vunpack.c.l.b16 %v11505
    %v11794 = vunpack.c.l.b16 %v11506
    %v11795 = vunpack.c.l.b16 %v11507
    %v11796 = vunpack.c.l.b16 %v11508
    %v11797 = vunpack.c.l.b16 %v11509
    %v11798 = vunpack.c.l.b16 %v11510
    %v11799 = vunpack.c.l.b16 %v11511
    %v11800 = vunpack.c.l.b16 %v11512
    %v11801 = vunpack.c.l.b16 %v11513
    %v11802 = vunpack.c.l.b16 %v11514
    %v11803 = vunpack.c.l.b16 %v11515
    %v11804 = vunpack.c.l.b16 %v11516
    %v11805 = vunpack.c.l.b16 %v11517
    %v11806 = vunpack.c.l.b16 %v11518
    %v11807 = vunpack.c.l.b16 %v11519
    %v11808 = vunpack.c.l.b16 %v11520
    %v11809 = vunpack.c.l.b16 %v11521
    %v11810 = vunpack.c.l.b16 %v11522
    %v11811 = vunpack.c.l.b16 %v11523
    %v11812 = vunpack.c.l.b16 %v11524
    %v11813 = vunpack.c.l.b16 %v11525
    %v11814 = vunpack.c.l.b16 %v11526
    %v11815 = vpack.c.b16 %v11672, %v11671
    %v11816 = vpack.c.b16 %v11674, %v11673
    %v11817 = vpack.c.b16 %v11676, %v11675
    %v11818 = vpack.c.b16 %v11678, %v11677
    %v11819 = vpack.c.b16 %v11680, %v11679
    %v11820 = vpack.c.b16 %v11682, %v11681
    %v11821 = vpack.c.b16 %v11684, %v11683
    %v11822 = vpack.c.b16 %v11686, %v11685
    %v11823 = vpack.c.b16 %v11688, %v11687
    %v11824 = vpack.c.b16 %v11690, %v11689
    %v11825 = vpack.c.b16 %v11692, %v11691
    %v11826 = vpack.c.b16 %v11694, %v11693
    %v11827 = vpack.c.b16 %v11696, %v11695
    %v11828 = vpack.c.b16 %v11698, %v11697
    %v11829 = vpack.c.b16 %v11700, %v11699
    %v11830 = vpack.c.b16 %v11702, %v11701
    %v11831 = vpack.c.b16 %v11704, %v11703
    %v11832 = vpack.c.b16 %v11706, %v11705
    %v11833 = vpack.c.b16 %v11708, %v11707
    %v11834 = vpack.c.b16 %v11710, %v11709
    %v11835 = vpack.c.b16 %v11712, %v11711
    %v11836 = vpack.c.b16 %v11714, %v11713
    %v11837 = vpack.c.b16 %v11716, %v11715
    %v11838 = vpack.c.b16 %v11718, %v11717
    %v11839 = vpack.c.b16 %v11720, %v11719
    %v11840 = vpack.c.b16 %v11722, %v11721
    %v11841 = vpack.c.b16 %v11724, %v11723
    %v11842 = vpack.c.b16 %v11726, %v11725
    %v11843 = vpack.c.b16 %v11728, %v11727
    %v11844 = vpack.c.b16 %v11730, %v11729
    %v11845 = vpack.c.b16 %v11732, %v11731
    %v11846 = vpack.c.b16 %v11734, %v11733
    %v11847 = vpack.c.b16 %v11736, %v11735
    %v11848 = vpack.c.b16 %v11738, %v11737
    %v11849 = vpack.c.b16 %v11740, %v11739
    %v11850 = vpack.c.b16 %v11742, %v11741
    %v11851 = vpack.c.b16 %v11744, %v11743
    %v11852 = vpack.c.b16 %v11746, %v11745
    %v11853 = vpack.c.b16 %v11748, %v11747
    %v11854 = vpack.c.b16 %v11750, %v11749
    %v11855 = vpack.c.b16 %v11752, %v11751
    %v11856 = vpack.c.b16 %v11754, %v11753
    %v11857 = vpack.c.b16 %v11756, %v11755
    %v11858 = vpack.c.b16 %v11758, %v11757
    %v11859 = vpack.c.b16 %v11760, %v11759
    %v11860 = vpack.c.b16 %v11762, %v11761
    %v11861 = vpack.c.b16 %v11764, %v11763
    %v11862 = vpack.c.b16 %v11766, %v11765
    %v11863 = vpack.c.b16 %v11768, %v11767
    %v11864 = vpack.c.b16 %v11770, %v11769
    %v11865 = vpack.c.b16 %v11772, %v11771
    %v11866 = vpack.c.b16 %v11774, %v11773
    %v11867 = vpack.c.b16 %v11776, %v11775
    %v11868 = vpack.c.b16 %v11778, %v11777
    %v11869 = vpack.c.b16 %v11780, %v11779
    %v11870 = vpack.c.b16 %v11782, %v11781
    %v11871 = vpack.c.b16 %v11784, %v11783
    %v11872 = vpack.c.b16 %v11786, %v11785
    %v11873 = vpack.c.b16 %v11788, %v11787
    %v11874 = vpack.c.b16 %v11790, %v11789
    %v11875 = vpack.c.b16 %v11792, %v11791
    %v11876 = vpack.c.b16 %v11794, %v11793
    %v11877 = vpack.c.b16 %v11796, %v11795
    %v11878 = vpack.c.b16 %v11798, %v11797
    %v11879 = vpack.c.b16 %v11800, %v11799
    %v11880 = vpack.c.b16 %v11802, %v11801
    %v11881 = vpack.c.b16 %v11804, %v11803
    %v11882 = vpack.c.b16 %v11806, %v11805
    %v11883 = vpack.c.b16 %v11808, %v11807
    %v11884 = vpack.c.b16 %v11810, %v11809
    %v11885 = vpack.c.b16 %v11812, %v11811
    %v11886 = vpack.c.b16 %v11814, %v11813
    %11959 = vmatpush.bf16.msra.mxu0 %v11822
    %11960 = vmatpush.bf16.msra.mxu0 %v11821
    %11961 = vmatpush.bf16.msra.mxu0 %v11820
    %11962 = vmatpush.bf16.msra.mxu0 %v11819
    %11963 = vmatpush.bf16.msra.mxu0 %v11818
    %11964 = vmatpush.bf16.msra.mxu0 %v11817
    %11965 = vmatpush.bf16.msra.mxu0 %v11816
    %11966 = vmatpush.bf16.msra.mxu0 %v11815
    %11967 = vmatmul.bf16.gmra.mxu0 %v317
    %v11968 = vpop.f32.mrf.mxu0
    %v11969 = vadd.f32 0.0, %v11968
    %v11970 = vpop.f32.mrf.mxu0
    %v11971 = vadd.f32 0.0, %v11970
    %11972 = vmatmul.bf16.gmra.mxu0 %v10711
    %v11973 = vpop.f32.mrf.mxu0
    %v11974 = vadd.f32 0.0, %v11973
    %v11975 = vpop.f32.mrf.mxu0
    %v11976 = vadd.f32 0.0, %v11975
    %11977 = vmatmul.bf16.gmra.mxu0 %v10712
    %v11978 = vpop.f32.mrf.mxu0
    %v11979 = vadd.f32 0.0, %v11978
    %v11980 = vpop.f32.mrf.mxu0
    %v11981 = vadd.f32 0.0, %v11980
    %11982 = vmatmul.bf16.gmra.mxu0 %v10713
    %v11983 = vpop.f32.mrf.mxu0
    %v11984 = vadd.f32 0.0, %v11983
    %v11985 = vpop.f32.mrf.mxu0
    %v11986 = vadd.f32 0.0, %v11985
    %11987 = vmatmul.bf16.gmra.mxu0 %v10714
    %v11988 = vpop.f32.mrf.mxu0
    %v11989 = vadd.f32 0.0, %v11988
    %v11990 = vpop.f32.mrf.mxu0
    %v11991 = vadd.f32 0.0, %v11990
    %11992 = vmatmul.bf16.gmra.mxu0 %v10715
    %v11993 = vpop.f32.mrf.mxu0
    %v11994 = vadd.f32 0.0, %v11993
    %v11995 = vpop.f32.mrf.mxu0
    %v11996 = vadd.f32 0.0, %v11995
    %11997 = vmatmul.bf16.gmra.mxu0 %v10716
    %v11998 = vpop.f32.mrf.mxu0
    %v11999 = vadd.f32 0.0, %v11998
    %v12000 = vpop.f32.mrf.mxu0
    %v12001 = vadd.f32 0.0, %v12000
    %12002 = vmatmul.bf16.gmra.mxu0 %v10717
    %v12003 = vpop.f32.mrf.mxu0
    %v12004 = vadd.f32 0.0, %v12003
    %v12005 = vpop.f32.mrf.mxu0
    %v12006 = vadd.f32 0.0, %v12005
    %12007 = vmatmul.bf16.gmra.mxu0 %v10718
    %v12008 = vpop.f32.mrf.mxu0
    %v12009 = vadd.f32 0.0, %v12008
    %v12010 = vpop.f32.mrf.mxu0
    %v12011 = vadd.f32 0.0, %v12010
    %12012 = vmatmul.bf16.gmra.mxu0 %v10719
    %v12013 = vpop.f32.mrf.mxu0
    %v12014 = vadd.f32 0.0, %v12013
    %v12015 = vpop.f32.mrf.mxu0
    %v12016 = vadd.f32 0.0, %v12015
    %12017 = vmatmul.bf16.gmra.mxu0 %v10720
    %v12018 = vpop.f32.mrf.mxu0
    %v12019 = vadd.f32 0.0, %v12018
    %v12020 = vpop.f32.mrf.mxu0
    %v12021 = vadd.f32 0.0, %v12020
    %12022 = vmatmul.bf16.gmra.mxu0 %v10721
    %v12023 = vpop.f32.mrf.mxu0
    %v12024 = vadd.f32 0.0, %v12023
    %v12025 = vpop.f32.mrf.mxu0
    %v12026 = vadd.f32 0.0, %v12025
    %12027 = vmatmul.bf16.gmra.mxu0 %v10722
    %v12028 = vpop.f32.mrf.mxu0
    %v12029 = vadd.f32 0.0, %v12028
    %v12030 = vpop.f32.mrf.mxu0
    %v12031 = vadd.f32 0.0, %v12030
    %12032 = vmatmul.bf16.gmra.mxu0 %v10723
    %v12033 = vpop.f32.mrf.mxu0
    %v12034 = vadd.f32 0.0, %v12033
    %v12035 = vpop.f32.mrf.mxu0
    %v12036 = vadd.f32 0.0, %v12035
    %12037 = vmatmul.bf16.gmra.mxu0 %v10724
    %v12038 = vpop.f32.mrf.mxu0
    %v12039 = vadd.f32 0.0, %v12038
    %v12040 = vpop.f32.mrf.mxu0
    %v12041 = vadd.f32 0.0, %v12040
    %12042 = vmatmul.bf16.gmra.mxu0 %v10725
    %v12043 = vpop.f32.mrf.mxu0
    %v12044 = vadd.f32 0.0, %v12043
    %v12045 = vpop.f32.mrf.mxu0
    %v12046 = vadd.f32 0.0, %v12045
    %12047 = vmatmul.bf16.gmra.mxu0 %v317
    %v12048 = vpop.f32.mrf.mxu0
    %v12049 = vadd.f32 0.0, %v12048
    %v12050 = vpop.f32.mrf.mxu0
    %v12051 = vadd.f32 0.0, %v12050
    %12052 = vmatmul.bf16.gmra.mxu0 %v10727
    %v12053 = vpop.f32.mrf.mxu0
    %v12054 = vadd.f32 0.0, %v12053
    %v12055 = vpop.f32.mrf.mxu0
    %v12056 = vadd.f32 0.0, %v12055
    %12057 = vmatmul.bf16.gmra.mxu0 %v10728
    %v12058 = vpop.f32.mrf.mxu0
    %v12059 = vadd.f32 0.0, %v12058
    %v12060 = vpop.f32.mrf.mxu0
    %v12061 = vadd.f32 0.0, %v12060
    %12062 = vmatmul.bf16.gmra.mxu0 %v10729
    %v12063 = vpop.f32.mrf.mxu0
    %v12064 = vadd.f32 0.0, %v12063
    %v12065 = vpop.f32.mrf.mxu0
    %v12066 = vadd.f32 0.0, %v12065
    %12067 = vmatmul.bf16.gmra.mxu0 %v10730
    %v12068 = vpop.f32.mrf.mxu0
    %v12069 = vadd.f32 0.0, %v12068
    %v12070 = vpop.f32.mrf.mxu0
    %v12071 = vadd.f32 0.0, %v12070
    %12072 = vmatmul.bf16.gmra.mxu0 %v10731
    %v12073 = vpop.f32.mrf.mxu0
    %v12074 = vadd.f32 0.0, %v12073
    %v12075 = vpop.f32.mrf.mxu0
    %v12076 = vadd.f32 0.0, %v12075
    %12077 = vmatmul.bf16.gmra.mxu0 %v10732
    %v12078 = vpop.f32.mrf.mxu0
    %v12079 = vadd.f32 0.0, %v12078
    %v12080 = vpop.f32.mrf.mxu0
    %v12081 = vadd.f32 0.0, %v12080
    %12082 = vmatmul.bf16.gmra.mxu0 %v10733
    %v12083 = vpop.f32.mrf.mxu0
    %v12084 = vadd.f32 0.0, %v12083
    %v12085 = vpop.f32.mrf.mxu0
    %v12086 = vadd.f32 0.0, %v12085
    %12087 = vmatmul.bf16.gmra.mxu0 %v10734
    %v12088 = vpop.f32.mrf.mxu0
    %v12089 = vadd.f32 0.0, %v12088
    %v12090 = vpop.f32.mrf.mxu0
    %v12091 = vadd.f32 0.0, %v12090
    %12092 = vmatmul.bf16.gmra.mxu0 %v10735
    %v12093 = vpop.f32.mrf.mxu0
    %v12094 = vadd.f32 0.0, %v12093
    %v12095 = vpop.f32.mrf.mxu0
    %v12096 = vadd.f32 0.0, %v12095
    %12097 = vmatmul.bf16.gmra.mxu0 %v10736
    %v12098 = vpop.f32.mrf.mxu0
    %v12099 = vadd.f32 0.0, %v12098
    %v12100 = vpop.f32.mrf.mxu0
    %v12101 = vadd.f32 0.0, %v12100
    %12102 = vmatmul.bf16.gmra.mxu0 %v10737
    %v12103 = vpop.f32.mrf.mxu0
    %v12104 = vadd.f32 0.0, %v12103
    %v12105 = vpop.f32.mrf.mxu0
    %v12106 = vadd.f32 0.0, %v12105
    %12107 = vmatmul.bf16.gmra.mxu0 %v10738
    %v12108 = vpop.f32.mrf.mxu0
    %v12109 = vadd.f32 0.0, %v12108
    %v12110 = vpop.f32.mrf.mxu0
    %v12111 = vadd.f32 0.0, %v12110
    %12112 = vmatmul.bf16.gmra.mxu0 %v10739
    %v12113 = vpop.f32.mrf.mxu0
    %v12114 = vadd.f32 0.0, %v12113
    %v12115 = vpop.f32.mrf.mxu0
    %v12116 = vadd.f32 0.0, %v12115
    %12117 = vmatmul.bf16.gmra.mxu0 %v10740
    %v12118 = vpop.f32.mrf.mxu0
    %v12119 = vadd.f32 0.0, %v12118
    %v12120 = vpop.f32.mrf.mxu0
    %v12121 = vadd.f32 0.0, %v12120
    %12122 = vmatmul.bf16.gmra.mxu0 %v10741
    %v12123 = vpop.f32.mrf.mxu0
    %v12124 = vadd.f32 0.0, %v12123
    %v12125 = vpop.f32.mrf.mxu0
    %v12126 = vadd.f32 0.0, %v12125
    %12127 = vdwg.mxu0
    %12128 = vmatpush.bf16.msra.mxu0 %v11830
    %12129 = vmatpush.bf16.msra.mxu0 %v11829
    %12130 = vmatpush.bf16.msra.mxu0 %v11828
    %12131 = vmatpush.bf16.msra.mxu0 %v11827
    %12132 = vmatpush.bf16.msra.mxu0 %v11826
    %12133 = vmatpush.bf16.msra.mxu0 %v11825
    %12134 = vmatpush.bf16.msra.mxu0 %v11824
    %12135 = vmatpush.bf16.msra.mxu0 %v11823
    %12136 = vmatmul.bf16.gmra.mxu0 %v6728
    %v12137 = vpop.f32.mrf.mxu0
    %v12138 = vadd.f32 %v11969, %v12137
    %v12139 = vpop.f32.mrf.mxu0
    %v12140 = vadd.f32 %v11971, %v12139
    %12141 = vmatmul.bf16.gmra.mxu0 %v10786
    %v12142 = vpop.f32.mrf.mxu0
    %v12143 = vadd.f32 %v11974, %v12142
    %v12144 = vpop.f32.mrf.mxu0
    %v12145 = vadd.f32 %v11976, %v12144
    %12146 = vmatmul.bf16.gmra.mxu0 %v10798
    %v12147 = vpop.f32.mrf.mxu0
    %v12148 = vadd.f32 %v11979, %v12147
    %v12149 = vpop.f32.mrf.mxu0
    %v12150 = vadd.f32 %v11981, %v12149
    %12151 = vmatmul.bf16.gmra.mxu0 %v10810
    %v12152 = vpop.f32.mrf.mxu0
    %v12153 = vadd.f32 %v11984, %v12152
    %v12154 = vpop.f32.mrf.mxu0
    %v12155 = vadd.f32 %v11986, %v12154
    %12156 = vmatmul.bf16.gmra.mxu0 %v10822
    %v12157 = vpop.f32.mrf.mxu0
    %v12158 = vadd.f32 %v11989, %v12157
    %v12159 = vpop.f32.mrf.mxu0
    %v12160 = vadd.f32 %v11991, %v12159
    %12161 = vmatmul.bf16.gmra.mxu0 %v10834
    %v12162 = vpop.f32.mrf.mxu0
    %v12163 = vadd.f32 %v11994, %v12162
    %v12164 = vpop.f32.mrf.mxu0
    %v12165 = vadd.f32 %v11996, %v12164
    %12166 = vmatmul.bf16.gmra.mxu0 %v10846
    %v12167 = vpop.f32.mrf.mxu0
    %v12168 = vadd.f32 %v11999, %v12167
    %v12169 = vpop.f32.mrf.mxu0
    %v12170 = vadd.f32 %v12001, %v12169
    %12171 = vmatmul.bf16.gmra.mxu0 %v10858
    %v12172 = vpop.f32.mrf.mxu0
    %v12173 = vadd.f32 %v12004, %v12172
    %v12174 = vpop.f32.mrf.mxu0
    %v12175 = vadd.f32 %v12006, %v12174
    %12176 = vmatmul.bf16.gmra.mxu0 %v10870
    %v12177 = vpop.f32.mrf.mxu0
    %v12178 = vadd.f32 %v12009, %v12177
    %v12179 = vpop.f32.mrf.mxu0
    %v12180 = vadd.f32 %v12011, %v12179
    %12181 = vmatmul.bf16.gmra.mxu0 %v10882
    %v12182 = vpop.f32.mrf.mxu0
    %v12183 = vadd.f32 %v12014, %v12182
    %v12184 = vpop.f32.mrf.mxu0
    %v12185 = vadd.f32 %v12016, %v12184
    %12186 = vmatmul.bf16.gmra.mxu0 %v10894
    %v12187 = vpop.f32.mrf.mxu0
    %v12188 = vadd.f32 %v12019, %v12187
    %v12189 = vpop.f32.mrf.mxu0
    %v12190 = vadd.f32 %v12021, %v12189
    %12191 = vmatmul.bf16.gmra.mxu0 %v10906
    %v12192 = vpop.f32.mrf.mxu0
    %v12193 = vadd.f32 %v12024, %v12192
    %v12194 = vpop.f32.mrf.mxu0
    %v12195 = vadd.f32 %v12026, %v12194
    %12196 = vmatmul.bf16.gmra.mxu0 %v10918
    %v12197 = vpop.f32.mrf.mxu0
    %v12198 = vadd.f32 %v12029, %v12197
    %v12199 = vpop.f32.mrf.mxu0
    %v12200 = vadd.f32 %v12031, %v12199
    %12201 = vmatmul.bf16.gmra.mxu0 %v10930
    %v12202 = vpop.f32.mrf.mxu0
    %v12203 = vadd.f32 %v12034, %v12202
    %v12204 = vpop.f32.mrf.mxu0
    %v12205 = vadd.f32 %v12036, %v12204
    %12206 = vmatmul.bf16.gmra.mxu0 %v10942
    %v12207 = vpop.f32.mrf.mxu0
    %v12208 = vadd.f32 %v12039, %v12207
    %v12209 = vpop.f32.mrf.mxu0
    %v12210 = vadd.f32 %v12041, %v12209
    %12211 = vmatmul.bf16.gmra.mxu0 %v10954
    %v12212 = vpop.f32.mrf.mxu0
    %v12213 = vadd.f32 %v12044, %v12212
    %v12214 = vpop.f32.mrf.mxu0
    %v12215 = vadd.f32 %v12046, %v12214
    %12216 = vmatmul.bf16.gmra.mxu0 %v6728
    %v12217 = vpop.f32.mrf.mxu0
    %v12218 = vadd.f32 %v12049, %v12217
    %v12219 = vpop.f32.mrf.mxu0
    %v12220 = vadd.f32 %v12051, %v12219
    %12221 = vmatmul.bf16.gmra.mxu0 %v10966
    %v12222 = vpop.f32.mrf.mxu0
    %v12223 = vadd.f32 %v12054, %v12222
    %v12224 = vpop.f32.mrf.mxu0
    %v12225 = vadd.f32 %v12056, %v12224
    %12226 = vmatmul.bf16.gmra.mxu0 %v10978
    %v12227 = vpop.f32.mrf.mxu0
    %v12228 = vadd.f32 %v12059, %v12227
    %v12229 = vpop.f32.mrf.mxu0
    %v12230 = vadd.f32 %v12061, %v12229
    %12231 = vmatmul.bf16.gmra.mxu0 %v10990
    %v12232 = vpop.f32.mrf.mxu0
    %v12233 = vadd.f32 %v12064, %v12232
    %v12234 = vpop.f32.mrf.mxu0
    %v12235 = vadd.f32 %v12066, %v12234
    %12236 = vmatmul.bf16.gmra.mxu0 %v11002
    %v12237 = vpop.f32.mrf.mxu0
    %v12238 = vadd.f32 %v12069, %v12237
    %v12239 = vpop.f32.mrf.mxu0
    %v12240 = vadd.f32 %v12071, %v12239
    %12241 = vmatmul.bf16.gmra.mxu0 %v11014
    %v12242 = vpop.f32.mrf.mxu0
    %v12243 = vadd.f32 %v12074, %v12242
    %v12244 = vpop.f32.mrf.mxu0
    %v12245 = vadd.f32 %v12076, %v12244
    %12246 = vmatmul.bf16.gmra.mxu0 %v11026
    %v12247 = vpop.f32.mrf.mxu0
    %v12248 = vadd.f32 %v12079, %v12247
    %v12249 = vpop.f32.mrf.mxu0
    %v12250 = vadd.f32 %v12081, %v12249
    %12251 = vmatmul.bf16.gmra.mxu0 %v11038
    %v12252 = vpop.f32.mrf.mxu0
    %v12253 = vadd.f32 %v12084, %v12252
    %v12254 = vpop.f32.mrf.mxu0
    %v12255 = vadd.f32 %v12086, %v12254
    %12256 = vmatmul.bf16.gmra.mxu0 %v11050
    %v12257 = vpop.f32.mrf.mxu0
    %v12258 = vadd.f32 %v12089, %v12257
    %v12259 = vpop.f32.mrf.mxu0
    %v12260 = vadd.f32 %v12091, %v12259
    %12261 = vmatmul.bf16.gmra.mxu0 %v11062
    %v12262 = vpop.f32.mrf.mxu0
    %v12263 = vadd.f32 %v12094, %v12262
    %v12264 = vpop.f32.mrf.mxu0
    %v12265 = vadd.f32 %v12096, %v12264
    %12266 = vmatmul.bf16.gmra.mxu0 %v11074
    %v12267 = vpop.f32.mrf.mxu0
    %v12268 = vadd.f32 %v12099, %v12267
    %v12269 = vpop.f32.mrf.mxu0
    %v12270 = vadd.f32 %v12101, %v12269
    %12271 = vmatmul.bf16.gmra.mxu0 %v11086
    %v12272 = vpop.f32.mrf.mxu0
    %v12273 = vadd.f32 %v12104, %v12272
    %v12274 = vpop.f32.mrf.mxu0
    %v12275 = vadd.f32 %v12106, %v12274
    %12276 = vmatmul.bf16.gmra.mxu0 %v11098
    %v12277 = vpop.f32.mrf.mxu0
    %v12278 = vadd.f32 %v12109, %v12277
    %v12279 = vpop.f32.mrf.mxu0
    %v12280 = vadd.f32 %v12111, %v12279
    %12281 = vmatmul.bf16.gmra.mxu0 %v11110
    %v12282 = vpop.f32.mrf.mxu0
    %v12283 = vadd.f32 %v12114, %v12282
    %v12284 = vpop.f32.mrf.mxu0
    %v12285 = vadd.f32 %v12116, %v12284
    %12286 = vmatmul.bf16.gmra.mxu0 %v11122
    %v12287 = vpop.f32.mrf.mxu0
    %v12288 = vadd.f32 %v12119, %v12287
    %v12289 = vpop.f32.mrf.mxu0
    %v12290 = vadd.f32 %v12121, %v12289
    %12291 = vmatmul.bf16.gmra.mxu0 %v11134
    %v12292 = vpop.f32.mrf.mxu0
    %v12293 = vadd.f32 %v12124, %v12292
    %v12294 = vpop.f32.mrf.mxu0
    %v12295 = vadd.f32 %v12126, %v12294
    %12296 = vdwg.mxu0
    %12297 = vmatpush.bf16.msra.mxu0 %v11838
    %12298 = vmatpush.bf16.msra.mxu0 %v11837
    %12299 = vmatpush.bf16.msra.mxu0 %v11836
    %12300 = vmatpush.bf16.msra.mxu0 %v11835
    %12301 = vmatpush.bf16.msra.mxu0 %v11834
    %12302 = vmatpush.bf16.msra.mxu0 %v11833
    %12303 = vmatpush.bf16.msra.mxu0 %v11832
    %12304 = vmatpush.bf16.msra.mxu0 %v11831
    %12305 = vmatmul.bf16.gmra.mxu0 %v7185
    %v12306 = vpop.f32.mrf.mxu0
    %v12307 = vadd.f32 %v12138, %v12306
    %v12308 = vpop.f32.mrf.mxu0
    %v12309 = vadd.f32 %v12140, %v12308
    %12310 = vmatmul.bf16.gmra.mxu0 %v11227
    %v12311 = vpop.f32.mrf.mxu0
    %v12312 = vadd.f32 %v12143, %v12311
    %v12313 = vpop.f32.mrf.mxu0
    %v12314 = vadd.f32 %v12145, %v12313
    %12315 = vmatmul.bf16.gmra.mxu0 %v11230
    %v12316 = vpop.f32.mrf.mxu0
    %v12317 = vadd.f32 %v12148, %v12316
    %v12318 = vpop.f32.mrf.mxu0
    %v12319 = vadd.f32 %v12150, %v12318
    %12320 = vmatmul.bf16.gmra.mxu0 %v11233
    %v12321 = vpop.f32.mrf.mxu0
    %v12322 = vadd.f32 %v12153, %v12321
    %v12323 = vpop.f32.mrf.mxu0
    %v12324 = vadd.f32 %v12155, %v12323
    %12325 = vmatmul.bf16.gmra.mxu0 %v11236
    %v12326 = vpop.f32.mrf.mxu0
    %v12327 = vadd.f32 %v12158, %v12326
    %v12328 = vpop.f32.mrf.mxu0
    %v12329 = vadd.f32 %v12160, %v12328
    %12330 = vmatmul.bf16.gmra.mxu0 %v11239
    %v12331 = vpop.f32.mrf.mxu0
    %v12332 = vadd.f32 %v12163, %v12331
    %v12333 = vpop.f32.mrf.mxu0
    %v12334 = vadd.f32 %v12165, %v12333
    %12335 = vmatmul.bf16.gmra.mxu0 %v11242
    %v12336 = vpop.f32.mrf.mxu0
    %v12337 = vadd.f32 %v12168, %v12336
    %v12338 = vpop.f32.mrf.mxu0
    %v12339 = vadd.f32 %v12170, %v12338
    %12340 = vmatmul.bf16.gmra.mxu0 %v11245
    %v12341 = vpop.f32.mrf.mxu0
    %v12342 = vadd.f32 %v12173, %v12341
    %v12343 = vpop.f32.mrf.mxu0
    %v12344 = vadd.f32 %v12175, %v12343
    %12345 = vmatmul.bf16.gmra.mxu0 %v11248
    %v12346 = vpop.f32.mrf.mxu0
    %v12347 = vadd.f32 %v12178, %v12346
    %v12348 = vpop.f32.mrf.mxu0
    %v12349 = vadd.f32 %v12180, %v12348
    %12350 = vmatmul.bf16.gmra.mxu0 %v11251
    %v12351 = vpop.f32.mrf.mxu0
    %v12352 = vadd.f32 %v12183, %v12351
    %v12353 = vpop.f32.mrf.mxu0
    %v12354 = vadd.f32 %v12185, %v12353
    %12355 = vmatmul.bf16.gmra.mxu0 %v11254
    %v12356 = vpop.f32.mrf.mxu0
    %v12357 = vadd.f32 %v12188, %v12356
    %v12358 = vpop.f32.mrf.mxu0
    %v12359 = vadd.f32 %v12190, %v12358
    %12360 = vmatmul.bf16.gmra.mxu0 %v11257
    %v12361 = vpop.f32.mrf.mxu0
    %v12362 = vadd.f32 %v12193, %v12361
    %v12363 = vpop.f32.mrf.mxu0
    %v12364 = vadd.f32 %v12195, %v12363
    %12365 = vmatmul.bf16.gmra.mxu0 %v11260
    %v12366 = vpop.f32.mrf.mxu0
    %v12367 = vadd.f32 %v12198, %v12366
    %v12368 = vpop.f32.mrf.mxu0
    %v12369 = vadd.f32 %v12200, %v12368
    %12370 = vmatmul.bf16.gmra.mxu0 %v11263
    %v12371 = vpop.f32.mrf.mxu0
    %v12372 = vadd.f32 %v12203, %v12371
    %v12373 = vpop.f32.mrf.mxu0
    %v12374 = vadd.f32 %v12205, %v12373
    %12375 = vmatmul.bf16.gmra.mxu0 %v11266
    %v12376 = vpop.f32.mrf.mxu0
    %v12377 = vadd.f32 %v12208, %v12376
    %v12378 = vpop.f32.mrf.mxu0
    %v12379 = vadd.f32 %v12210, %v12378
    %12380 = vmatmul.bf16.gmra.mxu0 %v11269
    %v12381 = vpop.f32.mrf.mxu0
    %v12382 = vadd.f32 %v12213, %v12381
    %v12383 = vpop.f32.mrf.mxu0
    %v12384 = vadd.f32 %v12215, %v12383
    %12385 = vmatmul.bf16.gmra.mxu0 %v7185
    %v12386 = vpop.f32.mrf.mxu0
    %v12387 = vadd.f32 %v12218, %v12386
    %v12388 = vpop.f32.mrf.mxu0
    %v12389 = vadd.f32 %v12220, %v12388
    %12390 = vmatmul.bf16.gmra.mxu0 %v11272
    %v12391 = vpop.f32.mrf.mxu0
    %v12392 = vadd.f32 %v12223, %v12391
    %v12393 = vpop.f32.mrf.mxu0
    %v12394 = vadd.f32 %v12225, %v12393
    %12395 = vmatmul.bf16.gmra.mxu0 %v11275
    %v12396 = vpop.f32.mrf.mxu0
    %v12397 = vadd.f32 %v12228, %v12396
    %v12398 = vpop.f32.mrf.mxu0
    %v12399 = vadd.f32 %v12230, %v12398
    %12400 = vmatmul.bf16.gmra.mxu0 %v11278
    %v12401 = vpop.f32.mrf.mxu0
    %v12402 = vadd.f32 %v12233, %v12401
    %v12403 = vpop.f32.mrf.mxu0
    %v12404 = vadd.f32 %v12235, %v12403
    %12405 = vmatmul.bf16.gmra.mxu0 %v11281
    %v12406 = vpop.f32.mrf.mxu0
    %v12407 = vadd.f32 %v12238, %v12406
    %v12408 = vpop.f32.mrf.mxu0
    %v12409 = vadd.f32 %v12240, %v12408
    %12410 = vmatmul.bf16.gmra.mxu0 %v11284
    %v12411 = vpop.f32.mrf.mxu0
    %v12412 = vadd.f32 %v12243, %v12411
    %v12413 = vpop.f32.mrf.mxu0
    %v12414 = vadd.f32 %v12245, %v12413
    %12415 = vmatmul.bf16.gmra.mxu0 %v11287
    %v12416 = vpop.f32.mrf.mxu0
    %v12417 = vadd.f32 %v12248, %v12416
    %v12418 = vpop.f32.mrf.mxu0
    %v12419 = vadd.f32 %v12250, %v12418
    %12420 = vmatmul.bf16.gmra.mxu0 %v11290
    %v12421 = vpop.f32.mrf.mxu0
    %v12422 = vadd.f32 %v12253, %v12421
    %v12423 = vpop.f32.mrf.mxu0
    %v12424 = vadd.f32 %v12255, %v12423
    %12425 = vmatmul.bf16.gmra.mxu0 %v11293
    %v12426 = vpop.f32.mrf.mxu0
    %v12427 = vadd.f32 %v12258, %v12426
    %v12428 = vpop.f32.mrf.mxu0
    %v12429 = vadd.f32 %v12260, %v12428
    %12430 = vmatmul.bf16.gmra.mxu0 %v11296
    %v12431 = vpop.f32.mrf.mxu0
    %v12432 = vadd.f32 %v12263, %v12431
    %v12433 = vpop.f32.mrf.mxu0
    %v12434 = vadd.f32 %v12265, %v12433
    %12435 = vmatmul.bf16.gmra.mxu0 %v11299
    %v12436 = vpop.f32.mrf.mxu0
    %v12437 = vadd.f32 %v12268, %v12436
    %v12438 = vpop.f32.mrf.mxu0
    %v12439 = vadd.f32 %v12270, %v12438
    %12440 = vmatmul.bf16.gmra.mxu0 %v11302
    %v12441 = vpop.f32.mrf.mxu0
    %v12442 = vadd.f32 %v12273, %v12441
    %v12443 = vpop.f32.mrf.mxu0
    %v12444 = vadd.f32 %v12275, %v12443
    %12445 = vmatmul.bf16.gmra.mxu0 %v11305
    %v12446 = vpop.f32.mrf.mxu0
    %v12447 = vadd.f32 %v12278, %v12446
    %v12448 = vpop.f32.mrf.mxu0
    %v12449 = vadd.f32 %v12280, %v12448
    %12450 = vmatmul.bf16.gmra.mxu0 %v11308
    %v12451 = vpop.f32.mrf.mxu0
    %v12452 = vadd.f32 %v12283, %v12451
    %v12453 = vpop.f32.mrf.mxu0
    %v12454 = vadd.f32 %v12285, %v12453
    %12455 = vmatmul.bf16.gmra.mxu0 %v11311
    %v12456 = vpop.f32.mrf.mxu0
    %v12457 = vadd.f32 %v12288, %v12456
    %v12458 = vpop.f32.mrf.mxu0
    %v12459 = vadd.f32 %v12290, %v12458
    %12460 = vmatmul.bf16.gmra.mxu0 %v11314
    %v12461 = vpop.f32.mrf.mxu0
    %v12462 = vadd.f32 %v12293, %v12461
    %v12463 = vpop.f32.mrf.mxu0
    %v12464 = vadd.f32 %v12295, %v12463
    %12465 = vdwg.mxu0
    %12466 = vmatpush.bf16.msra.mxu0 %v11846
    %12467 = vmatpush.bf16.msra.mxu0 %v11845
    %12468 = vmatpush.bf16.msra.mxu0 %v11844
    %12469 = vmatpush.bf16.msra.mxu0 %v11843
    %12470 = vmatpush.bf16.msra.mxu0 %v11842
    %12471 = vmatpush.bf16.msra.mxu0 %v11841
    %12472 = vmatpush.bf16.msra.mxu0 %v11840
    %12473 = vmatpush.bf16.msra.mxu0 %v11839
    %12474 = vmatmul.bf16.gmra.mxu0 %v10711
    %v12475 = vpop.f32.mrf.mxu0
    %v12476 = vadd.f32 %v12307, %v12475
    %v12477 = vpop.f32.mrf.mxu0
    %v12478 = vadd.f32 %v12309, %v12477
    %12479 = vmatmul.bf16.gmra.mxu0 %v10712
    %v12480 = vpop.f32.mrf.mxu0
    %v12481 = vadd.f32 %v12312, %v12480
    %v12482 = vpop.f32.mrf.mxu0
    %v12483 = vadd.f32 %v12314, %v12482
    %12484 = vmatmul.bf16.gmra.mxu0 %v10713
    %v12485 = vpop.f32.mrf.mxu0
    %v12486 = vadd.f32 %v12317, %v12485
    %v12487 = vpop.f32.mrf.mxu0
    %v12488 = vadd.f32 %v12319, %v12487
    %12489 = vmatmul.bf16.gmra.mxu0 %v10714
    %v12490 = vpop.f32.mrf.mxu0
    %v12491 = vadd.f32 %v12322, %v12490
    %v12492 = vpop.f32.mrf.mxu0
    %v12493 = vadd.f32 %v12324, %v12492
    %12494 = vmatmul.bf16.gmra.mxu0 %v10715
    %v12495 = vpop.f32.mrf.mxu0
    %v12496 = vadd.f32 %v12327, %v12495
    %v12497 = vpop.f32.mrf.mxu0
    %v12498 = vadd.f32 %v12329, %v12497
    %12499 = vmatmul.bf16.gmra.mxu0 %v10716
    %v12500 = vpop.f32.mrf.mxu0
    %v12501 = vadd.f32 %v12332, %v12500
    %v12502 = vpop.f32.mrf.mxu0
    %v12503 = vadd.f32 %v12334, %v12502
    %12504 = vmatmul.bf16.gmra.mxu0 %v10717
    %v12505 = vpop.f32.mrf.mxu0
    %v12506 = vadd.f32 %v12337, %v12505
    %v12507 = vpop.f32.mrf.mxu0
    %v12508 = vadd.f32 %v12339, %v12507
    %12509 = vmatmul.bf16.gmra.mxu0 %v10718
    %v12510 = vpop.f32.mrf.mxu0
    %v12511 = vadd.f32 %v12342, %v12510
    %v12512 = vpop.f32.mrf.mxu0
    %v12513 = vadd.f32 %v12344, %v12512
    %12514 = vmatmul.bf16.gmra.mxu0 %v10719
    %v12515 = vpop.f32.mrf.mxu0
    %v12516 = vadd.f32 %v12347, %v12515
    %v12517 = vpop.f32.mrf.mxu0
    %v12518 = vadd.f32 %v12349, %v12517
    %12519 = vmatmul.bf16.gmra.mxu0 %v10720
    %v12520 = vpop.f32.mrf.mxu0
    %v12521 = vadd.f32 %v12352, %v12520
    %v12522 = vpop.f32.mrf.mxu0
    %v12523 = vadd.f32 %v12354, %v12522
    %12524 = vmatmul.bf16.gmra.mxu0 %v10721
    %v12525 = vpop.f32.mrf.mxu0
    %v12526 = vadd.f32 %v12357, %v12525
    %v12527 = vpop.f32.mrf.mxu0
    %v12528 = vadd.f32 %v12359, %v12527
    %12529 = vmatmul.bf16.gmra.mxu0 %v10722
    %v12530 = vpop.f32.mrf.mxu0
    %v12531 = vadd.f32 %v12362, %v12530
    %v12532 = vpop.f32.mrf.mxu0
    %v12533 = vadd.f32 %v12364, %v12532
    %12534 = vmatmul.bf16.gmra.mxu0 %v10723
    %v12535 = vpop.f32.mrf.mxu0
    %v12536 = vadd.f32 %v12367, %v12535
    %v12537 = vpop.f32.mrf.mxu0
    %v12538 = vadd.f32 %v12369, %v12537
    %12539 = vmatmul.bf16.gmra.mxu0 %v10724
    %v12540 = vpop.f32.mrf.mxu0
    %v12541 = vadd.f32 %v12372, %v12540
    %v12542 = vpop.f32.mrf.mxu0
    %v12543 = vadd.f32 %v12374, %v12542
    %12544 = vmatmul.bf16.gmra.mxu0 %v10725
    %v12545 = vpop.f32.mrf.mxu0
    %v12546 = vadd.f32 %v12377, %v12545
    %v12547 = vpop.f32.mrf.mxu0
    %v12548 = vadd.f32 %v12379, %v12547
    %12549 = vmatmul.bf16.gmra.mxu0 %v10726
    %v12550 = vpop.f32.mrf.mxu0
    %v12551 = vadd.f32 %v12382, %v12550
    %v12552 = vpop.f32.mrf.mxu0
    %v12553 = vadd.f32 %v12384, %v12552
    %12554 = vmatmul.bf16.gmra.mxu0 %v10727
    %v12555 = vpop.f32.mrf.mxu0
    %v12556 = vadd.f32 %v12387, %v12555
    %v12557 = vpop.f32.mrf.mxu0
    %v12558 = vadd.f32 %v12389, %v12557
    %12559 = vmatmul.bf16.gmra.mxu0 %v10728
    %v12560 = vpop.f32.mrf.mxu0
    %v12561 = vadd.f32 %v12392, %v12560
    %v12562 = vpop.f32.mrf.mxu0
    %v12563 = vadd.f32 %v12394, %v12562
    %12564 = vmatmul.bf16.gmra.mxu0 %v10729
    %v12565 = vpop.f32.mrf.mxu0
    %v12566 = vadd.f32 %v12397, %v12565
    %v12567 = vpop.f32.mrf.mxu0
    %v12568 = vadd.f32 %v12399, %v12567
    %12569 = vmatmul.bf16.gmra.mxu0 %v10730
    %v12570 = vpop.f32.mrf.mxu0
    %v12571 = vadd.f32 %v12402, %v12570
    %v12572 = vpop.f32.mrf.mxu0
    %v12573 = vadd.f32 %v12404, %v12572
    %12574 = vmatmul.bf16.gmra.mxu0 %v10731
    %v12575 = vpop.f32.mrf.mxu0
    %v12576 = vadd.f32 %v12407, %v12575
    %v12577 = vpop.f32.mrf.mxu0
    %v12578 = vadd.f32 %v12409, %v12577
    %12579 = vmatmul.bf16.gmra.mxu0 %v10732
    %v12580 = vpop.f32.mrf.mxu0
    %v12581 = vadd.f32 %v12412, %v12580
    %v12582 = vpop.f32.mrf.mxu0
    %v12583 = vadd.f32 %v12414, %v12582
    %12584 = vmatmul.bf16.gmra.mxu0 %v10733
    %v12585 = vpop.f32.mrf.mxu0
    %v12586 = vadd.f32 %v12417, %v12585
    %v12587 = vpop.f32.mrf.mxu0
    %v12588 = vadd.f32 %v12419, %v12587
    %12589 = vmatmul.bf16.gmra.mxu0 %v10734
    %v12590 = vpop.f32.mrf.mxu0
    %v12591 = vadd.f32 %v12422, %v12590
    %v12592 = vpop.f32.mrf.mxu0
    %v12593 = vadd.f32 %v12424, %v12592
    %12594 = vmatmul.bf16.gmra.mxu0 %v10735
    %v12595 = vpop.f32.mrf.mxu0
    %v12596 = vadd.f32 %v12427, %v12595
    %v12597 = vpop.f32.mrf.mxu0
    %v12598 = vadd.f32 %v12429, %v12597
    %12599 = vmatmul.bf16.gmra.mxu0 %v10736
    %v12600 = vpop.f32.mrf.mxu0
    %v12601 = vadd.f32 %v12432, %v12600
    %v12602 = vpop.f32.mrf.mxu0
    %v12603 = vadd.f32 %v12434, %v12602
    %12604 = vmatmul.bf16.gmra.mxu0 %v10737
    %v12605 = vpop.f32.mrf.mxu0
    %v12606 = vadd.f32 %v12437, %v12605
    %v12607 = vpop.f32.mrf.mxu0
    %v12608 = vadd.f32 %v12439, %v12607
    %12609 = vmatmul.bf16.gmra.mxu0 %v10738
    %v12610 = vpop.f32.mrf.mxu0
    %v12611 = vadd.f32 %v12442, %v12610
    %v12612 = vpop.f32.mrf.mxu0
    %v12613 = vadd.f32 %v12444, %v12612
    %12614 = vmatmul.bf16.gmra.mxu0 %v10739
    %v12615 = vpop.f32.mrf.mxu0
    %v12616 = vadd.f32 %v12447, %v12615
    %v12617 = vpop.f32.mrf.mxu0
    %v12618 = vadd.f32 %v12449, %v12617
    %12619 = vmatmul.bf16.gmra.mxu0 %v10740
    %v12620 = vpop.f32.mrf.mxu0
    %v12621 = vadd.f32 %v12452, %v12620
    %v12622 = vpop.f32.mrf.mxu0
    %v12623 = vadd.f32 %v12454, %v12622
    %12624 = vmatmul.bf16.gmra.mxu0 %v10741
    %v12625 = vpop.f32.mrf.mxu0
    %v12626 = vadd.f32 %v12457, %v12625
    %v12627 = vpop.f32.mrf.mxu0
    %v12628 = vadd.f32 %v12459, %v12627
    %12629 = vmatmul.bf16.gmra.mxu0 %v10742
    %v12630 = vpop.f32.mrf.mxu0
    %v12631 = vadd.f32 %v12462, %v12630
    %v12632 = vpop.f32.mrf.mxu0
    %v12633 = vadd.f32 %v12464, %v12632
    %12634 = vdwg.mxu0
    %12635 = vmatpush.bf16.msra.mxu0 %v11854
    %12636 = vmatpush.bf16.msra.mxu0 %v11853
    %12637 = vmatpush.bf16.msra.mxu0 %v11852
    %12638 = vmatpush.bf16.msra.mxu0 %v11851
    %12639 = vmatpush.bf16.msra.mxu0 %v11850
    %12640 = vmatpush.bf16.msra.mxu0 %v11849
    %12641 = vmatpush.bf16.msra.mxu0 %v11848
    %12642 = vmatpush.bf16.msra.mxu0 %v11847
    %12643 = vmatmul.bf16.gmra.mxu0 %v10786
    %v12644 = vpop.f32.mrf.mxu0
    %v12645 = vadd.f32 %v12476, %v12644
    %v12646 = vpop.f32.mrf.mxu0
    %v12647 = vadd.f32 %v12478, %v12646
    %12648 = vmatmul.bf16.gmra.mxu0 %v10798
    %v12649 = vpop.f32.mrf.mxu0
    %v12650 = vadd.f32 %v12481, %v12649
    %v12651 = vpop.f32.mrf.mxu0
    %v12652 = vadd.f32 %v12483, %v12651
    %12653 = vmatmul.bf16.gmra.mxu0 %v10810
    %v12654 = vpop.f32.mrf.mxu0
    %v12655 = vadd.f32 %v12486, %v12654
    %v12656 = vpop.f32.mrf.mxu0
    %v12657 = vadd.f32 %v12488, %v12656
    %12658 = vmatmul.bf16.gmra.mxu0 %v10822
    %v12659 = vpop.f32.mrf.mxu0
    %v12660 = vadd.f32 %v12491, %v12659
    %v12661 = vpop.f32.mrf.mxu0
    %v12662 = vadd.f32 %v12493, %v12661
    %12663 = vmatmul.bf16.gmra.mxu0 %v10834
    %v12664 = vpop.f32.mrf.mxu0
    %v12665 = vadd.f32 %v12496, %v12664
    %v12666 = vpop.f32.mrf.mxu0
    %v12667 = vadd.f32 %v12498, %v12666
    %12668 = vmatmul.bf16.gmra.mxu0 %v10846
    %v12669 = vpop.f32.mrf.mxu0
    %v12670 = vadd.f32 %v12501, %v12669
    %v12671 = vpop.f32.mrf.mxu0
    %v12672 = vadd.f32 %v12503, %v12671
    %12673 = vmatmul.bf16.gmra.mxu0 %v10858
    %v12674 = vpop.f32.mrf.mxu0
    %v12675 = vadd.f32 %v12506, %v12674
    %v12676 = vpop.f32.mrf.mxu0
    %v12677 = vadd.f32 %v12508, %v12676
    %12678 = vmatmul.bf16.gmra.mxu0 %v10870
    %v12679 = vpop.f32.mrf.mxu0
    %v12680 = vadd.f32 %v12511, %v12679
    %v12681 = vpop.f32.mrf.mxu0
    %v12682 = vadd.f32 %v12513, %v12681
    %12683 = vmatmul.bf16.gmra.mxu0 %v10882
    %v12684 = vpop.f32.mrf.mxu0
    %v12685 = vadd.f32 %v12516, %v12684
    %v12686 = vpop.f32.mrf.mxu0
    %v12687 = vadd.f32 %v12518, %v12686
    %12688 = vmatmul.bf16.gmra.mxu0 %v10894
    %v12689 = vpop.f32.mrf.mxu0
    %v12690 = vadd.f32 %v12521, %v12689
    %v12691 = vpop.f32.mrf.mxu0
    %v12692 = vadd.f32 %v12523, %v12691
    %12693 = vmatmul.bf16.gmra.mxu0 %v10906
    %v12694 = vpop.f32.mrf.mxu0
    %v12695 = vadd.f32 %v12526, %v12694
    %v12696 = vpop.f32.mrf.mxu0
    %v12697 = vadd.f32 %v12528, %v12696
    %12698 = vmatmul.bf16.gmra.mxu0 %v10918
    %v12699 = vpop.f32.mrf.mxu0
    %v12700 = vadd.f32 %v12531, %v12699
    %v12701 = vpop.f32.mrf.mxu0
    %v12702 = vadd.f32 %v12533, %v12701
    %12703 = vmatmul.bf16.gmra.mxu0 %v10930
    %v12704 = vpop.f32.mrf.mxu0
    %v12705 = vadd.f32 %v12536, %v12704
    %v12706 = vpop.f32.mrf.mxu0
    %v12707 = vadd.f32 %v12538, %v12706
    %12708 = vmatmul.bf16.gmra.mxu0 %v10942
    %v12709 = vpop.f32.mrf.mxu0
    %v12710 = vadd.f32 %v12541, %v12709
    %v12711 = vpop.f32.mrf.mxu0
    %v12712 = vadd.f32 %v12543, %v12711
    %12713 = vmatmul.bf16.gmra.mxu0 %v10954
    %v12714 = vpop.f32.mrf.mxu0
    %v12715 = vadd.f32 %v12546, %v12714
    %v12716 = vpop.f32.mrf.mxu0
    %v12717 = vadd.f32 %v12548, %v12716
    %12718 = vmatmul.bf16.gmra.mxu0 %v11356
    %v12719 = vpop.f32.mrf.mxu0
    %v12720 = vadd.f32 %v12551, %v12719
    %v12721 = vpop.f32.mrf.mxu0
    %v12722 = vadd.f32 %v12553, %v12721
    %12723 = vmatmul.bf16.gmra.mxu0 %v10966
    %v12724 = vpop.f32.mrf.mxu0
    %v12725 = vadd.f32 %v12556, %v12724
    %v12726 = vpop.f32.mrf.mxu0
    %v12727 = vadd.f32 %v12558, %v12726
    %12728 = vmatmul.bf16.gmra.mxu0 %v10978
    %v12729 = vpop.f32.mrf.mxu0
    %v12730 = vadd.f32 %v12561, %v12729
    %v12731 = vpop.f32.mrf.mxu0
    %v12732 = vadd.f32 %v12563, %v12731
    %12733 = vmatmul.bf16.gmra.mxu0 %v10990
    %v12734 = vpop.f32.mrf.mxu0
    %v12735 = vadd.f32 %v12566, %v12734
    %v12736 = vpop.f32.mrf.mxu0
    %v12737 = vadd.f32 %v12568, %v12736
    %12738 = vmatmul.bf16.gmra.mxu0 %v11002
    %v12739 = vpop.f32.mrf.mxu0
    %v12740 = vadd.f32 %v12571, %v12739
    %v12741 = vpop.f32.mrf.mxu0
    %v12742 = vadd.f32 %v12573, %v12741
    %12743 = vmatmul.bf16.gmra.mxu0 %v11014
    %v12744 = vpop.f32.mrf.mxu0
    %v12745 = vadd.f32 %v12576, %v12744
    %v12746 = vpop.f32.mrf.mxu0
    %v12747 = vadd.f32 %v12578, %v12746
    %12748 = vmatmul.bf16.gmra.mxu0 %v11026
    %v12749 = vpop.f32.mrf.mxu0
    %v12750 = vadd.f32 %v12581, %v12749
    %v12751 = vpop.f32.mrf.mxu0
    %v12752 = vadd.f32 %v12583, %v12751
    %12753 = vmatmul.bf16.gmra.mxu0 %v11038
    %v12754 = vpop.f32.mrf.mxu0
    %v12755 = vadd.f32 %v12586, %v12754
    %v12756 = vpop.f32.mrf.mxu0
    %v12757 = vadd.f32 %v12588, %v12756
    %12758 = vmatmul.bf16.gmra.mxu0 %v11050
    %v12759 = vpop.f32.mrf.mxu0
    %v12760 = vadd.f32 %v12591, %v12759
    %v12761 = vpop.f32.mrf.mxu0
    %v12762 = vadd.f32 %v12593, %v12761
    %12763 = vmatmul.bf16.gmra.mxu0 %v11062
    %v12764 = vpop.f32.mrf.mxu0
    %v12765 = vadd.f32 %v12596, %v12764
    %v12766 = vpop.f32.mrf.mxu0
    %v12767 = vadd.f32 %v12598, %v12766
    %12768 = vmatmul.bf16.gmra.mxu0 %v11074
    %v12769 = vpop.f32.mrf.mxu0
    %v12770 = vadd.f32 %v12601, %v12769
    %v12771 = vpop.f32.mrf.mxu0
    %v12772 = vadd.f32 %v12603, %v12771
    %12773 = vmatmul.bf16.gmra.mxu0 %v11086
    %v12774 = vpop.f32.mrf.mxu0
    %v12775 = vadd.f32 %v12606, %v12774
    %v12776 = vpop.f32.mrf.mxu0
    %v12777 = vadd.f32 %v12608, %v12776
    %12778 = vmatmul.bf16.gmra.mxu0 %v11098
    %v12779 = vpop.f32.mrf.mxu0
    %v12780 = vadd.f32 %v12611, %v12779
    %v12781 = vpop.f32.mrf.mxu0
    %v12782 = vadd.f32 %v12613, %v12781
    %12783 = vmatmul.bf16.gmra.mxu0 %v11110
    %v12784 = vpop.f32.mrf.mxu0
    %v12785 = vadd.f32 %v12616, %v12784
    %v12786 = vpop.f32.mrf.mxu0
    %v12787 = vadd.f32 %v12618, %v12786
    %12788 = vmatmul.bf16.gmra.mxu0 %v11122
    %v12789 = vpop.f32.mrf.mxu0
    %v12790 = vadd.f32 %v12621, %v12789
    %v12791 = vpop.f32.mrf.mxu0
    %v12792 = vadd.f32 %v12623, %v12791
    %12793 = vmatmul.bf16.gmra.mxu0 %v11134
    %v12794 = vpop.f32.mrf.mxu0
    %v12795 = vadd.f32 %v12626, %v12794
    %v12796 = vpop.f32.mrf.mxu0
    %v12797 = vadd.f32 %v12628, %v12796
    %12798 = vmatmul.bf16.gmra.mxu0 %v11368
    %v12799 = vpop.f32.mrf.mxu0
    %v12800 = vadd.f32 %v12631, %v12799
    %v12801 = vpop.f32.mrf.mxu0
    %v12802 = vadd.f32 %v12633, %v12801
    %12803 = vdwg.mxu0
    %12804 = vmatpush.bf16.msra.mxu0 %v11862
    %12805 = vmatpush.bf16.msra.mxu0 %v11861
    %12806 = vmatpush.bf16.msra.mxu0 %v11860
    %12807 = vmatpush.bf16.msra.mxu0 %v11859
    %12808 = vmatpush.bf16.msra.mxu0 %v11858
    %12809 = vmatpush.bf16.msra.mxu0 %v11857
    %12810 = vmatpush.bf16.msra.mxu0 %v11856
    %12811 = vmatpush.bf16.msra.mxu0 %v11855
    %12812 = vmatmul.bf16.gmra.mxu0 %v11227
    %v12813 = vpop.f32.mrf.mxu0
    %v12814 = vadd.f32 %v12645, %v12813
    %v12815 = vpop.f32.mrf.mxu0
    %v12816 = vadd.f32 %v12647, %v12815
    %12817 = vmatmul.bf16.gmra.mxu0 %v11230
    %v12818 = vpop.f32.mrf.mxu0
    %v12819 = vadd.f32 %v12650, %v12818
    %v12820 = vpop.f32.mrf.mxu0
    %v12821 = vadd.f32 %v12652, %v12820
    %12822 = vmatmul.bf16.gmra.mxu0 %v11233
    %v12823 = vpop.f32.mrf.mxu0
    %v12824 = vadd.f32 %v12655, %v12823
    %v12825 = vpop.f32.mrf.mxu0
    %v12826 = vadd.f32 %v12657, %v12825
    %12827 = vmatmul.bf16.gmra.mxu0 %v11236
    %v12828 = vpop.f32.mrf.mxu0
    %v12829 = vadd.f32 %v12660, %v12828
    %v12830 = vpop.f32.mrf.mxu0
    %v12831 = vadd.f32 %v12662, %v12830
    %12832 = vmatmul.bf16.gmra.mxu0 %v11239
    %v12833 = vpop.f32.mrf.mxu0
    %v12834 = vadd.f32 %v12665, %v12833
    %v12835 = vpop.f32.mrf.mxu0
    %v12836 = vadd.f32 %v12667, %v12835
    %12837 = vmatmul.bf16.gmra.mxu0 %v11242
    %v12838 = vpop.f32.mrf.mxu0
    %v12839 = vadd.f32 %v12670, %v12838
    %v12840 = vpop.f32.mrf.mxu0
    %v12841 = vadd.f32 %v12672, %v12840
    %12842 = vmatmul.bf16.gmra.mxu0 %v11245
    %v12843 = vpop.f32.mrf.mxu0
    %v12844 = vadd.f32 %v12675, %v12843
    %v12845 = vpop.f32.mrf.mxu0
    %v12846 = vadd.f32 %v12677, %v12845
    %12847 = vmatmul.bf16.gmra.mxu0 %v11248
    %v12848 = vpop.f32.mrf.mxu0
    %v12849 = vadd.f32 %v12680, %v12848
    %v12850 = vpop.f32.mrf.mxu0
    %v12851 = vadd.f32 %v12682, %v12850
    %12852 = vmatmul.bf16.gmra.mxu0 %v11251
    %v12853 = vpop.f32.mrf.mxu0
    %v12854 = vadd.f32 %v12685, %v12853
    %v12855 = vpop.f32.mrf.mxu0
    %v12856 = vadd.f32 %v12687, %v12855
    %12857 = vmatmul.bf16.gmra.mxu0 %v11254
    %v12858 = vpop.f32.mrf.mxu0
    %v12859 = vadd.f32 %v12690, %v12858
    %v12860 = vpop.f32.mrf.mxu0
    %v12861 = vadd.f32 %v12692, %v12860
    %12862 = vmatmul.bf16.gmra.mxu0 %v11257
    %v12863 = vpop.f32.mrf.mxu0
    %v12864 = vadd.f32 %v12695, %v12863
    %v12865 = vpop.f32.mrf.mxu0
    %v12866 = vadd.f32 %v12697, %v12865
    %12867 = vmatmul.bf16.gmra.mxu0 %v11260
    %v12868 = vpop.f32.mrf.mxu0
    %v12869 = vadd.f32 %v12700, %v12868
    %v12870 = vpop.f32.mrf.mxu0
    %v12871 = vadd.f32 %v12702, %v12870
    %12872 = vmatmul.bf16.gmra.mxu0 %v11263
    %v12873 = vpop.f32.mrf.mxu0
    %v12874 = vadd.f32 %v12705, %v12873
    %v12875 = vpop.f32.mrf.mxu0
    %v12876 = vadd.f32 %v12707, %v12875
    %12877 = vmatmul.bf16.gmra.mxu0 %v11266
    %v12878 = vpop.f32.mrf.mxu0
    %v12879 = vadd.f32 %v12710, %v12878
    %v12880 = vpop.f32.mrf.mxu0
    %v12881 = vadd.f32 %v12712, %v12880
    %12882 = vmatmul.bf16.gmra.mxu0 %v11269
    %v12883 = vpop.f32.mrf.mxu0
    %v12884 = vadd.f32 %v12715, %v12883
    %v12885 = vpop.f32.mrf.mxu0
    %v12886 = vadd.f32 %v12717, %v12885
    %12887 = vmatmul.bf16.gmra.mxu0 %v11377
    %v12888 = vpop.f32.mrf.mxu0
    %v12889 = vadd.f32 %v12720, %v12888
    %v12890 = vpop.f32.mrf.mxu0
    %v12891 = vadd.f32 %v12722, %v12890
    %12892 = vmatmul.bf16.gmra.mxu0 %v11272
    %v12893 = vpop.f32.mrf.mxu0
    %v12894 = vadd.f32 %v12725, %v12893
    %v12895 = vpop.f32.mrf.mxu0
    %v12896 = vadd.f32 %v12727, %v12895
    %12897 = vmatmul.bf16.gmra.mxu0 %v11275
    %v12898 = vpop.f32.mrf.mxu0
    %v12899 = vadd.f32 %v12730, %v12898
    %v12900 = vpop.f32.mrf.mxu0
    %v12901 = vadd.f32 %v12732, %v12900
    %12902 = vmatmul.bf16.gmra.mxu0 %v11278
    %v12903 = vpop.f32.mrf.mxu0
    %v12904 = vadd.f32 %v12735, %v12903
    %v12905 = vpop.f32.mrf.mxu0
    %v12906 = vadd.f32 %v12737, %v12905
    %12907 = vmatmul.bf16.gmra.mxu0 %v11281
    %v12908 = vpop.f32.mrf.mxu0
    %v12909 = vadd.f32 %v12740, %v12908
    %v12910 = vpop.f32.mrf.mxu0
    %v12911 = vadd.f32 %v12742, %v12910
    %12912 = vmatmul.bf16.gmra.mxu0 %v11284
    %v12913 = vpop.f32.mrf.mxu0
    %v12914 = vadd.f32 %v12745, %v12913
    %v12915 = vpop.f32.mrf.mxu0
    %v12916 = vadd.f32 %v12747, %v12915
    %12917 = vmatmul.bf16.gmra.mxu0 %v11287
    %v12918 = vpop.f32.mrf.mxu0
    %v12919 = vadd.f32 %v12750, %v12918
    %v12920 = vpop.f32.mrf.mxu0
    %v12921 = vadd.f32 %v12752, %v12920
    %12922 = vmatmul.bf16.gmra.mxu0 %v11290
    %v12923 = vpop.f32.mrf.mxu0
    %v12924 = vadd.f32 %v12755, %v12923
    %v12925 = vpop.f32.mrf.mxu0
    %v12926 = vadd.f32 %v12757, %v12925
    %12927 = vmatmul.bf16.gmra.mxu0 %v11293
    %v12928 = vpop.f32.mrf.mxu0
    %v12929 = vadd.f32 %v12760, %v12928
    %v12930 = vpop.f32.mrf.mxu0
    %v12931 = vadd.f32 %v12762, %v12930
    %12932 = vmatmul.bf16.gmra.mxu0 %v11296
    %v12933 = vpop.f32.mrf.mxu0
    %v12934 = vadd.f32 %v12765, %v12933
    %v12935 = vpop.f32.mrf.mxu0
    %v12936 = vadd.f32 %v12767, %v12935
    %12937 = vmatmul.bf16.gmra.mxu0 %v11299
    %v12938 = vpop.f32.mrf.mxu0
    %v12939 = vadd.f32 %v12770, %v12938
    %v12940 = vpop.f32.mrf.mxu0
    %v12941 = vadd.f32 %v12772, %v12940
    %12942 = vmatmul.bf16.gmra.mxu0 %v11302
    %v12943 = vpop.f32.mrf.mxu0
    %v12944 = vadd.f32 %v12775, %v12943
    %v12945 = vpop.f32.mrf.mxu0
    %v12946 = vadd.f32 %v12777, %v12945
    %12947 = vmatmul.bf16.gmra.mxu0 %v11305
    %v12948 = vpop.f32.mrf.mxu0
    %v12949 = vadd.f32 %v12780, %v12948
    %v12950 = vpop.f32.mrf.mxu0
    %v12951 = vadd.f32 %v12782, %v12950
    %12952 = vmatmul.bf16.gmra.mxu0 %v11308
    %v12953 = vpop.f32.mrf.mxu0
    %v12954 = vadd.f32 %v12785, %v12953
    %v12955 = vpop.f32.mrf.mxu0
    %v12956 = vadd.f32 %v12787, %v12955
    %12957 = vmatmul.bf16.gmra.mxu0 %v11311
    %v12958 = vpop.f32.mrf.mxu0
    %v12959 = vadd.f32 %v12790, %v12958
    %v12960 = vpop.f32.mrf.mxu0
    %v12961 = vadd.f32 %v12792, %v12960
    %12962 = vmatmul.bf16.gmra.mxu0 %v11314
    %v12963 = vpop.f32.mrf.mxu0
    %v12964 = vadd.f32 %v12795, %v12963
    %v12965 = vpop.f32.mrf.mxu0
    %v12966 = vadd.f32 %v12797, %v12965
    %12967 = vmatmul.bf16.gmra.mxu0 %v11380
    %v12968 = vpop.f32.mrf.mxu0
    %v12969 = vadd.f32 %v12800, %v12968
    %v12970 = vpop.f32.mrf.mxu0
    %v12971 = vadd.f32 %v12802, %v12970
    %12972 = vdwg.mxu0
    %12973 = vmatpush.bf16.msra.mxu0 %v11870
    %12974 = vmatpush.bf16.msra.mxu0 %v11869
    %12975 = vmatpush.bf16.msra.mxu0 %v11868
    %12976 = vmatpush.bf16.msra.mxu0 %v11867
    %12977 = vmatpush.bf16.msra.mxu0 %v11866
    %12978 = vmatpush.bf16.msra.mxu0 %v11865
    %12979 = vmatpush.bf16.msra.mxu0 %v11864
    %12980 = vmatpush.bf16.msra.mxu0 %v11863
    %12981 = vmatmul.bf16.gmra.mxu0 %v10712
    %v12982 = vpop.f32.mrf.mxu0
    %v12983 = vadd.f32 %v12814, %v12982
    %v12984 = vpop.f32.mrf.mxu0
    %v12985 = vadd.f32 %v12816, %v12984
    %12986 = vmatmul.bf16.gmra.mxu0 %v10713
    %v12987 = vpop.f32.mrf.mxu0
    %v12988 = vadd.f32 %v12819, %v12987
    %v12989 = vpop.f32.mrf.mxu0
    %v12990 = vadd.f32 %v12821, %v12989
    %12991 = vmatmul.bf16.gmra.mxu0 %v10714
    %v12992 = vpop.f32.mrf.mxu0
    %v12993 = vadd.f32 %v12824, %v12992
    %v12994 = vpop.f32.mrf.mxu0
    %v12995 = vadd.f32 %v12826, %v12994
    %12996 = vmatmul.bf16.gmra.mxu0 %v10715
    %v12997 = vpop.f32.mrf.mxu0
    %v12998 = vadd.f32 %v12829, %v12997
    %v12999 = vpop.f32.mrf.mxu0
    %v13000 = vadd.f32 %v12831, %v12999
    %13001 = vmatmul.bf16.gmra.mxu0 %v10716
    %v13002 = vpop.f32.mrf.mxu0
    %v13003 = vadd.f32 %v12834, %v13002
    %v13004 = vpop.f32.mrf.mxu0
    %v13005 = vadd.f32 %v12836, %v13004
    %13006 = vmatmul.bf16.gmra.mxu0 %v10717
    %v13007 = vpop.f32.mrf.mxu0
    %v13008 = vadd.f32 %v12839, %v13007
    %v13009 = vpop.f32.mrf.mxu0
    %v13010 = vadd.f32 %v12841, %v13009
    %13011 = vmatmul.bf16.gmra.mxu0 %v10718
    %v13012 = vpop.f32.mrf.mxu0
    %v13013 = vadd.f32 %v12844, %v13012
    %v13014 = vpop.f32.mrf.mxu0
    %v13015 = vadd.f32 %v12846, %v13014
    %13016 = vmatmul.bf16.gmra.mxu0 %v10719
    %v13017 = vpop.f32.mrf.mxu0
    %v13018 = vadd.f32 %v12849, %v13017
    %v13019 = vpop.f32.mrf.mxu0
    %v13020 = vadd.f32 %v12851, %v13019
    %13021 = vmatmul.bf16.gmra.mxu0 %v10720
    %v13022 = vpop.f32.mrf.mxu0
    %v13023 = vadd.f32 %v12854, %v13022
    %v13024 = vpop.f32.mrf.mxu0
    %v13025 = vadd.f32 %v12856, %v13024
    %13026 = vmatmul.bf16.gmra.mxu0 %v10721
    %v13027 = vpop.f32.mrf.mxu0
    %v13028 = vadd.f32 %v12859, %v13027
    %v13029 = vpop.f32.mrf.mxu0
    %v13030 = vadd.f32 %v12861, %v13029
    %13031 = vmatmul.bf16.gmra.mxu0 %v10722
    %v13032 = vpop.f32.mrf.mxu0
    %v13033 = vadd.f32 %v12864, %v13032
    %v13034 = vpop.f32.mrf.mxu0
    %v13035 = vadd.f32 %v12866, %v13034
    %13036 = vmatmul.bf16.gmra.mxu0 %v10723
    %v13037 = vpop.f32.mrf.mxu0
    %v13038 = vadd.f32 %v12869, %v13037
    %v13039 = vpop.f32.mrf.mxu0
    %v13040 = vadd.f32 %v12871, %v13039
    %13041 = vmatmul.bf16.gmra.mxu0 %v10724
    %v13042 = vpop.f32.mrf.mxu0
    %v13043 = vadd.f32 %v12874, %v13042
    %v13044 = vpop.f32.mrf.mxu0
    %v13045 = vadd.f32 %v12876, %v13044
    %13046 = vmatmul.bf16.gmra.mxu0 %v10725
    %v13047 = vpop.f32.mrf.mxu0
    %v13048 = vadd.f32 %v12879, %v13047
    %v13049 = vpop.f32.mrf.mxu0
    %v13050 = vadd.f32 %v12881, %v13049
    %13051 = vmatmul.bf16.gmra.mxu0 %v10726
    %v13052 = vpop.f32.mrf.mxu0
    %v13053 = vadd.f32 %v12884, %v13052
    %v13054 = vpop.f32.mrf.mxu0
    %v13055 = vadd.f32 %v12886, %v13054
    %13056 = vmatmul.bf16.gmra.mxu0 %v317
    %v13057 = vpop.f32.mrf.mxu0
    %v13058 = vadd.f32 %v12889, %v13057
    %v13059 = vpop.f32.mrf.mxu0
    %v13060 = vadd.f32 %v12891, %v13059
    %13061 = vmatmul.bf16.gmra.mxu0 %v10728
    %v13062 = vpop.f32.mrf.mxu0
    %v13063 = vadd.f32 %v12894, %v13062
    %v13064 = vpop.f32.mrf.mxu0
    %v13065 = vadd.f32 %v12896, %v13064
    %13066 = vmatmul.bf16.gmra.mxu0 %v10729
    %v13067 = vpop.f32.mrf.mxu0
    %v13068 = vadd.f32 %v12899, %v13067
    %v13069 = vpop.f32.mrf.mxu0
    %v13070 = vadd.f32 %v12901, %v13069
    %13071 = vmatmul.bf16.gmra.mxu0 %v10730
    %v13072 = vpop.f32.mrf.mxu0
    %v13073 = vadd.f32 %v12904, %v13072
    %v13074 = vpop.f32.mrf.mxu0
    %v13075 = vadd.f32 %v12906, %v13074
    %13076 = vmatmul.bf16.gmra.mxu0 %v10731
    %v13077 = vpop.f32.mrf.mxu0
    %v13078 = vadd.f32 %v12909, %v13077
    %v13079 = vpop.f32.mrf.mxu0
    %v13080 = vadd.f32 %v12911, %v13079
    %13081 = vmatmul.bf16.gmra.mxu0 %v10732
    %v13082 = vpop.f32.mrf.mxu0
    %v13083 = vadd.f32 %v12914, %v13082
    %v13084 = vpop.f32.mrf.mxu0
    %v13085 = vadd.f32 %v12916, %v13084
    %13086 = vmatmul.bf16.gmra.mxu0 %v10733
    %v13087 = vpop.f32.mrf.mxu0
    %v13088 = vadd.f32 %v12919, %v13087
    %v13089 = vpop.f32.mrf.mxu0
    %v13090 = vadd.f32 %v12921, %v13089
    %13091 = vmatmul.bf16.gmra.mxu0 %v10734
    %v13092 = vpop.f32.mrf.mxu0
    %v13093 = vadd.f32 %v12924, %v13092
    %v13094 = vpop.f32.mrf.mxu0
    %v13095 = vadd.f32 %v12926, %v13094
    %13096 = vmatmul.bf16.gmra.mxu0 %v10735
    %v13097 = vpop.f32.mrf.mxu0
    %v13098 = vadd.f32 %v12929, %v13097
    %v13099 = vpop.f32.mrf.mxu0
    %v13100 = vadd.f32 %v12931, %v13099
    %13101 = vmatmul.bf16.gmra.mxu0 %v10736
    %v13102 = vpop.f32.mrf.mxu0
    %v13103 = vadd.f32 %v12934, %v13102
    %v13104 = vpop.f32.mrf.mxu0
    %v13105 = vadd.f32 %v12936, %v13104
    %13106 = vmatmul.bf16.gmra.mxu0 %v10737
    %v13107 = vpop.f32.mrf.mxu0
    %v13108 = vadd.f32 %v12939, %v13107
    %v13109 = vpop.f32.mrf.mxu0
    %v13110 = vadd.f32 %v12941, %v13109
    %13111 = vmatmul.bf16.gmra.mxu0 %v10738
    %v13112 = vpop.f32.mrf.mxu0
    %v13113 = vadd.f32 %v12944, %v13112
    %v13114 = vpop.f32.mrf.mxu0
    %v13115 = vadd.f32 %v12946, %v13114
    %13116 = vmatmul.bf16.gmra.mxu0 %v10739
    %v13117 = vpop.f32.mrf.mxu0
    %v13118 = vadd.f32 %v12949, %v13117
    %v13119 = vpop.f32.mrf.mxu0
    %v13120 = vadd.f32 %v12951, %v13119
    %13121 = vmatmul.bf16.gmra.mxu0 %v10740
    %v13122 = vpop.f32.mrf.mxu0
    %v13123 = vadd.f32 %v12954, %v13122
    %v13124 = vpop.f32.mrf.mxu0
    %v13125 = vadd.f32 %v12956, %v13124
    %13126 = vmatmul.bf16.gmra.mxu0 %v10741
    %v13127 = vpop.f32.mrf.mxu0
    %v13128 = vadd.f32 %v12959, %v13127
    %v13129 = vpop.f32.mrf.mxu0
    %v13130 = vadd.f32 %v12961, %v13129
    %13131 = vmatmul.bf16.gmra.mxu0 %v10742
    %v13132 = vpop.f32.mrf.mxu0
    %v13133 = vadd.f32 %v12964, %v13132
    %v13134 = vpop.f32.mrf.mxu0
    %v13135 = vadd.f32 %v12966, %v13134
    %13136 = vmatmul.bf16.gmra.mxu0 %v317
    %v13137 = vpop.f32.mrf.mxu0
    %v13138 = vadd.f32 %v12969, %v13137
    %v13139 = vpop.f32.mrf.mxu0
    %v13140 = vadd.f32 %v12971, %v13139
    %13141 = vdwg.mxu0
    %13142 = vmatpush.bf16.msra.mxu0 %v11878
    %13143 = vmatpush.bf16.msra.mxu0 %v11877
    %13144 = vmatpush.bf16.msra.mxu0 %v11876
    %13145 = vmatpush.bf16.msra.mxu0 %v11875
    %13146 = vmatpush.bf16.msra.mxu0 %v11874
    %13147 = vmatpush.bf16.msra.mxu0 %v11873
    %13148 = vmatpush.bf16.msra.mxu0 %v11872
    %13149 = vmatpush.bf16.msra.mxu0 %v11871
    %13150 = vmatmul.bf16.gmra.mxu0 %v10798
    %v13151 = vpop.f32.mrf.mxu0
    %v13152 = vadd.f32 %v12983, %v13151
    %v13153 = vpop.f32.mrf.mxu0
    %v13154 = vadd.f32 %v12985, %v13153
    %13155 = vmatmul.bf16.gmra.mxu0 %v10810
    %v13156 = vpop.f32.mrf.mxu0
    %v13157 = vadd.f32 %v12988, %v13156
    %v13158 = vpop.f32.mrf.mxu0
    %v13159 = vadd.f32 %v12990, %v13158
    %13160 = vmatmul.bf16.gmra.mxu0 %v10822
    %v13161 = vpop.f32.mrf.mxu0
    %v13162 = vadd.f32 %v12993, %v13161
    %v13163 = vpop.f32.mrf.mxu0
    %v13164 = vadd.f32 %v12995, %v13163
    %13165 = vmatmul.bf16.gmra.mxu0 %v10834
    %v13166 = vpop.f32.mrf.mxu0
    %v13167 = vadd.f32 %v12998, %v13166
    %v13168 = vpop.f32.mrf.mxu0
    %v13169 = vadd.f32 %v13000, %v13168
    %13170 = vmatmul.bf16.gmra.mxu0 %v10846
    %v13171 = vpop.f32.mrf.mxu0
    %v13172 = vadd.f32 %v13003, %v13171
    %v13173 = vpop.f32.mrf.mxu0
    %v13174 = vadd.f32 %v13005, %v13173
    %13175 = vmatmul.bf16.gmra.mxu0 %v10858
    %v13176 = vpop.f32.mrf.mxu0
    %v13177 = vadd.f32 %v13008, %v13176
    %v13178 = vpop.f32.mrf.mxu0
    %v13179 = vadd.f32 %v13010, %v13178
    %13180 = vmatmul.bf16.gmra.mxu0 %v10870
    %v13181 = vpop.f32.mrf.mxu0
    %v13182 = vadd.f32 %v13013, %v13181
    %v13183 = vpop.f32.mrf.mxu0
    %v13184 = vadd.f32 %v13015, %v13183
    %13185 = vmatmul.bf16.gmra.mxu0 %v10882
    %v13186 = vpop.f32.mrf.mxu0
    %v13187 = vadd.f32 %v13018, %v13186
    %v13188 = vpop.f32.mrf.mxu0
    %v13189 = vadd.f32 %v13020, %v13188
    %13190 = vmatmul.bf16.gmra.mxu0 %v10894
    %v13191 = vpop.f32.mrf.mxu0
    %v13192 = vadd.f32 %v13023, %v13191
    %v13193 = vpop.f32.mrf.mxu0
    %v13194 = vadd.f32 %v13025, %v13193
    %13195 = vmatmul.bf16.gmra.mxu0 %v10906
    %v13196 = vpop.f32.mrf.mxu0
    %v13197 = vadd.f32 %v13028, %v13196
    %v13198 = vpop.f32.mrf.mxu0
    %v13199 = vadd.f32 %v13030, %v13198
    %13200 = vmatmul.bf16.gmra.mxu0 %v10918
    %v13201 = vpop.f32.mrf.mxu0
    %v13202 = vadd.f32 %v13033, %v13201
    %v13203 = vpop.f32.mrf.mxu0
    %v13204 = vadd.f32 %v13035, %v13203
    %13205 = vmatmul.bf16.gmra.mxu0 %v10930
    %v13206 = vpop.f32.mrf.mxu0
    %v13207 = vadd.f32 %v13038, %v13206
    %v13208 = vpop.f32.mrf.mxu0
    %v13209 = vadd.f32 %v13040, %v13208
    %13210 = vmatmul.bf16.gmra.mxu0 %v10942
    %v13211 = vpop.f32.mrf.mxu0
    %v13212 = vadd.f32 %v13043, %v13211
    %v13213 = vpop.f32.mrf.mxu0
    %v13214 = vadd.f32 %v13045, %v13213
    %13215 = vmatmul.bf16.gmra.mxu0 %v10954
    %v13216 = vpop.f32.mrf.mxu0
    %v13217 = vadd.f32 %v13048, %v13216
    %v13218 = vpop.f32.mrf.mxu0
    %v13219 = vadd.f32 %v13050, %v13218
    %13220 = vmatmul.bf16.gmra.mxu0 %v11356
    %v13221 = vpop.f32.mrf.mxu0
    %v13222 = vadd.f32 %v13053, %v13221
    %v13223 = vpop.f32.mrf.mxu0
    %v13224 = vadd.f32 %v13055, %v13223
    %13225 = vmatmul.bf16.gmra.mxu0 %v6728
    %v13226 = vpop.f32.mrf.mxu0
    %v13227 = vadd.f32 %v13058, %v13226
    %v13228 = vpop.f32.mrf.mxu0
    %v13229 = vadd.f32 %v13060, %v13228
    %13230 = vmatmul.bf16.gmra.mxu0 %v10978
    %v13231 = vpop.f32.mrf.mxu0
    %v13232 = vadd.f32 %v13063, %v13231
    %v13233 = vpop.f32.mrf.mxu0
    %v13234 = vadd.f32 %v13065, %v13233
    %13235 = vmatmul.bf16.gmra.mxu0 %v10990
    %v13236 = vpop.f32.mrf.mxu0
    %v13237 = vadd.f32 %v13068, %v13236
    %v13238 = vpop.f32.mrf.mxu0
    %v13239 = vadd.f32 %v13070, %v13238
    %13240 = vmatmul.bf16.gmra.mxu0 %v11002
    %v13241 = vpop.f32.mrf.mxu0
    %v13242 = vadd.f32 %v13073, %v13241
    %v13243 = vpop.f32.mrf.mxu0
    %v13244 = vadd.f32 %v13075, %v13243
    %13245 = vmatmul.bf16.gmra.mxu0 %v11014
    %v13246 = vpop.f32.mrf.mxu0
    %v13247 = vadd.f32 %v13078, %v13246
    %v13248 = vpop.f32.mrf.mxu0
    %v13249 = vadd.f32 %v13080, %v13248
    %13250 = vmatmul.bf16.gmra.mxu0 %v11026
    %v13251 = vpop.f32.mrf.mxu0
    %v13252 = vadd.f32 %v13083, %v13251
    %v13253 = vpop.f32.mrf.mxu0
    %v13254 = vadd.f32 %v13085, %v13253
    %13255 = vmatmul.bf16.gmra.mxu0 %v11038
    %v13256 = vpop.f32.mrf.mxu0
    %v13257 = vadd.f32 %v13088, %v13256
    %v13258 = vpop.f32.mrf.mxu0
    %v13259 = vadd.f32 %v13090, %v13258
    %13260 = vmatmul.bf16.gmra.mxu0 %v11050
    %v13261 = vpop.f32.mrf.mxu0
    %v13262 = vadd.f32 %v13093, %v13261
    %v13263 = vpop.f32.mrf.mxu0
    %v13264 = vadd.f32 %v13095, %v13263
    %13265 = vmatmul.bf16.gmra.mxu0 %v11062
    %v13266 = vpop.f32.mrf.mxu0
    %v13267 = vadd.f32 %v13098, %v13266
    %v13268 = vpop.f32.mrf.mxu0
    %v13269 = vadd.f32 %v13100, %v13268
    %13270 = vmatmul.bf16.gmra.mxu0 %v11074
    %v13271 = vpop.f32.mrf.mxu0
    %v13272 = vadd.f32 %v13103, %v13271
    %v13273 = vpop.f32.mrf.mxu0
    %v13274 = vadd.f32 %v13105, %v13273
    %13275 = vmatmul.bf16.gmra.mxu0 %v11086
    %v13276 = vpop.f32.mrf.mxu0
    %v13277 = vadd.f32 %v13108, %v13276
    %v13278 = vpop.f32.mrf.mxu0
    %v13279 = vadd.f32 %v13110, %v13278
    %13280 = vmatmul.bf16.gmra.mxu0 %v11098
    %v13281 = vpop.f32.mrf.mxu0
    %v13282 = vadd.f32 %v13113, %v13281
    %v13283 = vpop.f32.mrf.mxu0
    %v13284 = vadd.f32 %v13115, %v13283
    %13285 = vmatmul.bf16.gmra.mxu0 %v11110
    %v13286 = vpop.f32.mrf.mxu0
    %v13287 = vadd.f32 %v13118, %v13286
    %v13288 = vpop.f32.mrf.mxu0
    %v13289 = vadd.f32 %v13120, %v13288
    %13290 = vmatmul.bf16.gmra.mxu0 %v11122
    %v13291 = vpop.f32.mrf.mxu0
    %v13292 = vadd.f32 %v13123, %v13291
    %v13293 = vpop.f32.mrf.mxu0
    %v13294 = vadd.f32 %v13125, %v13293
    %13295 = vmatmul.bf16.gmra.mxu0 %v11134
    %v13296 = vpop.f32.mrf.mxu0
    %v13297 = vadd.f32 %v13128, %v13296
    %v13298 = vpop.f32.mrf.mxu0
    %v13299 = vadd.f32 %v13130, %v13298
    %13300 = vmatmul.bf16.gmra.mxu0 %v11368
    %v13301 = vpop.f32.mrf.mxu0
    %v13302 = vadd.f32 %v13133, %v13301
    %v13303 = vpop.f32.mrf.mxu0
    %v13304 = vadd.f32 %v13135, %v13303
    %13305 = vmatmul.bf16.gmra.mxu0 %v6728
    %v13306 = vpop.f32.mrf.mxu0
    %v13307 = vadd.f32 %v13138, %v13306
    %v13308 = vpop.f32.mrf.mxu0
    %v13309 = vadd.f32 %v13140, %v13308
    %13310 = vdwg.mxu0
    %13311 = vmatpush.bf16.msra.mxu0 %v11886
    %13312 = vmatpush.bf16.msra.mxu0 %v11885
    %13313 = vmatpush.bf16.msra.mxu0 %v11884
    %13314 = vmatpush.bf16.msra.mxu0 %v11883
    %13315 = vmatpush.bf16.msra.mxu0 %v11882
    %13316 = vmatpush.bf16.msra.mxu0 %v11881
    %13317 = vmatpush.bf16.msra.mxu0 %v11880
    %13318 = vmatpush.bf16.msra.mxu0 %v11879
    %13319 = vmatmul.bf16.gmra.mxu0 %v11230
    %v13320 = vpop.f32.mrf.mxu0
    %v13321 = vadd.f32 %v13152, %v13320
    %v13322 = vpop.f32.mrf.mxu0
    %v13323 = vadd.f32 %v13154, %v13322
    %13324 = vmatmul.bf16.gmra.mxu0 %v11233
    %v13325 = vpop.f32.mrf.mxu0
    %v13326 = vadd.f32 %v13157, %v13325
    %v13327 = vpop.f32.mrf.mxu0
    %v13328 = vadd.f32 %v13159, %v13327
    %13329 = vmatmul.bf16.gmra.mxu0 %v11236
    %v13330 = vpop.f32.mrf.mxu0
    %v13331 = vadd.f32 %v13162, %v13330
    %v13332 = vpop.f32.mrf.mxu0
    %v13333 = vadd.f32 %v13164, %v13332
    %13334 = vmatmul.bf16.gmra.mxu0 %v11239
    %v13335 = vpop.f32.mrf.mxu0
    %v13336 = vadd.f32 %v13167, %v13335
    %v13337 = vpop.f32.mrf.mxu0
    %v13338 = vadd.f32 %v13169, %v13337
    %13339 = vmatmul.bf16.gmra.mxu0 %v11242
    %v13340 = vpop.f32.mrf.mxu0
    %v13341 = vadd.f32 %v13172, %v13340
    %v13342 = vpop.f32.mrf.mxu0
    %v13343 = vadd.f32 %v13174, %v13342
    %13344 = vmatmul.bf16.gmra.mxu0 %v11245
    %v13345 = vpop.f32.mrf.mxu0
    %v13346 = vadd.f32 %v13177, %v13345
    %v13347 = vpop.f32.mrf.mxu0
    %v13348 = vadd.f32 %v13179, %v13347
    %13349 = vmatmul.bf16.gmra.mxu0 %v11248
    %v13350 = vpop.f32.mrf.mxu0
    %v13351 = vadd.f32 %v13182, %v13350
    %v13352 = vpop.f32.mrf.mxu0
    %v13353 = vadd.f32 %v13184, %v13352
    %13354 = vmatmul.bf16.gmra.mxu0 %v11251
    %v13355 = vpop.f32.mrf.mxu0
    %v13356 = vadd.f32 %v13187, %v13355
    %v13357 = vpop.f32.mrf.mxu0
    %v13358 = vadd.f32 %v13189, %v13357
    %13359 = vmatmul.bf16.gmra.mxu0 %v11254
    %v13360 = vpop.f32.mrf.mxu0
    %v13361 = vadd.f32 %v13192, %v13360
    %v13362 = vpop.f32.mrf.mxu0
    %v13363 = vadd.f32 %v13194, %v13362
    %13364 = vmatmul.bf16.gmra.mxu0 %v11257
    %v13365 = vpop.f32.mrf.mxu0
    %v13366 = vadd.f32 %v13197, %v13365
    %v13367 = vpop.f32.mrf.mxu0
    %v13368 = vadd.f32 %v13199, %v13367
    %13369 = vmatmul.bf16.gmra.mxu0 %v11260
    %v13370 = vpop.f32.mrf.mxu0
    %v13371 = vadd.f32 %v13202, %v13370
    %v13372 = vpop.f32.mrf.mxu0
    %v13373 = vadd.f32 %v13204, %v13372
    %13374 = vmatmul.bf16.gmra.mxu0 %v11263
    %v13375 = vpop.f32.mrf.mxu0
    %v13376 = vadd.f32 %v13207, %v13375
    %v13377 = vpop.f32.mrf.mxu0
    %v13378 = vadd.f32 %v13209, %v13377
    %13379 = vmatmul.bf16.gmra.mxu0 %v11266
    %v13380 = vpop.f32.mrf.mxu0
    %v13381 = vadd.f32 %v13212, %v13380
    %v13382 = vpop.f32.mrf.mxu0
    %v13383 = vadd.f32 %v13214, %v13382
    %13384 = vmatmul.bf16.gmra.mxu0 %v11269
    %v13385 = vpop.f32.mrf.mxu0
    %v13386 = vadd.f32 %v13217, %v13385
    %v13387 = vpop.f32.mrf.mxu0
    %v13388 = vadd.f32 %v13219, %v13387
    %13389 = vmatmul.bf16.gmra.mxu0 %v11377
    %v13390 = vpop.f32.mrf.mxu0
    %v13391 = vadd.f32 %v13222, %v13390
    %v13392 = vpop.f32.mrf.mxu0
    %v13393 = vadd.f32 %v13224, %v13392
    %13394 = vmatmul.bf16.gmra.mxu0 %v7185
    %v13395 = vpop.f32.mrf.mxu0
    %v13396 = vadd.f32 %v13227, %v13395
    %v13397 = vpop.f32.mrf.mxu0
    %v13398 = vadd.f32 %v13229, %v13397
    %13399 = vmatmul.bf16.gmra.mxu0 %v11275
    %v13400 = vpop.f32.mrf.mxu0
    %v13401 = vadd.f32 %v13232, %v13400
    %v13402 = vpop.f32.mrf.mxu0
    %v13403 = vadd.f32 %v13234, %v13402
    %13404 = vmatmul.bf16.gmra.mxu0 %v11278
    %v13405 = vpop.f32.mrf.mxu0
    %v13406 = vadd.f32 %v13237, %v13405
    %v13407 = vpop.f32.mrf.mxu0
    %v13408 = vadd.f32 %v13239, %v13407
    %13409 = vmatmul.bf16.gmra.mxu0 %v11281
    %v13410 = vpop.f32.mrf.mxu0
    %v13411 = vadd.f32 %v13242, %v13410
    %v13412 = vpop.f32.mrf.mxu0
    %v13413 = vadd.f32 %v13244, %v13412
    %13414 = vmatmul.bf16.gmra.mxu0 %v11284
    %v13415 = vpop.f32.mrf.mxu0
    %v13416 = vadd.f32 %v13247, %v13415
    %v13417 = vpop.f32.mrf.mxu0
    %v13418 = vadd.f32 %v13249, %v13417
    %13419 = vmatmul.bf16.gmra.mxu0 %v11287
    %v13420 = vpop.f32.mrf.mxu0
    %v13421 = vadd.f32 %v13252, %v13420
    %v13422 = vpop.f32.mrf.mxu0
    %v13423 = vadd.f32 %v13254, %v13422
    %13424 = vmatmul.bf16.gmra.mxu0 %v11290
    %v13425 = vpop.f32.mrf.mxu0
    %v13426 = vadd.f32 %v13257, %v13425
    %v13427 = vpop.f32.mrf.mxu0
    %v13428 = vadd.f32 %v13259, %v13427
    %13429 = vmatmul.bf16.gmra.mxu0 %v11293
    %v13430 = vpop.f32.mrf.mxu0
    %v13431 = vadd.f32 %v13262, %v13430
    %v13432 = vpop.f32.mrf.mxu0
    %v13433 = vadd.f32 %v13264, %v13432
    %13434 = vmatmul.bf16.gmra.mxu0 %v11296
    %v13435 = vpop.f32.mrf.mxu0
    %v13436 = vadd.f32 %v13267, %v13435
    %v13437 = vpop.f32.mrf.mxu0
    %v13438 = vadd.f32 %v13269, %v13437
    %13439 = vmatmul.bf16.gmra.mxu0 %v11299
    %v13440 = vpop.f32.mrf.mxu0
    %v13441 = vadd.f32 %v13272, %v13440
    %v13442 = vpop.f32.mrf.mxu0
    %v13443 = vadd.f32 %v13274, %v13442
    %13444 = vmatmul.bf16.gmra.mxu0 %v11302
    %v13445 = vpop.f32.mrf.mxu0
    %v13446 = vadd.f32 %v13277, %v13445
    %v13447 = vpop.f32.mrf.mxu0
    %v13448 = vadd.f32 %v13279, %v13447
    %13449 = vmatmul.bf16.gmra.mxu0 %v11305
    %v13450 = vpop.f32.mrf.mxu0
    %v13451 = vadd.f32 %v13282, %v13450
    %v13452 = vpop.f32.mrf.mxu0
    %v13453 = vadd.f32 %v13284, %v13452
    %13454 = vmatmul.bf16.gmra.mxu0 %v11308
    %v13455 = vpop.f32.mrf.mxu0
    %v13456 = vadd.f32 %v13287, %v13455
    %v13457 = vpop.f32.mrf.mxu0
    %v13458 = vadd.f32 %v13289, %v13457
    %13459 = vmatmul.bf16.gmra.mxu0 %v11311
    %v13460 = vpop.f32.mrf.mxu0
    %v13461 = vadd.f32 %v13292, %v13460
    %v13462 = vpop.f32.mrf.mxu0
    %v13463 = vadd.f32 %v13294, %v13462
    %13464 = vmatmul.bf16.gmra.mxu0 %v11314
    %v13465 = vpop.f32.mrf.mxu0
    %v13466 = vadd.f32 %v13297, %v13465
    %v13467 = vpop.f32.mrf.mxu0
    %v13468 = vadd.f32 %v13299, %v13467
    %13469 = vmatmul.bf16.gmra.mxu0 %v11380
    %v13470 = vpop.f32.mrf.mxu0
    %v13471 = vadd.f32 %v13302, %v13470
    %v13472 = vpop.f32.mrf.mxu0
    %v13473 = vadd.f32 %v13304, %v13472
    %13474 = vmatmul.bf16.gmra.mxu0 %v7185
    %v13475 = vpop.f32.mrf.mxu0
    %v13476 = vadd.f32 %v13307, %v13475
    %v13477 = vpop.f32.mrf.mxu0
    %v13478 = vadd.f32 %v13309, %v13477
    %13479 = vdwg.mxu0
    %v13481 = vrot.slane %v10260, 1
    %v13482 = vperm.slane %v10260, 0
    %v13483 = vperm.slane %v13481, 0
    %v13486 = vmul.f32 %v13321, %v13482
    %v13487 = vmul.f32 %v13323, %v13482
    %v13488 = vmul.f32 %v13326, %v13482
    %v13489 = vmul.f32 %v13328, %v13482
    %v13490 = vmul.f32 %v13331, %v13482
    %v13491 = vmul.f32 %v13333, %v13482
    %v13492 = vmul.f32 %v13336, %v13482
    %v13493 = vmul.f32 %v13338, %v13482
    %v13494 = vmul.f32 %v13341, %v13482
    %v13495 = vmul.f32 %v13343, %v13482
    %v13496 = vmul.f32 %v13346, %v13482
    %v13497 = vmul.f32 %v13348, %v13482
    %v13498 = vmul.f32 %v13351, %v13482
    %v13499 = vmul.f32 %v13353, %v13482
    %v13500 = vmul.f32 %v13356, %v13482
    %v13501 = vmul.f32 %v13358, %v13482
    %v13502 = vmul.f32 %v13361, %v13482
    %v13503 = vmul.f32 %v13363, %v13482
    %v13504 = vmul.f32 %v13366, %v13482
    %v13505 = vmul.f32 %v13368, %v13482
    %v13506 = vmul.f32 %v13371, %v13482
    %v13507 = vmul.f32 %v13373, %v13482
    %v13508 = vmul.f32 %v13376, %v13482
    %v13509 = vmul.f32 %v13378, %v13482
    %v13510 = vmul.f32 %v13381, %v13482
    %v13511 = vmul.f32 %v13383, %v13482
    %v13512 = vmul.f32 %v13386, %v13482
    %v13513 = vmul.f32 %v13388, %v13482
    %v13514 = vmul.f32 %v13391, %v13482
    %v13515 = vmul.f32 %v13393, %v13482
    %v13516 = vmul.f32 %v13396, %v13482
    %v13517 = vmul.f32 %v13398, %v13482
    %v13518 = vmul.f32 %v13401, %v13483
    %v13519 = vmul.f32 %v13403, %v13483
    %v13520 = vmul.f32 %v13406, %v13483
    %v13521 = vmul.f32 %v13408, %v13483
    %v13522 = vmul.f32 %v13411, %v13483
    %v13523 = vmul.f32 %v13413, %v13483
    %v13524 = vmul.f32 %v13416, %v13483
    %v13525 = vmul.f32 %v13418, %v13483
    %v13526 = vmul.f32 %v13421, %v13483
    %v13527 = vmul.f32 %v13423, %v13483
    %v13528 = vmul.f32 %v13426, %v13483
    %v13529 = vmul.f32 %v13428, %v13483
    %v13530 = vmul.f32 %v13431, %v13483
    %v13531 = vmul.f32 %v13433, %v13483
    %v13532 = vmul.f32 %v13436, %v13483
    %v13533 = vmul.f32 %v13438, %v13483
    %v13534 = vmul.f32 %v13441, %v13483
    %v13535 = vmul.f32 %v13443, %v13483
    %v13536 = vmul.f32 %v13446, %v13483
    %v13537 = vmul.f32 %v13448, %v13483
    %v13538 = vmul.f32 %v13451, %v13483
    %v13539 = vmul.f32 %v13453, %v13483
    %v13540 = vmul.f32 %v13456, %v13483
    %v13541 = vmul.f32 %v13458, %v13483
    %v13542 = vmul.f32 %v13461, %v13483
    %v13543 = vmul.f32 %v13463, %v13483
    %v13544 = vmul.f32 %v13466, %v13483
    %v13545 = vmul.f32 %v13468, %v13483
    %v13546 = vmul.f32 %v13471, %v13483
    %v13547 = vmul.f32 %v13473, %v13483
    %v13548 = vmul.f32 %v13476, %v13483
    %v13549 = vmul.f32 %v13478, %v13483
    %v13550 = vstv %s10262
    %v13551 = vmul.f32 %v13550, %v10228
    %v13552 = vmul.f32 %v13550, %v10229
    %v13553 = vmul.f32 %v13550, %v10230
    %v13554 = vmul.f32 %v13550, %v10231
    %v13555 = vmul.f32 %v13550, %v10232
    %v13556 = vmul.f32 %v13550, %v10233
    %v13557 = vmul.f32 %v13550, %v10234
    %v13558 = vmul.f32 %v13550, %v10235
    %v13559 = vmul.f32 %v13550, %v10236
    %v13560 = vmul.f32 %v13550, %v10237
    %v13561 = vmul.f32 %v13550, %v10238
    %v13562 = vmul.f32 %v13550, %v10239
    %v13563 = vmul.f32 %v13550, %v10240
    %v13564 = vmul.f32 %v13550, %v10241
    %v13565 = vmul.f32 %v13550, %v10242
    %v13566 = vmul.f32 %v13550, %v10243
    %v13567 = vmul.f32 %v13550, %v10244
    %v13568 = vmul.f32 %v13550, %v10245
    %v13569 = vmul.f32 %v13550, %v10246
    %v13570 = vmul.f32 %v13550, %v10247
    %v13571 = vmul.f32 %v13550, %v10248
    %v13572 = vmul.f32 %v13550, %v10249
    %v13573 = vmul.f32 %v13550, %v10250
    %v13574 = vmul.f32 %v13550, %v10251
    %v13575 = vmul.f32 %v13550, %v10252
    %v13576 = vmul.f32 %v13550, %v10253
    %v13577 = vmul.f32 %v13550, %v10254
    %v13578 = vmul.f32 %v13550, %v10255
    %v13579 = vmul.f32 %v13550, %v10256
    %v13580 = vmul.f32 %v13550, %v10257
    %v13581 = vmul.f32 %v13550, %v10258
    %v13582 = vmul.f32 %v13550, %v10259
    %13584 = vset.pattern.permute.xlu0 0
    %13585 = vperm.xlu0 %13584, %v13551
    %v13586 = vpop.permute.xlu0 %13585
    %13589 = vset.pattern.permute.xlu0 0
    %13590 = vperm.xlu0 %13589, %v13552
    %v13591 = vpop.permute.xlu0 %13590
    %13594 = vset.pattern.permute.xlu0 0
    %13595 = vperm.xlu0 %13594, %v13553
    %v13596 = vpop.permute.xlu0 %13595
    %13599 = vset.pattern.permute.xlu0 0
    %13600 = vperm.xlu0 %13599, %v13554
    %v13601 = vpop.permute.xlu0 %13600
    %13604 = vset.pattern.permute.xlu0 0
    %13605 = vperm.xlu0 %13604, %v13555
    %v13606 = vpop.permute.xlu0 %13605
    %13609 = vset.pattern.permute.xlu0 0
    %13610 = vperm.xlu0 %13609, %v13556
    %v13611 = vpop.permute.xlu0 %13610
    %13614 = vset.pattern.permute.xlu0 0
    %13615 = vperm.xlu0 %13614, %v13557
    %v13616 = vpop.permute.xlu0 %13615
    %13619 = vset.pattern.permute.xlu0 0
    %13620 = vperm.xlu0 %13619, %v13558
    %v13621 = vpop.permute.xlu0 %13620
    %13624 = vset.pattern.permute.xlu0 0
    %13625 = vperm.xlu0 %13624, %v13559
    %v13626 = vpop.permute.xlu0 %13625
    %13629 = vset.pattern.permute.xlu0 0
    %13630 = vperm.xlu0 %13629, %v13560
    %v13631 = vpop.permute.xlu0 %13630
    %13634 = vset.pattern.permute.xlu0 0
    %13635 = vperm.xlu0 %13634, %v13561
    %v13636 = vpop.permute.xlu0 %13635
    %13639 = vset.pattern.permute.xlu0 0
    %13640 = vperm.xlu0 %13639, %v13562
    %v13641 = vpop.permute.xlu0 %13640
    %13644 = vset.pattern.permute.xlu0 0
    %13645 = vperm.xlu0 %13644, %v13563
    %v13646 = vpop.permute.xlu0 %13645
    %13649 = vset.pattern.permute.xlu0 0
    %13650 = vperm.xlu0 %13649, %v13564
    %v13651 = vpop.permute.xlu0 %13650
    %13654 = vset.pattern.permute.xlu0 0
    %13655 = vperm.xlu0 %13654, %v13565
    %v13656 = vpop.permute.xlu0 %13655
    %13659 = vset.pattern.permute.xlu0 0
    %13660 = vperm.xlu0 %13659, %v13566
    %v13661 = vpop.permute.xlu0 %13660
    %13664 = vset.pattern.permute.xlu0 0
    %13665 = vperm.xlu0 %13664, %v13567
    %v13666 = vpop.permute.xlu0 %13665
    %13669 = vset.pattern.permute.xlu0 0
    %13670 = vperm.xlu0 %13669, %v13568
    %v13671 = vpop.permute.xlu0 %13670
    %13674 = vset.pattern.permute.xlu0 0
    %13675 = vperm.xlu0 %13674, %v13569
    %v13676 = vpop.permute.xlu0 %13675
    %13679 = vset.pattern.permute.xlu0 0
    %13680 = vperm.xlu0 %13679, %v13570
    %v13681 = vpop.permute.xlu0 %13680
    %13684 = vset.pattern.permute.xlu0 0
    %13685 = vperm.xlu0 %13684, %v13571
    %v13686 = vpop.permute.xlu0 %13685
    %13689 = vset.pattern.permute.xlu0 0
    %13690 = vperm.xlu0 %13689, %v13572
    %v13691 = vpop.permute.xlu0 %13690
    %13694 = vset.pattern.permute.xlu0 0
    %13695 = vperm.xlu0 %13694, %v13573
    %v13696 = vpop.permute.xlu0 %13695
    %13699 = vset.pattern.permute.xlu0 0
    %13700 = vperm.xlu0 %13699, %v13574
    %v13701 = vpop.permute.xlu0 %13700
    %13704 = vset.pattern.permute.xlu0 0
    %13705 = vperm.xlu0 %13704, %v13575
    %v13706 = vpop.permute.xlu0 %13705
    %13709 = vset.pattern.permute.xlu0 0
    %13710 = vperm.xlu0 %13709, %v13576
    %v13711 = vpop.permute.xlu0 %13710
    %13714 = vset.pattern.permute.xlu0 0
    %13715 = vperm.xlu0 %13714, %v13577
    %v13716 = vpop.permute.xlu0 %13715
    %13719 = vset.pattern.permute.xlu0 0
    %13720 = vperm.xlu0 %13719, %v13578
    %v13721 = vpop.permute.xlu0 %13720
    %13724 = vset.pattern.permute.xlu0 0
    %13725 = vperm.xlu0 %13724, %v13579
    %v13726 = vpop.permute.xlu0 %13725
    %13729 = vset.pattern.permute.xlu0 0
    %13730 = vperm.xlu0 %13729, %v13580
    %v13731 = vpop.permute.xlu0 %13730
    %13734 = vset.pattern.permute.xlu0 0
    %13735 = vperm.xlu0 %13734, %v13581
    %v13736 = vpop.permute.xlu0 %13735
    %13739 = vset.pattern.permute.xlu0 0
    %13740 = vperm.xlu0 %13739, %v13582
    %v13741 = vpop.permute.xlu0 %13740
    %v13743 = vadd.f32 %v13486, %v13586
    %v13744 = vadd.f32 %v13487, %v13591
    %v13745 = vadd.f32 %v13488, %v13596
    %v13746 = vadd.f32 %v13489, %v13601
    %v13747 = vadd.f32 %v13490, %v13606
    %v13748 = vadd.f32 %v13491, %v13611
    %v13749 = vadd.f32 %v13492, %v13616
    %v13750 = vadd.f32 %v13493, %v13621
    %v13751 = vadd.f32 %v13494, %v13626
    %v13752 = vadd.f32 %v13495, %v13631
    %v13753 = vadd.f32 %v13496, %v13636
    %v13754 = vadd.f32 %v13497, %v13641
    %v13755 = vadd.f32 %v13498, %v13646
    %v13756 = vadd.f32 %v13499, %v13651
    %v13757 = vadd.f32 %v13500, %v13656
    %v13758 = vadd.f32 %v13501, %v13661
    %v13759 = vadd.f32 %v13502, %v13666
    %v13760 = vadd.f32 %v13503, %v13671
    %v13761 = vadd.f32 %v13504, %v13676
    %v13762 = vadd.f32 %v13505, %v13681
    %v13763 = vadd.f32 %v13506, %v13686
    %v13764 = vadd.f32 %v13507, %v13691
    %v13765 = vadd.f32 %v13508, %v13696
    %v13766 = vadd.f32 %v13509, %v13701
    %v13767 = vadd.f32 %v13510, %v13706
    %v13768 = vadd.f32 %v13511, %v13711
    %v13769 = vadd.f32 %v13512, %v13716
    %v13770 = vadd.f32 %v13513, %v13721
    %v13771 = vadd.f32 %v13514, %v13726
    %v13772 = vadd.f32 %v13515, %v13731
    %v13773 = vadd.f32 %v13516, %v13736
    %v13774 = vadd.f32 %v13517, %v13741
    %v13775 = vadd.f32 %v13518, %v13586
    %v13776 = vadd.f32 %v13519, %v13591
    %v13777 = vadd.f32 %v13520, %v13596
    %v13778 = vadd.f32 %v13521, %v13601
    %v13779 = vadd.f32 %v13522, %v13606
    %v13780 = vadd.f32 %v13523, %v13611
    %v13781 = vadd.f32 %v13524, %v13616
    %v13782 = vadd.f32 %v13525, %v13621
    %v13783 = vadd.f32 %v13526, %v13626
    %v13784 = vadd.f32 %v13527, %v13631
    %v13785 = vadd.f32 %v13528, %v13636
    %v13786 = vadd.f32 %v13529, %v13641
    %v13787 = vadd.f32 %v13530, %v13646
    %v13788 = vadd.f32 %v13531, %v13651
    %v13789 = vadd.f32 %v13532, %v13656
    %v13790 = vadd.f32 %v13533, %v13661
    %v13791 = vadd.f32 %v13534, %v13666
    %v13792 = vadd.f32 %v13535, %v13671
    %v13793 = vadd.f32 %v13536, %v13676
    %v13794 = vadd.f32 %v13537, %v13681
    %v13795 = vadd.f32 %v13538, %v13686
    %v13796 = vadd.f32 %v13539, %v13691
    %v13797 = vadd.f32 %v13540, %v13696
    %v13798 = vadd.f32 %v13541, %v13701
    %v13799 = vadd.f32 %v13542, %v13706
    %v13800 = vadd.f32 %v13543, %v13711
    %v13801 = vadd.f32 %v13544, %v13716
    %v13802 = vadd.f32 %v13545, %v13721
    %v13803 = vadd.f32 %v13546, %v13726
    %v13804 = vadd.f32 %v13547, %v13731
    %v13805 = vadd.f32 %v13548, %v13736
    %v13806 = vadd.f32 %v13549, %v13741
    %v13808 = vperm.slane %v10261, 0
    %v13810 = vadd.f32 %v13743, %v13808
    %v13811 = vadd.f32 %v13744, %v13808
    %v13812 = vadd.f32 %v13745, %v13808
    %v13813 = vadd.f32 %v13746, %v13808
    %v13814 = vadd.f32 %v13747, %v13808
    %v13815 = vadd.f32 %v13748, %v13808
    %v13816 = vadd.f32 %v13749, %v13808
    %v13817 = vadd.f32 %v13750, %v13808
    %v13818 = vadd.f32 %v13751, %v13808
    %v13819 = vadd.f32 %v13752, %v13808
    %v13820 = vadd.f32 %v13753, %v13808
    %v13821 = vadd.f32 %v13754, %v13808
    %v13822 = vadd.f32 %v13755, %v13808
    %v13823 = vadd.f32 %v13756, %v13808
    %v13824 = vadd.f32 %v13757, %v13808
    %v13825 = vadd.f32 %v13758, %v13808
    %v13826 = vadd.f32 %v13759, %v13808
    %v13827 = vadd.f32 %v13760, %v13808
    %v13828 = vadd.f32 %v13761, %v13808
    %v13829 = vadd.f32 %v13762, %v13808
    %v13830 = vadd.f32 %v13763, %v13808
    %v13831 = vadd.f32 %v13764, %v13808
    %v13832 = vadd.f32 %v13765, %v13808
    %v13833 = vadd.f32 %v13766, %v13808
    %v13834 = vadd.f32 %v13767, %v13808
    %v13835 = vadd.f32 %v13768, %v13808
    %v13836 = vadd.f32 %v13769, %v13808
    %v13837 = vadd.f32 %v13770, %v13808
    %v13838 = vadd.f32 %v13771, %v13808
    %v13839 = vadd.f32 %v13772, %v13808
    %v13840 = vadd.f32 %v13773, %v13808
    %v13841 = vadd.f32 %v13774, %v13808
    %v13842 = vadd.f32 %v13775, %v13808
    %v13843 = vadd.f32 %v13776, %v13808
    %v13844 = vadd.f32 %v13777, %v13808
    %v13845 = vadd.f32 %v13778, %v13808
    %v13846 = vadd.f32 %v13779, %v13808
    %v13847 = vadd.f32 %v13780, %v13808
    %v13848 = vadd.f32 %v13781, %v13808
    %v13849 = vadd.f32 %v13782, %v13808
    %v13850 = vadd.f32 %v13783, %v13808
    %v13851 = vadd.f32 %v13784, %v13808
    %v13852 = vadd.f32 %v13785, %v13808
    %v13853 = vadd.f32 %v13786, %v13808
    %v13854 = vadd.f32 %v13787, %v13808
    %v13855 = vadd.f32 %v13788, %v13808
    %v13856 = vadd.f32 %v13789, %v13808
    %v13857 = vadd.f32 %v13790, %v13808
    %v13858 = vadd.f32 %v13791, %v13808
    %v13859 = vadd.f32 %v13792, %v13808
    %v13860 = vadd.f32 %v13793, %v13808
    %v13861 = vadd.f32 %v13794, %v13808
    %v13862 = vadd.f32 %v13795, %v13808
    %v13863 = vadd.f32 %v13796, %v13808
    %v13864 = vadd.f32 %v13797, %v13808
    %v13865 = vadd.f32 %v13798, %v13808
    %v13866 = vadd.f32 %v13799, %v13808
    %v13867 = vadd.f32 %v13800, %v13808
    %v13868 = vadd.f32 %v13801, %v13808
    %v13869 = vadd.f32 %v13802, %v13808
    %v13870 = vadd.f32 %v13803, %v13808
    %v13871 = vadd.f32 %v13804, %v13808
    %v13872 = vadd.f32 %v13805, %v13808
    %v13873 = vadd.f32 %v13806, %v13808
    %vm13874 = vcmp.ge.f32.partialorder %v13810, 0.0
    %vm13875 = vcmp.ge.f32.partialorder %v13811, 0.0
    %vm13876 = vcmp.ge.f32.partialorder %v13812, 0.0
    %vm13877 = vcmp.ge.f32.partialorder %v13813, 0.0
    %vm13878 = vcmp.ge.f32.partialorder %v13814, 0.0
    %vm13879 = vcmp.ge.f32.partialorder %v13815, 0.0
    %vm13880 = vcmp.ge.f32.partialorder %v13816, 0.0
    %vm13881 = vcmp.ge.f32.partialorder %v13817, 0.0
    %vm13882 = vcmp.ge.f32.partialorder %v13818, 0.0
    %vm13883 = vcmp.ge.f32.partialorder %v13819, 0.0
    %vm13884 = vcmp.ge.f32.partialorder %v13820, 0.0
    %vm13885 = vcmp.ge.f32.partialorder %v13821, 0.0
    %vm13886 = vcmp.ge.f32.partialorder %v13822, 0.0
    %vm13887 = vcmp.ge.f32.partialorder %v13823, 0.0
    %vm13888 = vcmp.ge.f32.partialorder %v13824, 0.0
    %vm13889 = vcmp.ge.f32.partialorder %v13825, 0.0
    %vm13890 = vcmp.ge.f32.partialorder %v13826, 0.0
    %vm13891 = vcmp.ge.f32.partialorder %v13827, 0.0
    %vm13892 = vcmp.ge.f32.partialorder %v13828, 0.0
    %vm13893 = vcmp.ge.f32.partialorder %v13829, 0.0
    %vm13894 = vcmp.ge.f32.partialorder %v13830, 0.0
    %vm13895 = vcmp.ge.f32.partialorder %v13831, 0.0
    %vm13896 = vcmp.ge.f32.partialorder %v13832, 0.0
    %vm13897 = vcmp.ge.f32.partialorder %v13833, 0.0
    %vm13898 = vcmp.ge.f32.partialorder %v13834, 0.0
    %vm13899 = vcmp.ge.f32.partialorder %v13835, 0.0
    %vm13900 = vcmp.ge.f32.partialorder %v13836, 0.0
    %vm13901 = vcmp.ge.f32.partialorder %v13837, 0.0
    %vm13902 = vcmp.ge.f32.partialorder %v13838, 0.0
    %vm13903 = vcmp.ge.f32.partialorder %v13839, 0.0
    %vm13904 = vcmp.ge.f32.partialorder %v13840, 0.0
    %vm13905 = vcmp.ge.f32.partialorder %v13841, 0.0
    %vm13906 = vcmp.ge.f32.partialorder %v13842, 0.0
    %vm13907 = vcmp.ge.f32.partialorder %v13843, 0.0
    %vm13908 = vcmp.ge.f32.partialorder %v13844, 0.0
    %vm13909 = vcmp.ge.f32.partialorder %v13845, 0.0
    %vm13910 = vcmp.ge.f32.partialorder %v13846, 0.0
    %vm13911 = vcmp.ge.f32.partialorder %v13847, 0.0
    %vm13912 = vcmp.ge.f32.partialorder %v13848, 0.0
    %vm13913 = vcmp.ge.f32.partialorder %v13849, 0.0
    %vm13914 = vcmp.ge.f32.partialorder %v13850, 0.0
    %vm13915 = vcmp.ge.f32.partialorder %v13851, 0.0
    %vm13916 = vcmp.ge.f32.partialorder %v13852, 0.0
    %vm13917 = vcmp.ge.f32.partialorder %v13853, 0.0
    %vm13918 = vcmp.ge.f32.partialorder %v13854, 0.0
    %vm13919 = vcmp.ge.f32.partialorder %v13855, 0.0
    %vm13920 = vcmp.ge.f32.partialorder %v13856, 0.0
    %vm13921 = vcmp.ge.f32.partialorder %v13857, 0.0
    %vm13922 = vcmp.ge.f32.partialorder %v13858, 0.0
    %vm13923 = vcmp.ge.f32.partialorder %v13859, 0.0
    %vm13924 = vcmp.ge.f32.partialorder %v13860, 0.0
    %vm13925 = vcmp.ge.f32.partialorder %v13861, 0.0
    %vm13926 = vcmp.ge.f32.partialorder %v13862, 0.0
    %vm13927 = vcmp.ge.f32.partialorder %v13863, 0.0
    %vm13928 = vcmp.ge.f32.partialorder %v13864, 0.0
    %vm13929 = vcmp.ge.f32.partialorder %v13865, 0.0
    %vm13930 = vcmp.ge.f32.partialorder %v13866, 0.0
    %vm13931 = vcmp.ge.f32.partialorder %v13867, 0.0
    %vm13932 = vcmp.ge.f32.partialorder %v13868, 0.0
    %vm13933 = vcmp.ge.f32.partialorder %v13869, 0.0
    %vm13934 = vcmp.ge.f32.partialorder %v13870, 0.0
    %vm13935 = vcmp.ge.f32.partialorder %v13871, 0.0
    %vm13936 = vcmp.ge.f32.partialorder %v13872, 0.0
    %vm13937 = vcmp.ge.f32.partialorder %v13873, 0.0
    %v13938 = vmul.f32 %v13810, 0.2
    %v13939 = vmul.f32 %v13811, 0.2
    %v13940 = vmul.f32 %v13812, 0.2
    %v13941 = vmul.f32 %v13813, 0.2
    %v13942 = vmul.f32 %v13814, 0.2
    %v13943 = vmul.f32 %v13815, 0.2
    %v13944 = vmul.f32 %v13816, 0.2
    %v13945 = vmul.f32 %v13817, 0.2
    %v13946 = vmul.f32 %v13818, 0.2
    %v13947 = vmul.f32 %v13819, 0.2
    %v13948 = vmul.f32 %v13820, 0.2
    %v13949 = vmul.f32 %v13821, 0.2
    %v13950 = vmul.f32 %v13822, 0.2
    %v13951 = vmul.f32 %v13823, 0.2
    %v13952 = vmul.f32 %v13824, 0.2
    %v13953 = vmul.f32 %v13825, 0.2
    %v13954 = vmul.f32 %v13826, 0.2
    %v13955 = vmul.f32 %v13827, 0.2
    %v13956 = vmul.f32 %v13828, 0.2
    %v13957 = vmul.f32 %v13829, 0.2
    %v13958 = vmul.f32 %v13830, 0.2
    %v13959 = vmul.f32 %v13831, 0.2
    %v13960 = vmul.f32 %v13832, 0.2
    %v13961 = vmul.f32 %v13833, 0.2
    %v13962 = vmul.f32 %v13834, 0.2
    %v13963 = vmul.f32 %v13835, 0.2
    %v13964 = vmul.f32 %v13836, 0.2
    %v13965 = vmul.f32 %v13837, 0.2
    %v13966 = vmul.f32 %v13838, 0.2
    %v13967 = vmul.f32 %v13839, 0.2
    %v13968 = vmul.f32 %v13840, 0.2
    %v13969 = vmul.f32 %v13841, 0.2
    %v13970 = vmul.f32 %v13842, 0.2
    %v13971 = vmul.f32 %v13843, 0.2
    %v13972 = vmul.f32 %v13844, 0.2
    %v13973 = vmul.f32 %v13845, 0.2
    %v13974 = vmul.f32 %v13846, 0.2
    %v13975 = vmul.f32 %v13847, 0.2
    %v13976 = vmul.f32 %v13848, 0.2
    %v13977 = vmul.f32 %v13849, 0.2
    %v13978 = vmul.f32 %v13850, 0.2
    %v13979 = vmul.f32 %v13851, 0.2
    %v13980 = vmul.f32 %v13852, 0.2
    %v13981 = vmul.f32 %v13853, 0.2
    %v13982 = vmul.f32 %v13854, 0.2
    %v13983 = vmul.f32 %v13855, 0.2
    %v13984 = vmul.f32 %v13856, 0.2
    %v13985 = vmul.f32 %v13857, 0.2
    %v13986 = vmul.f32 %v13858, 0.2
    %v13987 = vmul.f32 %v13859, 0.2
    %v13988 = vmul.f32 %v13860, 0.2
    %v13989 = vmul.f32 %v13861, 0.2
    %v13990 = vmul.f32 %v13862, 0.2
    %v13991 = vmul.f32 %v13863, 0.2
    %v13992 = vmul.f32 %v13864, 0.2
    %v13993 = vmul.f32 %v13865, 0.2
    %v13994 = vmul.f32 %v13866, 0.2
    %v13995 = vmul.f32 %v13867, 0.2
    %v13996 = vmul.f32 %v13868, 0.2
    %v13997 = vmul.f32 %v13869, 0.2
    %v13998 = vmul.f32 %v13870, 0.2
    %v13999 = vmul.f32 %v13871, 0.2
    %v14000 = vmul.f32 %v13872, 0.2
    %v14001 = vmul.f32 %v13873, 0.2
    %v14002 = vsel %vm13874, %v13810, %v13938
    %v14003 = vsel %vm13875, %v13811, %v13939
    %v14004 = vsel %vm13876, %v13812, %v13940
    %v14005 = vsel %vm13877, %v13813, %v13941
    %v14006 = vsel %vm13878, %v13814, %v13942
    %v14007 = vsel %vm13879, %v13815, %v13943
    %v14008 = vsel %vm13880, %v13816, %v13944
    %v14009 = vsel %vm13881, %v13817, %v13945
    %v14010 = vsel %vm13882, %v13818, %v13946
    %v14011 = vsel %vm13883, %v13819, %v13947
    %v14012 = vsel %vm13884, %v13820, %v13948
    %v14013 = vsel %vm13885, %v13821, %v13949
    %v14014 = vsel %vm13886, %v13822, %v13950
    %v14015 = vsel %vm13887, %v13823, %v13951
    %v14016 = vsel %vm13888, %v13824, %v13952
    %v14017 = vsel %vm13889, %v13825, %v13953
    %v14018 = vsel %vm13890, %v13826, %v13954
    %v14019 = vsel %vm13891, %v13827, %v13955
    %v14020 = vsel %vm13892, %v13828, %v13956
    %v14021 = vsel %vm13893, %v13829, %v13957
    %v14022 = vsel %vm13894, %v13830, %v13958
    %v14023 = vsel %vm13895, %v13831, %v13959
    %v14024 = vsel %vm13896, %v13832, %v13960
    %v14025 = vsel %vm13897, %v13833, %v13961
    %v14026 = vsel %vm13898, %v13834, %v13962
    %v14027 = vsel %vm13899, %v13835, %v13963
    %v14028 = vsel %vm13900, %v13836, %v13964
    %v14029 = vsel %vm13901, %v13837, %v13965
    %v14030 = vsel %vm13902, %v13838, %v13966
    %v14031 = vsel %vm13903, %v13839, %v13967
    %v14032 = vsel %vm13904, %v13840, %v13968
    %v14033 = vsel %vm13905, %v13841, %v13969
    %v14034 = vsel %vm13906, %v13842, %v13970
    %v14035 = vsel %vm13907, %v13843, %v13971
    %v14036 = vsel %vm13908, %v13844, %v13972
    %v14037 = vsel %vm13909, %v13845, %v13973
    %v14038 = vsel %vm13910, %v13846, %v13974
    %v14039 = vsel %vm13911, %v13847, %v13975
    %v14040 = vsel %vm13912, %v13848, %v13976
    %v14041 = vsel %vm13913, %v13849, %v13977
    %v14042 = vsel %vm13914, %v13850, %v13978
    %v14043 = vsel %vm13915, %v13851, %v13979
    %v14044 = vsel %vm13916, %v13852, %v13980
    %v14045 = vsel %vm13917, %v13853, %v13981
    %v14046 = vsel %vm13918, %v13854, %v13982
    %v14047 = vsel %vm13919, %v13855, %v13983
    %v14048 = vsel %vm13920, %v13856, %v13984
    %v14049 = vsel %vm13921, %v13857, %v13985
    %v14050 = vsel %vm13922, %v13858, %v13986
    %v14051 = vsel %vm13923, %v13859, %v13987
    %v14052 = vsel %vm13924, %v13860, %v13988
    %v14053 = vsel %vm13925, %v13861, %v13989
    %v14054 = vsel %vm13926, %v13862, %v13990
    %v14055 = vsel %vm13927, %v13863, %v13991
    %v14056 = vsel %vm13928, %v13864, %v13992
    %v14057 = vsel %vm13929, %v13865, %v13993
    %v14058 = vsel %vm13930, %v13866, %v13994
    %v14059 = vsel %vm13931, %v13867, %v13995
    %v14060 = vsel %vm13932, %v13868, %v13996
    %v14061 = vsel %vm13933, %v13869, %v13997
    %v14062 = vsel %vm13934, %v13870, %v13998
    %v14063 = vsel %vm13935, %v13871, %v13999
    %v14064 = vsel %vm13936, %v13872, %v14000
    %v14065 = vsel %vm13937, %v13873, %v14001
    %v14066 = vmul.f32 %v14002, 1.4142135
    %v14067 = vmul.f32 %v14003, 1.4142135
    %v14068 = vmul.f32 %v14004, 1.4142135
    %v14069 = vmul.f32 %v14005, 1.4142135
    %v14070 = vmul.f32 %v14006, 1.4142135
    %v14071 = vmul.f32 %v14007, 1.4142135
    %v14072 = vmul.f32 %v14008, 1.4142135
    %v14073 = vmul.f32 %v14009, 1.4142135
    %v14074 = vmul.f32 %v14010, 1.4142135
    %v14075 = vmul.f32 %v14011, 1.4142135
    %v14076 = vmul.f32 %v14012, 1.4142135
    %v14077 = vmul.f32 %v14013, 1.4142135
    %v14078 = vmul.f32 %v14014, 1.4142135
    %v14079 = vmul.f32 %v14015, 1.4142135
    %v14080 = vmul.f32 %v14016, 1.4142135
    %v14081 = vmul.f32 %v14017, 1.4142135
    %v14082 = vmul.f32 %v14018, 1.4142135
    %v14083 = vmul.f32 %v14019, 1.4142135
    %v14084 = vmul.f32 %v14020, 1.4142135
    %v14085 = vmul.f32 %v14021, 1.4142135
    %v14086 = vmul.f32 %v14022, 1.4142135
    %v14087 = vmul.f32 %v14023, 1.4142135
    %v14088 = vmul.f32 %v14024, 1.4142135
    %v14089 = vmul.f32 %v14025, 1.4142135
    %v14090 = vmul.f32 %v14026, 1.4142135
    %v14091 = vmul.f32 %v14027, 1.4142135
    %v14092 = vmul.f32 %v14028, 1.4142135
    %v14093 = vmul.f32 %v14029, 1.4142135
    %v14094 = vmul.f32 %v14030, 1.4142135
    %v14095 = vmul.f32 %v14031, 1.4142135
    %v14096 = vmul.f32 %v14032, 1.4142135
    %v14097 = vmul.f32 %v14033, 1.4142135
    %v14098 = vmul.f32 %v14034, 1.4142135
    %v14099 = vmul.f32 %v14035, 1.4142135
    %v14100 = vmul.f32 %v14036, 1.4142135
    %v14101 = vmul.f32 %v14037, 1.4142135
    %v14102 = vmul.f32 %v14038, 1.4142135
    %v14103 = vmul.f32 %v14039, 1.4142135
    %v14104 = vmul.f32 %v14040, 1.4142135
    %v14105 = vmul.f32 %v14041, 1.4142135
    %v14106 = vmul.f32 %v14042, 1.4142135
    %v14107 = vmul.f32 %v14043, 1.4142135
    %v14108 = vmul.f32 %v14044, 1.4142135
    %v14109 = vmul.f32 %v14045, 1.4142135
    %v14110 = vmul.f32 %v14046, 1.4142135
    %v14111 = vmul.f32 %v14047, 1.4142135
    %v14112 = vmul.f32 %v14048, 1.4142135
    %v14113 = vmul.f32 %v14049, 1.4142135
    %v14114 = vmul.f32 %v14050, 1.4142135
    %v14115 = vmul.f32 %v14051, 1.4142135
    %v14116 = vmul.f32 %v14052, 1.4142135
    %v14117 = vmul.f32 %v14053, 1.4142135
    %v14118 = vmul.f32 %v14054, 1.4142135
    %v14119 = vmul.f32 %v14055, 1.4142135
    %v14120 = vmul.f32 %v14056, 1.4142135
    %v14121 = vmul.f32 %v14057, 1.4142135
    %v14122 = vmul.f32 %v14058, 1.4142135
    %v14123 = vmul.f32 %v14059, 1.4142135
    %v14124 = vmul.f32 %v14060, 1.4142135
    %v14125 = vmul.f32 %v14061, 1.4142135
    %v14126 = vmul.f32 %v14062, 1.4142135
    %v14127 = vmul.f32 %v14063, 1.4142135
    %v14128 = vmul.f32 %v14064, 1.4142135
    %v14129 = vmul.f32 %v14065, 1.4142135
    %14130 = vst [vmem:[#allocation18] sm:$0xff] %v14066
    %14131 = vst [vmem:[#allocation18 + $0x8] sm:$0xff] %v14067
    %14132 = vst [vmem:[#allocation18 + $0x10] sm:$0xff] %v14068
    %14133 = vst [vmem:[#allocation18 + $0x18] sm:$0xff] %v14069
    %14134 = vst [vmem:[#allocation18 + $0x20] sm:$0xff] %v14070
    %14135 = vst [vmem:[#allocation18 + $0x28] sm:$0xff] %v14071
    %14136 = vst [vmem:[#allocation18 + $0x30] sm:$0xff] %v14072
    %14137 = vst [vmem:[#allocation18 + $0x38] sm:$0xff] %v14073
    %14138 = vst [vmem:[#allocation18 + $0x40] sm:$0xff] %v14074
    %14139 = vst [vmem:[#allocation18 + $0x48] sm:$0xff] %v14075
    %14140 = vst [vmem:[#allocation18 + $0x50] sm:$0xff] %v14076
    %14141 = vst [vmem:[#allocation18 + $0x58] sm:$0xff] %v14077
    %14142 = vst [vmem:[#allocation18 + $0x60] sm:$0xff] %v14078
    %14143 = vst [vmem:[#allocation18 + $0x68] sm:$0xff] %v14079
    %14144 = vst [vmem:[#allocation18 + $0x70] sm:$0xff] %v14080
    %14145 = vst [vmem:[#allocation18 + $0x78] sm:$0xff] %v14081
    %14146 = vst [vmem:[#allocation18 + $0x80] sm:$0xff] %v14082
    %14147 = vst [vmem:[#allocation18 + $0x88] sm:$0xff] %v14083
    %14148 = vst [vmem:[#allocation18 + $0x90] sm:$0xff] %v14084
    %14149 = vst [vmem:[#allocation18 + $0x98] sm:$0xff] %v14085
    %14150 = vst [vmem:[#allocation18 + $0xa0] sm:$0xff] %v14086
    %14151 = vst [vmem:[#allocation18 + $0xa8] sm:$0xff] %v14087
    %14152 = vst [vmem:[#allocation18 + $0xb0] sm:$0xff] %v14088
    %14153 = vst [vmem:[#allocation18 + $0xb8] sm:$0xff] %v14089
    %14154 = vst [vmem:[#allocation18 + $0xc0] sm:$0xff] %v14090
    %14155 = vst [vmem:[#allocation18 + $0xc8] sm:$0xff] %v14091
    %14156 = vst [vmem:[#allocation18 + $0xd0] sm:$0xff] %v14092
    %14157 = vst [vmem:[#allocation18 + $0xd8] sm:$0xff] %v14093
    %14158 = vst [vmem:[#allocation18 + $0xe0] sm:$0xff] %v14094
    %14159 = vst [vmem:[#allocation18 + $0xe8] sm:$0xff] %v14095
    %14160 = vst [vmem:[#allocation18 + $0xf0] sm:$0xff] %v14096
    %14161 = vst [vmem:[#allocation18 + $0xf8] sm:$0xff] %v14097
    %14162 = vst [vmem:[#allocation18 + $0x100] sm:$0xff] %v14098
    %14163 = vst [vmem:[#allocation18 + $0x108] sm:$0xff] %v14099
    %14164 = vst [vmem:[#allocation18 + $0x110] sm:$0xff] %v14100
    %14165 = vst [vmem:[#allocation18 + $0x118] sm:$0xff] %v14101
    %14166 = vst [vmem:[#allocation18 + $0x120] sm:$0xff] %v14102
    %14167 = vst [vmem:[#allocation18 + $0x128] sm:$0xff] %v14103
    %14168 = vst [vmem:[#allocation18 + $0x130] sm:$0xff] %v14104
    %14169 = vst [vmem:[#allocation18 + $0x138] sm:$0xff] %v14105
    %14170 = vst [vmem:[#allocation18 + $0x140] sm:$0xff] %v14106
    %14171 = vst [vmem:[#allocation18 + $0x148] sm:$0xff] %v14107
    %14172 = vst [vmem:[#allocation18 + $0x150] sm:$0xff] %v14108
    %14173 = vst [vmem:[#allocation18 + $0x158] sm:$0xff] %v14109
    %14174 = vst [vmem:[#allocation18 + $0x160] sm:$0xff] %v14110
    %14175 = vst [vmem:[#allocation18 + $0x168] sm:$0xff] %v14111
    %14176 = vst [vmem:[#allocation18 + $0x170] sm:$0xff] %v14112
    %14177 = vst [vmem:[#allocation18 + $0x178] sm:$0xff] %v14113
    %14178 = vst [vmem:[#allocation18 + $0x180] sm:$0xff] %v14114
    %14179 = vst [vmem:[#allocation18 + $0x188] sm:$0xff] %v14115
    %14180 = vst [vmem:[#allocation18 + $0x190] sm:$0xff] %v14116
    %14181 = vst [vmem:[#allocation18 + $0x198] sm:$0xff] %v14117
    %14182 = vst [vmem:[#allocation18 + $0x1a0] sm:$0xff] %v14118
    %14183 = vst [vmem:[#allocation18 + $0x1a8] sm:$0xff] %v14119
    %14184 = vst [vmem:[#allocation18 + $0x1b0] sm:$0xff] %v14120
    %14185 = vst [vmem:[#allocation18 + $0x1b8] sm:$0xff] %v14121
    %14186 = vst [vmem:[#allocation18 + $0x1c0] sm:$0xff] %v14122
    %14187 = vst [vmem:[#allocation18 + $0x1c8] sm:$0xff] %v14123
    %14188 = vst [vmem:[#allocation18 + $0x1d0] sm:$0xff] %v14124
    %14189 = vst [vmem:[#allocation18 + $0x1d8] sm:$0xff] %v14125
    %14190 = vst [vmem:[#allocation18 + $0x1e0] sm:$0xff] %v14126
    %14191 = vst [vmem:[#allocation18 + $0x1e8] sm:$0xff] %v14127
    %14192 = vst [vmem:[#allocation18 + $0x1f0] sm:$0xff] %v14128
    %14193 = vst [vmem:[#allocation18 + $0x1f8] sm:$0xff] %v14129
    // Predicated region
    $region138: #{style_encoder_forward.3} parent=1 // pred_check
      _
    $region139: #{style_encoder_forward.3} parent=1 // pred_check_branch
      %14195 = sbr.rel (0) target = $region141
    $region140: #{style_encoder_forward.3} parent=1 // pred_region
      %14197 = vsyncadd [#allocation4], 0
      %s14198 = sshll.u32 [#allocation18], 4
      %s14199 = int_to_ptr.vmem [resolvable:$true] %s14198
      %s14200 = sshll.u32 %s25, 4
      %s14201 = int_to_ptr.hbm [resolvable:$true] %s14200
      %14206 = dma.vmem_to_hbm [thread:$0]  %s14199, 8192, %s14201, [#allocation4], 128, 128, 8
    $region141: #{style_encoder_forward.3} parent=1 // pred_fallthru
      _
    // Predicated region
    $region142: #{style_encoder_forward.3} parent=1 // pred_check
      _
    $region143: #{style_encoder_forward.3} parent=1 // pred_check_branch
      %14208 = sbr.rel (0) target = $region145
    $region144: #{style_encoder_forward.3} parent=1 // pred_region
      %14210 = dma.done [#allocation4], 8192
    $region145: #{style_encoder_forward.3} parent=1 // pred_fallthru
      _
    %14211 = vsyncpa [#allocation3], 1
    %14212 = vsyncpa [#allocation7], 1
    %14213 = vsyncpa [#allocation10], 1
    %14214 = vsyncpa [#allocation13], 1
    %14215 = vsyncpa [#allocation16], 1
    %14216 = vsyncpa [#allocation4], 1
    %14217 = vsyncpa [#allocation5], 1

</llo_original>
